<compile_context>
chip_gen: v7x
topology: tpu7x:2x2x1
jax: 0.10.0
libtpu: 0.0.40
codegen_flags: <defaults>
</compile_context>

<pallas_src>
import functools

import jax
import jax.numpy as jnp
from jax import lax
from jax.experimental import pallas as pl
from jax.experimental.pallas import tpu as pltpu

LANE = 128
_COL0 = 8   # interior column offset inside the padded scratch (sublane aligned)


def _round_up(x, m):
    return ((x + m - 1) // m) * m


def _pad_last(x, n_pad):
    c = x.shape[-1]
    if c == n_pad:
        return x
    pad = [(0, 0)] * (x.ndim - 1) + [(0, n_pad - c)]
    return jnp.pad(x, pad)


# ---------------------------------------------------------------------------
# In-kernel helper: 3x3 conv as one long-K implicit-GEMM matmul
# ---------------------------------------------------------------------------
def _conv3x3_gemm(pad_ref, w_ref, H, W):
    """pad_ref: (H+2, W+_COL0+1, C) f32 padded activation; real data at rows
    [1:1+H], cols [_COL0:_COL0+W], zeros elsewhere.
    w_ref: (9*C, Cout) bf16, columns packed in (kw, kh, cin) order."""
    C = pad_ref.shape[-1]
    patches = []
    for kw in range(3):
        # One load + one bf16 cast per kw window (3 per conv, not 9); the kh
        # slices below are on the untiled leading axis (free).
        c0 = _COL0 - 1 + kw
        xkw = pad_ref[:, c0:c0 + W, :].astype(jnp.bfloat16)       # (H+2, W, C)
        for kh in range(3):
            patches.append(xkw[kh:kh + H].reshape(H * W, C))
    slab = jnp.concatenate(patches, axis=-1)                      # (H*W, 9*C) bf16
    return jnp.dot(slab, w_ref[...], preferred_element_type=jnp.float32)


# ---------------------------------------------------------------------------
# Fused block kernel
# ---------------------------------------------------------------------------
def _fused_block_kernel(x_ref, w1_ref, w2_ref, w3_ref,
                        s1_ref, t1_ref, s2_ref, t2_ref, s3_ref, t3_ref,
                        *rest, H, W, has_downsample):
    if has_downsample:
        wd_ref, sd_ref, td_ref, o_ref, pad1_ref, pad2_ref, pad3_ref = rest
    else:
        o_ref, pad1_ref, pad2_ref, pad3_ref = rest

    # Halo must be exactly zero.  Re-zeroed every grid step because the batch
    # axis is "parallel" and may run on another TensorCore with its own scratch.
    pad1_ref[...] = jnp.zeros_like(pad1_ref)
    pad2_ref[...] = jnp.zeros_like(pad2_ref)
    pad3_ref[...] = jnp.zeros_like(pad3_ref)

    x = x_ref[0]                                                  # (H, W, Cin) f32

    # layer 1: bn1 + relu (f32) -> padded VMEM scratch -> implicit-GEMM conv1
    a1 = jnp.maximum(x * s1_ref[...] + t1_ref[...], 0.0)
    pad1_ref[1:1 + H, _COL0:_COL0 + W, :] = a1                    # aligned store
    out1 = _conv3x3_gemm(pad1_ref, w1_ref, H, W)                  # (H*W, Cout) f32

    # layer 2
    a2 = jnp.maximum(out1 * s2_ref[...] + t2_ref[...], 0.0)
    pad2_ref[1:1 + H, _COL0:_COL0 + W, :] = a2.reshape(H, W, -1)
    out2 = _conv3x3_gemm(pad2_ref, w2_ref, H, W)

    # layer 3
    a3 = jnp.maximum(out2 * s3_ref[...] + t3_ref[...], 0.0)
    pad3_ref[1:1 + H, _COL0:_COL0 + W, :] = a3.reshape(H, W, -1)
    out3 = _conv3x3_gemm(pad3_ref, w3_ref, H, W)

    # torch.cat((out1,out2,out3),1): channel placement is baked into the padded
    # weights (disjoint ranges), so the concat is a plain add — no lane shuffles.
    cat = out1 + out2 + out3                                      # (H*W, Cout) f32

    if has_downsample:
        xd = jnp.maximum(x * sd_ref[...] + td_ref[...], 0.0).astype(jnp.bfloat16)
        res = jnp.dot(xd.reshape(H * W, -1), wd_ref[...],
                      preferred_element_type=jnp.float32)
    else:
        res = x.reshape(H * W, -1)                                # identity residual

    o_ref[0] = (cat + res).reshape(H, W, -1).astype(o_ref.dtype)


# ---------------------------------------------------------------------------
# Forward wrapper: one pallas_call for the whole block
# ---------------------------------------------------------------------------
@functools.partial(jax.jit, static_argnames=("in_planes", "out_planes"))
def hdtr_conv_block_forward(packed, x_nchw, *, in_planes, out_planes):
    B, C, H, W = x_nchw.shape
    assert C == in_planes
    assert out_planes % 4 == 0, "out_planes must be divisible by 4"
    assert W % 8 == 0, "W must be a multiple of 8 (layout-free (H,W,C)->(H*W,C))"

    cin_p = _round_up(in_planes, LANE)
    cout_p = _round_up(out_planes, LANE)
    has_ds = in_planes != out_planes

    x_nhwc = jnp.transpose(x_nchw, (0, 2, 3, 1)).astype(jnp.float32)
    x_p = _pad_last(x_nhwc, cin_p)                                # (B, H, W, cin_p) f32

    args = [x_p, packed["w1p"], packed["w2p"], packed["w3p"],
            packed["s1"], packed["t1"], packed["s2"], packed["t2"],
            packed["s3"], packed["t3"]]
    in_specs = [
        pl.BlockSpec((1, H, W, cin_p), lambda b: (b, 0, 0, 0)),
        pl.BlockSpec((9 * cin_p, cout_p), lambda b: (0, 0)),
        pl.BlockSpec((9 * cout_p, cout_p), lambda b: (0, 0)),
        pl.BlockSpec((9 * cout_p, cout_p), lambda b: (0, 0)),
        pl.BlockSpec((1, cin_p), lambda b: (0, 0)),
        pl.BlockSpec((1, cin_p), lambda b: (0, 0)),
        pl.BlockSpec((1, cout_p), lambda b: (0, 0)),
        pl.BlockSpec((1, cout_p), lambda b: (0, 0)),
        pl.BlockSpec((1, cout_p), lambda b: (0, 0)),
        pl.BlockSpec((1, cout_p), lambda b: (0, 0)),
    ]
    if has_ds:
        args += [packed["wdp"], packed["sd"], packed["td"]]
        in_specs += [
            pl.BlockSpec((cin_p, cout_p), lambda b: (0, 0)),
            pl.BlockSpec((1, cin_p), lambda b: (0, 0)),
            pl.BlockSpec((1, cin_p), lambda b: (0, 0)),
        ]

    kernel = functools.partial(_fused_block_kernel, H=H, W=W, has_downsample=has_ds)
    pad_w = W + _COL0 + 1

    out = pl.pallas_call(
        kernel,
        out_shape=jax.ShapeDtypeStruct((B, H, W, cout_p), jnp.float32),
        grid_spec=pltpu.PrefetchScalarGridSpec(
            num_scalar_prefetch=0,
            grid=(B,),
            in_specs=in_specs,
            out_specs=pl.BlockSpec((1, H, W, cout_p), lambda b: (b, 0, 0, 0)),
            scratch_shapes=[
                pltpu.VMEM((H + 2, pad_w, cin_p), jnp.float32),
                pltpu.VMEM((H + 2, pad_w, cout_p), jnp.float32),
                pltpu.VMEM((H + 2, pad_w, cout_p), jnp.float32),
            ]),
        compiler_params=pltpu.CompilerParams(
            dimension_semantics=("parallel",),
            vmem_limit_bytes=32 * 1024 * 1024),
    )(*args)

    out = out[..., :out_planes]
    return jnp.transpose(out, (0, 3, 1, 2))                       # back to NCHW


# ---------------------------------------------------------------------------
# Parameter init: BN folded, weights placed/padded/packed/bf16-cast ONCE
# ---------------------------------------------------------------------------
def init_params(key, in_planes, out_planes):
    assert out_planes % 4 == 0
    c1, c2, c3 = out_planes // 2, out_planes // 4, out_planes // 4
    cin_p = _round_up(in_planes, LANE)
    cout_p = _round_up(out_planes, LANE)

    def bn_fold(k, c):
        kg, kb, km, kv = jax.random.split(k, 4)
        gamma = jax.random.uniform(kg, (c,), jnp.float32, 0.5, 1.5)
        beta = 0.1 * jax.random.normal(kb, (c,), jnp.float32)
        mean = 0.1 * jax.random.normal(km, (c,), jnp.float32)
        var = jax.random.uniform(kv, (c,), jnp.float32, 0.5, 1.5)
        s = gamma / jnp.sqrt(var + 1e-5)          # inference-mode fold
        t = beta - mean * s
        return s, t

    def conv_w(k, ks, cin, cout):
        w = jax.random.normal(k, (ks, ks, cin, cout), jnp.float32)
        return w / jnp.sqrt(jnp.float32(ks * ks * cin))

    def place_vec(v, width, off):
        return jnp.zeros((1, width), jnp.float32).at[0, off:off + v.shape[0]].set(v)

    def pack3x3(w, cin_pad, cout_pad, cin_off, cout_off):
        ks, _, cin, cout = w.shape
        wf = jnp.zeros((ks, ks, cin_pad, cout_pad), jnp.float32)
        wf = wf.at[:, :, cin_off:cin_off + cin, cout_off:cout_off + cout].set(w)
        # column order must match the kernel's im2col slab: kw-major, kh, cin
        wp = jnp.transpose(wf, (1, 0, 2, 3)).reshape(ks * ks * cin_pad, cout_pad)
        return wp.astype(jnp.bfloat16)

    keys = jax.random.split(key, 8)
    s1, t1 = bn_fold(keys[0], in_planes)
    w1 = conv_w(keys[1], 3, in_planes, c1)
    s2, t2 = bn_fold(keys[2], c1)
    w2 = conv_w(keys[3], 3, c1, c2)
    s3, t3 = bn_fold(keys[4], c2)
    w3 = conv_w(keys[5], 3, c2, c3)

    raw = dict(s1=s1, t1=t1, w1=w1, s2=s2, t2=t2, w2=w2, s3=s3, t3=t3, w3=w3)
    packed = {
        "s1": place_vec(s1, cin_p, 0),  "t1": place_vec(t1, cin_p, 0),
        "w1p": pack3x3(w1, cin_p, cout_p, 0, 0),
        "s2": place_vec(s2, cout_p, 0), "t2": place_vec(t2, cout_p, 0),
        "w2p": pack3x3(w2, cout_p, cout_p, 0, c1),
        "s3": place_vec(s3, cout_p, c1), "t3": place_vec(t3, cout_p, c1),
        "w3p": pack3x3(w3, cout_p, cout_p, c1, c1 + c2),
    }

    if in_planes != out_planes:
        sd, td = bn_fold(keys[6], in_planes)
        wd = conv_w(keys[7], 1, in_planes, out_planes)
        raw.update(sd=sd, td=td, wd=wd)
        wdf = jnp.zeros((cin_p, cout_p), jnp.float32)
        wdf = wdf.at[:in_planes, :out_planes].set(wd[0, 0])
        packed.update({"sd": place_vec(sd, cin_p, 0),
                       "td": place_vec(td, cin_p, 0),
                       "wdp": wdf.astype(jnp.bfloat16)})

    return {"raw": raw, "packed": packed}


# ---------------------------------------------------------------------------
# Plain-JAX reference (same bf16 quantization points as the kernel)
# ---------------------------------------------------------------------------
def reference_forward(raw, x_nchw, in_planes, out_planes):
    x = jnp.transpose(x_nchw, (0, 2, 3, 1)).astype(jnp.float32)

    def bnrelu_q(a, s, t):
        a = jnp.maximum(a * s + t, 0.0)
        return a.astype(jnp.bfloat16).astype(jnp.float32)

    def conv(a, w, pad):
        return lax.conv_general_dilated(
            a, w.astype(jnp.bfloat16).astype(jnp.float32), (1, 1),
            [(pad, pad), (pad, pad)],
            dimension_numbers=("NHWC", "HWIO", "NHWC"))

    out1 = conv(bnrelu_q(x, raw["s1"], raw["t1"]), raw["w1"], 1)
    out2 = conv(bnrelu_q(out1, raw["s2"], raw["t2"]), raw["w2"], 1)
    out3 = conv(bnrelu_q(out2, raw["s3"], raw["t3"]), raw["w3"], 1)
    cat = jnp.concatenate([out1, out2, out3], axis=-1)
    if in_planes != out_planes:
        res = conv(bnrelu_q(x, raw["sd"], raw["td"]), raw["wd"], 0)
    else:
        res = x
    return jnp.transpose(cat + res, (0, 3, 1, 2))


if __name__ == "__main__":
    key = jax.random.PRNGKey(0)
    kp, kx = jax.random.split(key)

    in_planes, out_planes = 64, 128      # in != out -> exercises the 1x1 downsample
    batch, H, W = 2, 16, 16

    params = init_params(kp, in_planes, out_planes)
    x = jax.random.normal(kx, (batch, in_planes, H, W), jnp.float32)

    out = hdtr_conv_block_forward(params["packed"], x,
                                  in_planes=in_planes, out_planes=out_planes)
    out = jax.block_until_ready(out)

    assert out.shape == (batch, out_planes, H, W), out.shape
    assert bool(jnp.all(jnp.isfinite(out)))

    ref = reference_forward(params["raw"], x, in_planes, out_planes)
    max_err = float(jnp.max(jnp.abs(out - ref)))
    assert max_err < 5e-2, f"max abs error vs reference: {max_err}"

    print("KERNEL_OK")
</pallas_src>

<mosaic_0001>
module attributes {stable_mosaic.version = 11 : i64} {
  func.func @_fused_block_kernel(%arg0: i32, %arg1: memref<1x16x16x128xf32, #tpu.memory_space<vmem>>, %arg2: memref<1152x128xbf16, #tpu.memory_space<vmem>>, %arg3: memref<1152x128xbf16, #tpu.memory_space<vmem>>, %arg4: memref<1152x128xbf16, #tpu.memory_space<vmem>>, %arg5: memref<1x128xf32, #tpu.memory_space<vmem>>, %arg6: memref<1x128xf32, #tpu.memory_space<vmem>>, %arg7: memref<1x128xf32, #tpu.memory_space<vmem>>, %arg8: memref<1x128xf32, #tpu.memory_space<vmem>>, %arg9: memref<1x128xf32, #tpu.memory_space<vmem>>, %arg10: memref<1x128xf32, #tpu.memory_space<vmem>>, %arg11: memref<128x128xbf16, #tpu.memory_space<vmem>>, %arg12: memref<1x128xf32, #tpu.memory_space<vmem>>, %arg13: memref<1x128xf32, #tpu.memory_space<vmem>>, %arg14: memref<1x16x16x128xf32, #tpu.memory_space<vmem>>, %arg15: memref<18x25x128xf32, #tpu.memory_space<vmem>>, %arg16: memref<18x25x128xf32, #tpu.memory_space<vmem>>, %arg17: memref<18x25x128xf32, #tpu.memory_space<vmem>>) attributes {dimension_semantics = [#tpu.dimension_semantics<parallel>], iteration_bounds = array<i64: 2>, scalar_prefetch = 0 : i64, scratch_operands = 3 : i64, tpu.core_type = #tpu.core_type<tc>, window_params = [{transform_indices = @transform_0, window_bounds = array<i64: 1, 16, 16, 128>}, {pipeline_mode = #tpu.pipeline_mode<synchronous>, transform_indices = @transform_1, window_bounds = array<i64: 1152, 128>}, {pipeline_mode = #tpu.pipeline_mode<synchronous>, transform_indices = @transform_2, window_bounds = array<i64: 1152, 128>}, {pipeline_mode = #tpu.pipeline_mode<synchronous>, transform_indices = @transform_3, window_bounds = array<i64: 1152, 128>}, {pipeline_mode = #tpu.pipeline_mode<synchronous>, transform_indices = @transform_4, window_bounds = array<i64: 1, 128>}, {pipeline_mode = #tpu.pipeline_mode<synchronous>, transform_indices = @transform_5, window_bounds = array<i64: 1, 128>}, {pipeline_mode = #tpu.pipeline_mode<synchronous>, transform_indices = @transform_6, window_bounds = array<i64: 1, 128>}, {pipeline_mode = #tpu.pipeline_mode<synchronous>, transform_indices = @transform_7, window_bounds = array<i64: 1, 128>}, {pipeline_mode = #tpu.pipeline_mode<synchronous>, transform_indices = @transform_8, window_bounds = array<i64: 1, 128>}, {pipeline_mode = #tpu.pipeline_mode<synchronous>, transform_indices = @transform_9, window_bounds = array<i64: 1, 128>}, {pipeline_mode = #tpu.pipeline_mode<synchronous>, transform_indices = @transform_10, window_bounds = array<i64: 128, 128>}, {pipeline_mode = #tpu.pipeline_mode<synchronous>, transform_indices = @transform_11, window_bounds = array<i64: 1, 128>}, {pipeline_mode = #tpu.pipeline_mode<synchronous>, transform_indices = @transform_12, window_bounds = array<i64: 1, 128>}, {transform_indices = @transform_13, window_bounds = array<i64: 1, 16, 16, 128>}]} {
    %cst = arith.constant 0.000000e+00 : f32
    %0 = vector.broadcast %cst : f32 to vector<18x25x128xf32>
    %c0 = arith.constant 0 : index
    %c0_0 = arith.constant 0 : index
    %c0_1 = arith.constant 0 : index
    %1 = vector.load %arg15[%c0, %c0_0, %c0_1] : memref<18x25x128xf32, #tpu.memory_space<vmem>>, vector<18x25x128xf32>
    tpu.vector_store %arg15[%c0, %c0_0, %c0_1], %0 {strides = array<i32>} : memref<18x25x128xf32, #tpu.memory_space<vmem>>, vector<18x25x128xf32>,
    %cst_2 = arith.constant 0.000000e+00 : f32
    %2 = vector.broadcast %cst_2 : f32 to vector<18x25x128xf32>
    %c0_3 = arith.constant 0 : index
    %c0_4 = arith.constant 0 : index
    %c0_5 = arith.constant 0 : index
    %3 = vector.load %arg16[%c0_3, %c0_4, %c0_5] : memref<18x25x128xf32, #tpu.memory_space<vmem>>, vector<18x25x128xf32>
    tpu.vector_store %arg16[%c0_3, %c0_4, %c0_5], %2 {strides = array<i32>} : memref<18x25x128xf32, #tpu.memory_space<vmem>>, vector<18x25x128xf32>,
    %cst_6 = arith.constant 0.000000e+00 : f32
    %4 = vector.broadcast %cst_6 : f32 to vector<18x25x128xf32>
    %c0_7 = arith.constant 0 : index
    %c0_8 = arith.constant 0 : index
    %c0_9 = arith.constant 0 : index
    %5 = vector.load %arg17[%c0_7, %c0_8, %c0_9] : memref<18x25x128xf32, #tpu.memory_space<vmem>>, vector<18x25x128xf32>
    tpu.vector_store %arg17[%c0_7, %c0_8, %c0_9], %4 {strides = array<i32>} : memref<18x25x128xf32, #tpu.memory_space<vmem>>, vector<18x25x128xf32>,
    %c0_10 = arith.constant 0 : index
    %c0_11 = arith.constant 0 : index
    %c0_12 = arith.constant 0 : index
    %c0_13 = arith.constant 0 : index
    %6 = vector.load %arg1[%c0_10, %c0_11, %c0_12, %c0_13] : memref<1x16x16x128xf32, #tpu.memory_space<vmem>>, vector<1x16x16x128xf32>
    %7 = vector.shape_cast %6 : vector<1x16x16x128xf32> to vector<16x16x128xf32>
    %c0_14 = arith.constant 0 : index
    %c0_15 = arith.constant 0 : index
    %8 = vector.load %arg5[%c0_14, %c0_15] : memref<1x128xf32, #tpu.memory_space<vmem>>, vector<1x128xf32>
    %9 = vector.shape_cast %8 : vector<1x128xf32> to vector<1x1x128xf32>
    %10 = vector.broadcast %9 : vector<1x1x128xf32> to vector<16x16x128xf32>
    %11 = arith.mulf %7, %10 : vector<16x16x128xf32>
    %c0_16 = arith.constant 0 : index
    %c0_17 = arith.constant 0 : index
    %12 = vector.load %arg6[%c0_16, %c0_17] : memref<1x128xf32, #tpu.memory_space<vmem>>, vector<1x128xf32>
    %13 = vector.shape_cast %12 : vector<1x128xf32> to vector<1x1x128xf32>
    %14 = vector.broadcast %13 : vector<1x1x128xf32> to vector<16x16x128xf32>
    %15 = arith.addf %11, %14 : vector<16x16x128xf32>
    %cst_18 = arith.constant 0.000000e+00 : f32
    %16 = vector.broadcast %cst_18 : f32 to vector<16x16x128xf32>
    %17 = arith.maximumf %15, %16 : vector<16x16x128xf32>
    %c1 = arith.constant 1 : index
    %c8 = arith.constant 8 : index
    %c0_19 = arith.constant 0 : index
    %18 = vector.load %arg15[%c1, %c8, %c0_19] : memref<18x25x128xf32, #tpu.memory_space<vmem>>, vector<16x16x128xf32>
    tpu.vector_store %arg15[%c1, %c8, %c0_19], %17 {strides = array<i32>} : memref<18x25x128xf32, #tpu.memory_space<vmem>>, vector<16x16x128xf32>,
    %c0_20 = arith.constant 0 : index
    %c7 = arith.constant 7 : index
    %c0_21 = arith.constant 0 : index
    %19 = vector.load %arg15[%c0_20, %c7, %c0_21] : memref<18x25x128xf32, #tpu.memory_space<vmem>>, vector<18x16x128xf32>
    %20 = arith.truncf %19 : vector<18x16x128xf32> to vector<18x16x128xbf16>
    %21 = vector.extract_strided_slice %20 {offsets = [0, 0, 0], sizes = [16, 16, 128], strides = [1, 1, 1]} : vector<18x16x128xbf16> to vector<16x16x128xbf16>
    %22 = vector.shape_cast %21 : vector<16x16x128xbf16> to vector<256x128xbf16>
    %23 = vector.extract_strided_slice %20 {offsets = [1, 0, 0], sizes = [16, 16, 128], strides = [1, 1, 1]} : vector<18x16x128xbf16> to vector<16x16x128xbf16>
    %24 = vector.shape_cast %23 : vector<16x16x128xbf16> to vector<256x128xbf16>
    %25 = vector.extract_strided_slice %20 {offsets = [2, 0, 0], sizes = [16, 16, 128], strides = [1, 1, 1]} : vector<18x16x128xbf16> to vector<16x16x128xbf16>
    %26 = vector.shape_cast %25 : vector<16x16x128xbf16> to vector<256x128xbf16>
    %c0_22 = arith.constant 0 : index
    %c8_23 = arith.constant 8 : index
    %c0_24 = arith.constant 0 : index
    %27 = vector.load %arg15[%c0_22, %c8_23, %c0_24] : memref<18x25x128xf32, #tpu.memory_space<vmem>>, vector<18x16x128xf32>
    %28 = arith.truncf %27 : vector<18x16x128xf32> to vector<18x16x128xbf16>
    %29 = vector.extract_strided_slice %28 {offsets = [0, 0, 0], sizes = [16, 16, 128], strides = [1, 1, 1]} : vector<18x16x128xbf16> to vector<16x16x128xbf16>
    %30 = vector.shape_cast %29 : vector<16x16x128xbf16> to vector<256x128xbf16>
    %31 = vector.extract_strided_slice %28 {offsets = [1, 0, 0], sizes = [16, 16, 128], strides = [1, 1, 1]} : vector<18x16x128xbf16> to vector<16x16x128xbf16>
    %32 = vector.shape_cast %31 : vector<16x16x128xbf16> to vector<256x128xbf16>
    %33 = vector.extract_strided_slice %28 {offsets = [2, 0, 0], sizes = [16, 16, 128], strides = [1, 1, 1]} : vector<18x16x128xbf16> to vector<16x16x128xbf16>
    %34 = vector.shape_cast %33 : vector<16x16x128xbf16> to vector<256x128xbf16>
    %c0_25 = arith.constant 0 : index
    %c9 = arith.constant 9 : index
    %c0_26 = arith.constant 0 : index
    %35 = vector.load %arg15[%c0_25, %c9, %c0_26] : memref<18x25x128xf32, #tpu.memory_space<vmem>>, vector<18x16x128xf32>
    %36 = arith.truncf %35 : vector<18x16x128xf32> to vector<18x16x128xbf16>
    %37 = vector.extract_strided_slice %36 {offsets = [0, 0, 0], sizes = [16, 16, 128], strides = [1, 1, 1]} : vector<18x16x128xbf16> to vector<16x16x128xbf16>
    %38 = vector.shape_cast %37 : vector<16x16x128xbf16> to vector<256x128xbf16>
    %39 = vector.extract_strided_slice %36 {offsets = [1, 0, 0], sizes = [16, 16, 128], strides = [1, 1, 1]} : vector<18x16x128xbf16> to vector<16x16x128xbf16>
    %40 = vector.shape_cast %39 : vector<16x16x128xbf16> to vector<256x128xbf16>
    %41 = vector.extract_strided_slice %36 {offsets = [2, 0, 0], sizes = [16, 16, 128], strides = [1, 1, 1]} : vector<18x16x128xbf16> to vector<16x16x128xbf16>
    %42 = vector.shape_cast %41 : vector<16x16x128xbf16> to vector<256x128xbf16>
    %43 = tpu.concatenate %22, %24, %26, %30, %32, %34, %38, %40, %42 in 1 : vector<256x128xbf16>, vector<256x128xbf16>, vector<256x128xbf16>, vector<256x128xbf16>, vector<256x128xbf16>, vector<256x128xbf16>, vector<256x128xbf16>, vector<256x128xbf16>, vector<256x128xbf16> -> vector<256x1152xbf16>
    %c0_27 = arith.constant 0 : index
    %c0_28 = arith.constant 0 : index
    %44 = vector.load %arg2[%c0_27, %c0_28] : memref<1152x128xbf16, #tpu.memory_space<vmem>>, vector<1152x128xbf16>
    %cst_29 = arith.constant dense<0.000000e+00> : vector<256x128xf32>
    %45 = tpu.matmul %43, %44, %cst_29 {dimension_numbers = #tpu.dot_dimension_numbers<[1], [0], [0], [1], [0, 0, 1, 1], [], []>} : vector<256x1152xbf16>, vector<1152x128xbf16>, vector<256x128xf32> -> vector<256x128xf32>
    %c0_30 = arith.constant 0 : index
    %c0_31 = arith.constant 0 : index
    %46 = vector.load %arg7[%c0_30, %c0_31] : memref<1x128xf32, #tpu.memory_space<vmem>>, vector<1x128xf32>
    %47 = vector.broadcast %46 : vector<1x128xf32> to vector<256x128xf32>
    %48 = arith.mulf %45, %47 : vector<256x128xf32>
    %c0_32 = arith.constant 0 : index
    %c0_33 = arith.constant 0 : index
    %49 = vector.load %arg8[%c0_32, %c0_33] : memref<1x128xf32, #tpu.memory_space<vmem>>, vector<1x128xf32>
    %50 = vector.broadcast %49 : vector<1x128xf32> to vector<256x128xf32>
    %51 = arith.addf %48, %50 : vector<256x128xf32>
    %cst_34 = arith.constant 0.000000e+00 : f32
    %52 = vector.broadcast %cst_34 : f32 to vector<256x128xf32>
    %53 = arith.maximumf %51, %52 : vector<256x128xf32>
    %54 = vector.shape_cast %53 : vector<256x128xf32> to vector<16x16x128xf32>
    %c1_35 = arith.constant 1 : index
    %c8_36 = arith.constant 8 : index
    %c0_37 = arith.constant 0 : index
    %55 = vector.load %arg16[%c1_35, %c8_36, %c0_37] : memref<18x25x128xf32, #tpu.memory_space<vmem>>, vector<16x16x128xf32>
    tpu.vector_store %arg16[%c1_35, %c8_36, %c0_37], %54 {strides = array<i32>} : memref<18x25x128xf32, #tpu.memory_space<vmem>>, vector<16x16x128xf32>,
    %c0_38 = arith.constant 0 : index
    %c7_39 = arith.constant 7 : index
    %c0_40 = arith.constant 0 : index
    %56 = vector.load %arg16[%c0_38, %c7_39, %c0_40] : memref<18x25x128xf32, #tpu.memory_space<vmem>>, vector<18x16x128xf32>
    %57 = arith.truncf %56 : vector<18x16x128xf32> to vector<18x16x128xbf16>
    %58 = vector.extract_strided_slice %57 {offsets = [0, 0, 0], sizes = [16, 16, 128], strides = [1, 1, 1]} : vector<18x16x128xbf16> to vector<16x16x128xbf16>
    %59 = vector.shape_cast %58 : vector<16x16x128xbf16> to vector<256x128xbf16>
    %60 = vector.extract_strided_slice %57 {offsets = [1, 0, 0], sizes = [16, 16, 128], strides = [1, 1, 1]} : vector<18x16x128xbf16> to vector<16x16x128xbf16>
    %61 = vector.shape_cast %60 : vector<16x16x128xbf16> to vector<256x128xbf16>
    %62 = vector.extract_strided_slice %57 {offsets = [2, 0, 0], sizes = [16, 16, 128], strides = [1, 1, 1]} : vector<18x16x128xbf16> to vector<16x16x128xbf16>
    %63 = vector.shape_cast %62 : vector<16x16x128xbf16> to vector<256x128xbf16>
    %c0_41 = arith.constant 0 : index
    %c8_42 = arith.constant 8 : index
    %c0_43 = arith.constant 0 : index
    %64 = vector.load %arg16[%c0_41, %c8_42, %c0_43] : memref<18x25x128xf32, #tpu.memory_space<vmem>>, vector<18x16x128xf32>
    %65 = arith.truncf %64 : vector<18x16x128xf32> to vector<18x16x128xbf16>
    %66 = vector.extract_strided_slice %65 {offsets = [0, 0, 0], sizes = [16, 16, 128], strides = [1, 1, 1]} : vector<18x16x128xbf16> to vector<16x16x128xbf16>
    %67 = vector.shape_cast %66 : vector<16x16x128xbf16> to vector<256x128xbf16>
    %68 = vector.extract_strided_slice %65 {offsets = [1, 0, 0], sizes = [16, 16, 128], strides = [1, 1, 1]} : vector<18x16x128xbf16> to vector<16x16x128xbf16>
    %69 = vector.shape_cast %68 : vector<16x16x128xbf16> to vector<256x128xbf16>
    %70 = vector.extract_strided_slice %65 {offsets = [2, 0, 0], sizes = [16, 16, 128], strides = [1, 1, 1]} : vector<18x16x128xbf16> to vector<16x16x128xbf16>
    %71 = vector.shape_cast %70 : vector<16x16x128xbf16> to vector<256x128xbf16>
    %c0_44 = arith.constant 0 : index
    %c9_45 = arith.constant 9 : index
    %c0_46 = arith.constant 0 : index
    %72 = vector.load %arg16[%c0_44, %c9_45, %c0_46] : memref<18x25x128xf32, #tpu.memory_space<vmem>>, vector<18x16x128xf32>
    %73 = arith.truncf %72 : vector<18x16x128xf32> to vector<18x16x128xbf16>
    %74 = vector.extract_strided_slice %73 {offsets = [0, 0, 0], sizes = [16, 16, 128], strides = [1, 1, 1]} : vector<18x16x128xbf16> to vector<16x16x128xbf16>
    %75 = vector.shape_cast %74 : vector<16x16x128xbf16> to vector<256x128xbf16>
    %76 = vector.extract_strided_slice %73 {offsets = [1, 0, 0], sizes = [16, 16, 128], strides = [1, 1, 1]} : vector<18x16x128xbf16> to vector<16x16x128xbf16>
    %77 = vector.shape_cast %76 : vector<16x16x128xbf16> to vector<256x128xbf16>
    %78 = vector.extract_strided_slice %73 {offsets = [2, 0, 0], sizes = [16, 16, 128], strides = [1, 1, 1]} : vector<18x16x128xbf16> to vector<16x16x128xbf16>
    %79 = vector.shape_cast %78 : vector<16x16x128xbf16> to vector<256x128xbf16>
    %80 = tpu.concatenate %59, %61, %63, %67, %69, %71, %75, %77, %79 in 1 : vector<256x128xbf16>, vector<256x128xbf16>, vector<256x128xbf16>, vector<256x128xbf16>, vector<256x128xbf16>, vector<256x128xbf16>, vector<256x128xbf16>, vector<256x128xbf16>, vector<256x128xbf16> -> vector<256x1152xbf16>
    %c0_47 = arith.constant 0 : index
    %c0_48 = arith.constant 0 : index
    %81 = vector.load %arg3[%c0_47, %c0_48] : memref<1152x128xbf16, #tpu.memory_space<vmem>>, vector<1152x128xbf16>
    %cst_49 = arith.constant dense<0.000000e+00> : vector<256x128xf32>
    %82 = tpu.matmul %80, %81, %cst_49 {dimension_numbers = #tpu.dot_dimension_numbers<[1], [0], [0], [1], [0, 0, 1, 1], [], []>} : vector<256x1152xbf16>, vector<1152x128xbf16>, vector<256x128xf32> -> vector<256x128xf32>
    %c0_50 = arith.constant 0 : index
    %c0_51 = arith.constant 0 : index
    %83 = vector.load %arg9[%c0_50, %c0_51] : memref<1x128xf32, #tpu.memory_space<vmem>>, vector<1x128xf32>
    %84 = vector.broadcast %83 : vector<1x128xf32> to vector<256x128xf32>
    %85 = arith.mulf %82, %84 : vector<256x128xf32>
    %c0_52 = arith.constant 0 : index
    %c0_53 = arith.constant 0 : index
    %86 = vector.load %arg10[%c0_52, %c0_53] : memref<1x128xf32, #tpu.memory_space<vmem>>, vector<1x128xf32>
    %87 = vector.broadcast %86 : vector<1x128xf32> to vector<256x128xf32>
    %88 = arith.addf %85, %87 : vector<256x128xf32>
    %cst_54 = arith.constant 0.000000e+00 : f32
    %89 = vector.broadcast %cst_54 : f32 to vector<256x128xf32>
    %90 = arith.maximumf %88, %89 : vector<256x128xf32>
    %91 = vector.shape_cast %90 : vector<256x128xf32> to vector<16x16x128xf32>
    %c1_55 = arith.constant 1 : index
    %c8_56 = arith.constant 8 : index
    %c0_57 = arith.constant 0 : index
    %92 = vector.load %arg17[%c1_55, %c8_56, %c0_57] : memref<18x25x128xf32, #tpu.memory_space<vmem>>, vector<16x16x128xf32>
    tpu.vector_store %arg17[%c1_55, %c8_56, %c0_57], %91 {strides = array<i32>} : memref<18x25x128xf32, #tpu.memory_space<vmem>>, vector<16x16x128xf32>,
    %c0_58 = arith.constant 0 : index
    %c7_59 = arith.constant 7 : index
    %c0_60 = arith.constant 0 : index
    %93 = vector.load %arg17[%c0_58, %c7_59, %c0_60] : memref<18x25x128xf32, #tpu.memory_space<vmem>>, vector<18x16x128xf32>
    %94 = arith.truncf %93 : vector<18x16x128xf32> to vector<18x16x128xbf16>
    %95 = vector.extract_strided_slice %94 {offsets = [0, 0, 0], sizes = [16, 16, 128], strides = [1, 1, 1]} : vector<18x16x128xbf16> to vector<16x16x128xbf16>
    %96 = vector.shape_cast %95 : vector<16x16x128xbf16> to vector<256x128xbf16>
    %97 = vector.extract_strided_slice %94 {offsets = [1, 0, 0], sizes = [16, 16, 128], strides = [1, 1, 1]} : vector<18x16x128xbf16> to vector<16x16x128xbf16>
    %98 = vector.shape_cast %97 : vector<16x16x128xbf16> to vector<256x128xbf16>
    %99 = vector.extract_strided_slice %94 {offsets = [2, 0, 0], sizes = [16, 16, 128], strides = [1, 1, 1]} : vector<18x16x128xbf16> to vector<16x16x128xbf16>
    %100 = vector.shape_cast %99 : vector<16x16x128xbf16> to vector<256x128xbf16>
    %c0_61 = arith.constant 0 : index
    %c8_62 = arith.constant 8 : index
    %c0_63 = arith.constant 0 : index
    %101 = vector.load %arg17[%c0_61, %c8_62, %c0_63] : memref<18x25x128xf32, #tpu.memory_space<vmem>>, vector<18x16x128xf32>
    %102 = arith.truncf %101 : vector<18x16x128xf32> to vector<18x16x128xbf16>
    %103 = vector.extract_strided_slice %102 {offsets = [0, 0, 0], sizes = [16, 16, 128], strides = [1, 1, 1]} : vector<18x16x128xbf16> to vector<16x16x128xbf16>
    %104 = vector.shape_cast %103 : vector<16x16x128xbf16> to vector<256x128xbf16>
    %105 = vector.extract_strided_slice %102 {offsets = [1, 0, 0], sizes = [16, 16, 128], strides = [1, 1, 1]} : vector<18x16x128xbf16> to vector<16x16x128xbf16>
    %106 = vector.shape_cast %105 : vector<16x16x128xbf16> to vector<256x128xbf16>
    %107 = vector.extract_strided_slice %102 {offsets = [2, 0, 0], sizes = [16, 16, 128], strides = [1, 1, 1]} : vector<18x16x128xbf16> to vector<16x16x128xbf16>
    %108 = vector.shape_cast %107 : vector<16x16x128xbf16> to vector<256x128xbf16>
    %c0_64 = arith.constant 0 : index
    %c9_65 = arith.constant 9 : index
    %c0_66 = arith.constant 0 : index
    %109 = vector.load %arg17[%c0_64, %c9_65, %c0_66] : memref<18x25x128xf32, #tpu.memory_space<vmem>>, vector<18x16x128xf32>
    %110 = arith.truncf %109 : vector<18x16x128xf32> to vector<18x16x128xbf16>
    %111 = vector.extract_strided_slice %110 {offsets = [0, 0, 0], sizes = [16, 16, 128], strides = [1, 1, 1]} : vector<18x16x128xbf16> to vector<16x16x128xbf16>
    %112 = vector.shape_cast %111 : vector<16x16x128xbf16> to vector<256x128xbf16>
    %113 = vector.extract_strided_slice %110 {offsets = [1, 0, 0], sizes = [16, 16, 128], strides = [1, 1, 1]} : vector<18x16x128xbf16> to vector<16x16x128xbf16>
    %114 = vector.shape_cast %113 : vector<16x16x128xbf16> to vector<256x128xbf16>
    %115 = vector.extract_strided_slice %110 {offsets = [2, 0, 0], sizes = [16, 16, 128], strides = [1, 1, 1]} : vector<18x16x128xbf16> to vector<16x16x128xbf16>
    %116 = vector.shape_cast %115 : vector<16x16x128xbf16> to vector<256x128xbf16>
    %117 = tpu.concatenate %96, %98, %100, %104, %106, %108, %112, %114, %116 in 1 : vector<256x128xbf16>, vector<256x128xbf16>, vector<256x128xbf16>, vector<256x128xbf16>, vector<256x128xbf16>, vector<256x128xbf16>, vector<256x128xbf16>, vector<256x128xbf16>, vector<256x128xbf16> -> vector<256x1152xbf16>
    %c0_67 = arith.constant 0 : index
    %c0_68 = arith.constant 0 : index
    %118 = vector.load %arg4[%c0_67, %c0_68] : memref<1152x128xbf16, #tpu.memory_space<vmem>>, vector<1152x128xbf16>
    %cst_69 = arith.constant dense<0.000000e+00> : vector<256x128xf32>
    %119 = tpu.matmul %117, %118, %cst_69 {dimension_numbers = #tpu.dot_dimension_numbers<[1], [0], [0], [1], [0, 0, 1, 1], [], []>} : vector<256x1152xbf16>, vector<1152x128xbf16>, vector<256x128xf32> -> vector<256x128xf32>
    %120 = arith.addf %45, %82 : vector<256x128xf32>
    %121 = arith.addf %120, %119 : vector<256x128xf32>
    %c0_70 = arith.constant 0 : index
    %c0_71 = arith.constant 0 : index
    %122 = vector.load %arg12[%c0_70, %c0_71] : memref<1x128xf32, #tpu.memory_space<vmem>>, vector<1x128xf32>
    %123 = vector.shape_cast %122 : vector<1x128xf32> to vector<1x1x128xf32>
    %124 = vector.broadcast %123 : vector<1x1x128xf32> to vector<16x16x128xf32>
    %125 = arith.mulf %7, %124 : vector<16x16x128xf32>
    %c0_72 = arith.constant 0 : index
    %c0_73 = arith.constant 0 : index
    %126 = vector.load %arg13[%c0_72, %c0_73] : memref<1x128xf32, #tpu.memory_space<vmem>>, vector<1x128xf32>
    %127 = vector.shape_cast %126 : vector<1x128xf32> to vector<1x1x128xf32>
    %128 = vector.broadcast %127 : vector<1x1x128xf32> to vector<16x16x128xf32>
    %129 = arith.addf %125, %128 : vector<16x16x128xf32>
    %cst_74 = arith.constant 0.000000e+00 : f32
    %130 = vector.broadcast %cst_74 : f32 to vector<16x16x128xf32>
    %131 = arith.maximumf %129, %130 : vector<16x16x128xf32>
    %132 = arith.truncf %131 : vector<16x16x128xf32> to vector<16x16x128xbf16>
    %133 = vector.shape_cast %132 : vector<16x16x128xbf16> to vector<256x128xbf16>
    %c0_75 = arith.constant 0 : index
    %c0_76 = arith.constant 0 : index
    %134 = vector.load %arg11[%c0_75, %c0_76] : memref<128x128xbf16, #tpu.memory_space<vmem>>, vector<128x128xbf16>
    %cst_77 = arith.constant dense<0.000000e+00> : vector<256x128xf32>
    %135 = tpu.matmul %133, %134, %cst_77 {dimension_numbers = #tpu.dot_dimension_numbers<[1], [0], [0], [1], [0, 0, 1, 1], [], []>} : vector<256x128xbf16>, vector<128x128xbf16>, vector<256x128xf32> -> vector<256x128xf32>
    %136 = arith.addf %121, %135 : vector<256x128xf32>
    %137 = vector.shape_cast %136 : vector<256x128xf32> to vector<16x16x128xf32>
    %c0_78 = arith.constant 0 : index
    %c0_79 = arith.constant 0 : index
    %c0_80 = arith.constant 0 : index
    %c0_81 = arith.constant 0 : index
    %138 = vector.load %arg14[%c0_78, %c0_79, %c0_80, %c0_81] : memref<1x16x16x128xf32, #tpu.memory_space<vmem>>, vector<1x16x16x128xf32>
    %139 = vector.shape_cast %138 : vector<1x16x16x128xf32> to vector<16x16x128xf32>
    %140 = vector.shape_cast %137 : vector<16x16x128xf32> to vector<1x16x16x128xf32>
    tpu.vector_store %arg14[%c0_78, %c0_79, %c0_80, %c0_81], %140 {strides = array<i32>} : memref<1x16x16x128xf32, #tpu.memory_space<vmem>>, vector<1x16x16x128xf32>,
    return
  }
  func.func @transform_0(%arg0: i32) -> (i32, i32, i32, i32) {
    %c0_i32 = arith.constant 0 : i32
    %c0_i32_0 = arith.constant 0 : i32
    %c0_i32_1 = arith.constant 0 : i32
    %c0_i32_2 = arith.constant 0 : i32
    return %arg0, %c0_i32, %c0_i32_0, %c0_i32_1 : i32, i32, i32, i32
  }
  func.func @transform_1(%arg0: i32) -> (i32, i32) {
    %c0_i32 = arith.constant 0 : i32
    %c0_i32_0 = arith.constant 0 : i32
    %c0_i32_1 = arith.constant 0 : i32
    return %c0_i32, %c0_i32_0 : i32, i32
  }
  func.func @transform_2(%arg0: i32) -> (i32, i32) {
    %c0_i32 = arith.constant 0 : i32
    %c0_i32_0 = arith.constant 0 : i32
    %c0_i32_1 = arith.constant 0 : i32
    return %c0_i32, %c0_i32_0 : i32, i32
  }
  func.func @transform_3(%arg0: i32) -> (i32, i32) {
    %c0_i32 = arith.constant 0 : i32
    %c0_i32_0 = arith.constant 0 : i32
    %c0_i32_1 = arith.constant 0 : i32
    return %c0_i32, %c0_i32_0 : i32, i32
  }
  func.func @transform_4(%arg0: i32) -> (i32, i32) {
    %c0_i32 = arith.constant 0 : i32
    %c0_i32_0 = arith.constant 0 : i32
    %c0_i32_1 = arith.constant 0 : i32
    return %c0_i32, %c0_i32_0 : i32, i32
  }
  func.func @transform_5(%arg0: i32) -> (i32, i32) {
    %c0_i32 = arith.constant 0 : i32
    %c0_i32_0 = arith.constant 0 : i32
    %c0_i32_1 = arith.constant 0 : i32
    return %c0_i32, %c0_i32_0 : i32, i32
  }
  func.func @transform_6(%arg0: i32) -> (i32, i32) {
    %c0_i32 = arith.constant 0 : i32
    %c0_i32_0 = arith.constant 0 : i32
    %c0_i32_1 = arith.constant 0 : i32
    return %c0_i32, %c0_i32_0 : i32, i32
  }
  func.func @transform_7(%arg0: i32) -> (i32, i32) {
    %c0_i32 = arith.constant 0 : i32
    %c0_i32_0 = arith.constant 0 : i32
    %c0_i32_1 = arith.constant 0 : i32
    return %c0_i32, %c0_i32_0 : i32, i32
  }
  func.func @transform_8(%arg0: i32) -> (i32, i32) {
    %c0_i32 = arith.constant 0 : i32
    %c0_i32_0 = arith.constant 0 : i32
    %c0_i32_1 = arith.constant 0 : i32
    return %c0_i32, %c0_i32_0 : i32, i32
  }
  func.func @transform_9(%arg0: i32) -> (i32, i32) {
    %c0_i32 = arith.constant 0 : i32
    %c0_i32_0 = arith.constant 0 : i32
    %c0_i32_1 = arith.constant 0 : i32
    return %c0_i32, %c0_i32_0 : i32, i32
  }
  func.func @transform_10(%arg0: i32) -> (i32, i32) {
    %c0_i32 = arith.constant 0 : i32
    %c0_i32_0 = arith.constant 0 : i32
    %c0_i32_1 = arith.constant 0 : i32
    return %c0_i32, %c0_i32_0 : i32, i32
  }
  func.func @transform_11(%arg0: i32) -> (i32, i32) {
    %c0_i32 = arith.constant 0 : i32
    %c0_i32_0 = arith.constant 0 : i32
    %c0_i32_1 = arith.constant 0 : i32
    return %c0_i32, %c0_i32_0 : i32, i32
  }
  func.func @transform_12(%arg0: i32) -> (i32, i32) {
    %c0_i32 = arith.constant 0 : i32
    %c0_i32_0 = arith.constant 0 : i32
    %c0_i32_1 = arith.constant 0 : i32
    return %c0_i32, %c0_i32_0 : i32, i32
  }
  func.func @transform_13(%arg0: i32) -> (i32, i32, i32, i32) {
    %c0_i32 = arith.constant 0 : i32
    %c0_i32_0 = arith.constant 0 : i32
    %c0_i32_1 = arith.constant 0 : i32
    %c0_i32_2 = arith.constant 0 : i32
    return %arg0, %c0_i32, %c0_i32_0, %c0_i32_1 : i32, i32, i32, i32
  }
}

</mosaic_0001>

<llo_original>
// kernel: hdtr_conv_block_forward.1
$region0: #{hdtr_conv_block_forward.1}
  #allocation0 [shape = 'u32[]', space=smem, size = 0x4, offset = 0x4, fixed_abs, tag = 'smem constant byte address 0x4 - core index']
  #allocation1 [shape = 'u32[144,128]{1,0:T(1,128)}', space=vmem, size = 0x12000, scoped, tag = 'internal scratch']
  #allocation2 [shape = 'f32[18,25,128]{2,1,0:T(8,128)}', space=vmem, size = 0x48000, scoped, tag = 'scratch operand']
  #allocation3 [shape = 'f32[18,25,128]{2,1,0:T(8,128)}', space=vmem, size = 0x48000, scoped, tag = 'scratch operand']
  #allocation4 [shape = 'f32[18,25,128]{2,1,0:T(8,128)}', space=vmem, size = 0x48000, scoped, tag = 'scratch operand']
  %s0 = inlined_call_operand.vmem [shape: f32[2,16,16,128], index: 0, kind: input, shape index: {}]
  %s1 = inlined_call_operand.vmem [shape: bf16[1152,128], index: 1, kind: input, shape index: {}]
  %s2 = inlined_call_operand.hbm [shape: bf16[1152,128], index: 2, kind: input, shape index: {}]
  %s3 = inlined_call_operand.hbm [shape: bf16[1152,128], index: 3, kind: input, shape index: {}]
  %s4 = inlined_call_operand.vmem [shape: f32[1,128], index: 4, kind: input, shape index: {}]
  %s5 = inlined_call_operand.vmem [shape: f32[1,128], index: 5, kind: input, shape index: {}]
  %s6 = inlined_call_operand.vmem [shape: f32[1,128], index: 6, kind: input, shape index: {}]
  %s7 = inlined_call_operand.vmem [shape: f32[1,128], index: 7, kind: input, shape index: {}]
  %s8 = inlined_call_operand.vmem [shape: f32[1,128], index: 8, kind: input, shape index: {}]
  %s9 = inlined_call_operand.vmem [shape: f32[1,128], index: 9, kind: input, shape index: {}]
  %s10 = inlined_call_operand.vmem [shape: bf16[128,128], index: 10, kind: input, shape index: {}]
  %s11 = inlined_call_operand.vmem [shape: f32[1,128], index: 11, kind: input, shape index: {}]
  %s12 = inlined_call_operand.vmem [shape: f32[1,128], index: 12, kind: input, shape index: {}]
  %s13 = inlined_call_operand.hbm [shape: f32[2,16,16,128], index: 13, kind: output, shape index: {}]
  %s14 = sld [smem:[#allocation0]]
  $region93: #{hdtr_conv_block_forward.1} parent=0
    _
  %s16 = ssub.s32 1, %s14
  %s17 = scalar_select 0, %s16, %s14
  $region1: #{hdtr_conv_block_forward.1} parent=0
    #allocation5 [shape = 'u8[294912]{0}', space=vmem, size = 0x48000, scoped, tag = 'input window, operand 2, single buffered']
    #allocation6 [shape = 's32[2]{0}', space=sflag, size = 0x8, scoped, tag = 'scoped memory for hdtr_conv_block_forward.1']
    #allocation7 [shape = 's32[2]{0}', space=sflag, size = 0x8, scoped, tag = 'scoped memory for hdtr_conv_block_forward.1']
    #allocation8 [shape = 'u8[294912]{0}', space=vmem, size = 0x48000, scoped, tag = 'input window, operand 3, single buffered']
    #allocation9 [shape = 's32[1]{0}', space=sflag, size = 0x4, scoped, tag = 'scoped memory for hdtr_conv_block_forward.1']
    #allocation10 [shape = 'u8[262144]{0}', space=vmem, size = 0x40000, scoped, tag = 'output window, operand 0']
    %18 = vsyncpa [#allocation6], 0
    %19 = vsyncpa [#allocation9], 0
    %20 = vsyncpa [#allocation7], 0
    %s21 = scalar_lea.sflag [#allocation7], 1
    %22 = vsyncpa %s21, 0
    loop: start=0, step=1, limit=4
    $region2: #{hdtr_conv_block_forward.1} parent=1 // loop_pre_header
      _
    $region3: #{hdtr_conv_block_forward.1} parent=1 // loop_header
      %s24 = sphi 0, %s28
      %p25 = scmp.ge.s32.totalorder %s24, 4
      %s34 = sphi 0, %s36
      %s37 = sphi 0, %s34
      %s38 = sphi 0, %s37
      %s54 = sphi 0, %s38
      %s58 = sphi 0, %s58
      %s60 = sphi 0, %s58
      %s61 = sphi 0, %s60
      %s75 = sphi 0, %s61
      %s79 = sphi 0, %s79
      %s81 = sphi 0, %s79
      %s82 = sphi 0, %s81
      %s96 = sphi 0, %s82
      %s100 = sphi 0, %s100
      %s102 = sphi 0, %s100
      %s103 = sphi 0, %s102
      %s117 = sphi 0, %s103
      %s121 = sphi 0, %s121
      %s123 = sphi 0, %s121
      %s124 = sphi 0, %s123
      %s138 = sphi 0, %s124
      %s142 = sphi 0, %s142
      %s144 = sphi 0, %s142
      %s145 = sphi 0, %s144
      %s159 = sphi 0, %s145
      %s163 = sphi 0, %s163
      %s165 = sphi 0, %s163
      %s166 = sphi 0, %s165
      %s180 = sphi 0, %s166
      %s184 = sphi 0, %s184
      %s186 = sphi 0, %s184
      %s187 = sphi 0, %s186
      %s201 = sphi 0, %s187
      %s205 = sphi 0, %s205
      %s207 = sphi 0, %s205
      %s208 = sphi 0, %s207
      %s222 = sphi 0, %s208
      %s226 = sphi 0, %s226
      %s228 = sphi 0, %s226
      %s229 = sphi 0, %s228
      %s243 = sphi 0, %s229
      %s247 = sphi 0, %s247
      %s249 = sphi 0, %s247
      %s250 = sphi 0, %s249
      %s264 = sphi 0, %s250
      %s268 = sphi 0, %s268
      %s270 = sphi 0, %s268
      %s271 = sphi 0, %s270
      %s285 = sphi 0, %s271
      %s289 = sphi 0, %s289
      %s291 = sphi 0, %s289
      %s292 = sphi 0, %s291
      %s306 = sphi 0, %s292
      %s312 = sphi 0, %s314
      %s315 = sphi 0, %s312
      %s316 = sphi 0, %s315
      %s332 = sphi 0, %s316
    $region4: #{hdtr_conv_block_forward.1} parent=1 // loop_header_branch
      %27 = sbr.rel (%p25) target = $region8
    $region5: #{hdtr_conv_block_forward.1} parent=1 // loop_body
      %s29 = ssub.s32 %s24, 1
      %s30 = ssub.s32 %s24, 2
      %s31 = sadd.s32 %s24, 1
      %s32 = ssub.s32 %s24, %s31
      %p33 = scmp.eq.s32.totalorder %s32, 0
      %s35 = sadd.s32 %s34, 1
      %s36 = scalar_select %p33, %s34, %s35
      %p39 = pneg %p33
      %p40 = scmp.eq.s32.totalorder %s24, 1
      %p41 = por %p39, %p40
      %p42 = scmp.ne.s32.totalorder %s34, %s37
      %p43 = scmp.eq.s32.totalorder %s24, 0
      %p44 = por %p42, %p43
      %p45 = scmp.ne.s32.totalorder %s34, %s37
      %p46 = scmp.eq.s32.totalorder %s29, 1
      %p47 = por %p45, %p46
      %p48 = scmp.ne.s32.totalorder %s37, %s38
      %p49 = scmp.eq.s32.totalorder %s29, 0
      %p50 = por %p48, %p49
      %p51 = scmp.ne.s32.totalorder %s37, %s38
      %p52 = scmp.eq.s32.totalorder %s30, 1
      %p53 = por %p51, %p52
      %p55 = scmp.ne.s32.totalorder %s38, %s54
      %p56 = scmp.eq.s32.totalorder %s30, 0
      %p57 = por %p55, %p56
      %s59 = sadd.s32 %s58, 1
      %p62 = scmp.eq.s32.totalorder %s24, 1
      %p63 = scmp.ne.s32.totalorder %s58, %s60
      %p64 = scmp.eq.s32.totalorder %s24, 0
      %p65 = por %p63, %p64
      %p66 = scmp.ne.s32.totalorder %s58, %s60
      %p67 = scmp.eq.s32.totalorder %s29, 1
      %p68 = por %p66, %p67
      %p69 = scmp.ne.s32.totalorder %s60, %s61
      %p70 = scmp.eq.s32.totalorder %s29, 0
      %p71 = por %p69, %p70
      %p72 = scmp.ne.s32.totalorder %s60, %s61
      %p73 = scmp.eq.s32.totalorder %s30, 1
      %p74 = por %p72, %p73
      %p76 = scmp.ne.s32.totalorder %s61, %s75
      %p77 = scmp.eq.s32.totalorder %s30, 0
      %p78 = por %p76, %p77
      %s80 = sadd.s32 %s79, 1
      %p83 = scmp.eq.s32.totalorder %s24, 1
      %p84 = scmp.ne.s32.totalorder %s79, %s81
      %p85 = scmp.eq.s32.totalorder %s24, 0
      %p86 = por %p84, %p85
      %p87 = scmp.ne.s32.totalorder %s79, %s81
      %p88 = scmp.eq.s32.totalorder %s29, 1
      %p89 = por %p87, %p88
      %p90 = scmp.ne.s32.totalorder %s81, %s82
      %p91 = scmp.eq.s32.totalorder %s29, 0
      %p92 = por %p90, %p91
      %p93 = scmp.ne.s32.totalorder %s81, %s82
      %p94 = scmp.eq.s32.totalorder %s30, 1
      %p95 = por %p93, %p94
      %p97 = scmp.ne.s32.totalorder %s82, %s96
      %p98 = scmp.eq.s32.totalorder %s30, 0
      %p99 = por %p97, %p98
      %s101 = sadd.s32 %s100, 1
      %p104 = scmp.eq.s32.totalorder %s24, 1
      %p105 = scmp.ne.s32.totalorder %s100, %s102
      %p106 = scmp.eq.s32.totalorder %s24, 0
      %p107 = por %p105, %p106
      %p108 = scmp.ne.s32.totalorder %s100, %s102
      %p109 = scmp.eq.s32.totalorder %s29, 1
      %p110 = por %p108, %p109
      %p111 = scmp.ne.s32.totalorder %s102, %s103
      %p112 = scmp.eq.s32.totalorder %s29, 0
      %p113 = por %p111, %p112
      %p114 = scmp.ne.s32.totalorder %s102, %s103
      %p115 = scmp.eq.s32.totalorder %s30, 1
      %p116 = por %p114, %p115
      %p118 = scmp.ne.s32.totalorder %s103, %s117
      %p119 = scmp.eq.s32.totalorder %s30, 0
      %p120 = por %p118, %p119
      %s122 = sadd.s32 %s121, 1
      %p125 = scmp.eq.s32.totalorder %s24, 1
      %p126 = scmp.ne.s32.totalorder %s121, %s123
      %p127 = scmp.eq.s32.totalorder %s24, 0
      %p128 = por %p126, %p127
      %p129 = scmp.ne.s32.totalorder %s121, %s123
      %p130 = scmp.eq.s32.totalorder %s29, 1
      %p131 = por %p129, %p130
      %p132 = scmp.ne.s32.totalorder %s123, %s124
      %p133 = scmp.eq.s32.totalorder %s29, 0
      %p134 = por %p132, %p133
      %p135 = scmp.ne.s32.totalorder %s123, %s124
      %p136 = scmp.eq.s32.totalorder %s30, 1
      %p137 = por %p135, %p136
      %p139 = scmp.ne.s32.totalorder %s124, %s138
      %p140 = scmp.eq.s32.totalorder %s30, 0
      %p141 = por %p139, %p140
      %s143 = sadd.s32 %s142, 1
      %p146 = scmp.eq.s32.totalorder %s24, 1
      %p147 = scmp.ne.s32.totalorder %s142, %s144
      %p148 = scmp.eq.s32.totalorder %s24, 0
      %p149 = por %p147, %p148
      %p150 = scmp.ne.s32.totalorder %s142, %s144
      %p151 = scmp.eq.s32.totalorder %s29, 1
      %p152 = por %p150, %p151
      %p153 = scmp.ne.s32.totalorder %s144, %s145
      %p154 = scmp.eq.s32.totalorder %s29, 0
      %p155 = por %p153, %p154
      %p156 = scmp.ne.s32.totalorder %s144, %s145
      %p157 = scmp.eq.s32.totalorder %s30, 1
      %p158 = por %p156, %p157
      %p160 = scmp.ne.s32.totalorder %s145, %s159
      %p161 = scmp.eq.s32.totalorder %s30, 0
      %p162 = por %p160, %p161
      %s164 = sadd.s32 %s163, 1
      %p167 = scmp.eq.s32.totalorder %s24, 1
      %p168 = scmp.ne.s32.totalorder %s163, %s165
      %p169 = scmp.eq.s32.totalorder %s24, 0
      %p170 = por %p168, %p169
      %p171 = scmp.ne.s32.totalorder %s163, %s165
      %p172 = scmp.eq.s32.totalorder %s29, 1
      %p173 = por %p171, %p172
      %p174 = scmp.ne.s32.totalorder %s165, %s166
      %p175 = scmp.eq.s32.totalorder %s29, 0
      %p176 = por %p174, %p175
      %p177 = scmp.ne.s32.totalorder %s165, %s166
      %p178 = scmp.eq.s32.totalorder %s30, 1
      %p179 = por %p177, %p178
      %p181 = scmp.ne.s32.totalorder %s166, %s180
      %p182 = scmp.eq.s32.totalorder %s30, 0
      %p183 = por %p181, %p182
      %s185 = sadd.s32 %s184, 1
      %p188 = scmp.eq.s32.totalorder %s24, 1
      %p189 = scmp.ne.s32.totalorder %s184, %s186
      %p190 = scmp.eq.s32.totalorder %s24, 0
      %p191 = por %p189, %p190
      %p192 = scmp.ne.s32.totalorder %s184, %s186
      %p193 = scmp.eq.s32.totalorder %s29, 1
      %p194 = por %p192, %p193
      %p195 = scmp.ne.s32.totalorder %s186, %s187
      %p196 = scmp.eq.s32.totalorder %s29, 0
      %p197 = por %p195, %p196
      %p198 = scmp.ne.s32.totalorder %s186, %s187
      %p199 = scmp.eq.s32.totalorder %s30, 1
      %p200 = por %p198, %p199
      %p202 = scmp.ne.s32.totalorder %s187, %s201
      %p203 = scmp.eq.s32.totalorder %s30, 0
      %p204 = por %p202, %p203
      %s206 = sadd.s32 %s205, 1
      %p209 = scmp.eq.s32.totalorder %s24, 1
      %p210 = scmp.ne.s32.totalorder %s205, %s207
      %p211 = scmp.eq.s32.totalorder %s24, 0
      %p212 = por %p210, %p211
      %p213 = scmp.ne.s32.totalorder %s205, %s207
      %p214 = scmp.eq.s32.totalorder %s29, 1
      %p215 = por %p213, %p214
      %p216 = scmp.ne.s32.totalorder %s207, %s208
      %p217 = scmp.eq.s32.totalorder %s29, 0
      %p218 = por %p216, %p217
      %p219 = scmp.ne.s32.totalorder %s207, %s208
      %p220 = scmp.eq.s32.totalorder %s30, 1
      %p221 = por %p219, %p220
      %p223 = scmp.ne.s32.totalorder %s208, %s222
      %p224 = scmp.eq.s32.totalorder %s30, 0
      %p225 = por %p223, %p224
      %s227 = sadd.s32 %s226, 1
      %p230 = scmp.eq.s32.totalorder %s24, 1
      %p231 = scmp.ne.s32.totalorder %s226, %s228
      %p232 = scmp.eq.s32.totalorder %s24, 0
      %p233 = por %p231, %p232
      %p234 = scmp.ne.s32.totalorder %s226, %s228
      %p235 = scmp.eq.s32.totalorder %s29, 1
      %p236 = por %p234, %p235
      %p237 = scmp.ne.s32.totalorder %s228, %s229
      %p238 = scmp.eq.s32.totalorder %s29, 0
      %p239 = por %p237, %p238
      %p240 = scmp.ne.s32.totalorder %s228, %s229
      %p241 = scmp.eq.s32.totalorder %s30, 1
      %p242 = por %p240, %p241
      %p244 = scmp.ne.s32.totalorder %s229, %s243
      %p245 = scmp.eq.s32.totalorder %s30, 0
      %p246 = por %p244, %p245
      %s248 = sadd.s32 %s247, 1
      %p251 = scmp.eq.s32.totalorder %s24, 1
      %p252 = scmp.ne.s32.totalorder %s247, %s249
      %p253 = scmp.eq.s32.totalorder %s24, 0
      %p254 = por %p252, %p253
      %p255 = scmp.ne.s32.totalorder %s247, %s249
      %p256 = scmp.eq.s32.totalorder %s29, 1
      %p257 = por %p255, %p256
      %p258 = scmp.ne.s32.totalorder %s249, %s250
      %p259 = scmp.eq.s32.totalorder %s29, 0
      %p260 = por %p258, %p259
      %p261 = scmp.ne.s32.totalorder %s249, %s250
      %p262 = scmp.eq.s32.totalorder %s30, 1
      %p263 = por %p261, %p262
      %p265 = scmp.ne.s32.totalorder %s250, %s264
      %p266 = scmp.eq.s32.totalorder %s30, 0
      %p267 = por %p265, %p266
      %s269 = sadd.s32 %s268, 1
      %p272 = scmp.eq.s32.totalorder %s24, 1
      %p273 = scmp.ne.s32.totalorder %s268, %s270
      %p274 = scmp.eq.s32.totalorder %s24, 0
      %p275 = por %p273, %p274
      %p276 = scmp.ne.s32.totalorder %s268, %s270
      %p277 = scmp.eq.s32.totalorder %s29, 1
      %p278 = por %p276, %p277
      %p279 = scmp.ne.s32.totalorder %s270, %s271
      %p280 = scmp.eq.s32.totalorder %s29, 0
      %p281 = por %p279, %p280
      %p282 = scmp.ne.s32.totalorder %s270, %s271
      %p283 = scmp.eq.s32.totalorder %s30, 1
      %p284 = por %p282, %p283
      %p286 = scmp.ne.s32.totalorder %s271, %s285
      %p287 = scmp.eq.s32.totalorder %s30, 0
      %p288 = por %p286, %p287
      %s290 = sadd.s32 %s289, 1
      %p293 = scmp.eq.s32.totalorder %s24, 1
      %p294 = scmp.ne.s32.totalorder %s289, %s291
      %p295 = scmp.eq.s32.totalorder %s24, 0
      %p296 = por %p294, %p295
      %p297 = scmp.ne.s32.totalorder %s289, %s291
      %p298 = scmp.eq.s32.totalorder %s29, 1
      %p299 = por %p297, %p298
      %p300 = scmp.ne.s32.totalorder %s291, %s292
      %p301 = scmp.eq.s32.totalorder %s29, 0
      %p302 = por %p300, %p301
      %p303 = scmp.ne.s32.totalorder %s291, %s292
      %p304 = scmp.eq.s32.totalorder %s30, 1
      %p305 = por %p303, %p304
      %p307 = scmp.ne.s32.totalorder %s292, %s306
      %p308 = scmp.eq.s32.totalorder %s30, 0
      %p309 = por %p307, %p308
      %s310 = ssub.s32 %s24, %s31
      %p311 = scmp.eq.s32.totalorder %s310, 0
      %s313 = sadd.s32 %s312, 1
      %s314 = scalar_select %p311, %s312, %s313
      %p317 = pneg %p311
      %p318 = scmp.eq.s32.totalorder %s24, 1
      %p319 = por %p317, %p318
      %p320 = scmp.ne.s32.totalorder %s312, %s315
      %p321 = scmp.eq.s32.totalorder %s24, 0
      %p322 = por %p320, %p321
      %p323 = scmp.ne.s32.totalorder %s312, %s315
      %p324 = scmp.eq.s32.totalorder %s29, 1
      %p325 = por %p323, %p324
      %p326 = scmp.ne.s32.totalorder %s315, %s316
      %p327 = scmp.eq.s32.totalorder %s29, 0
      %p328 = por %p326, %p327
      %p329 = scmp.ne.s32.totalorder %s315, %s316
      %p330 = scmp.eq.s32.totalorder %s30, 1
      %p331 = por %p329, %p330
      %p333 = scmp.ne.s32.totalorder %s316, %s332
      %p334 = scmp.eq.s32.totalorder %s30, 0
      %p335 = por %p333, %p334
      %p336 = scmp.le.s32.totalorder 1, %s24
      %p337 = scmp.lt.s32.totalorder %s24, 3
      %p338 = pnand %p336, %p337
      %p339 = pneg %p338
      // Predicated region
      $region9: #{hdtr_conv_block_forward.1} parent=5 // pred_check
        _
      $region10: #{hdtr_conv_block_forward.1} parent=5 // pred_check_branch
        %341 = sbr.rel (%p338) target = $region12
      $region11: #{hdtr_conv_block_forward.1} parent=5 // pred_region
        %s342 = ssub.s32 %s24, 1
        // Predicated region
        $region13: #{hdtr_conv_block_forward.1} parent=11 // pred_check
          %p343 = pneg %p71
        $region14: #{hdtr_conv_block_forward.1} parent=11 // pred_check_branch
          %345 = sbr.rel (%p343) target = $region16
        $region15: #{hdtr_conv_block_forward.1} parent=11 // pred_region
          _
        $region16: #{hdtr_conv_block_forward.1} parent=11 // pred_fallthru
          _
        // Predicated region
        $region17: #{hdtr_conv_block_forward.1} parent=11 // pred_check
          %p346 = pneg %p92
        $region18: #{hdtr_conv_block_forward.1} parent=11 // pred_check_branch
          %348 = sbr.rel (%p346) target = $region20
        $region19: #{hdtr_conv_block_forward.1} parent=11 // pred_region
          %s350 = ssub.s32 9216, 9216
          %351 = vsyncadd [#allocation6], %s350
          %s352 = sshll.u32 [#allocation5], 4
          %s353 = int_to_ptr.vmem [resolvable:$true] %s352
          %358 = dma.hbm_to_vmem [thread:$0]  %s2, 9216, %s353, [#allocation6], 64, 64, 4
        $region20: #{hdtr_conv_block_forward.1} parent=11 // pred_fallthru
          _
        // Predicated region
        $region21: #{hdtr_conv_block_forward.1} parent=11 // pred_check
          %p359 = pneg %p113
        $region22: #{hdtr_conv_block_forward.1} parent=11 // pred_check_branch
          %361 = sbr.rel (%p359) target = $region24
        $region23: #{hdtr_conv_block_forward.1} parent=11 // pred_region
          %s363 = ssub.s32 9216, 9216
          %364 = vsyncadd [#allocation9], %s363
          %s365 = sshll.u32 [#allocation8], 4
          %s366 = int_to_ptr.vmem [resolvable:$true] %s365
          %371 = dma.hbm_to_vmem [thread:$0]  %s3, 9216, %s366, [#allocation9], 64, 64, 4
        $region24: #{hdtr_conv_block_forward.1} parent=11 // pred_fallthru
          _
        // Predicated region
        $region25: #{hdtr_conv_block_forward.1} parent=11 // pred_check
          %p372 = pneg %p134
        $region26: #{hdtr_conv_block_forward.1} parent=11 // pred_check_branch
          %374 = sbr.rel (%p372) target = $region28
        $region27: #{hdtr_conv_block_forward.1} parent=11 // pred_region
          _
        $region28: #{hdtr_conv_block_forward.1} parent=11 // pred_fallthru
          _
        // Predicated region
        $region29: #{hdtr_conv_block_forward.1} parent=11 // pred_check
          %p375 = pneg %p155
        $region30: #{hdtr_conv_block_forward.1} parent=11 // pred_check_branch
          %377 = sbr.rel (%p375) target = $region32
        $region31: #{hdtr_conv_block_forward.1} parent=11 // pred_region
          _
        $region32: #{hdtr_conv_block_forward.1} parent=11 // pred_fallthru
          _
        // Predicated region
        $region33: #{hdtr_conv_block_forward.1} parent=11 // pred_check
          %p378 = pneg %p176
        $region34: #{hdtr_conv_block_forward.1} parent=11 // pred_check_branch
          %380 = sbr.rel (%p378) target = $region36
        $region35: #{hdtr_conv_block_forward.1} parent=11 // pred_region
          _
        $region36: #{hdtr_conv_block_forward.1} parent=11 // pred_fallthru
          _
        // Predicated region
        $region37: #{hdtr_conv_block_forward.1} parent=11 // pred_check
          %p381 = pneg %p197
        $region38: #{hdtr_conv_block_forward.1} parent=11 // pred_check_branch
          %383 = sbr.rel (%p381) target = $region40
        $region39: #{hdtr_conv_block_forward.1} parent=11 // pred_region
          _
        $region40: #{hdtr_conv_block_forward.1} parent=11 // pred_fallthru
          _
        // Predicated region
        $region41: #{hdtr_conv_block_forward.1} parent=11 // pred_check
          %p384 = pneg %p218
        $region42: #{hdtr_conv_block_forward.1} parent=11 // pred_check_branch
          %386 = sbr.rel (%p384) target = $region44
        $region43: #{hdtr_conv_block_forward.1} parent=11 // pred_region
          _
        $region44: #{hdtr_conv_block_forward.1} parent=11 // pred_fallthru
          _
        // Predicated region
        $region45: #{hdtr_conv_block_forward.1} parent=11 // pred_check
          %p387 = pneg %p239
        $region46: #{hdtr_conv_block_forward.1} parent=11 // pred_check_branch
          %389 = sbr.rel (%p387) target = $region48
        $region47: #{hdtr_conv_block_forward.1} parent=11 // pred_region
          _
        $region48: #{hdtr_conv_block_forward.1} parent=11 // pred_fallthru
          _
        // Predicated region
        $region49: #{hdtr_conv_block_forward.1} parent=11 // pred_check
          %p390 = pneg %p260
        $region50: #{hdtr_conv_block_forward.1} parent=11 // pred_check_branch
          %392 = sbr.rel (%p390) target = $region52
        $region51: #{hdtr_conv_block_forward.1} parent=11 // pred_region
          _
        $region52: #{hdtr_conv_block_forward.1} parent=11 // pred_fallthru
          _
        // Predicated region
        $region53: #{hdtr_conv_block_forward.1} parent=11 // pred_check
          %p393 = pneg %p281
        $region54: #{hdtr_conv_block_forward.1} parent=11 // pred_check_branch
          %395 = sbr.rel (%p393) target = $region56
        $region55: #{hdtr_conv_block_forward.1} parent=11 // pred_region
          _
        $region56: #{hdtr_conv_block_forward.1} parent=11 // pred_fallthru
          _
        // Predicated region
        $region57: #{hdtr_conv_block_forward.1} parent=11 // pred_check
          %p396 = pneg %p302
        $region58: #{hdtr_conv_block_forward.1} parent=11 // pred_check_branch
          %398 = sbr.rel (%p396) target = $region60
        $region59: #{hdtr_conv_block_forward.1} parent=11 // pred_region
          _
        $region60: #{hdtr_conv_block_forward.1} parent=11 // pred_fallthru
          _
      $region12: #{hdtr_conv_block_forward.1} parent=5 // pred_fallthru
        _
      %p399 = scmp.lt.s32.totalorder %s24, 2
      // Predicated region
      $region61: #{hdtr_conv_block_forward.1} parent=5 // pred_check
        %p400 = pneg %p399
      $region62: #{hdtr_conv_block_forward.1} parent=5 // pred_check_branch
        %402 = sbr.rel (%p400) target = $region64
      $region63: #{hdtr_conv_block_forward.1} parent=5 // pred_region
        // Predicated region
        $region65: #{hdtr_conv_block_forward.1} parent=63 // pred_check
          %p403 = pneg %p44
        $region66: #{hdtr_conv_block_forward.1} parent=63 // pred_check_branch
          %405 = sbr.rel (%p403) target = $region68
        $region67: #{hdtr_conv_block_forward.1} parent=63 // pred_region
          %p406 = scmp.lt.s32.totalorder %s24, 1
          %s407 = scalar_select %p406, %s24, 1
          %s408 = smul.addr %s407, 32
          %s409 = smul.addr %s408, 8
          %s410 = scalar_lea.vmem %s0, %s409
        $region68: #{hdtr_conv_block_forward.1} parent=63 // pred_fallthru
          _
      $region64: #{hdtr_conv_block_forward.1} parent=5 // pred_fallthru
        _
      %p411 = scmp.le.s32.totalorder 1, %s24
      %p412 = scmp.lt.s32.totalorder %s24, 3
      %p413 = pnand %p411, %p412
      %p414 = pneg %p413
      // Predicated region
      $region69: #{hdtr_conv_block_forward.1} parent=5 // pred_check
        _
      $region70: #{hdtr_conv_block_forward.1} parent=5 // pred_check_branch
        %416 = sbr.rel (%p413) target = $region72
      $region71: #{hdtr_conv_block_forward.1} parent=5 // pred_region
        %s417 = ssub.s32 %s24, 1
        // Predicated region
        $region73: #{hdtr_conv_block_forward.1} parent=71 // pred_check
          %p418 = pneg %p92
        $region74: #{hdtr_conv_block_forward.1} parent=71 // pred_check_branch
          %420 = sbr.rel (%p418) target = $region76
        $region75: #{hdtr_conv_block_forward.1} parent=71 // pred_region
          %421 = dma.done [#allocation6], 9216
        $region76: #{hdtr_conv_block_forward.1} parent=71 // pred_fallthru
          _
        // Predicated region
        $region77: #{hdtr_conv_block_forward.1} parent=71 // pred_check
          %p422 = pneg %p113
        $region78: #{hdtr_conv_block_forward.1} parent=71 // pred_check_branch
          %424 = sbr.rel (%p422) target = $region80
        $region79: #{hdtr_conv_block_forward.1} parent=71 // pred_region
          %425 = dma.done [#allocation9], 9216
        $region80: #{hdtr_conv_block_forward.1} parent=71 // pred_fallthru
          _
        %p426 = scmp.lt.s32.totalorder %s29, 1
        %s427 = scalar_select %p426, %s29, 1
        %s428 = smul.addr %s427, 32
        %s429 = smul.addr %s428, 8
        %s430 = scalar_lea.vmem %s0, %s429
        %p431 = pneg %p50
        %p432 = pneg %p47
        %p433 = pneg %p71
        %p434 = pneg %p68
        %p435 = pneg %p92
        %p436 = pneg %p89
        %p437 = pneg %p113
        %p438 = pneg %p110
        %p439 = pneg %p134
        %p440 = pneg %p131
        %p441 = pneg %p155
        %p442 = pneg %p152
        %p443 = pneg %p176
        %p444 = pneg %p173
        %p445 = pneg %p197
        %p446 = pneg %p194
        %p447 = pneg %p218
        %p448 = pneg %p215
        %p449 = pneg %p239
        %p450 = pneg %p236
        %p451 = pneg %p260
        %p452 = pneg %p257
        %p453 = pneg %p281
        %p454 = pneg %p278
        %p455 = pneg %p302
        %p456 = pneg %p299
        %p457 = pneg %p328
        %p458 = pneg %p325
        %s459 = sand.u32 %s315, 1
        %s460 = scalar_lea.sflag [#allocation7], %s459
        %s461 = sand.u32 %s315, 1
        %s462 = smul.addr %s461, 256
        %s463 = scalar_lea.vmem [#allocation10], %s462
        %p464 = scmp.lt.s32.totalorder %s29, 1
        %s465 = scalar_select %p464, %s29, 1
        %s466 = smul.addr %s465, 32
        %s467 = smul.addr %s466, 8
        %s468 = scalar_lea.vmem %s0, %s467
        %470 = vst [vmem:[#allocation2] sm:$0xff] 0.0
        %471 = vst [vmem:[#allocation2 + $0x8] sm:$0xff] 0.0
        %472 = vst [vmem:[#allocation2 + $0x10] sm:$0xff] 0.0
        %473 = vst [vmem:[#allocation2 + $0x18] sm:$0x1] 0.0
        %474 = vst [vmem:[#allocation2 + $0x20] sm:$0xff] 0.0
        %475 = vst [vmem:[#allocation2 + $0x28] sm:$0xff] 0.0
        %476 = vst [vmem:[#allocation2 + $0x30] sm:$0xff] 0.0
        %477 = vst [vmem:[#allocation2 + $0x38] sm:$0x1] 0.0
        %478 = vst [vmem:[#allocation2 + $0x40] sm:$0xff] 0.0
        %479 = vst [vmem:[#allocation2 + $0x48] sm:$0xff] 0.0
        %480 = vst [vmem:[#allocation2 + $0x50] sm:$0xff] 0.0
        %481 = vst [vmem:[#allocation2 + $0x58] sm:$0x1] 0.0
        %482 = vst [vmem:[#allocation2 + $0x60] sm:$0xff] 0.0
        %483 = vst [vmem:[#allocation2 + $0x68] sm:$0xff] 0.0
        %484 = vst [vmem:[#allocation2 + $0x70] sm:$0xff] 0.0
        %485 = vst [vmem:[#allocation2 + $0x78] sm:$0x1] 0.0
        %486 = vst [vmem:[#allocation2 + $0x80] sm:$0xff] 0.0
        %487 = vst [vmem:[#allocation2 + $0x88] sm:$0xff] 0.0
        %488 = vst [vmem:[#allocation2 + $0x90] sm:$0xff] 0.0
        %489 = vst [vmem:[#allocation2 + $0x98] sm:$0x1] 0.0
        %490 = vst [vmem:[#allocation2 + $0xa0] sm:$0xff] 0.0
        %491 = vst [vmem:[#allocation2 + $0xa8] sm:$0xff] 0.0
        %492 = vst [vmem:[#allocation2 + $0xb0] sm:$0xff] 0.0
        %493 = vst [vmem:[#allocation2 + $0xb8] sm:$0x1] 0.0
        %494 = vst [vmem:[#allocation2 + $0xc0] sm:$0xff] 0.0
        %495 = vst [vmem:[#allocation2 + $0xc8] sm:$0xff] 0.0
        %496 = vst [vmem:[#allocation2 + $0xd0] sm:$0xff] 0.0
        %497 = vst [vmem:[#allocation2 + $0xd8] sm:$0x1] 0.0
        %498 = vst [vmem:[#allocation2 + $0xe0] sm:$0xff] 0.0
        %499 = vst [vmem:[#allocation2 + $0xe8] sm:$0xff] 0.0
        %500 = vst [vmem:[#allocation2 + $0xf0] sm:$0xff] 0.0
        %501 = vst [vmem:[#allocation2 + $0xf8] sm:$0x1] 0.0
        %502 = vst [vmem:[#allocation2 + $0x100] sm:$0xff] 0.0
        %503 = vst [vmem:[#allocation2 + $0x108] sm:$0xff] 0.0
        %504 = vst [vmem:[#allocation2 + $0x110] sm:$0xff] 0.0
        %505 = vst [vmem:[#allocation2 + $0x118] sm:$0x1] 0.0
        %506 = vst [vmem:[#allocation2 + $0x120] sm:$0xff] 0.0
        %507 = vst [vmem:[#allocation2 + $0x128] sm:$0xff] 0.0
        %508 = vst [vmem:[#allocation2 + $0x130] sm:$0xff] 0.0
        %509 = vst [vmem:[#allocation2 + $0x138] sm:$0x1] 0.0
        %510 = vst [vmem:[#allocation2 + $0x140] sm:$0xff] 0.0
        %511 = vst [vmem:[#allocation2 + $0x148] sm:$0xff] 0.0
        %512 = vst [vmem:[#allocation2 + $0x150] sm:$0xff] 0.0
        %513 = vst [vmem:[#allocation2 + $0x158] sm:$0x1] 0.0
        %514 = vst [vmem:[#allocation2 + $0x160] sm:$0xff] 0.0
        %515 = vst [vmem:[#allocation2 + $0x168] sm:$0xff] 0.0
        %516 = vst [vmem:[#allocation2 + $0x170] sm:$0xff] 0.0
        %517 = vst [vmem:[#allocation2 + $0x178] sm:$0x1] 0.0
        %518 = vst [vmem:[#allocation2 + $0x180] sm:$0xff] 0.0
        %519 = vst [vmem:[#allocation2 + $0x188] sm:$0xff] 0.0
        %520 = vst [vmem:[#allocation2 + $0x190] sm:$0xff] 0.0
        %521 = vst [vmem:[#allocation2 + $0x198] sm:$0x1] 0.0
        %522 = vst [vmem:[#allocation2 + $0x1a0] sm:$0xff] 0.0
        %523 = vst [vmem:[#allocation2 + $0x1a8] sm:$0xff] 0.0
        %524 = vst [vmem:[#allocation2 + $0x1b0] sm:$0xff] 0.0
        %525 = vst [vmem:[#allocation2 + $0x1b8] sm:$0x1] 0.0
        %526 = vst [vmem:[#allocation2 + $0x1c0] sm:$0xff] 0.0
        %527 = vst [vmem:[#allocation2 + $0x1c8] sm:$0xff] 0.0
        %528 = vst [vmem:[#allocation2 + $0x1d0] sm:$0xff] 0.0
        %529 = vst [vmem:[#allocation2 + $0x1d8] sm:$0x1] 0.0
        %530 = vst [vmem:[#allocation2 + $0x1e0] sm:$0xff] 0.0
        %531 = vst [vmem:[#allocation2 + $0x1e8] sm:$0xff] 0.0
        %532 = vst [vmem:[#allocation2 + $0x1f0] sm:$0xff] 0.0
        %533 = vst [vmem:[#allocation2 + $0x1f8] sm:$0x1] 0.0
        %534 = vst [vmem:[#allocation2 + $0x200] sm:$0xff] 0.0
        %535 = vst [vmem:[#allocation2 + $0x208] sm:$0xff] 0.0
        %536 = vst [vmem:[#allocation2 + $0x210] sm:$0xff] 0.0
        %537 = vst [vmem:[#allocation2 + $0x218] sm:$0x1] 0.0
        %538 = vst [vmem:[#allocation2 + $0x220] sm:$0xff] 0.0
        %539 = vst [vmem:[#allocation2 + $0x228] sm:$0xff] 0.0
        %540 = vst [vmem:[#allocation2 + $0x230] sm:$0xff] 0.0
        %541 = vst [vmem:[#allocation2 + $0x238] sm:$0x1] 0.0
        %542 = vst [vmem:[#allocation3] sm:$0xff] 0.0
        %543 = vst [vmem:[#allocation3 + $0x8] sm:$0xff] 0.0
        %544 = vst [vmem:[#allocation3 + $0x10] sm:$0xff] 0.0
        %545 = vst [vmem:[#allocation3 + $0x18] sm:$0x1] 0.0
        %546 = vst [vmem:[#allocation3 + $0x20] sm:$0xff] 0.0
        %547 = vst [vmem:[#allocation3 + $0x28] sm:$0xff] 0.0
        %548 = vst [vmem:[#allocation3 + $0x30] sm:$0xff] 0.0
        %549 = vst [vmem:[#allocation3 + $0x38] sm:$0x1] 0.0
        %550 = vst [vmem:[#allocation3 + $0x40] sm:$0xff] 0.0
        %551 = vst [vmem:[#allocation3 + $0x48] sm:$0xff] 0.0
        %552 = vst [vmem:[#allocation3 + $0x50] sm:$0xff] 0.0
        %553 = vst [vmem:[#allocation3 + $0x58] sm:$0x1] 0.0
        %554 = vst [vmem:[#allocation3 + $0x60] sm:$0xff] 0.0
        %555 = vst [vmem:[#allocation3 + $0x68] sm:$0xff] 0.0
        %556 = vst [vmem:[#allocation3 + $0x70] sm:$0xff] 0.0
        %557 = vst [vmem:[#allocation3 + $0x78] sm:$0x1] 0.0
        %558 = vst [vmem:[#allocation3 + $0x80] sm:$0xff] 0.0
        %559 = vst [vmem:[#allocation3 + $0x88] sm:$0xff] 0.0
        %560 = vst [vmem:[#allocation3 + $0x90] sm:$0xff] 0.0
        %561 = vst [vmem:[#allocation3 + $0x98] sm:$0x1] 0.0
        %562 = vst [vmem:[#allocation3 + $0xa0] sm:$0xff] 0.0
        %563 = vst [vmem:[#allocation3 + $0xa8] sm:$0xff] 0.0
        %564 = vst [vmem:[#allocation3 + $0xb0] sm:$0xff] 0.0
        %565 = vst [vmem:[#allocation3 + $0xb8] sm:$0x1] 0.0
        %566 = vst [vmem:[#allocation3 + $0xc0] sm:$0xff] 0.0
        %567 = vst [vmem:[#allocation3 + $0xc8] sm:$0xff] 0.0
        %568 = vst [vmem:[#allocation3 + $0xd0] sm:$0xff] 0.0
        %569 = vst [vmem:[#allocation3 + $0xd8] sm:$0x1] 0.0
        %570 = vst [vmem:[#allocation3 + $0xe0] sm:$0xff] 0.0
        %571 = vst [vmem:[#allocation3 + $0xe8] sm:$0xff] 0.0
        %572 = vst [vmem:[#allocation3 + $0xf0] sm:$0xff] 0.0
        %573 = vst [vmem:[#allocation3 + $0xf8] sm:$0x1] 0.0
        %574 = vst [vmem:[#allocation3 + $0x100] sm:$0xff] 0.0
        %575 = vst [vmem:[#allocation3 + $0x108] sm:$0xff] 0.0
        %576 = vst [vmem:[#allocation3 + $0x110] sm:$0xff] 0.0
        %577 = vst [vmem:[#allocation3 + $0x118] sm:$0x1] 0.0
        %578 = vst [vmem:[#allocation3 + $0x120] sm:$0xff] 0.0
        %579 = vst [vmem:[#allocation3 + $0x128] sm:$0xff] 0.0
        %580 = vst [vmem:[#allocation3 + $0x130] sm:$0xff] 0.0
        %581 = vst [vmem:[#allocation3 + $0x138] sm:$0x1] 0.0
        %582 = vst [vmem:[#allocation3 + $0x140] sm:$0xff] 0.0
        %583 = vst [vmem:[#allocation3 + $0x148] sm:$0xff] 0.0
        %584 = vst [vmem:[#allocation3 + $0x150] sm:$0xff] 0.0
        %585 = vst [vmem:[#allocation3 + $0x158] sm:$0x1] 0.0
        %586 = vst [vmem:[#allocation3 + $0x160] sm:$0xff] 0.0
        %587 = vst [vmem:[#allocation3 + $0x168] sm:$0xff] 0.0
        %588 = vst [vmem:[#allocation3 + $0x170] sm:$0xff] 0.0
        %589 = vst [vmem:[#allocation3 + $0x178] sm:$0x1] 0.0
        %590 = vst [vmem:[#allocation3 + $0x180] sm:$0xff] 0.0
        %591 = vst [vmem:[#allocation3 + $0x188] sm:$0xff] 0.0
        %592 = vst [vmem:[#allocation3 + $0x190] sm:$0xff] 0.0
        %593 = vst [vmem:[#allocation3 + $0x198] sm:$0x1] 0.0
        %594 = vst [vmem:[#allocation3 + $0x1a0] sm:$0xff] 0.0
        %595 = vst [vmem:[#allocation3 + $0x1a8] sm:$0xff] 0.0
        %596 = vst [vmem:[#allocation3 + $0x1b0] sm:$0xff] 0.0
        %597 = vst [vmem:[#allocation3 + $0x1b8] sm:$0x1] 0.0
        %598 = vst [vmem:[#allocation3 + $0x1c0] sm:$0xff] 0.0
        %599 = vst [vmem:[#allocation3 + $0x1c8] sm:$0xff] 0.0
        %600 = vst [vmem:[#allocation3 + $0x1d0] sm:$0xff] 0.0
        %601 = vst [vmem:[#allocation3 + $0x1d8] sm:$0x1] 0.0
        %602 = vst [vmem:[#allocation3 + $0x1e0] sm:$0xff] 0.0
        %603 = vst [vmem:[#allocation3 + $0x1e8] sm:$0xff] 0.0
        %604 = vst [vmem:[#allocation3 + $0x1f0] sm:$0xff] 0.0
        %605 = vst [vmem:[#allocation3 + $0x1f8] sm:$0x1] 0.0
        %606 = vst [vmem:[#allocation3 + $0x200] sm:$0xff] 0.0
        %607 = vst [vmem:[#allocation3 + $0x208] sm:$0xff] 0.0
        %608 = vst [vmem:[#allocation3 + $0x210] sm:$0xff] 0.0
        %609 = vst [vmem:[#allocation3 + $0x218] sm:$0x1] 0.0
        %610 = vst [vmem:[#allocation3 + $0x220] sm:$0xff] 0.0
        %611 = vst [vmem:[#allocation3 + $0x228] sm:$0xff] 0.0
        %612 = vst [vmem:[#allocation3 + $0x230] sm:$0xff] 0.0
        %613 = vst [vmem:[#allocation3 + $0x238] sm:$0x1] 0.0
        %614 = vst [vmem:[#allocation4] sm:$0xff] 0.0
        %615 = vst [vmem:[#allocation4 + $0x8] sm:$0xff] 0.0
        %616 = vst [vmem:[#allocation4 + $0x10] sm:$0xff] 0.0
        %617 = vst [vmem:[#allocation4 + $0x18] sm:$0x1] 0.0
        %618 = vst [vmem:[#allocation4 + $0x20] sm:$0xff] 0.0
        %619 = vst [vmem:[#allocation4 + $0x28] sm:$0xff] 0.0
        %620 = vst [vmem:[#allocation4 + $0x30] sm:$0xff] 0.0
        %621 = vst [vmem:[#allocation4 + $0x38] sm:$0x1] 0.0
        %622 = vst [vmem:[#allocation4 + $0x40] sm:$0xff] 0.0
        %623 = vst [vmem:[#allocation4 + $0x48] sm:$0xff] 0.0
        %624 = vst [vmem:[#allocation4 + $0x50] sm:$0xff] 0.0
        %625 = vst [vmem:[#allocation4 + $0x58] sm:$0x1] 0.0
        %626 = vst [vmem:[#allocation4 + $0x60] sm:$0xff] 0.0
        %627 = vst [vmem:[#allocation4 + $0x68] sm:$0xff] 0.0
        %628 = vst [vmem:[#allocation4 + $0x70] sm:$0xff] 0.0
        %629 = vst [vmem:[#allocation4 + $0x78] sm:$0x1] 0.0
        %630 = vst [vmem:[#allocation4 + $0x80] sm:$0xff] 0.0
        %631 = vst [vmem:[#allocation4 + $0x88] sm:$0xff] 0.0
        %632 = vst [vmem:[#allocation4 + $0x90] sm:$0xff] 0.0
        %633 = vst [vmem:[#allocation4 + $0x98] sm:$0x1] 0.0
        %634 = vst [vmem:[#allocation4 + $0xa0] sm:$0xff] 0.0
        %635 = vst [vmem:[#allocation4 + $0xa8] sm:$0xff] 0.0
        %636 = vst [vmem:[#allocation4 + $0xb0] sm:$0xff] 0.0
        %637 = vst [vmem:[#allocation4 + $0xb8] sm:$0x1] 0.0
        %638 = vst [vmem:[#allocation4 + $0xc0] sm:$0xff] 0.0
        %639 = vst [vmem:[#allocation4 + $0xc8] sm:$0xff] 0.0
        %640 = vst [vmem:[#allocation4 + $0xd0] sm:$0xff] 0.0
        %641 = vst [vmem:[#allocation4 + $0xd8] sm:$0x1] 0.0
        %642 = vst [vmem:[#allocation4 + $0xe0] sm:$0xff] 0.0
        %643 = vst [vmem:[#allocation4 + $0xe8] sm:$0xff] 0.0
        %644 = vst [vmem:[#allocation4 + $0xf0] sm:$0xff] 0.0
        %645 = vst [vmem:[#allocation4 + $0xf8] sm:$0x1] 0.0
        %646 = vst [vmem:[#allocation4 + $0x100] sm:$0xff] 0.0
        %647 = vst [vmem:[#allocation4 + $0x108] sm:$0xff] 0.0
        %648 = vst [vmem:[#allocation4 + $0x110] sm:$0xff] 0.0
        %649 = vst [vmem:[#allocation4 + $0x118] sm:$0x1] 0.0
        %650 = vst [vmem:[#allocation4 + $0x120] sm:$0xff] 0.0
        %651 = vst [vmem:[#allocation4 + $0x128] sm:$0xff] 0.0
        %652 = vst [vmem:[#allocation4 + $0x130] sm:$0xff] 0.0
        %653 = vst [vmem:[#allocation4 + $0x138] sm:$0x1] 0.0
        %654 = vst [vmem:[#allocation4 + $0x140] sm:$0xff] 0.0
        %655 = vst [vmem:[#allocation4 + $0x148] sm:$0xff] 0.0
        %656 = vst [vmem:[#allocation4 + $0x150] sm:$0xff] 0.0
        %657 = vst [vmem:[#allocation4 + $0x158] sm:$0x1] 0.0
        %658 = vst [vmem:[#allocation4 + $0x160] sm:$0xff] 0.0
        %659 = vst [vmem:[#allocation4 + $0x168] sm:$0xff] 0.0
        %660 = vst [vmem:[#allocation4 + $0x170] sm:$0xff] 0.0
        %661 = vst [vmem:[#allocation4 + $0x178] sm:$0x1] 0.0
        %662 = vst [vmem:[#allocation4 + $0x180] sm:$0xff] 0.0
        %663 = vst [vmem:[#allocation4 + $0x188] sm:$0xff] 0.0
        %664 = vst [vmem:[#allocation4 + $0x190] sm:$0xff] 0.0
        %665 = vst [vmem:[#allocation4 + $0x198] sm:$0x1] 0.0
        %666 = vst [vmem:[#allocation4 + $0x1a0] sm:$0xff] 0.0
        %667 = vst [vmem:[#allocation4 + $0x1a8] sm:$0xff] 0.0
        %668 = vst [vmem:[#allocation4 + $0x1b0] sm:$0xff] 0.0
        %669 = vst [vmem:[#allocation4 + $0x1b8] sm:$0x1] 0.0
        %670 = vst [vmem:[#allocation4 + $0x1c0] sm:$0xff] 0.0
        %671 = vst [vmem:[#allocation4 + $0x1c8] sm:$0xff] 0.0
        %672 = vst [vmem:[#allocation4 + $0x1d0] sm:$0xff] 0.0
        %673 = vst [vmem:[#allocation4 + $0x1d8] sm:$0x1] 0.0
        %674 = vst [vmem:[#allocation4 + $0x1e0] sm:$0xff] 0.0
        %675 = vst [vmem:[#allocation4 + $0x1e8] sm:$0xff] 0.0
        %676 = vst [vmem:[#allocation4 + $0x1f0] sm:$0xff] 0.0
        %677 = vst [vmem:[#allocation4 + $0x1f8] sm:$0x1] 0.0
        %678 = vst [vmem:[#allocation4 + $0x200] sm:$0xff] 0.0
        %679 = vst [vmem:[#allocation4 + $0x208] sm:$0xff] 0.0
        %680 = vst [vmem:[#allocation4 + $0x210] sm:$0xff] 0.0
        %681 = vst [vmem:[#allocation4 + $0x218] sm:$0x1] 0.0
        %682 = vst [vmem:[#allocation4 + $0x220] sm:$0xff] 0.0
        %683 = vst [vmem:[#allocation4 + $0x228] sm:$0xff] 0.0
        %684 = vst [vmem:[#allocation4 + $0x230] sm:$0xff] 0.0
        %685 = vst [vmem:[#allocation4 + $0x238] sm:$0x1] 0.0
        %v686 = vld [vmem:[%s468] sm:$0xff]
        %v687 = vld [vmem:[%s468 + $0x8] sm:$0xff]
        %v688 = vld [vmem:[%s468 + $0x10] sm:$0xff]
        %v689 = vld [vmem:[%s468 + $0x18] sm:$0xff]
        %v690 = vld [vmem:[%s468 + $0x20] sm:$0xff]
        %v691 = vld [vmem:[%s468 + $0x28] sm:$0xff]
        %v692 = vld [vmem:[%s468 + $0x30] sm:$0xff]
        %v693 = vld [vmem:[%s468 + $0x38] sm:$0xff]
        %v694 = vld [vmem:[%s468 + $0x40] sm:$0xff]
        %v695 = vld [vmem:[%s468 + $0x48] sm:$0xff]
        %v696 = vld [vmem:[%s468 + $0x50] sm:$0xff]
        %v697 = vld [vmem:[%s468 + $0x58] sm:$0xff]
        %v698 = vld [vmem:[%s468 + $0x60] sm:$0xff]
        %v699 = vld [vmem:[%s468 + $0x68] sm:$0xff]
        %v700 = vld [vmem:[%s468 + $0x70] sm:$0xff]
        %v701 = vld [vmem:[%s468 + $0x78] sm:$0xff]
        %v702 = vld [vmem:[%s468 + $0x80] sm:$0xff]
        %v703 = vld [vmem:[%s468 + $0x88] sm:$0xff]
        %v704 = vld [vmem:[%s468 + $0x90] sm:$0xff]
        %v705 = vld [vmem:[%s468 + $0x98] sm:$0xff]
        %v706 = vld [vmem:[%s468 + $0xa0] sm:$0xff]
        %v707 = vld [vmem:[%s468 + $0xa8] sm:$0xff]
        %v708 = vld [vmem:[%s468 + $0xb0] sm:$0xff]
        %v709 = vld [vmem:[%s468 + $0xb8] sm:$0xff]
        %v710 = vld [vmem:[%s468 + $0xc0] sm:$0xff]
        %v711 = vld [vmem:[%s468 + $0xc8] sm:$0xff]
        %v712 = vld [vmem:[%s468 + $0xd0] sm:$0xff]
        %v713 = vld [vmem:[%s468 + $0xd8] sm:$0xff]
        %v714 = vld [vmem:[%s468 + $0xe0] sm:$0xff]
        %v715 = vld [vmem:[%s468 + $0xe8] sm:$0xff]
        %v716 = vld [vmem:[%s468 + $0xf0] sm:$0xff]
        %v717 = vld [vmem:[%s468 + $0xf8] sm:$0xff]
        %v718 = vld [vmem:[%s4] sm:$0x1]
        %v720 = vlaneseq
        %v721 = vshrl.u32 %v720, 7
        %v722 = vsub.s32 0, %v721
        %v723 = vrot.slane %v718, %v722
        %v725 = vmul.f32 %v686, %v723
        %v726 = vmul.f32 %v687, %v723
        %v727 = vmul.f32 %v688, %v723
        %v728 = vmul.f32 %v689, %v723
        %v729 = vmul.f32 %v690, %v723
        %v730 = vmul.f32 %v691, %v723
        %v731 = vmul.f32 %v692, %v723
        %v732 = vmul.f32 %v693, %v723
        %v733 = vmul.f32 %v694, %v723
        %v734 = vmul.f32 %v695, %v723
        %v735 = vmul.f32 %v696, %v723
        %v736 = vmul.f32 %v697, %v723
        %v737 = vmul.f32 %v698, %v723
        %v738 = vmul.f32 %v699, %v723
        %v739 = vmul.f32 %v700, %v723
        %v740 = vmul.f32 %v701, %v723
        %v741 = vmul.f32 %v702, %v723
        %v742 = vmul.f32 %v703, %v723
        %v743 = vmul.f32 %v704, %v723
        %v744 = vmul.f32 %v705, %v723
        %v745 = vmul.f32 %v706, %v723
        %v746 = vmul.f32 %v707, %v723
        %v747 = vmul.f32 %v708, %v723
        %v748 = vmul.f32 %v709, %v723
        %v749 = vmul.f32 %v710, %v723
        %v750 = vmul.f32 %v711, %v723
        %v751 = vmul.f32 %v712, %v723
        %v752 = vmul.f32 %v713, %v723
        %v753 = vmul.f32 %v714, %v723
        %v754 = vmul.f32 %v715, %v723
        %v755 = vmul.f32 %v716, %v723
        %v756 = vmul.f32 %v717, %v723
        %v757 = vld [vmem:[%s5] sm:$0x1]
        %v759 = vlaneseq
        %v760 = vshrl.u32 %v759, 7
        %v761 = vsub.s32 0, %v760
        %v762 = vrot.slane %v757, %v761
        %v764 = vadd.f32 %v725, %v762
        %v765 = vadd.f32 %v726, %v762
        %v766 = vadd.f32 %v727, %v762
        %v767 = vadd.f32 %v728, %v762
        %v768 = vadd.f32 %v729, %v762
        %v769 = vadd.f32 %v730, %v762
        %v770 = vadd.f32 %v731, %v762
        %v771 = vadd.f32 %v732, %v762
        %v772 = vadd.f32 %v733, %v762
        %v773 = vadd.f32 %v734, %v762
        %v774 = vadd.f32 %v735, %v762
        %v775 = vadd.f32 %v736, %v762
        %v776 = vadd.f32 %v737, %v762
        %v777 = vadd.f32 %v738, %v762
        %v778 = vadd.f32 %v739, %v762
        %v779 = vadd.f32 %v740, %v762
        %v780 = vadd.f32 %v741, %v762
        %v781 = vadd.f32 %v742, %v762
        %v782 = vadd.f32 %v743, %v762
        %v783 = vadd.f32 %v744, %v762
        %v784 = vadd.f32 %v745, %v762
        %v785 = vadd.f32 %v746, %v762
        %v786 = vadd.f32 %v747, %v762
        %v787 = vadd.f32 %v748, %v762
        %v788 = vadd.f32 %v749, %v762
        %v789 = vadd.f32 %v750, %v762
        %v790 = vadd.f32 %v751, %v762
        %v791 = vadd.f32 %v752, %v762
        %v792 = vadd.f32 %v753, %v762
        %v793 = vadd.f32 %v754, %v762
        %v794 = vadd.f32 %v755, %v762
        %v795 = vadd.f32 %v756, %v762
        %v796 = vmax.f32 %v764, 0.0
        %v797 = vmax.f32 %v765, 0.0
        %v798 = vmax.f32 %v766, 0.0
        %v799 = vmax.f32 %v767, 0.0
        %v800 = vmax.f32 %v768, 0.0
        %v801 = vmax.f32 %v769, 0.0
        %v802 = vmax.f32 %v770, 0.0
        %v803 = vmax.f32 %v771, 0.0
        %v804 = vmax.f32 %v772, 0.0
        %v805 = vmax.f32 %v773, 0.0
        %v806 = vmax.f32 %v774, 0.0
        %v807 = vmax.f32 %v775, 0.0
        %v808 = vmax.f32 %v776, 0.0
        %v809 = vmax.f32 %v777, 0.0
        %v810 = vmax.f32 %v778, 0.0
        %v811 = vmax.f32 %v779, 0.0
        %v812 = vmax.f32 %v780, 0.0
        %v813 = vmax.f32 %v781, 0.0
        %v814 = vmax.f32 %v782, 0.0
        %v815 = vmax.f32 %v783, 0.0
        %v816 = vmax.f32 %v784, 0.0
        %v817 = vmax.f32 %v785, 0.0
        %v818 = vmax.f32 %v786, 0.0
        %v819 = vmax.f32 %v787, 0.0
        %v820 = vmax.f32 %v788, 0.0
        %v821 = vmax.f32 %v789, 0.0
        %v822 = vmax.f32 %v790, 0.0
        %v823 = vmax.f32 %v791, 0.0
        %v824 = vmax.f32 %v792, 0.0
        %v825 = vmax.f32 %v793, 0.0
        %v826 = vmax.f32 %v794, 0.0
        %v827 = vmax.f32 %v795, 0.0
        %s828 = scalar_lea.vmem [#allocation2], 32
        %829 = vst [vmem:[%s828 + $0x8] sm:$0xff] %v796
        %830 = vst [vmem:[%s828 + $0x10] sm:$0xff] %v797
        %831 = vst [vmem:[%s828 + $0x28] sm:$0xff] %v798
        %832 = vst [vmem:[%s828 + $0x30] sm:$0xff] %v799
        %833 = vst [vmem:[%s828 + $0x48] sm:$0xff] %v800
        %834 = vst [vmem:[%s828 + $0x50] sm:$0xff] %v801
        %835 = vst [vmem:[%s828 + $0x68] sm:$0xff] %v802
        %836 = vst [vmem:[%s828 + $0x70] sm:$0xff] %v803
        %837 = vst [vmem:[%s828 + $0x88] sm:$0xff] %v804
        %838 = vst [vmem:[%s828 + $0x90] sm:$0xff] %v805
        %839 = vst [vmem:[%s828 + $0xa8] sm:$0xff] %v806
        %840 = vst [vmem:[%s828 + $0xb0] sm:$0xff] %v807
        %841 = vst [vmem:[%s828 + $0xc8] sm:$0xff] %v808
        %842 = vst [vmem:[%s828 + $0xd0] sm:$0xff] %v809
        %843 = vst [vmem:[%s828 + $0xe8] sm:$0xff] %v810
        %844 = vst [vmem:[%s828 + $0xf0] sm:$0xff] %v811
        %845 = vst [vmem:[%s828 + $0x108] sm:$0xff] %v812
        %846 = vst [vmem:[%s828 + $0x110] sm:$0xff] %v813
        %847 = vst [vmem:[%s828 + $0x128] sm:$0xff] %v814
        %848 = vst [vmem:[%s828 + $0x130] sm:$0xff] %v815
        %849 = vst [vmem:[%s828 + $0x148] sm:$0xff] %v816
        %850 = vst [vmem:[%s828 + $0x150] sm:$0xff] %v817
        %851 = vst [vmem:[%s828 + $0x168] sm:$0xff] %v818
        %852 = vst [vmem:[%s828 + $0x170] sm:$0xff] %v819
        %853 = vst [vmem:[%s828 + $0x188] sm:$0xff] %v820
        %854 = vst [vmem:[%s828 + $0x190] sm:$0xff] %v821
        %855 = vst [vmem:[%s828 + $0x1a8] sm:$0xff] %v822
        %856 = vst [vmem:[%s828 + $0x1b0] sm:$0xff] %v823
        %857 = vst [vmem:[%s828 + $0x1c8] sm:$0xff] %v824
        %858 = vst [vmem:[%s828 + $0x1d0] sm:$0xff] %v825
        %859 = vst [vmem:[%s828 + $0x1e8] sm:$0xff] %v826
        %860 = vst [vmem:[%s828 + $0x1f0] sm:$0xff] %v827
        %v861 = vld [vmem:[#allocation2 + $0x7] sm:$0xff]
        %v862 = vld [vmem:[#allocation2 + $0xf] sm:$0xff]
        %v863 = vld [vmem:[#allocation2 + $0x27] sm:$0xff]
        %v864 = vld [vmem:[#allocation2 + $0x2f] sm:$0xff]
        %v865 = vld [vmem:[#allocation2 + $0x47] sm:$0xff]
        %v866 = vld [vmem:[#allocation2 + $0x4f] sm:$0xff]
        %v867 = vld [vmem:[#allocation2 + $0x67] sm:$0xff]
        %v868 = vld [vmem:[#allocation2 + $0x6f] sm:$0xff]
        %v869 = vld [vmem:[#allocation2 + $0x87] sm:$0xff]
        %v870 = vld [vmem:[#allocation2 + $0x8f] sm:$0xff]
        %v871 = vld [vmem:[#allocation2 + $0xa7] sm:$0xff]
        %v872 = vld [vmem:[#allocation2 + $0xaf] sm:$0xff]
        %v873 = vld [vmem:[#allocation2 + $0xc7] sm:$0xff]
        %v874 = vld [vmem:[#allocation2 + $0xcf] sm:$0xff]
        %v875 = vld [vmem:[#allocation2 + $0xe7] sm:$0xff]
        %v876 = vld [vmem:[#allocation2 + $0xef] sm:$0xff]
        %v877 = vld [vmem:[#allocation2 + $0x107] sm:$0xff]
        %v878 = vld [vmem:[#allocation2 + $0x10f] sm:$0xff]
        %v879 = vld [vmem:[#allocation2 + $0x127] sm:$0xff]
        %v880 = vld [vmem:[#allocation2 + $0x12f] sm:$0xff]
        %v881 = vld [vmem:[#allocation2 + $0x147] sm:$0xff]
        %v882 = vld [vmem:[#allocation2 + $0x14f] sm:$0xff]
        %v883 = vld [vmem:[#allocation2 + $0x167] sm:$0xff]
        %v884 = vld [vmem:[#allocation2 + $0x16f] sm:$0xff]
        %v885 = vld [vmem:[#allocation2 + $0x187] sm:$0xff]
        %v886 = vld [vmem:[#allocation2 + $0x18f] sm:$0xff]
        %v887 = vld [vmem:[#allocation2 + $0x1a7] sm:$0xff]
        %v888 = vld [vmem:[#allocation2 + $0x1af] sm:$0xff]
        %v889 = vld [vmem:[#allocation2 + $0x1c7] sm:$0xff]
        %v890 = vld [vmem:[#allocation2 + $0x1cf] sm:$0xff]
        %v891 = vld [vmem:[#allocation2 + $0x1e7] sm:$0xff]
        %v892 = vld [vmem:[#allocation2 + $0x1ef] sm:$0xff]
        %v893 = vld [vmem:[#allocation2 + $0x207] sm:$0xff]
        %v894 = vld [vmem:[#allocation2 + $0x20f] sm:$0xff]
        %v895 = vld [vmem:[#allocation2 + $0x227] sm:$0xff]
        %v896 = vld [vmem:[#allocation2 + $0x22f] sm:$0xff]
        %v897 = vpack.c.bf16 %v862, %v861
        %v898 = vpack.c.bf16 %v864, %v863
        %v899 = vpack.c.bf16 %v866, %v865
        %v900 = vpack.c.bf16 %v868, %v867
        %v901 = vpack.c.bf16 %v870, %v869
        %v902 = vpack.c.bf16 %v872, %v871
        %v903 = vpack.c.bf16 %v874, %v873
        %v904 = vpack.c.bf16 %v876, %v875
        %v905 = vpack.c.bf16 %v878, %v877
        %v906 = vpack.c.bf16 %v880, %v879
        %v907 = vpack.c.bf16 %v882, %v881
        %v908 = vpack.c.bf16 %v884, %v883
        %v909 = vpack.c.bf16 %v886, %v885
        %v910 = vpack.c.bf16 %v888, %v887
        %v911 = vpack.c.bf16 %v890, %v889
        %v912 = vpack.c.bf16 %v892, %v891
        %v913 = vpack.c.bf16 %v894, %v893
        %v914 = vpack.c.bf16 %v896, %v895
        %v915 = vld [vmem:[#allocation2 + $0x8] sm:$0xff]
        %v916 = vld [vmem:[#allocation2 + $0x10] sm:$0xff]
        %v917 = vld [vmem:[#allocation2 + $0x28] sm:$0xff]
        %v918 = vld [vmem:[#allocation2 + $0x30] sm:$0xff]
        %v919 = vld [vmem:[#allocation2 + $0x48] sm:$0xff]
        %v920 = vld [vmem:[#allocation2 + $0x50] sm:$0xff]
        %v921 = vld [vmem:[#allocation2 + $0x68] sm:$0xff]
        %v922 = vld [vmem:[#allocation2 + $0x70] sm:$0xff]
        %v923 = vld [vmem:[#allocation2 + $0x88] sm:$0xff]
        %v924 = vld [vmem:[#allocation2 + $0x90] sm:$0xff]
        %v925 = vld [vmem:[#allocation2 + $0xa8] sm:$0xff]
        %v926 = vld [vmem:[#allocation2 + $0xb0] sm:$0xff]
        %v927 = vld [vmem:[#allocation2 + $0xc8] sm:$0xff]
        %v928 = vld [vmem:[#allocation2 + $0xd0] sm:$0xff]
        %v929 = vld [vmem:[#allocation2 + $0xe8] sm:$0xff]
        %v930 = vld [vmem:[#allocation2 + $0xf0] sm:$0xff]
        %v931 = vld [vmem:[#allocation2 + $0x108] sm:$0xff]
        %v932 = vld [vmem:[#allocation2 + $0x110] sm:$0xff]
        %v933 = vld [vmem:[#allocation2 + $0x128] sm:$0xff]
        %v934 = vld [vmem:[#allocation2 + $0x130] sm:$0xff]
        %v935 = vld [vmem:[#allocation2 + $0x148] sm:$0xff]
        %v936 = vld [vmem:[#allocation2 + $0x150] sm:$0xff]
        %v937 = vld [vmem:[#allocation2 + $0x168] sm:$0xff]
        %v938 = vld [vmem:[#allocation2 + $0x170] sm:$0xff]
        %v939 = vld [vmem:[#allocation2 + $0x188] sm:$0xff]
        %v940 = vld [vmem:[#allocation2 + $0x190] sm:$0xff]
        %v941 = vld [vmem:[#allocation2 + $0x1a8] sm:$0xff]
        %v942 = vld [vmem:[#allocation2 + $0x1b0] sm:$0xff]
        %v943 = vld [vmem:[#allocation2 + $0x1c8] sm:$0xff]
        %v944 = vld [vmem:[#allocation2 + $0x1d0] sm:$0xff]
        %v945 = vld [vmem:[#allocation2 + $0x1e8] sm:$0xff]
        %v946 = vld [vmem:[#allocation2 + $0x1f0] sm:$0xff]
        %v947 = vld [vmem:[#allocation2 + $0x208] sm:$0xff]
        %v948 = vld [vmem:[#allocation2 + $0x210] sm:$0xff]
        %v949 = vld [vmem:[#allocation2 + $0x228] sm:$0xff]
        %v950 = vld [vmem:[#allocation2 + $0x230] sm:$0xff]
        %v951 = vpack.c.bf16 %v916, %v915
        %v952 = vpack.c.bf16 %v918, %v917
        %v953 = vpack.c.bf16 %v920, %v919
        %v954 = vpack.c.bf16 %v922, %v921
        %v955 = vpack.c.bf16 %v924, %v923
        %v956 = vpack.c.bf16 %v926, %v925
        %v957 = vpack.c.bf16 %v928, %v927
        %v958 = vpack.c.bf16 %v930, %v929
        %v959 = vpack.c.bf16 %v932, %v931
        %v960 = vpack.c.bf16 %v934, %v933
        %v961 = vpack.c.bf16 %v936, %v935
        %v962 = vpack.c.bf16 %v938, %v937
        %v963 = vpack.c.bf16 %v940, %v939
        %v964 = vpack.c.bf16 %v942, %v941
        %v965 = vpack.c.bf16 %v944, %v943
        %v966 = vpack.c.bf16 %v946, %v945
        %v967 = vpack.c.bf16 %v948, %v947
        %v968 = vpack.c.bf16 %v950, %v949
        %v969 = vld [vmem:[#allocation2 + $0x9] sm:$0xff]
        %v970 = vld [vmem:[#allocation2 + $0x11] sm:$0xff]
        %v971 = vld [vmem:[#allocation2 + $0x29] sm:$0xff]
        %v972 = vld [vmem:[#allocation2 + $0x31] sm:$0xff]
        %v973 = vld [vmem:[#allocation2 + $0x49] sm:$0xff]
        %v974 = vld [vmem:[#allocation2 + $0x51] sm:$0xff]
        %v975 = vld [vmem:[#allocation2 + $0x69] sm:$0xff]
        %v976 = vld [vmem:[#allocation2 + $0x71] sm:$0xff]
        %v977 = vld [vmem:[#allocation2 + $0x89] sm:$0xff]
        %v978 = vld [vmem:[#allocation2 + $0x91] sm:$0xff]
        %v979 = vld [vmem:[#allocation2 + $0xa9] sm:$0xff]
        %v980 = vld [vmem:[#allocation2 + $0xb1] sm:$0xff]
        %v981 = vld [vmem:[#allocation2 + $0xc9] sm:$0xff]
        %v982 = vld [vmem:[#allocation2 + $0xd1] sm:$0xff]
        %v983 = vld [vmem:[#allocation2 + $0xe9] sm:$0xff]
        %v984 = vld [vmem:[#allocation2 + $0xf1] sm:$0xff]
        %v985 = vld [vmem:[#allocation2 + $0x109] sm:$0xff]
        %v986 = vld [vmem:[#allocation2 + $0x111] sm:$0xff]
        %v987 = vld [vmem:[#allocation2 + $0x129] sm:$0xff]
        %v988 = vld [vmem:[#allocation2 + $0x131] sm:$0xff]
        %v989 = vld [vmem:[#allocation2 + $0x149] sm:$0xff]
        %v990 = vld [vmem:[#allocation2 + $0x151] sm:$0xff]
        %v991 = vld [vmem:[#allocation2 + $0x169] sm:$0xff]
        %v992 = vld [vmem:[#allocation2 + $0x171] sm:$0xff]
        %v993 = vld [vmem:[#allocation2 + $0x189] sm:$0xff]
        %v994 = vld [vmem:[#allocation2 + $0x191] sm:$0xff]
        %v995 = vld [vmem:[#allocation2 + $0x1a9] sm:$0xff]
        %v996 = vld [vmem:[#allocation2 + $0x1b1] sm:$0xff]
        %v997 = vld [vmem:[#allocation2 + $0x1c9] sm:$0xff]
        %v998 = vld [vmem:[#allocation2 + $0x1d1] sm:$0xff]
        %v999 = vld [vmem:[#allocation2 + $0x1e9] sm:$0xff]
        %v1000 = vld [vmem:[#allocation2 + $0x1f1] sm:$0xff]
        %v1001 = vld [vmem:[#allocation2 + $0x209] sm:$0xff]
        %v1002 = vld [vmem:[#allocation2 + $0x211] sm:$0xff]
        %v1003 = vld [vmem:[#allocation2 + $0x229] sm:$0xff]
        %v1004 = vld [vmem:[#allocation2 + $0x231] sm:$0xff]
        %v1005 = vpack.c.bf16 %v970, %v969
        %v1006 = vpack.c.bf16 %v972, %v971
        %v1007 = vpack.c.bf16 %v974, %v973
        %v1008 = vpack.c.bf16 %v976, %v975
        %v1009 = vpack.c.bf16 %v978, %v977
        %v1010 = vpack.c.bf16 %v980, %v979
        %v1011 = vpack.c.bf16 %v982, %v981
        %v1012 = vpack.c.bf16 %v984, %v983
        %v1013 = vpack.c.bf16 %v986, %v985
        %v1014 = vpack.c.bf16 %v988, %v987
        %v1015 = vpack.c.bf16 %v990, %v989
        %v1016 = vpack.c.bf16 %v992, %v991
        %v1017 = vpack.c.bf16 %v994, %v993
        %v1018 = vpack.c.bf16 %v996, %v995
        %v1019 = vpack.c.bf16 %v998, %v997
        %v1020 = vpack.c.bf16 %v1000, %v999
        %v1021 = vpack.c.bf16 %v1002, %v1001
        %v1022 = vpack.c.bf16 %v1004, %v1003
        %v1023 = vld [vmem:[%s1] sm:$0xf]
        %v1024 = vld [vmem:[%s1 + $0x4] sm:$0xf]
        %v1025 = vld [vmem:[%s1 + $0x8] sm:$0xf]
        %v1026 = vld [vmem:[%s1 + $0xc] sm:$0xf]
        %v1027 = vld [vmem:[%s1 + $0x10] sm:$0xf]
        %v1028 = vld [vmem:[%s1 + $0x14] sm:$0xf]
        %v1029 = vld [vmem:[%s1 + $0x18] sm:$0xf]
        %v1030 = vld [vmem:[%s1 + $0x1c] sm:$0xf]
        %v1031 = vld [vmem:[%s1 + $0x20] sm:$0xf]
        %v1032 = vld [vmem:[%s1 + $0x24] sm:$0xf]
        %v1033 = vld [vmem:[%s1 + $0x28] sm:$0xf]
        %v1034 = vld [vmem:[%s1 + $0x2c] sm:$0xf]
        %v1035 = vld [vmem:[%s1 + $0x30] sm:$0xf]
        %v1036 = vld [vmem:[%s1 + $0x34] sm:$0xf]
        %v1037 = vld [vmem:[%s1 + $0x38] sm:$0xf]
        %v1038 = vld [vmem:[%s1 + $0x3c] sm:$0xf]
        %v1039 = vld [vmem:[%s1 + $0x40] sm:$0xf]
        %v1040 = vld [vmem:[%s1 + $0x44] sm:$0xf]
        %v1041 = vld [vmem:[%s1 + $0x48] sm:$0xf]
        %v1042 = vld [vmem:[%s1 + $0x4c] sm:$0xf]
        %v1043 = vld [vmem:[%s1 + $0x50] sm:$0xf]
        %v1044 = vld [vmem:[%s1 + $0x54] sm:$0xf]
        %v1045 = vld [vmem:[%s1 + $0x58] sm:$0xf]
        %v1046 = vld [vmem:[%s1 + $0x5c] sm:$0xf]
        %v1047 = vld [vmem:[%s1 + $0x60] sm:$0xf]
        %v1048 = vld [vmem:[%s1 + $0x64] sm:$0xf]
        %v1049 = vld [vmem:[%s1 + $0x68] sm:$0xf]
        %v1050 = vld [vmem:[%s1 + $0x6c] sm:$0xf]
        %v1051 = vld [vmem:[%s1 + $0x70] sm:$0xf]
        %v1052 = vld [vmem:[%s1 + $0x74] sm:$0xf]
        %v1053 = vld [vmem:[%s1 + $0x78] sm:$0xf]
        %v1054 = vld [vmem:[%s1 + $0x7c] sm:$0xf]
        %v1055 = vld [vmem:[%s1 + $0x80] sm:$0xf]
        %v1056 = vld [vmem:[%s1 + $0x84] sm:$0xf]
        %v1057 = vld [vmem:[%s1 + $0x88] sm:$0xf]
        %v1058 = vld [vmem:[%s1 + $0x8c] sm:$0xf]
        %v1059 = vld [vmem:[%s1 + $0x90] sm:$0xf]
        %v1060 = vld [vmem:[%s1 + $0x94] sm:$0xf]
        %v1061 = vld [vmem:[%s1 + $0x98] sm:$0xf]
        %v1062 = vld [vmem:[%s1 + $0x9c] sm:$0xf]
        %v1063 = vld [vmem:[%s1 + $0xa0] sm:$0xf]
        %v1064 = vld [vmem:[%s1 + $0xa4] sm:$0xf]
        %v1065 = vld [vmem:[%s1 + $0xa8] sm:$0xf]
        %v1066 = vld [vmem:[%s1 + $0xac] sm:$0xf]
        %v1067 = vld [vmem:[%s1 + $0xb0] sm:$0xf]
        %v1068 = vld [vmem:[%s1 + $0xb4] sm:$0xf]
        %v1069 = vld [vmem:[%s1 + $0xb8] sm:$0xf]
        %v1070 = vld [vmem:[%s1 + $0xbc] sm:$0xf]
        %v1071 = vld [vmem:[%s1 + $0xc0] sm:$0xf]
        %v1072 = vld [vmem:[%s1 + $0xc4] sm:$0xf]
        %v1073 = vld [vmem:[%s1 + $0xc8] sm:$0xf]
        %v1074 = vld [vmem:[%s1 + $0xcc] sm:$0xf]
        %v1075 = vld [vmem:[%s1 + $0xd0] sm:$0xf]
        %v1076 = vld [vmem:[%s1 + $0xd4] sm:$0xf]
        %v1077 = vld [vmem:[%s1 + $0xd8] sm:$0xf]
        %v1078 = vld [vmem:[%s1 + $0xdc] sm:$0xf]
        %v1079 = vld [vmem:[%s1 + $0xe0] sm:$0xf]
        %v1080 = vld [vmem:[%s1 + $0xe4] sm:$0xf]
        %v1081 = vld [vmem:[%s1 + $0xe8] sm:$0xf]
        %v1082 = vld [vmem:[%s1 + $0xec] sm:$0xf]
        %v1083 = vld [vmem:[%s1 + $0xf0] sm:$0xf]
        %v1084 = vld [vmem:[%s1 + $0xf4] sm:$0xf]
        %v1085 = vld [vmem:[%s1 + $0xf8] sm:$0xf]
        %v1086 = vld [vmem:[%s1 + $0xfc] sm:$0xf]
        %v1087 = vld [vmem:[%s1 + $0x100] sm:$0xf]
        %v1088 = vld [vmem:[%s1 + $0x104] sm:$0xf]
        %v1089 = vld [vmem:[%s1 + $0x108] sm:$0xf]
        %v1090 = vld [vmem:[%s1 + $0x10c] sm:$0xf]
        %v1091 = vld [vmem:[%s1 + $0x110] sm:$0xf]
        %v1092 = vld [vmem:[%s1 + $0x114] sm:$0xf]
        %v1093 = vld [vmem:[%s1 + $0x118] sm:$0xf]
        %v1094 = vld [vmem:[%s1 + $0x11c] sm:$0xf]
        %v1095 = vld [vmem:[%s1 + $0x120] sm:$0xf]
        %v1096 = vld [vmem:[%s1 + $0x124] sm:$0xf]
        %v1097 = vld [vmem:[%s1 + $0x128] sm:$0xf]
        %v1098 = vld [vmem:[%s1 + $0x12c] sm:$0xf]
        %v1099 = vld [vmem:[%s1 + $0x130] sm:$0xf]
        %v1100 = vld [vmem:[%s1 + $0x134] sm:$0xf]
        %v1101 = vld [vmem:[%s1 + $0x138] sm:$0xf]
        %v1102 = vld [vmem:[%s1 + $0x13c] sm:$0xf]
        %v1103 = vld [vmem:[%s1 + $0x140] sm:$0xf]
        %v1104 = vld [vmem:[%s1 + $0x144] sm:$0xf]
        %v1105 = vld [vmem:[%s1 + $0x148] sm:$0xf]
        %v1106 = vld [vmem:[%s1 + $0x14c] sm:$0xf]
        %v1107 = vld [vmem:[%s1 + $0x150] sm:$0xf]
        %v1108 = vld [vmem:[%s1 + $0x154] sm:$0xf]
        %v1109 = vld [vmem:[%s1 + $0x158] sm:$0xf]
        %v1110 = vld [vmem:[%s1 + $0x15c] sm:$0xf]
        %v1111 = vld [vmem:[%s1 + $0x160] sm:$0xf]
        %v1112 = vld [vmem:[%s1 + $0x164] sm:$0xf]
        %v1113 = vld [vmem:[%s1 + $0x168] sm:$0xf]
        %v1114 = vld [vmem:[%s1 + $0x16c] sm:$0xf]
        %v1115 = vld [vmem:[%s1 + $0x170] sm:$0xf]
        %v1116 = vld [vmem:[%s1 + $0x174] sm:$0xf]
        %v1117 = vld [vmem:[%s1 + $0x178] sm:$0xf]
        %v1118 = vld [vmem:[%s1 + $0x17c] sm:$0xf]
        %v1119 = vld [vmem:[%s1 + $0x180] sm:$0xf]
        %v1120 = vld [vmem:[%s1 + $0x184] sm:$0xf]
        %v1121 = vld [vmem:[%s1 + $0x188] sm:$0xf]
        %v1122 = vld [vmem:[%s1 + $0x18c] sm:$0xf]
        %v1123 = vld [vmem:[%s1 + $0x190] sm:$0xf]
        %v1124 = vld [vmem:[%s1 + $0x194] sm:$0xf]
        %v1125 = vld [vmem:[%s1 + $0x198] sm:$0xf]
        %v1126 = vld [vmem:[%s1 + $0x19c] sm:$0xf]
        %v1127 = vld [vmem:[%s1 + $0x1a0] sm:$0xf]
        %v1128 = vld [vmem:[%s1 + $0x1a4] sm:$0xf]
        %v1129 = vld [vmem:[%s1 + $0x1a8] sm:$0xf]
        %v1130 = vld [vmem:[%s1 + $0x1ac] sm:$0xf]
        %v1131 = vld [vmem:[%s1 + $0x1b0] sm:$0xf]
        %v1132 = vld [vmem:[%s1 + $0x1b4] sm:$0xf]
        %v1133 = vld [vmem:[%s1 + $0x1b8] sm:$0xf]
        %v1134 = vld [vmem:[%s1 + $0x1bc] sm:$0xf]
        %v1135 = vld [vmem:[%s1 + $0x1c0] sm:$0xf]
        %v1136 = vld [vmem:[%s1 + $0x1c4] sm:$0xf]
        %v1137 = vld [vmem:[%s1 + $0x1c8] sm:$0xf]
        %v1138 = vld [vmem:[%s1 + $0x1cc] sm:$0xf]
        %v1139 = vld [vmem:[%s1 + $0x1d0] sm:$0xf]
        %v1140 = vld [vmem:[%s1 + $0x1d4] sm:$0xf]
        %v1141 = vld [vmem:[%s1 + $0x1d8] sm:$0xf]
        %v1142 = vld [vmem:[%s1 + $0x1dc] sm:$0xf]
        %v1143 = vld [vmem:[%s1 + $0x1e0] sm:$0xf]
        %v1144 = vld [vmem:[%s1 + $0x1e4] sm:$0xf]
        %v1145 = vld [vmem:[%s1 + $0x1e8] sm:$0xf]
        %v1146 = vld [vmem:[%s1 + $0x1ec] sm:$0xf]
        %v1147 = vld [vmem:[%s1 + $0x1f0] sm:$0xf]
        %v1148 = vld [vmem:[%s1 + $0x1f4] sm:$0xf]
        %v1149 = vld [vmem:[%s1 + $0x1f8] sm:$0xf]
        %v1150 = vld [vmem:[%s1 + $0x1fc] sm:$0xf]
        %v1151 = vld [vmem:[%s1 + $0x200] sm:$0xf]
        %v1152 = vld [vmem:[%s1 + $0x204] sm:$0xf]
        %v1153 = vld [vmem:[%s1 + $0x208] sm:$0xf]
        %v1154 = vld [vmem:[%s1 + $0x20c] sm:$0xf]
        %v1155 = vld [vmem:[%s1 + $0x210] sm:$0xf]
        %v1156 = vld [vmem:[%s1 + $0x214] sm:$0xf]
        %v1157 = vld [vmem:[%s1 + $0x218] sm:$0xf]
        %v1158 = vld [vmem:[%s1 + $0x21c] sm:$0xf]
        %v1159 = vld [vmem:[%s1 + $0x220] sm:$0xf]
        %v1160 = vld [vmem:[%s1 + $0x224] sm:$0xf]
        %v1161 = vld [vmem:[%s1 + $0x228] sm:$0xf]
        %v1162 = vld [vmem:[%s1 + $0x22c] sm:$0xf]
        %v1163 = vld [vmem:[%s1 + $0x230] sm:$0xf]
        %v1164 = vld [vmem:[%s1 + $0x234] sm:$0xf]
        %v1165 = vld [vmem:[%s1 + $0x238] sm:$0xf]
        %v1166 = vld [vmem:[%s1 + $0x23c] sm:$0xf]
        %v1311 = vunpack.c.l.b16 %v1023
        %v1312 = vunpack.c.l.b16 %v1024
        %v1313 = vunpack.c.l.b16 %v1025
        %v1314 = vunpack.c.l.b16 %v1026
        %v1315 = vunpack.c.l.b16 %v1027
        %v1316 = vunpack.c.l.b16 %v1028
        %v1317 = vunpack.c.l.b16 %v1029
        %v1318 = vunpack.c.l.b16 %v1030
        %v1319 = vunpack.c.l.b16 %v1031
        %v1320 = vunpack.c.l.b16 %v1032
        %v1321 = vunpack.c.l.b16 %v1033
        %v1322 = vunpack.c.l.b16 %v1034
        %v1323 = vunpack.c.l.b16 %v1035
        %v1324 = vunpack.c.l.b16 %v1036
        %v1325 = vunpack.c.l.b16 %v1037
        %v1326 = vunpack.c.l.b16 %v1038
        %v1327 = vunpack.c.l.b16 %v1039
        %v1328 = vunpack.c.l.b16 %v1040
        %v1329 = vunpack.c.l.b16 %v1041
        %v1330 = vunpack.c.l.b16 %v1042
        %v1331 = vunpack.c.l.b16 %v1043
        %v1332 = vunpack.c.l.b16 %v1044
        %v1333 = vunpack.c.l.b16 %v1045
        %v1334 = vunpack.c.l.b16 %v1046
        %v1335 = vunpack.c.l.b16 %v1047
        %v1336 = vunpack.c.l.b16 %v1048
        %v1337 = vunpack.c.l.b16 %v1049
        %v1338 = vunpack.c.l.b16 %v1050
        %v1339 = vunpack.c.l.b16 %v1051
        %v1340 = vunpack.c.l.b16 %v1052
        %v1341 = vunpack.c.l.b16 %v1053
        %v1342 = vunpack.c.l.b16 %v1054
        %v1343 = vunpack.c.l.b16 %v1055
        %v1344 = vunpack.c.l.b16 %v1056
        %v1345 = vunpack.c.l.b16 %v1057
        %v1346 = vunpack.c.l.b16 %v1058
        %v1347 = vunpack.c.l.b16 %v1059
        %v1348 = vunpack.c.l.b16 %v1060
        %v1349 = vunpack.c.l.b16 %v1061
        %v1350 = vunpack.c.l.b16 %v1062
        %v1351 = vunpack.c.l.b16 %v1063
        %v1352 = vunpack.c.l.b16 %v1064
        %v1353 = vunpack.c.l.b16 %v1065
        %v1354 = vunpack.c.l.b16 %v1066
        %v1355 = vunpack.c.l.b16 %v1067
        %v1356 = vunpack.c.l.b16 %v1068
        %v1357 = vunpack.c.l.b16 %v1069
        %v1358 = vunpack.c.l.b16 %v1070
        %v1359 = vunpack.c.l.b16 %v1071
        %v1360 = vunpack.c.l.b16 %v1072
        %v1361 = vunpack.c.l.b16 %v1073
        %v1362 = vunpack.c.l.b16 %v1074
        %v1363 = vunpack.c.l.b16 %v1075
        %v1364 = vunpack.c.l.b16 %v1076
        %v1365 = vunpack.c.l.b16 %v1077
        %v1366 = vunpack.c.l.b16 %v1078
        %v1367 = vunpack.c.l.b16 %v1079
        %v1368 = vunpack.c.l.b16 %v1080
        %v1369 = vunpack.c.l.b16 %v1081
        %v1370 = vunpack.c.l.b16 %v1082
        %v1371 = vunpack.c.l.b16 %v1083
        %v1372 = vunpack.c.l.b16 %v1084
        %v1373 = vunpack.c.l.b16 %v1085
        %v1374 = vunpack.c.l.b16 %v1086
        %v1375 = vunpack.c.l.b16 %v1087
        %v1376 = vunpack.c.l.b16 %v1088
        %v1377 = vunpack.c.l.b16 %v1089
        %v1378 = vunpack.c.l.b16 %v1090
        %v1379 = vunpack.c.l.b16 %v1091
        %v1380 = vunpack.c.l.b16 %v1092
        %v1381 = vunpack.c.l.b16 %v1093
        %v1382 = vunpack.c.l.b16 %v1094
        %v1383 = vunpack.c.l.b16 %v1095
        %v1384 = vunpack.c.l.b16 %v1096
        %v1385 = vunpack.c.l.b16 %v1097
        %v1386 = vunpack.c.l.b16 %v1098
        %v1387 = vunpack.c.l.b16 %v1099
        %v1388 = vunpack.c.l.b16 %v1100
        %v1389 = vunpack.c.l.b16 %v1101
        %v1390 = vunpack.c.l.b16 %v1102
        %v1391 = vunpack.c.l.b16 %v1103
        %v1392 = vunpack.c.l.b16 %v1104
        %v1393 = vunpack.c.l.b16 %v1105
        %v1394 = vunpack.c.l.b16 %v1106
        %v1395 = vunpack.c.l.b16 %v1107
        %v1396 = vunpack.c.l.b16 %v1108
        %v1397 = vunpack.c.l.b16 %v1109
        %v1398 = vunpack.c.l.b16 %v1110
        %v1399 = vunpack.c.l.b16 %v1111
        %v1400 = vunpack.c.l.b16 %v1112
        %v1401 = vunpack.c.l.b16 %v1113
        %v1402 = vunpack.c.l.b16 %v1114
        %v1403 = vunpack.c.l.b16 %v1115
        %v1404 = vunpack.c.l.b16 %v1116
        %v1405 = vunpack.c.l.b16 %v1117
        %v1406 = vunpack.c.l.b16 %v1118
        %v1407 = vunpack.c.l.b16 %v1119
        %v1408 = vunpack.c.l.b16 %v1120
        %v1409 = vunpack.c.l.b16 %v1121
        %v1410 = vunpack.c.l.b16 %v1122
        %v1411 = vunpack.c.l.b16 %v1123
        %v1412 = vunpack.c.l.b16 %v1124
        %v1413 = vunpack.c.l.b16 %v1125
        %v1414 = vunpack.c.l.b16 %v1126
        %v1415 = vunpack.c.l.b16 %v1127
        %v1416 = vunpack.c.l.b16 %v1128
        %v1417 = vunpack.c.l.b16 %v1129
        %v1418 = vunpack.c.l.b16 %v1130
        %v1419 = vunpack.c.l.b16 %v1131
        %v1420 = vunpack.c.l.b16 %v1132
        %v1421 = vunpack.c.l.b16 %v1133
        %v1422 = vunpack.c.l.b16 %v1134
        %v1423 = vunpack.c.l.b16 %v1135
        %v1424 = vunpack.c.l.b16 %v1136
        %v1425 = vunpack.c.l.b16 %v1137
        %v1426 = vunpack.c.l.b16 %v1138
        %v1427 = vunpack.c.l.b16 %v1139
        %v1428 = vunpack.c.l.b16 %v1140
        %v1429 = vunpack.c.l.b16 %v1141
        %v1430 = vunpack.c.l.b16 %v1142
        %v1431 = vunpack.c.l.b16 %v1143
        %v1432 = vunpack.c.l.b16 %v1144
        %v1433 = vunpack.c.l.b16 %v1145
        %v1434 = vunpack.c.l.b16 %v1146
        %v1435 = vunpack.c.l.b16 %v1147
        %v1436 = vunpack.c.l.b16 %v1148
        %v1437 = vunpack.c.l.b16 %v1149
        %v1438 = vunpack.c.l.b16 %v1150
        %v1439 = vunpack.c.l.b16 %v1151
        %v1440 = vunpack.c.l.b16 %v1152
        %v1441 = vunpack.c.l.b16 %v1153
        %v1442 = vunpack.c.l.b16 %v1154
        %v1443 = vunpack.c.l.b16 %v1155
        %v1444 = vunpack.c.l.b16 %v1156
        %v1445 = vunpack.c.l.b16 %v1157
        %v1446 = vunpack.c.l.b16 %v1158
        %v1447 = vunpack.c.l.b16 %v1159
        %v1448 = vunpack.c.l.b16 %v1160
        %v1449 = vunpack.c.l.b16 %v1161
        %v1450 = vunpack.c.l.b16 %v1162
        %v1451 = vunpack.c.l.b16 %v1163
        %v1452 = vunpack.c.l.b16 %v1164
        %v1453 = vunpack.c.l.b16 %v1165
        %v1454 = vunpack.c.l.b16 %v1166
        %v1455 = vpack.c.b16 %v1312, %v1311
        %v1456 = vpack.c.b16 %v1314, %v1313
        %v1457 = vpack.c.b16 %v1316, %v1315
        %v1458 = vpack.c.b16 %v1318, %v1317
        %v1459 = vpack.c.b16 %v1320, %v1319
        %v1460 = vpack.c.b16 %v1322, %v1321
        %v1461 = vpack.c.b16 %v1324, %v1323
        %v1462 = vpack.c.b16 %v1326, %v1325
        %v1463 = vpack.c.b16 %v1328, %v1327
        %v1464 = vpack.c.b16 %v1330, %v1329
        %v1465 = vpack.c.b16 %v1332, %v1331
        %v1466 = vpack.c.b16 %v1334, %v1333
        %v1467 = vpack.c.b16 %v1336, %v1335
        %v1468 = vpack.c.b16 %v1338, %v1337
        %v1469 = vpack.c.b16 %v1340, %v1339
        %v1470 = vpack.c.b16 %v1342, %v1341
        %v1471 = vpack.c.b16 %v1344, %v1343
        %v1472 = vpack.c.b16 %v1346, %v1345
        %v1473 = vpack.c.b16 %v1348, %v1347
        %v1474 = vpack.c.b16 %v1350, %v1349
        %v1475 = vpack.c.b16 %v1352, %v1351
        %v1476 = vpack.c.b16 %v1354, %v1353
        %v1477 = vpack.c.b16 %v1356, %v1355
        %v1478 = vpack.c.b16 %v1358, %v1357
        %v1479 = vpack.c.b16 %v1360, %v1359
        %v1480 = vpack.c.b16 %v1362, %v1361
        %v1481 = vpack.c.b16 %v1364, %v1363
        %v1482 = vpack.c.b16 %v1366, %v1365
        %v1483 = vpack.c.b16 %v1368, %v1367
        %v1484 = vpack.c.b16 %v1370, %v1369
        %v1485 = vpack.c.b16 %v1372, %v1371
        %v1486 = vpack.c.b16 %v1374, %v1373
        %v1487 = vpack.c.b16 %v1376, %v1375
        %v1488 = vpack.c.b16 %v1378, %v1377
        %v1489 = vpack.c.b16 %v1380, %v1379
        %v1490 = vpack.c.b16 %v1382, %v1381
        %v1491 = vpack.c.b16 %v1384, %v1383
        %v1492 = vpack.c.b16 %v1386, %v1385
        %v1493 = vpack.c.b16 %v1388, %v1387
        %v1494 = vpack.c.b16 %v1390, %v1389
        %v1495 = vpack.c.b16 %v1392, %v1391
        %v1496 = vpack.c.b16 %v1394, %v1393
        %v1497 = vpack.c.b16 %v1396, %v1395
        %v1498 = vpack.c.b16 %v1398, %v1397
        %v1499 = vpack.c.b16 %v1400, %v1399
        %v1500 = vpack.c.b16 %v1402, %v1401
        %v1501 = vpack.c.b16 %v1404, %v1403
        %v1502 = vpack.c.b16 %v1406, %v1405
        %v1503 = vpack.c.b16 %v1408, %v1407
        %v1504 = vpack.c.b16 %v1410, %v1409
        %v1505 = vpack.c.b16 %v1412, %v1411
        %v1506 = vpack.c.b16 %v1414, %v1413
        %v1507 = vpack.c.b16 %v1416, %v1415
        %v1508 = vpack.c.b16 %v1418, %v1417
        %v1509 = vpack.c.b16 %v1420, %v1419
        %v1510 = vpack.c.b16 %v1422, %v1421
        %v1511 = vpack.c.b16 %v1424, %v1423
        %v1512 = vpack.c.b16 %v1426, %v1425
        %v1513 = vpack.c.b16 %v1428, %v1427
        %v1514 = vpack.c.b16 %v1430, %v1429
        %v1515 = vpack.c.b16 %v1432, %v1431
        %v1516 = vpack.c.b16 %v1434, %v1433
        %v1517 = vpack.c.b16 %v1436, %v1435
        %v1518 = vpack.c.b16 %v1438, %v1437
        %v1519 = vpack.c.b16 %v1440, %v1439
        %v1520 = vpack.c.b16 %v1442, %v1441
        %v1521 = vpack.c.b16 %v1444, %v1443
        %v1522 = vpack.c.b16 %v1446, %v1445
        %v1523 = vpack.c.b16 %v1448, %v1447
        %v1524 = vpack.c.b16 %v1450, %v1449
        %v1525 = vpack.c.b16 %v1452, %v1451
        %v1526 = vpack.c.b16 %v1454, %v1453
        %1599 = vmatprep.subr.bf16.mxu0 0
        %1600 = vmatpush1.bf16.msra.mxu0 %v1455
        %1601 = vmatprep.subr.bf16.mxu0 0
        %1602 = vmatpush1.bf16.msra.mxu0 %v1456
        %1603 = vmatprep.subr.bf16.mxu0 0
        %1604 = vmatpush1.bf16.msra.mxu0 %v1457
        %1605 = vmatprep.subr.bf16.mxu0 0
        %1606 = vmatpush1.bf16.msra.mxu0 %v1458
        %1607 = vmatprep.subr.bf16.mxu0 0
        %1608 = vmatpush1.bf16.msra.mxu0 %v1459
        %1609 = vmatprep.subr.bf16.mxu0 0
        %1610 = vmatpush1.bf16.msra.mxu0 %v1460
        %1611 = vmatprep.subr.bf16.mxu0 0
        %1612 = vmatpush1.bf16.msra.mxu0 %v1461
        %1613 = vmatprep.subr.bf16.mxu0 0
        %1614 = vmatpush1.bf16.msra.mxu0 %v1462
        %1615 = vmatprep.subr.bf16.mxu0 0
        %1616 = vmatpush1.bf16.msra.mxu0 %v1463
        %1617 = vmatprep.subr.bf16.mxu0 0
        %1618 = vmatpush1.bf16.msra.mxu0 %v1464
        %1619 = vmatprep.subr.bf16.mxu0 0
        %1620 = vmatpush1.bf16.msra.mxu0 %v1465
        %1621 = vmatprep.subr.bf16.mxu0 0
        %1622 = vmatpush1.bf16.msra.mxu0 %v1466
        %1623 = vmatprep.subr.bf16.mxu0 0
        %1624 = vmatpush1.bf16.msra.mxu0 %v1467
        %1625 = vmatprep.subr.bf16.mxu0 0
        %1626 = vmatpush1.bf16.msra.mxu0 %v1468
        %1627 = vmatprep.subr.bf16.mxu0 0
        %1628 = vmatpush1.bf16.msra.mxu0 %v1469
        %1629 = vmatprep.subr.bf16.mxu0 0
        %1630 = vmatpush1.bf16.msra.mxu0 %v1470
        %1631 = vmatprep.mubr.bf16.mxu0 %v898
        %1632 = vmatmul.mubr.bf16.gmra.mrb[0].mxu0 %v897
        %v1633 = vpop.f32.mrb[0].mxu0
        %v1634 = vadd.f32 0.0, %v1633
        %v1635 = vpop.f32.mrb[0].mxu0
        %v1636 = vpop.f32.mrb[0].mxu0
        %v1637 = vadd.f32 0.0, %v1636
        %v1638 = vpop.f32.mrb[0].mxu0
        %1639 = vmatprep.mubr.bf16.mxu0 %v899
        %1640 = vmatmul.mubr.bf16.gmra.mrb[0].mxu0 %v898
        %v1641 = vpop.f32.mrb[0].mxu0
        %v1642 = vadd.f32 0.0, %v1641
        %v1643 = vpop.f32.mrb[0].mxu0
        %v1644 = vpop.f32.mrb[0].mxu0
        %v1645 = vadd.f32 0.0, %v1644
        %v1646 = vpop.f32.mrb[0].mxu0
        %1647 = vmatprep.mubr.bf16.mxu0 %v900
        %1648 = vmatmul.mubr.bf16.gmra.mrb[0].mxu0 %v899
        %v1649 = vpop.f32.mrb[0].mxu0
        %v1650 = vadd.f32 0.0, %v1649
        %v1651 = vpop.f32.mrb[0].mxu0
        %v1652 = vpop.f32.mrb[0].mxu0
        %v1653 = vadd.f32 0.0, %v1652
        %v1654 = vpop.f32.mrb[0].mxu0
        %1655 = vmatprep.mubr.bf16.mxu0 %v901
        %1656 = vmatmul.mubr.bf16.gmra.mrb[0].mxu0 %v900
        %v1657 = vpop.f32.mrb[0].mxu0
        %v1658 = vadd.f32 0.0, %v1657
        %v1659 = vpop.f32.mrb[0].mxu0
        %v1660 = vpop.f32.mrb[0].mxu0
        %v1661 = vadd.f32 0.0, %v1660
        %v1662 = vpop.f32.mrb[0].mxu0
        %1663 = vmatprep.mubr.bf16.mxu0 %v902
        %1664 = vmatmul.mubr.bf16.gmra.mrb[0].mxu0 %v901
        %v1665 = vpop.f32.mrb[0].mxu0
        %v1666 = vadd.f32 0.0, %v1665
        %v1667 = vpop.f32.mrb[0].mxu0
        %v1668 = vpop.f32.mrb[0].mxu0
        %v1669 = vadd.f32 0.0, %v1668
        %v1670 = vpop.f32.mrb[0].mxu0
        %1671 = vmatprep.mubr.bf16.mxu0 %v903
        %1672 = vmatmul.mubr.bf16.gmra.mrb[0].mxu0 %v902
        %v1673 = vpop.f32.mrb[0].mxu0
        %v1674 = vadd.f32 0.0, %v1673
        %v1675 = vpop.f32.mrb[0].mxu0
        %v1676 = vpop.f32.mrb[0].mxu0
        %v1677 = vadd.f32 0.0, %v1676
        %v1678 = vpop.f32.mrb[0].mxu0
        %1679 = vmatprep.mubr.bf16.mxu0 %v904
        %1680 = vmatmul.mubr.bf16.gmra.mrb[0].mxu0 %v903
        %v1681 = vpop.f32.mrb[0].mxu0
        %v1682 = vadd.f32 0.0, %v1681
        %v1683 = vpop.f32.mrb[0].mxu0
        %v1684 = vpop.f32.mrb[0].mxu0
        %v1685 = vadd.f32 0.0, %v1684
        %v1686 = vpop.f32.mrb[0].mxu0
        %1687 = vmatprep.mubr.bf16.mxu0 %v905
        %1688 = vmatmul.mubr.bf16.gmra.mrb[0].mxu0 %v904
        %v1689 = vpop.f32.mrb[0].mxu0
        %v1690 = vadd.f32 0.0, %v1689
        %v1691 = vpop.f32.mrb[0].mxu0
        %v1692 = vpop.f32.mrb[0].mxu0
        %v1693 = vadd.f32 0.0, %v1692
        %v1694 = vpop.f32.mrb[0].mxu0
        %1695 = vmatprep.mubr.bf16.mxu0 %v906
        %1696 = vmatmul.mubr.bf16.gmra.mrb[0].mxu0 %v905
        %v1697 = vpop.f32.mrb[0].mxu0
        %v1698 = vadd.f32 0.0, %v1697
        %v1699 = vpop.f32.mrb[0].mxu0
        %v1700 = vpop.f32.mrb[0].mxu0
        %v1701 = vadd.f32 0.0, %v1700
        %v1702 = vpop.f32.mrb[0].mxu0
        %1703 = vmatprep.mubr.bf16.mxu0 %v907
        %1704 = vmatmul.mubr.bf16.gmra.mrb[0].mxu0 %v906
        %v1705 = vpop.f32.mrb[0].mxu0
        %v1706 = vadd.f32 0.0, %v1705
        %v1707 = vpop.f32.mrb[0].mxu0
        %v1708 = vpop.f32.mrb[0].mxu0
        %v1709 = vadd.f32 0.0, %v1708
        %v1710 = vpop.f32.mrb[0].mxu0
        %1711 = vmatprep.mubr.bf16.mxu0 %v908
        %1712 = vmatmul.mubr.bf16.gmra.mrb[0].mxu0 %v907
        %v1713 = vpop.f32.mrb[0].mxu0
        %v1714 = vadd.f32 0.0, %v1713
        %v1715 = vpop.f32.mrb[0].mxu0
        %v1716 = vpop.f32.mrb[0].mxu0
        %v1717 = vadd.f32 0.0, %v1716
        %v1718 = vpop.f32.mrb[0].mxu0
        %1719 = vmatprep.mubr.bf16.mxu0 %v909
        %1720 = vmatmul.mubr.bf16.gmra.mrb[0].mxu0 %v908
        %v1721 = vpop.f32.mrb[0].mxu0
        %v1722 = vadd.f32 0.0, %v1721
        %v1723 = vpop.f32.mrb[0].mxu0
        %v1724 = vpop.f32.mrb[0].mxu0
        %v1725 = vadd.f32 0.0, %v1724
        %v1726 = vpop.f32.mrb[0].mxu0
        %1727 = vmatprep.mubr.bf16.mxu0 %v910
        %1728 = vmatmul.mubr.bf16.gmra.mrb[0].mxu0 %v909
        %v1729 = vpop.f32.mrb[0].mxu0
        %v1730 = vadd.f32 0.0, %v1729
        %v1731 = vpop.f32.mrb[0].mxu0
        %v1732 = vpop.f32.mrb[0].mxu0
        %v1733 = vadd.f32 0.0, %v1732
        %v1734 = vpop.f32.mrb[0].mxu0
        %1735 = vmatprep.mubr.bf16.mxu0 %v911
        %1736 = vmatmul.mubr.bf16.gmra.mrb[0].mxu0 %v910
        %v1737 = vpop.f32.mrb[0].mxu0
        %v1738 = vadd.f32 0.0, %v1737
        %v1739 = vpop.f32.mrb[0].mxu0
        %v1740 = vpop.f32.mrb[0].mxu0
        %v1741 = vadd.f32 0.0, %v1740
        %v1742 = vpop.f32.mrb[0].mxu0
        %1743 = vmatprep.mubr.bf16.mxu0 %v912
        %1744 = vmatmul.mubr.bf16.gmra.mrb[0].mxu0 %v911
        %v1745 = vpop.f32.mrb[0].mxu0
        %v1746 = vadd.f32 0.0, %v1745
        %v1747 = vpop.f32.mrb[0].mxu0
        %v1748 = vpop.f32.mrb[0].mxu0
        %v1749 = vadd.f32 0.0, %v1748
        %v1750 = vpop.f32.mrb[0].mxu0
        %1751 = vmatprep.mubr.bf16.mxu0 %v913
        %1752 = vmatmul.mubr.bf16.gmra.mrb[0].mxu0 %v912
        %v1753 = vpop.f32.mrb[0].mxu0
        %v1754 = vadd.f32 0.0, %v1753
        %v1755 = vpop.f32.mrb[0].mxu0
        %v1756 = vpop.f32.mrb[0].mxu0
        %v1757 = vadd.f32 0.0, %v1756
        %v1758 = vpop.f32.mrb[0].mxu0
        %1759 = vdwg.mxu0
        %1760 = vmatprep.subr.bf16.mxu0 0
        %1761 = vmatpush1.bf16.msra.mxu0 %v1471
        %1762 = vmatprep.subr.bf16.mxu0 0
        %1763 = vmatpush1.bf16.msra.mxu0 %v1472
        %1764 = vmatprep.subr.bf16.mxu0 0
        %1765 = vmatpush1.bf16.msra.mxu0 %v1473
        %1766 = vmatprep.subr.bf16.mxu0 0
        %1767 = vmatpush1.bf16.msra.mxu0 %v1474
        %1768 = vmatprep.subr.bf16.mxu0 0
        %1769 = vmatpush1.bf16.msra.mxu0 %v1475
        %1770 = vmatprep.subr.bf16.mxu0 0
        %1771 = vmatpush1.bf16.msra.mxu0 %v1476
        %1772 = vmatprep.subr.bf16.mxu0 0
        %1773 = vmatpush1.bf16.msra.mxu0 %v1477
        %1774 = vmatprep.subr.bf16.mxu0 0
        %1775 = vmatpush1.bf16.msra.mxu0 %v1478
        %1776 = vmatprep.subr.bf16.mxu0 0
        %1777 = vmatpush1.bf16.msra.mxu0 %v1479
        %1778 = vmatprep.subr.bf16.mxu0 0
        %1779 = vmatpush1.bf16.msra.mxu0 %v1480
        %1780 = vmatprep.subr.bf16.mxu0 0
        %1781 = vmatpush1.bf16.msra.mxu0 %v1481
        %1782 = vmatprep.subr.bf16.mxu0 0
        %1783 = vmatpush1.bf16.msra.mxu0 %v1482
        %1784 = vmatprep.subr.bf16.mxu0 0
        %1785 = vmatpush1.bf16.msra.mxu0 %v1483
        %1786 = vmatprep.subr.bf16.mxu0 0
        %1787 = vmatpush1.bf16.msra.mxu0 %v1484
        %1788 = vmatprep.subr.bf16.mxu0 0
        %1789 = vmatpush1.bf16.msra.mxu0 %v1485
        %1790 = vmatprep.subr.bf16.mxu0 0
        %1791 = vmatpush1.bf16.msra.mxu0 %v1486
        %1792 = vmatprep.mubr.bf16.mxu0 %v951
        %1793 = vmatmul.mubr.bf16.gmra.mrb[0].mxu0 %v899
        %v1794 = vpop.f32.mrb[0].mxu0
        %v1795 = vadd.f32 %v1634, %v1794
        %v1796 = vpop.f32.mrb[0].mxu0
        %v1797 = vpop.f32.mrb[0].mxu0
        %v1798 = vadd.f32 %v1637, %v1797
        %v1799 = vpop.f32.mrb[0].mxu0
        %1800 = vmatprep.mubr.bf16.mxu0 %v952
        %1801 = vmatmul.mubr.bf16.gmra.mrb[0].mxu0 %v900
        %v1802 = vpop.f32.mrb[0].mxu0
        %v1803 = vadd.f32 %v1642, %v1802
        %v1804 = vpop.f32.mrb[0].mxu0
        %v1805 = vpop.f32.mrb[0].mxu0
        %v1806 = vadd.f32 %v1645, %v1805
        %v1807 = vpop.f32.mrb[0].mxu0
        %1808 = vmatprep.mubr.bf16.mxu0 %v953
        %1809 = vmatmul.mubr.bf16.gmra.mrb[0].mxu0 %v901
        %v1810 = vpop.f32.mrb[0].mxu0
        %v1811 = vadd.f32 %v1650, %v1810
        %v1812 = vpop.f32.mrb[0].mxu0
        %v1813 = vpop.f32.mrb[0].mxu0
        %v1814 = vadd.f32 %v1653, %v1813
        %v1815 = vpop.f32.mrb[0].mxu0
        %1816 = vmatprep.mubr.bf16.mxu0 %v954
        %1817 = vmatmul.mubr.bf16.gmra.mrb[0].mxu0 %v902
        %v1818 = vpop.f32.mrb[0].mxu0
        %v1819 = vadd.f32 %v1658, %v1818
        %v1820 = vpop.f32.mrb[0].mxu0
        %v1821 = vpop.f32.mrb[0].mxu0
        %v1822 = vadd.f32 %v1661, %v1821
        %v1823 = vpop.f32.mrb[0].mxu0
        %1824 = vmatprep.mubr.bf16.mxu0 %v955
        %1825 = vmatmul.mubr.bf16.gmra.mrb[0].mxu0 %v903
        %v1826 = vpop.f32.mrb[0].mxu0
        %v1827 = vadd.f32 %v1666, %v1826
        %v1828 = vpop.f32.mrb[0].mxu0
        %v1829 = vpop.f32.mrb[0].mxu0
        %v1830 = vadd.f32 %v1669, %v1829
        %v1831 = vpop.f32.mrb[0].mxu0
        %1832 = vmatprep.mubr.bf16.mxu0 %v956
        %1833 = vmatmul.mubr.bf16.gmra.mrb[0].mxu0 %v904
        %v1834 = vpop.f32.mrb[0].mxu0
        %v1835 = vadd.f32 %v1674, %v1834
        %v1836 = vpop.f32.mrb[0].mxu0
        %v1837 = vpop.f32.mrb[0].mxu0
        %v1838 = vadd.f32 %v1677, %v1837
        %v1839 = vpop.f32.mrb[0].mxu0
        %1840 = vmatprep.mubr.bf16.mxu0 %v957
        %1841 = vmatmul.mubr.bf16.gmra.mrb[0].mxu0 %v905
        %v1842 = vpop.f32.mrb[0].mxu0
        %v1843 = vadd.f32 %v1682, %v1842
        %v1844 = vpop.f32.mrb[0].mxu0
        %v1845 = vpop.f32.mrb[0].mxu0
        %v1846 = vadd.f32 %v1685, %v1845
        %v1847 = vpop.f32.mrb[0].mxu0
        %1848 = vmatprep.mubr.bf16.mxu0 %v958
        %1849 = vmatmul.mubr.bf16.gmra.mrb[0].mxu0 %v906
        %v1850 = vpop.f32.mrb[0].mxu0
        %v1851 = vadd.f32 %v1690, %v1850
        %v1852 = vpop.f32.mrb[0].mxu0
        %v1853 = vpop.f32.mrb[0].mxu0
        %v1854 = vadd.f32 %v1693, %v1853
        %v1855 = vpop.f32.mrb[0].mxu0
        %1856 = vmatprep.mubr.bf16.mxu0 %v959
        %1857 = vmatmul.mubr.bf16.gmra.mrb[0].mxu0 %v907
        %v1858 = vpop.f32.mrb[0].mxu0
        %v1859 = vadd.f32 %v1698, %v1858
        %v1860 = vpop.f32.mrb[0].mxu0
        %v1861 = vpop.f32.mrb[0].mxu0
        %v1862 = vadd.f32 %v1701, %v1861
        %v1863 = vpop.f32.mrb[0].mxu0
        %1864 = vmatprep.mubr.bf16.mxu0 %v960
        %1865 = vmatmul.mubr.bf16.gmra.mrb[0].mxu0 %v908
        %v1866 = vpop.f32.mrb[0].mxu0
        %v1867 = vadd.f32 %v1706, %v1866
        %v1868 = vpop.f32.mrb[0].mxu0
        %v1869 = vpop.f32.mrb[0].mxu0
        %v1870 = vadd.f32 %v1709, %v1869
        %v1871 = vpop.f32.mrb[0].mxu0
        %1872 = vmatprep.mubr.bf16.mxu0 %v961
        %1873 = vmatmul.mubr.bf16.gmra.mrb[0].mxu0 %v909
        %v1874 = vpop.f32.mrb[0].mxu0
        %v1875 = vadd.f32 %v1714, %v1874
        %v1876 = vpop.f32.mrb[0].mxu0
        %v1877 = vpop.f32.mrb[0].mxu0
        %v1878 = vadd.f32 %v1717, %v1877
        %v1879 = vpop.f32.mrb[0].mxu0
        %1880 = vmatprep.mubr.bf16.mxu0 %v962
        %1881 = vmatmul.mubr.bf16.gmra.mrb[0].mxu0 %v910
        %v1882 = vpop.f32.mrb[0].mxu0
        %v1883 = vadd.f32 %v1722, %v1882
        %v1884 = vpop.f32.mrb[0].mxu0
        %v1885 = vpop.f32.mrb[0].mxu0
        %v1886 = vadd.f32 %v1725, %v1885
        %v1887 = vpop.f32.mrb[0].mxu0
        %1888 = vmatprep.mubr.bf16.mxu0 %v963
        %1889 = vmatmul.mubr.bf16.gmra.mrb[0].mxu0 %v911
        %v1890 = vpop.f32.mrb[0].mxu0
        %v1891 = vadd.f32 %v1730, %v1890
        %v1892 = vpop.f32.mrb[0].mxu0
        %v1893 = vpop.f32.mrb[0].mxu0
        %v1894 = vadd.f32 %v1733, %v1893
        %v1895 = vpop.f32.mrb[0].mxu0
        %1896 = vmatprep.mubr.bf16.mxu0 %v964
        %1897 = vmatmul.mubr.bf16.gmra.mrb[0].mxu0 %v912
        %v1898 = vpop.f32.mrb[0].mxu0
        %v1899 = vadd.f32 %v1738, %v1898
        %v1900 = vpop.f32.mrb[0].mxu0
        %v1901 = vpop.f32.mrb[0].mxu0
        %v1902 = vadd.f32 %v1741, %v1901
        %v1903 = vpop.f32.mrb[0].mxu0
        %1904 = vmatprep.mubr.bf16.mxu0 %v965
        %1905 = vmatmul.mubr.bf16.gmra.mrb[0].mxu0 %v913
        %v1906 = vpop.f32.mrb[0].mxu0
        %v1907 = vadd.f32 %v1746, %v1906
        %v1908 = vpop.f32.mrb[0].mxu0
        %v1909 = vpop.f32.mrb[0].mxu0
        %v1910 = vadd.f32 %v1749, %v1909
        %v1911 = vpop.f32.mrb[0].mxu0
        %1912 = vmatprep.mubr.bf16.mxu0 %v966
        %1913 = vmatmul.mubr.bf16.gmra.mrb[0].mxu0 %v914
        %v1914 = vpop.f32.mrb[0].mxu0
        %v1915 = vadd.f32 %v1754, %v1914
        %v1916 = vpop.f32.mrb[0].mxu0
        %v1917 = vpop.f32.mrb[0].mxu0
        %v1918 = vadd.f32 %v1757, %v1917
        %v1919 = vpop.f32.mrb[0].mxu0
        %1920 = vdwg.mxu0
        %1921 = vmatprep.subr.bf16.mxu0 0
        %1922 = vmatpush1.bf16.msra.mxu0 %v1487
        %1923 = vmatprep.subr.bf16.mxu0 0
        %1924 = vmatpush1.bf16.msra.mxu0 %v1488
        %1925 = vmatprep.subr.bf16.mxu0 0
        %1926 = vmatpush1.bf16.msra.mxu0 %v1489
        %1927 = vmatprep.subr.bf16.mxu0 0
        %1928 = vmatpush1.bf16.msra.mxu0 %v1490
        %1929 = vmatprep.subr.bf16.mxu0 0
        %1930 = vmatpush1.bf16.msra.mxu0 %v1491
        %1931 = vmatprep.subr.bf16.mxu0 0
        %1932 = vmatpush1.bf16.msra.mxu0 %v1492
        %1933 = vmatprep.subr.bf16.mxu0 0
        %1934 = vmatpush1.bf16.msra.mxu0 %v1493
        %1935 = vmatprep.subr.bf16.mxu0 0
        %1936 = vmatpush1.bf16.msra.mxu0 %v1494
        %1937 = vmatprep.subr.bf16.mxu0 0
        %1938 = vmatpush1.bf16.msra.mxu0 %v1495
        %1939 = vmatprep.subr.bf16.mxu0 0
        %1940 = vmatpush1.bf16.msra.mxu0 %v1496
        %1941 = vmatprep.subr.bf16.mxu0 0
        %1942 = vmatpush1.bf16.msra.mxu0 %v1497
        %1943 = vmatprep.subr.bf16.mxu0 0
        %1944 = vmatpush1.bf16.msra.mxu0 %v1498
        %1945 = vmatprep.subr.bf16.mxu0 0
        %1946 = vmatpush1.bf16.msra.mxu0 %v1499
        %1947 = vmatprep.subr.bf16.mxu0 0
        %1948 = vmatpush1.bf16.msra.mxu0 %v1500
        %1949 = vmatprep.subr.bf16.mxu0 0
        %1950 = vmatpush1.bf16.msra.mxu0 %v1501
        %1951 = vmatprep.subr.bf16.mxu0 0
        %1952 = vmatpush1.bf16.msra.mxu0 %v1502
        %1953 = vmatprep.mubr.bf16.mxu0 %v953
        %1954 = vmatmul.mubr.bf16.gmra.mrb[0].mxu0 %v952
        %v1955 = vpop.f32.mrb[0].mxu0
        %v1956 = vadd.f32 %v1795, %v1955
        %v1957 = vpop.f32.mrb[0].mxu0
        %v1958 = vpop.f32.mrb[0].mxu0
        %v1959 = vadd.f32 %v1798, %v1958
        %v1960 = vpop.f32.mrb[0].mxu0
        %1961 = vmatprep.mubr.bf16.mxu0 %v954
        %1962 = vmatmul.mubr.bf16.gmra.mrb[0].mxu0 %v953
        %v1963 = vpop.f32.mrb[0].mxu0
        %v1964 = vadd.f32 %v1803, %v1963
        %v1965 = vpop.f32.mrb[0].mxu0
        %v1966 = vpop.f32.mrb[0].mxu0
        %v1967 = vadd.f32 %v1806, %v1966
        %v1968 = vpop.f32.mrb[0].mxu0
        %1969 = vmatprep.mubr.bf16.mxu0 %v955
        %1970 = vmatmul.mubr.bf16.gmra.mrb[0].mxu0 %v954
        %v1971 = vpop.f32.mrb[0].mxu0
        %v1972 = vadd.f32 %v1811, %v1971
        %v1973 = vpop.f32.mrb[0].mxu0
        %v1974 = vpop.f32.mrb[0].mxu0
        %v1975 = vadd.f32 %v1814, %v1974
        %v1976 = vpop.f32.mrb[0].mxu0
        %1977 = vmatprep.mubr.bf16.mxu0 %v956
        %1978 = vmatmul.mubr.bf16.gmra.mrb[0].mxu0 %v955
        %v1979 = vpop.f32.mrb[0].mxu0
        %v1980 = vadd.f32 %v1819, %v1979
        %v1981 = vpop.f32.mrb[0].mxu0
        %v1982 = vpop.f32.mrb[0].mxu0
        %v1983 = vadd.f32 %v1822, %v1982
        %v1984 = vpop.f32.mrb[0].mxu0
        %1985 = vmatprep.mubr.bf16.mxu0 %v957
        %1986 = vmatmul.mubr.bf16.gmra.mrb[0].mxu0 %v956
        %v1987 = vpop.f32.mrb[0].mxu0
        %v1988 = vadd.f32 %v1827, %v1987
        %v1989 = vpop.f32.mrb[0].mxu0
        %v1990 = vpop.f32.mrb[0].mxu0
        %v1991 = vadd.f32 %v1830, %v1990
        %v1992 = vpop.f32.mrb[0].mxu0
        %1993 = vmatprep.mubr.bf16.mxu0 %v958
        %1994 = vmatmul.mubr.bf16.gmra.mrb[0].mxu0 %v957
        %v1995 = vpop.f32.mrb[0].mxu0
        %v1996 = vadd.f32 %v1835, %v1995
        %v1997 = vpop.f32.mrb[0].mxu0
        %v1998 = vpop.f32.mrb[0].mxu0
        %v1999 = vadd.f32 %v1838, %v1998
        %v2000 = vpop.f32.mrb[0].mxu0
        %2001 = vmatprep.mubr.bf16.mxu0 %v959
        %2002 = vmatmul.mubr.bf16.gmra.mrb[0].mxu0 %v958
        %v2003 = vpop.f32.mrb[0].mxu0
        %v2004 = vadd.f32 %v1843, %v2003
        %v2005 = vpop.f32.mrb[0].mxu0
        %v2006 = vpop.f32.mrb[0].mxu0
        %v2007 = vadd.f32 %v1846, %v2006
        %v2008 = vpop.f32.mrb[0].mxu0
        %2009 = vmatprep.mubr.bf16.mxu0 %v960
        %2010 = vmatmul.mubr.bf16.gmra.mrb[0].mxu0 %v959
        %v2011 = vpop.f32.mrb[0].mxu0
        %v2012 = vadd.f32 %v1851, %v2011
        %v2013 = vpop.f32.mrb[0].mxu0
        %v2014 = vpop.f32.mrb[0].mxu0
        %v2015 = vadd.f32 %v1854, %v2014
        %v2016 = vpop.f32.mrb[0].mxu0
        %2017 = vmatprep.mubr.bf16.mxu0 %v961
        %2018 = vmatmul.mubr.bf16.gmra.mrb[0].mxu0 %v960
        %v2019 = vpop.f32.mrb[0].mxu0
        %v2020 = vadd.f32 %v1859, %v2019
        %v2021 = vpop.f32.mrb[0].mxu0
        %v2022 = vpop.f32.mrb[0].mxu0
        %v2023 = vadd.f32 %v1862, %v2022
        %v2024 = vpop.f32.mrb[0].mxu0
        %2025 = vmatprep.mubr.bf16.mxu0 %v962
        %2026 = vmatmul.mubr.bf16.gmra.mrb[0].mxu0 %v961
        %v2027 = vpop.f32.mrb[0].mxu0
        %v2028 = vadd.f32 %v1867, %v2027
        %v2029 = vpop.f32.mrb[0].mxu0
        %v2030 = vpop.f32.mrb[0].mxu0
        %v2031 = vadd.f32 %v1870, %v2030
        %v2032 = vpop.f32.mrb[0].mxu0
        %2033 = vmatprep.mubr.bf16.mxu0 %v963
        %2034 = vmatmul.mubr.bf16.gmra.mrb[0].mxu0 %v962
        %v2035 = vpop.f32.mrb[0].mxu0
        %v2036 = vadd.f32 %v1875, %v2035
        %v2037 = vpop.f32.mrb[0].mxu0
        %v2038 = vpop.f32.mrb[0].mxu0
        %v2039 = vadd.f32 %v1878, %v2038
        %v2040 = vpop.f32.mrb[0].mxu0
        %2041 = vmatprep.mubr.bf16.mxu0 %v964
        %2042 = vmatmul.mubr.bf16.gmra.mrb[0].mxu0 %v963
        %v2043 = vpop.f32.mrb[0].mxu0
        %v2044 = vadd.f32 %v1883, %v2043
        %v2045 = vpop.f32.mrb[0].mxu0
        %v2046 = vpop.f32.mrb[0].mxu0
        %v2047 = vadd.f32 %v1886, %v2046
        %v2048 = vpop.f32.mrb[0].mxu0
        %2049 = vmatprep.mubr.bf16.mxu0 %v965
        %2050 = vmatmul.mubr.bf16.gmra.mrb[0].mxu0 %v964
        %v2051 = vpop.f32.mrb[0].mxu0
        %v2052 = vadd.f32 %v1891, %v2051
        %v2053 = vpop.f32.mrb[0].mxu0
        %v2054 = vpop.f32.mrb[0].mxu0
        %v2055 = vadd.f32 %v1894, %v2054
        %v2056 = vpop.f32.mrb[0].mxu0
        %2057 = vmatprep.mubr.bf16.mxu0 %v966
        %2058 = vmatmul.mubr.bf16.gmra.mrb[0].mxu0 %v965
        %v2059 = vpop.f32.mrb[0].mxu0
        %v2060 = vadd.f32 %v1899, %v2059
        %v2061 = vpop.f32.mrb[0].mxu0
        %v2062 = vpop.f32.mrb[0].mxu0
        %v2063 = vadd.f32 %v1902, %v2062
        %v2064 = vpop.f32.mrb[0].mxu0
        %2065 = vmatprep.mubr.bf16.mxu0 %v967
        %2066 = vmatmul.mubr.bf16.gmra.mrb[0].mxu0 %v966
        %v2067 = vpop.f32.mrb[0].mxu0
        %v2068 = vadd.f32 %v1907, %v2067
        %v2069 = vpop.f32.mrb[0].mxu0
        %v2070 = vpop.f32.mrb[0].mxu0
        %v2071 = vadd.f32 %v1910, %v2070
        %v2072 = vpop.f32.mrb[0].mxu0
        %2073 = vmatprep.mubr.bf16.mxu0 %v968
        %2074 = vmatmul.mubr.bf16.gmra.mrb[0].mxu0 %v967
        %v2075 = vpop.f32.mrb[0].mxu0
        %v2076 = vadd.f32 %v1915, %v2075
        %v2077 = vpop.f32.mrb[0].mxu0
        %v2078 = vpop.f32.mrb[0].mxu0
        %v2079 = vadd.f32 %v1918, %v2078
        %v2080 = vpop.f32.mrb[0].mxu0
        %2081 = vdwg.mxu0
        %2082 = vmatprep.subr.bf16.mxu0 0
        %2083 = vmatpush1.bf16.msra.mxu0 %v1503
        %2084 = vmatprep.subr.bf16.mxu0 0
        %2085 = vmatpush1.bf16.msra.mxu0 %v1504
        %2086 = vmatprep.subr.bf16.mxu0 0
        %2087 = vmatpush1.bf16.msra.mxu0 %v1505
        %2088 = vmatprep.subr.bf16.mxu0 0
        %2089 = vmatpush1.bf16.msra.mxu0 %v1506
        %2090 = vmatprep.subr.bf16.mxu0 0
        %2091 = vmatpush1.bf16.msra.mxu0 %v1507
        %2092 = vmatprep.subr.bf16.mxu0 0
        %2093 = vmatpush1.bf16.msra.mxu0 %v1508
        %2094 = vmatprep.subr.bf16.mxu0 0
        %2095 = vmatpush1.bf16.msra.mxu0 %v1509
        %2096 = vmatprep.subr.bf16.mxu0 0
        %2097 = vmatpush1.bf16.msra.mxu0 %v1510
        %2098 = vmatprep.subr.bf16.mxu0 0
        %2099 = vmatpush1.bf16.msra.mxu0 %v1511
        %2100 = vmatprep.subr.bf16.mxu0 0
        %2101 = vmatpush1.bf16.msra.mxu0 %v1512
        %2102 = vmatprep.subr.bf16.mxu0 0
        %2103 = vmatpush1.bf16.msra.mxu0 %v1513
        %2104 = vmatprep.subr.bf16.mxu0 0
        %2105 = vmatpush1.bf16.msra.mxu0 %v1514
        %2106 = vmatprep.subr.bf16.mxu0 0
        %2107 = vmatpush1.bf16.msra.mxu0 %v1515
        %2108 = vmatprep.subr.bf16.mxu0 0
        %2109 = vmatpush1.bf16.msra.mxu0 %v1516
        %2110 = vmatprep.subr.bf16.mxu0 0
        %2111 = vmatpush1.bf16.msra.mxu0 %v1517
        %2112 = vmatprep.subr.bf16.mxu0 0
        %2113 = vmatpush1.bf16.msra.mxu0 %v1518
        %2114 = vmatprep.mubr.bf16.mxu0 %v1006
        %2115 = vmatmul.mubr.bf16.gmra.mrb[0].mxu0 %v1005
        %v2116 = vpop.f32.mrb[0].mxu0
        %v2117 = vadd.f32 %v1956, %v2116
        %v2118 = vpop.f32.mrb[0].mxu0
        %v2119 = vpop.f32.mrb[0].mxu0
        %v2120 = vadd.f32 %v1959, %v2119
        %v2121 = vpop.f32.mrb[0].mxu0
        %2122 = vmatprep.mubr.bf16.mxu0 %v1007
        %2123 = vmatmul.mubr.bf16.gmra.mrb[0].mxu0 %v1006
        %v2124 = vpop.f32.mrb[0].mxu0
        %v2125 = vadd.f32 %v1964, %v2124
        %v2126 = vpop.f32.mrb[0].mxu0
        %v2127 = vpop.f32.mrb[0].mxu0
        %v2128 = vadd.f32 %v1967, %v2127
        %v2129 = vpop.f32.mrb[0].mxu0
        %2130 = vmatprep.mubr.bf16.mxu0 %v1008
        %2131 = vmatmul.mubr.bf16.gmra.mrb[0].mxu0 %v1007
        %v2132 = vpop.f32.mrb[0].mxu0
        %v2133 = vadd.f32 %v1972, %v2132
        %v2134 = vpop.f32.mrb[0].mxu0
        %v2135 = vpop.f32.mrb[0].mxu0
        %v2136 = vadd.f32 %v1975, %v2135
        %v2137 = vpop.f32.mrb[0].mxu0
        %2138 = vmatprep.mubr.bf16.mxu0 %v1009
        %2139 = vmatmul.mubr.bf16.gmra.mrb[0].mxu0 %v1008
        %v2140 = vpop.f32.mrb[0].mxu0
        %v2141 = vadd.f32 %v1980, %v2140
        %v2142 = vpop.f32.mrb[0].mxu0
        %v2143 = vpop.f32.mrb[0].mxu0
        %v2144 = vadd.f32 %v1983, %v2143
        %v2145 = vpop.f32.mrb[0].mxu0
        %2146 = vmatprep.mubr.bf16.mxu0 %v1010
        %2147 = vmatmul.mubr.bf16.gmra.mrb[0].mxu0 %v1009
        %v2148 = vpop.f32.mrb[0].mxu0
        %v2149 = vadd.f32 %v1988, %v2148
        %v2150 = vpop.f32.mrb[0].mxu0
        %v2151 = vpop.f32.mrb[0].mxu0
        %v2152 = vadd.f32 %v1991, %v2151
        %v2153 = vpop.f32.mrb[0].mxu0
        %2154 = vmatprep.mubr.bf16.mxu0 %v1011
        %2155 = vmatmul.mubr.bf16.gmra.mrb[0].mxu0 %v1010
        %v2156 = vpop.f32.mrb[0].mxu0
        %v2157 = vadd.f32 %v1996, %v2156
        %v2158 = vpop.f32.mrb[0].mxu0
        %v2159 = vpop.f32.mrb[0].mxu0
        %v2160 = vadd.f32 %v1999, %v2159
        %v2161 = vpop.f32.mrb[0].mxu0
        %2162 = vmatprep.mubr.bf16.mxu0 %v1012
        %2163 = vmatmul.mubr.bf16.gmra.mrb[0].mxu0 %v1011
        %v2164 = vpop.f32.mrb[0].mxu0
        %v2165 = vadd.f32 %v2004, %v2164
        %v2166 = vpop.f32.mrb[0].mxu0
        %v2167 = vpop.f32.mrb[0].mxu0
        %v2168 = vadd.f32 %v2007, %v2167
        %v2169 = vpop.f32.mrb[0].mxu0
        %2170 = vmatprep.mubr.bf16.mxu0 %v1013
        %2171 = vmatmul.mubr.bf16.gmra.mrb[0].mxu0 %v1012
        %v2172 = vpop.f32.mrb[0].mxu0
        %v2173 = vadd.f32 %v2012, %v2172
        %v2174 = vpop.f32.mrb[0].mxu0
        %v2175 = vpop.f32.mrb[0].mxu0
        %v2176 = vadd.f32 %v2015, %v2175
        %v2177 = vpop.f32.mrb[0].mxu0
        %2178 = vmatprep.mubr.bf16.mxu0 %v1014
        %2179 = vmatmul.mubr.bf16.gmra.mrb[0].mxu0 %v1013
        %v2180 = vpop.f32.mrb[0].mxu0
        %v2181 = vadd.f32 %v2020, %v2180
        %v2182 = vpop.f32.mrb[0].mxu0
        %v2183 = vpop.f32.mrb[0].mxu0
        %v2184 = vadd.f32 %v2023, %v2183
        %v2185 = vpop.f32.mrb[0].mxu0
        %2186 = vmatprep.mubr.bf16.mxu0 %v1015
        %2187 = vmatmul.mubr.bf16.gmra.mrb[0].mxu0 %v1014
        %v2188 = vpop.f32.mrb[0].mxu0
        %v2189 = vadd.f32 %v2028, %v2188
        %v2190 = vpop.f32.mrb[0].mxu0
        %v2191 = vpop.f32.mrb[0].mxu0
        %v2192 = vadd.f32 %v2031, %v2191
        %v2193 = vpop.f32.mrb[0].mxu0
        %2194 = vmatprep.mubr.bf16.mxu0 %v1016
        %2195 = vmatmul.mubr.bf16.gmra.mrb[0].mxu0 %v1015
        %v2196 = vpop.f32.mrb[0].mxu0
        %v2197 = vadd.f32 %v2036, %v2196
        %v2198 = vpop.f32.mrb[0].mxu0
        %v2199 = vpop.f32.mrb[0].mxu0
        %v2200 = vadd.f32 %v2039, %v2199
        %v2201 = vpop.f32.mrb[0].mxu0
        %2202 = vmatprep.mubr.bf16.mxu0 %v1017
        %2203 = vmatmul.mubr.bf16.gmra.mrb[0].mxu0 %v1016
        %v2204 = vpop.f32.mrb[0].mxu0
        %v2205 = vadd.f32 %v2044, %v2204
        %v2206 = vpop.f32.mrb[0].mxu0
        %v2207 = vpop.f32.mrb[0].mxu0
        %v2208 = vadd.f32 %v2047, %v2207
        %v2209 = vpop.f32.mrb[0].mxu0
        %2210 = vmatprep.mubr.bf16.mxu0 %v1018
        %2211 = vmatmul.mubr.bf16.gmra.mrb[0].mxu0 %v1017
        %v2212 = vpop.f32.mrb[0].mxu0
        %v2213 = vadd.f32 %v2052, %v2212
        %v2214 = vpop.f32.mrb[0].mxu0
        %v2215 = vpop.f32.mrb[0].mxu0
        %v2216 = vadd.f32 %v2055, %v2215
        %v2217 = vpop.f32.mrb[0].mxu0
        %2218 = vmatprep.mubr.bf16.mxu0 %v1019
        %2219 = vmatmul.mubr.bf16.gmra.mrb[0].mxu0 %v1018
        %v2220 = vpop.f32.mrb[0].mxu0
        %v2221 = vadd.f32 %v2060, %v2220
        %v2222 = vpop.f32.mrb[0].mxu0
        %v2223 = vpop.f32.mrb[0].mxu0
        %v2224 = vadd.f32 %v2063, %v2223
        %v2225 = vpop.f32.mrb[0].mxu0
        %2226 = vmatprep.mubr.bf16.mxu0 %v1020
        %2227 = vmatmul.mubr.bf16.gmra.mrb[0].mxu0 %v1019
        %v2228 = vpop.f32.mrb[0].mxu0
        %v2229 = vadd.f32 %v2068, %v2228
        %v2230 = vpop.f32.mrb[0].mxu0
        %v2231 = vpop.f32.mrb[0].mxu0
        %v2232 = vadd.f32 %v2071, %v2231
        %v2233 = vpop.f32.mrb[0].mxu0
        %2234 = vmatprep.mubr.bf16.mxu0 %v1021
        %2235 = vmatmul.mubr.bf16.gmra.mrb[0].mxu0 %v1020
        %v2236 = vpop.f32.mrb[0].mxu0
        %v2237 = vadd.f32 %v2076, %v2236
        %v2238 = vpop.f32.mrb[0].mxu0
        %v2239 = vpop.f32.mrb[0].mxu0
        %v2240 = vadd.f32 %v2079, %v2239
        %v2241 = vpop.f32.mrb[0].mxu0
        %2242 = vdwg.mxu0
        %2243 = vmatprep.subr.bf16.mxu0 0
        %2244 = vmatpush1.bf16.msra.mxu0 %v1519
        %2245 = vmatprep.subr.bf16.mxu0 0
        %2246 = vmatpush1.bf16.msra.mxu0 %v1520
        %2247 = vmatprep.subr.bf16.mxu0 0
        %2248 = vmatpush1.bf16.msra.mxu0 %v1521
        %2249 = vmatprep.subr.bf16.mxu0 0
        %2250 = vmatpush1.bf16.msra.mxu0 %v1522
        %2251 = vmatprep.subr.bf16.mxu0 0
        %2252 = vmatpush1.bf16.msra.mxu0 %v1523
        %2253 = vmatprep.subr.bf16.mxu0 0
        %2254 = vmatpush1.bf16.msra.mxu0 %v1524
        %2255 = vmatprep.subr.bf16.mxu0 0
        %2256 = vmatpush1.bf16.msra.mxu0 %v1525
        %2257 = vmatprep.subr.bf16.mxu0 0
        %2258 = vmatpush1.bf16.msra.mxu0 %v1526
        %2259 = vmatprep.subr.bf16.mxu0 0
        %2260 = vmatpush1.bf16.msra.mxu0 0
        %2261 = vmatprep.subr.bf16.mxu0 0
        %2262 = vmatpush1.bf16.msra.mxu0 0
        %2263 = vmatprep.subr.bf16.mxu0 0
        %2264 = vmatpush1.bf16.msra.mxu0 0
        %2265 = vmatprep.subr.bf16.mxu0 0
        %2266 = vmatpush1.bf16.msra.mxu0 0
        %2267 = vmatprep.subr.bf16.mxu0 0
        %2268 = vmatpush1.bf16.msra.mxu0 0
        %2269 = vmatprep.subr.bf16.mxu0 0
        %2270 = vmatpush1.bf16.msra.mxu0 0
        %2271 = vmatprep.subr.bf16.mxu0 0
        %2272 = vmatpush1.bf16.msra.mxu0 0
        %2273 = vmatprep.subr.bf16.mxu0 0
        %2274 = vmatpush1.bf16.msra.mxu0 0
        %2275 = vmatprep.mubr.bf16.mxu0 0
        %2276 = vmatmul.mubr.bf16.gmra.mrb[0].mxu0 %v1007
        %v2277 = vpop.f32.mrb[0].mxu0
        %v2278 = vadd.f32 %v2117, %v2277
        %v2279 = vpop.f32.mrb[0].mxu0
        %v2280 = vpop.f32.mrb[0].mxu0
        %v2281 = vadd.f32 %v2120, %v2280
        %v2282 = vpop.f32.mrb[0].mxu0
        %2283 = vmatprep.mubr.bf16.mxu0 0
        %2284 = vmatmul.mubr.bf16.gmra.mrb[0].mxu0 %v1008
        %v2285 = vpop.f32.mrb[0].mxu0
        %v2286 = vadd.f32 %v2125, %v2285
        %v2287 = vpop.f32.mrb[0].mxu0
        %v2288 = vpop.f32.mrb[0].mxu0
        %v2289 = vadd.f32 %v2128, %v2288
        %v2290 = vpop.f32.mrb[0].mxu0
        %2291 = vmatprep.mubr.bf16.mxu0 0
        %2292 = vmatmul.mubr.bf16.gmra.mrb[0].mxu0 %v1009
        %v2293 = vpop.f32.mrb[0].mxu0
        %v2294 = vadd.f32 %v2133, %v2293
        %v2295 = vpop.f32.mrb[0].mxu0
        %v2296 = vpop.f32.mrb[0].mxu0
        %v2297 = vadd.f32 %v2136, %v2296
        %v2298 = vpop.f32.mrb[0].mxu0
        %2299 = vmatprep.mubr.bf16.mxu0 0
        %2300 = vmatmul.mubr.bf16.gmra.mrb[0].mxu0 %v1010
        %v2301 = vpop.f32.mrb[0].mxu0
        %v2302 = vadd.f32 %v2141, %v2301
        %v2303 = vpop.f32.mrb[0].mxu0
        %v2304 = vpop.f32.mrb[0].mxu0
        %v2305 = vadd.f32 %v2144, %v2304
        %v2306 = vpop.f32.mrb[0].mxu0
        %2307 = vmatprep.mubr.bf16.mxu0 0
        %2308 = vmatmul.mubr.bf16.gmra.mrb[0].mxu0 %v1011
        %v2309 = vpop.f32.mrb[0].mxu0
        %v2310 = vadd.f32 %v2149, %v2309
        %v2311 = vpop.f32.mrb[0].mxu0
        %v2312 = vpop.f32.mrb[0].mxu0
        %v2313 = vadd.f32 %v2152, %v2312
        %v2314 = vpop.f32.mrb[0].mxu0
        %2315 = vmatprep.mubr.bf16.mxu0 0
        %2316 = vmatmul.mubr.bf16.gmra.mrb[0].mxu0 %v1012
        %v2317 = vpop.f32.mrb[0].mxu0
        %v2318 = vadd.f32 %v2157, %v2317
        %v2319 = vpop.f32.mrb[0].mxu0
        %v2320 = vpop.f32.mrb[0].mxu0
        %v2321 = vadd.f32 %v2160, %v2320
        %v2322 = vpop.f32.mrb[0].mxu0
        %2323 = vmatprep.mubr.bf16.mxu0 0
        %2324 = vmatmul.mubr.bf16.gmra.mrb[0].mxu0 %v1013
        %v2325 = vpop.f32.mrb[0].mxu0
        %v2326 = vadd.f32 %v2165, %v2325
        %v2327 = vpop.f32.mrb[0].mxu0
        %v2328 = vpop.f32.mrb[0].mxu0
        %v2329 = vadd.f32 %v2168, %v2328
        %v2330 = vpop.f32.mrb[0].mxu0
        %2331 = vmatprep.mubr.bf16.mxu0 0
        %2332 = vmatmul.mubr.bf16.gmra.mrb[0].mxu0 %v1014
        %v2333 = vpop.f32.mrb[0].mxu0
        %v2334 = vadd.f32 %v2173, %v2333
        %v2335 = vpop.f32.mrb[0].mxu0
        %v2336 = vpop.f32.mrb[0].mxu0
        %v2337 = vadd.f32 %v2176, %v2336
        %v2338 = vpop.f32.mrb[0].mxu0
        %2339 = vmatprep.mubr.bf16.mxu0 0
        %2340 = vmatmul.mubr.bf16.gmra.mrb[0].mxu0 %v1015
        %v2341 = vpop.f32.mrb[0].mxu0
        %v2342 = vadd.f32 %v2181, %v2341
        %v2343 = vpop.f32.mrb[0].mxu0
        %v2344 = vpop.f32.mrb[0].mxu0
        %v2345 = vadd.f32 %v2184, %v2344
        %v2346 = vpop.f32.mrb[0].mxu0
        %2347 = vmatprep.mubr.bf16.mxu0 0
        %2348 = vmatmul.mubr.bf16.gmra.mrb[0].mxu0 %v1016
        %v2349 = vpop.f32.mrb[0].mxu0
        %v2350 = vadd.f32 %v2189, %v2349
        %v2351 = vpop.f32.mrb[0].mxu0
        %v2352 = vpop.f32.mrb[0].mxu0
        %v2353 = vadd.f32 %v2192, %v2352
        %v2354 = vpop.f32.mrb[0].mxu0
        %2355 = vmatprep.mubr.bf16.mxu0 0
        %2356 = vmatmul.mubr.bf16.gmra.mrb[0].mxu0 %v1017
        %v2357 = vpop.f32.mrb[0].mxu0
        %v2358 = vadd.f32 %v2197, %v2357
        %v2359 = vpop.f32.mrb[0].mxu0
        %v2360 = vpop.f32.mrb[0].mxu0
        %v2361 = vadd.f32 %v2200, %v2360
        %v2362 = vpop.f32.mrb[0].mxu0
        %2363 = vmatprep.mubr.bf16.mxu0 0
        %2364 = vmatmul.mubr.bf16.gmra.mrb[0].mxu0 %v1018
        %v2365 = vpop.f32.mrb[0].mxu0
        %v2366 = vadd.f32 %v2205, %v2365
        %v2367 = vpop.f32.mrb[0].mxu0
        %v2368 = vpop.f32.mrb[0].mxu0
        %v2369 = vadd.f32 %v2208, %v2368
        %v2370 = vpop.f32.mrb[0].mxu0
        %2371 = vmatprep.mubr.bf16.mxu0 0
        %2372 = vmatmul.mubr.bf16.gmra.mrb[0].mxu0 %v1019
        %v2373 = vpop.f32.mrb[0].mxu0
        %v2374 = vadd.f32 %v2213, %v2373
        %v2375 = vpop.f32.mrb[0].mxu0
        %v2376 = vpop.f32.mrb[0].mxu0
        %v2377 = vadd.f32 %v2216, %v2376
        %v2378 = vpop.f32.mrb[0].mxu0
        %2379 = vmatprep.mubr.bf16.mxu0 0
        %2380 = vmatmul.mubr.bf16.gmra.mrb[0].mxu0 %v1020
        %v2381 = vpop.f32.mrb[0].mxu0
        %v2382 = vadd.f32 %v2221, %v2381
        %v2383 = vpop.f32.mrb[0].mxu0
        %v2384 = vpop.f32.mrb[0].mxu0
        %v2385 = vadd.f32 %v2224, %v2384
        %v2386 = vpop.f32.mrb[0].mxu0
        %2387 = vmatprep.mubr.bf16.mxu0 0
        %2388 = vmatmul.mubr.bf16.gmra.mrb[0].mxu0 %v1021
        %v2389 = vpop.f32.mrb[0].mxu0
        %v2390 = vadd.f32 %v2229, %v2389
        %v2391 = vpop.f32.mrb[0].mxu0
        %v2392 = vpop.f32.mrb[0].mxu0
        %v2393 = vadd.f32 %v2232, %v2392
        %v2394 = vpop.f32.mrb[0].mxu0
        %2395 = vmatprep.mubr.bf16.mxu0 0
        %2396 = vmatmul.mubr.bf16.gmra.mrb[0].mxu0 %v1022
        %v2397 = vpop.f32.mrb[0].mxu0
        %v2398 = vadd.f32 %v2237, %v2397
        %v2399 = vpop.f32.mrb[0].mxu0
        %v2400 = vpop.f32.mrb[0].mxu0
        %v2401 = vadd.f32 %v2240, %v2400
        %v2402 = vpop.f32.mrb[0].mxu0
        %2403 = vdwg.mxu0
        %v2404 = vld [vmem:[%s6] sm:$0x1]
        %v2406 = vlaneseq
        %v2407 = vshrl.u32 %v2406, 7
        %v2408 = vsub.s32 0, %v2407
        %v2409 = vrot.slane %v2404, %v2408
        %v2411 = vmul.f32 %v2278, %v2409
        %v2412 = vmul.f32 %v2281, %v2409
        %v2413 = vmul.f32 %v2286, %v2409
        %v2414 = vmul.f32 %v2289, %v2409
        %v2415 = vmul.f32 %v2294, %v2409
        %v2416 = vmul.f32 %v2297, %v2409
        %v2417 = vmul.f32 %v2302, %v2409
        %v2418 = vmul.f32 %v2305, %v2409
        %v2419 = vmul.f32 %v2310, %v2409
        %v2420 = vmul.f32 %v2313, %v2409
        %v2421 = vmul.f32 %v2318, %v2409
        %v2422 = vmul.f32 %v2321, %v2409
        %v2423 = vmul.f32 %v2326, %v2409
        %v2424 = vmul.f32 %v2329, %v2409
        %v2425 = vmul.f32 %v2334, %v2409
        %v2426 = vmul.f32 %v2337, %v2409
        %v2427 = vmul.f32 %v2342, %v2409
        %v2428 = vmul.f32 %v2345, %v2409
        %v2429 = vmul.f32 %v2350, %v2409
        %v2430 = vmul.f32 %v2353, %v2409
        %v2431 = vmul.f32 %v2358, %v2409
        %v2432 = vmul.f32 %v2361, %v2409
        %v2433 = vmul.f32 %v2366, %v2409
        %v2434 = vmul.f32 %v2369, %v2409
        %v2435 = vmul.f32 %v2374, %v2409
        %v2436 = vmul.f32 %v2377, %v2409
        %v2437 = vmul.f32 %v2382, %v2409
        %v2438 = vmul.f32 %v2385, %v2409
        %v2439 = vmul.f32 %v2390, %v2409
        %v2440 = vmul.f32 %v2393, %v2409
        %v2441 = vmul.f32 %v2398, %v2409
        %v2442 = vmul.f32 %v2401, %v2409
        %v2443 = vld [vmem:[%s7] sm:$0x1]
        %v2445 = vlaneseq
        %v2446 = vshrl.u32 %v2445, 7
        %v2447 = vsub.s32 0, %v2446
        %v2448 = vrot.slane %v2443, %v2447
        %v2450 = vadd.f32 %v2411, %v2448
        %v2451 = vadd.f32 %v2412, %v2448
        %v2452 = vadd.f32 %v2413, %v2448
        %v2453 = vadd.f32 %v2414, %v2448
        %v2454 = vadd.f32 %v2415, %v2448
        %v2455 = vadd.f32 %v2416, %v2448
        %v2456 = vadd.f32 %v2417, %v2448
        %v2457 = vadd.f32 %v2418, %v2448
        %v2458 = vadd.f32 %v2419, %v2448
        %v2459 = vadd.f32 %v2420, %v2448
        %v2460 = vadd.f32 %v2421, %v2448
        %v2461 = vadd.f32 %v2422, %v2448
        %v2462 = vadd.f32 %v2423, %v2448
        %v2463 = vadd.f32 %v2424, %v2448
        %v2464 = vadd.f32 %v2425, %v2448
        %v2465 = vadd.f32 %v2426, %v2448
        %v2466 = vadd.f32 %v2427, %v2448
        %v2467 = vadd.f32 %v2428, %v2448
        %v2468 = vadd.f32 %v2429, %v2448
        %v2469 = vadd.f32 %v2430, %v2448
        %v2470 = vadd.f32 %v2431, %v2448
        %v2471 = vadd.f32 %v2432, %v2448
        %v2472 = vadd.f32 %v2433, %v2448
        %v2473 = vadd.f32 %v2434, %v2448
        %v2474 = vadd.f32 %v2435, %v2448
        %v2475 = vadd.f32 %v2436, %v2448
        %v2476 = vadd.f32 %v2437, %v2448
        %v2477 = vadd.f32 %v2438, %v2448
        %v2478 = vadd.f32 %v2439, %v2448
        %v2479 = vadd.f32 %v2440, %v2448
        %v2480 = vadd.f32 %v2441, %v2448
        %v2481 = vadd.f32 %v2442, %v2448
        %v2482 = vmax.f32 %v2450, 0.0
        %v2483 = vmax.f32 %v2451, 0.0
        %v2484 = vmax.f32 %v2452, 0.0
        %v2485 = vmax.f32 %v2453, 0.0
        %v2486 = vmax.f32 %v2454, 0.0
        %v2487 = vmax.f32 %v2455, 0.0
        %v2488 = vmax.f32 %v2456, 0.0
        %v2489 = vmax.f32 %v2457, 0.0
        %v2490 = vmax.f32 %v2458, 0.0
        %v2491 = vmax.f32 %v2459, 0.0
        %v2492 = vmax.f32 %v2460, 0.0
        %v2493 = vmax.f32 %v2461, 0.0
        %v2494 = vmax.f32 %v2462, 0.0
        %v2495 = vmax.f32 %v2463, 0.0
        %v2496 = vmax.f32 %v2464, 0.0
        %v2497 = vmax.f32 %v2465, 0.0
        %v2498 = vmax.f32 %v2466, 0.0
        %v2499 = vmax.f32 %v2467, 0.0
        %v2500 = vmax.f32 %v2468, 0.0
        %v2501 = vmax.f32 %v2469, 0.0
        %v2502 = vmax.f32 %v2470, 0.0
        %v2503 = vmax.f32 %v2471, 0.0
        %v2504 = vmax.f32 %v2472, 0.0
        %v2505 = vmax.f32 %v2473, 0.0
        %v2506 = vmax.f32 %v2474, 0.0
        %v2507 = vmax.f32 %v2475, 0.0
        %v2508 = vmax.f32 %v2476, 0.0
        %v2509 = vmax.f32 %v2477, 0.0
        %v2510 = vmax.f32 %v2478, 0.0
        %v2511 = vmax.f32 %v2479, 0.0
        %v2512 = vmax.f32 %v2480, 0.0
        %v2513 = vmax.f32 %v2481, 0.0
        %s2514 = scalar_lea.vmem [#allocation3], 32
        %2515 = vst [vmem:[%s2514 + $0x8] sm:$0xff] %v2482
        %2516 = vst [vmem:[%s2514 + $0x10] sm:$0xff] %v2483
        %2517 = vst [vmem:[%s2514 + $0x28] sm:$0xff] %v2484
        %2518 = vst [vmem:[%s2514 + $0x30] sm:$0xff] %v2485
        %2519 = vst [vmem:[%s2514 + $0x48] sm:$0xff] %v2486
        %2520 = vst [vmem:[%s2514 + $0x50] sm:$0xff] %v2487
        %2521 = vst [vmem:[%s2514 + $0x68] sm:$0xff] %v2488
        %2522 = vst [vmem:[%s2514 + $0x70] sm:$0xff] %v2489
        %2523 = vst [vmem:[%s2514 + $0x88] sm:$0xff] %v2490
        %2524 = vst [vmem:[%s2514 + $0x90] sm:$0xff] %v2491
        %2525 = vst [vmem:[%s2514 + $0xa8] sm:$0xff] %v2492
        %2526 = vst [vmem:[%s2514 + $0xb0] sm:$0xff] %v2493
        %2527 = vst [vmem:[%s2514 + $0xc8] sm:$0xff] %v2494
        %2528 = vst [vmem:[%s2514 + $0xd0] sm:$0xff] %v2495
        %2529 = vst [vmem:[%s2514 + $0xe8] sm:$0xff] %v2496
        %2530 = vst [vmem:[%s2514 + $0xf0] sm:$0xff] %v2497
        %2531 = vst [vmem:[%s2514 + $0x108] sm:$0xff] %v2498
        %2532 = vst [vmem:[%s2514 + $0x110] sm:$0xff] %v2499
        %2533 = vst [vmem:[%s2514 + $0x128] sm:$0xff] %v2500
        %2534 = vst [vmem:[%s2514 + $0x130] sm:$0xff] %v2501
        %2535 = vst [vmem:[%s2514 + $0x148] sm:$0xff] %v2502
        %2536 = vst [vmem:[%s2514 + $0x150] sm:$0xff] %v2503
        %2537 = vst [vmem:[%s2514 + $0x168] sm:$0xff] %v2504
        %2538 = vst [vmem:[%s2514 + $0x170] sm:$0xff] %v2505
        %2539 = vst [vmem:[%s2514 + $0x188] sm:$0xff] %v2506
        %2540 = vst [vmem:[%s2514 + $0x190] sm:$0xff] %v2507
        %2541 = vst [vmem:[%s2514 + $0x1a8] sm:$0xff] %v2508
        %2542 = vst [vmem:[%s2514 + $0x1b0] sm:$0xff] %v2509
        %2543 = vst [vmem:[%s2514 + $0x1c8] sm:$0xff] %v2510
        %2544 = vst [vmem:[%s2514 + $0x1d0] sm:$0xff] %v2511
        %2545 = vst [vmem:[%s2514 + $0x1e8] sm:$0xff] %v2512
        %2546 = vst [vmem:[%s2514 + $0x1f0] sm:$0xff] %v2513
        %v2547 = vld [vmem:[#allocation3 + $0x7] sm:$0xff]
        %v2548 = vld [vmem:[#allocation3 + $0xf] sm:$0xff]
        %v2549 = vld [vmem:[#allocation3 + $0x27] sm:$0xff]
        %v2550 = vld [vmem:[#allocation3 + $0x2f] sm:$0xff]
        %v2551 = vld [vmem:[#allocation3 + $0x47] sm:$0xff]
        %v2552 = vld [vmem:[#allocation3 + $0x4f] sm:$0xff]
        %v2553 = vld [vmem:[#allocation3 + $0x67] sm:$0xff]
        %v2554 = vld [vmem:[#allocation3 + $0x6f] sm:$0xff]
        %v2555 = vld [vmem:[#allocation3 + $0x87] sm:$0xff]
        %v2556 = vld [vmem:[#allocation3 + $0x8f] sm:$0xff]
        %v2557 = vld [vmem:[#allocation3 + $0xa7] sm:$0xff]
        %v2558 = vld [vmem:[#allocation3 + $0xaf] sm:$0xff]
        %v2559 = vld [vmem:[#allocation3 + $0xc7] sm:$0xff]
        %v2560 = vld [vmem:[#allocation3 + $0xcf] sm:$0xff]
        %v2561 = vld [vmem:[#allocation3 + $0xe7] sm:$0xff]
        %v2562 = vld [vmem:[#allocation3 + $0xef] sm:$0xff]
        %v2563 = vld [vmem:[#allocation3 + $0x107] sm:$0xff]
        %v2564 = vld [vmem:[#allocation3 + $0x10f] sm:$0xff]
        %v2565 = vld [vmem:[#allocation3 + $0x127] sm:$0xff]
        %v2566 = vld [vmem:[#allocation3 + $0x12f] sm:$0xff]
        %v2567 = vld [vmem:[#allocation3 + $0x147] sm:$0xff]
        %v2568 = vld [vmem:[#allocation3 + $0x14f] sm:$0xff]
        %v2569 = vld [vmem:[#allocation3 + $0x167] sm:$0xff]
        %v2570 = vld [vmem:[#allocation3 + $0x16f] sm:$0xff]
        %v2571 = vld [vmem:[#allocation3 + $0x187] sm:$0xff]
        %v2572 = vld [vmem:[#allocation3 + $0x18f] sm:$0xff]
        %v2573 = vld [vmem:[#allocation3 + $0x1a7] sm:$0xff]
        %v2574 = vld [vmem:[#allocation3 + $0x1af] sm:$0xff]
        %v2575 = vld [vmem:[#allocation3 + $0x1c7] sm:$0xff]
        %v2576 = vld [vmem:[#allocation3 + $0x1cf] sm:$0xff]
        %v2577 = vld [vmem:[#allocation3 + $0x1e7] sm:$0xff]
        %v2578 = vld [vmem:[#allocation3 + $0x1ef] sm:$0xff]
        %v2579 = vld [vmem:[#allocation3 + $0x207] sm:$0xff]
        %v2580 = vld [vmem:[#allocation3 + $0x20f] sm:$0xff]
        %v2581 = vld [vmem:[#allocation3 + $0x227] sm:$0xff]
        %v2582 = vld [vmem:[#allocation3 + $0x22f] sm:$0xff]
        %v2583 = vpack.c.bf16 %v2548, %v2547
        %v2584 = vpack.c.bf16 %v2550, %v2549
        %v2585 = vpack.c.bf16 %v2552, %v2551
        %v2586 = vpack.c.bf16 %v2554, %v2553
        %v2587 = vpack.c.bf16 %v2556, %v2555
        %v2588 = vpack.c.bf16 %v2558, %v2557
        %v2589 = vpack.c.bf16 %v2560, %v2559
        %v2590 = vpack.c.bf16 %v2562, %v2561
        %v2591 = vpack.c.bf16 %v2564, %v2563
        %v2592 = vpack.c.bf16 %v2566, %v2565
        %v2593 = vpack.c.bf16 %v2568, %v2567
        %v2594 = vpack.c.bf16 %v2570, %v2569
        %v2595 = vpack.c.bf16 %v2572, %v2571
        %v2596 = vpack.c.bf16 %v2574, %v2573
        %v2597 = vpack.c.bf16 %v2576, %v2575
        %v2598 = vpack.c.bf16 %v2578, %v2577
        %v2599 = vpack.c.bf16 %v2580, %v2579
        %v2600 = vpack.c.bf16 %v2582, %v2581
        %v2601 = vld [vmem:[#allocation3 + $0x8] sm:$0xff]
        %v2602 = vld [vmem:[#allocation3 + $0x10] sm:$0xff]
        %v2603 = vld [vmem:[#allocation3 + $0x28] sm:$0xff]
        %v2604 = vld [vmem:[#allocation3 + $0x30] sm:$0xff]
        %v2605 = vld [vmem:[#allocation3 + $0x48] sm:$0xff]
        %v2606 = vld [vmem:[#allocation3 + $0x50] sm:$0xff]
        %v2607 = vld [vmem:[#allocation3 + $0x68] sm:$0xff]
        %v2608 = vld [vmem:[#allocation3 + $0x70] sm:$0xff]
        %v2609 = vld [vmem:[#allocation3 + $0x88] sm:$0xff]
        %v2610 = vld [vmem:[#allocation3 + $0x90] sm:$0xff]
        %v2611 = vld [vmem:[#allocation3 + $0xa8] sm:$0xff]
        %v2612 = vld [vmem:[#allocation3 + $0xb0] sm:$0xff]
        %v2613 = vld [vmem:[#allocation3 + $0xc8] sm:$0xff]
        %v2614 = vld [vmem:[#allocation3 + $0xd0] sm:$0xff]
        %v2615 = vld [vmem:[#allocation3 + $0xe8] sm:$0xff]
        %v2616 = vld [vmem:[#allocation3 + $0xf0] sm:$0xff]
        %v2617 = vld [vmem:[#allocation3 + $0x108] sm:$0xff]
        %v2618 = vld [vmem:[#allocation3 + $0x110] sm:$0xff]
        %v2619 = vld [vmem:[#allocation3 + $0x128] sm:$0xff]
        %v2620 = vld [vmem:[#allocation3 + $0x130] sm:$0xff]
        %v2621 = vld [vmem:[#allocation3 + $0x148] sm:$0xff]
        %v2622 = vld [vmem:[#allocation3 + $0x150] sm:$0xff]
        %v2623 = vld [vmem:[#allocation3 + $0x168] sm:$0xff]
        %v2624 = vld [vmem:[#allocation3 + $0x170] sm:$0xff]
        %v2625 = vld [vmem:[#allocation3 + $0x188] sm:$0xff]
        %v2626 = vld [vmem:[#allocation3 + $0x190] sm:$0xff]
        %v2627 = vld [vmem:[#allocation3 + $0x1a8] sm:$0xff]
        %v2628 = vld [vmem:[#allocation3 + $0x1b0] sm:$0xff]
        %v2629 = vld [vmem:[#allocation3 + $0x1c8] sm:$0xff]
        %v2630 = vld [vmem:[#allocation3 + $0x1d0] sm:$0xff]
        %v2631 = vld [vmem:[#allocation3 + $0x1e8] sm:$0xff]
        %v2632 = vld [vmem:[#allocation3 + $0x1f0] sm:$0xff]
        %v2633 = vld [vmem:[#allocation3 + $0x208] sm:$0xff]
        %v2634 = vld [vmem:[#allocation3 + $0x210] sm:$0xff]
        %v2635 = vld [vmem:[#allocation3 + $0x228] sm:$0xff]
        %v2636 = vld [vmem:[#allocation3 + $0x230] sm:$0xff]
        %v2637 = vpack.c.bf16 %v2602, %v2601
        %v2638 = vpack.c.bf16 %v2604, %v2603
        %v2639 = vpack.c.bf16 %v2606, %v2605
        %v2640 = vpack.c.bf16 %v2608, %v2607
        %v2641 = vpack.c.bf16 %v2610, %v2609
        %v2642 = vpack.c.bf16 %v2612, %v2611
        %v2643 = vpack.c.bf16 %v2614, %v2613
        %v2644 = vpack.c.bf16 %v2616, %v2615
        %v2645 = vpack.c.bf16 %v2618, %v2617
        %v2646 = vpack.c.bf16 %v2620, %v2619
        %v2647 = vpack.c.bf16 %v2622, %v2621
        %v2648 = vpack.c.bf16 %v2624, %v2623
        %v2649 = vpack.c.bf16 %v2626, %v2625
        %v2650 = vpack.c.bf16 %v2628, %v2627
        %v2651 = vpack.c.bf16 %v2630, %v2629
        %v2652 = vpack.c.bf16 %v2632, %v2631
        %v2653 = vpack.c.bf16 %v2634, %v2633
        %v2654 = vpack.c.bf16 %v2636, %v2635
        %v2655 = vld [vmem:[#allocation3 + $0x9] sm:$0xff]
        %v2656 = vld [vmem:[#allocation3 + $0x11] sm:$0xff]
        %v2657 = vld [vmem:[#allocation3 + $0x29] sm:$0xff]
        %v2658 = vld [vmem:[#allocation3 + $0x31] sm:$0xff]
        %v2659 = vld [vmem:[#allocation3 + $0x49] sm:$0xff]
        %v2660 = vld [vmem:[#allocation3 + $0x51] sm:$0xff]
        %v2661 = vld [vmem:[#allocation3 + $0x69] sm:$0xff]
        %v2662 = vld [vmem:[#allocation3 + $0x71] sm:$0xff]
        %v2663 = vld [vmem:[#allocation3 + $0x89] sm:$0xff]
        %v2664 = vld [vmem:[#allocation3 + $0x91] sm:$0xff]
        %v2665 = vld [vmem:[#allocation3 + $0xa9] sm:$0xff]
        %v2666 = vld [vmem:[#allocation3 + $0xb1] sm:$0xff]
        %v2667 = vld [vmem:[#allocation3 + $0xc9] sm:$0xff]
        %v2668 = vld [vmem:[#allocation3 + $0xd1] sm:$0xff]
        %v2669 = vld [vmem:[#allocation3 + $0xe9] sm:$0xff]
        %v2670 = vld [vmem:[#allocation3 + $0xf1] sm:$0xff]
        %v2671 = vld [vmem:[#allocation3 + $0x109] sm:$0xff]
        %v2672 = vld [vmem:[#allocation3 + $0x111] sm:$0xff]
        %v2673 = vld [vmem:[#allocation3 + $0x129] sm:$0xff]
        %v2674 = vld [vmem:[#allocation3 + $0x131] sm:$0xff]
        %v2675 = vld [vmem:[#allocation3 + $0x149] sm:$0xff]
        %v2676 = vld [vmem:[#allocation3 + $0x151] sm:$0xff]
        %v2677 = vld [vmem:[#allocation3 + $0x169] sm:$0xff]
        %v2678 = vld [vmem:[#allocation3 + $0x171] sm:$0xff]
        %v2679 = vld [vmem:[#allocation3 + $0x189] sm:$0xff]
        %v2680 = vld [vmem:[#allocation3 + $0x191] sm:$0xff]
        %v2681 = vld [vmem:[#allocation3 + $0x1a9] sm:$0xff]
        %v2682 = vld [vmem:[#allocation3 + $0x1b1] sm:$0xff]
        %v2683 = vld [vmem:[#allocation3 + $0x1c9] sm:$0xff]
        %v2684 = vld [vmem:[#allocation3 + $0x1d1] sm:$0xff]
        %v2685 = vld [vmem:[#allocation3 + $0x1e9] sm:$0xff]
        %v2686 = vld [vmem:[#allocation3 + $0x1f1] sm:$0xff]
        %v2687 = vld [vmem:[#allocation3 + $0x209] sm:$0xff]
        %v2688 = vld [vmem:[#allocation3 + $0x211] sm:$0xff]
        %v2689 = vld [vmem:[#allocation3 + $0x229] sm:$0xff]
        %v2690 = vld [vmem:[#allocation3 + $0x231] sm:$0xff]
        %v2691 = vpack.c.bf16 %v2656, %v2655
        %v2692 = vpack.c.bf16 %v2658, %v2657
        %v2693 = vpack.c.bf16 %v2660, %v2659
        %v2694 = vpack.c.bf16 %v2662, %v2661
        %v2695 = vpack.c.bf16 %v2664, %v2663
        %v2696 = vpack.c.bf16 %v2666, %v2665
        %v2697 = vpack.c.bf16 %v2668, %v2667
        %v2698 = vpack.c.bf16 %v2670, %v2669
        %v2699 = vpack.c.bf16 %v2672, %v2671
        %v2700 = vpack.c.bf16 %v2674, %v2673
        %v2701 = vpack.c.bf16 %v2676, %v2675
        %v2702 = vpack.c.bf16 %v2678, %v2677
        %v2703 = vpack.c.bf16 %v2680, %v2679
        %v2704 = vpack.c.bf16 %v2682, %v2681
        %v2705 = vpack.c.bf16 %v2684, %v2683
        %v2706 = vpack.c.bf16 %v2686, %v2685
        %v2707 = vpack.c.bf16 %v2688, %v2687
        %v2708 = vpack.c.bf16 %v2690, %v2689
        %v2709 = vld [vmem:[#allocation5] sm:$0xf]
        %v2710 = vld [vmem:[#allocation5 + $0x4] sm:$0xf]
        %v2711 = vld [vmem:[#allocation5 + $0x8] sm:$0xf]
        %v2712 = vld [vmem:[#allocation5 + $0xc] sm:$0xf]
        %v2713 = vld [vmem:[#allocation5 + $0x10] sm:$0xf]
        %v2714 = vld [vmem:[#allocation5 + $0x14] sm:$0xf]
        %v2715 = vld [vmem:[#allocation5 + $0x18] sm:$0xf]
        %v2716 = vld [vmem:[#allocation5 + $0x1c] sm:$0xf]
        %v2717 = vld [vmem:[#allocation5 + $0x20] sm:$0xf]
        %v2718 = vld [vmem:[#allocation5 + $0x24] sm:$0xf]
        %v2719 = vld [vmem:[#allocation5 + $0x28] sm:$0xf]
        %v2720 = vld [vmem:[#allocation5 + $0x2c] sm:$0xf]
        %v2721 = vld [vmem:[#allocation5 + $0x30] sm:$0xf]
        %v2722 = vld [vmem:[#allocation5 + $0x34] sm:$0xf]
        %v2723 = vld [vmem:[#allocation5 + $0x38] sm:$0xf]
        %v2724 = vld [vmem:[#allocation5 + $0x3c] sm:$0xf]
        %v2725 = vld [vmem:[#allocation5 + $0x40] sm:$0xf]
        %v2726 = vld [vmem:[#allocation5 + $0x44] sm:$0xf]
        %v2727 = vld [vmem:[#allocation5 + $0x48] sm:$0xf]
        %v2728 = vld [vmem:[#allocation5 + $0x4c] sm:$0xf]
        %v2729 = vld [vmem:[#allocation5 + $0x50] sm:$0xf]
        %v2730 = vld [vmem:[#allocation5 + $0x54] sm:$0xf]
        %v2731 = vld [vmem:[#allocation5 + $0x58] sm:$0xf]
        %v2732 = vld [vmem:[#allocation5 + $0x5c] sm:$0xf]
        %v2733 = vld [vmem:[#allocation5 + $0x60] sm:$0xf]
        %v2734 = vld [vmem:[#allocation5 + $0x64] sm:$0xf]
        %v2735 = vld [vmem:[#allocation5 + $0x68] sm:$0xf]
        %v2736 = vld [vmem:[#allocation5 + $0x6c] sm:$0xf]
        %v2737 = vld [vmem:[#allocation5 + $0x70] sm:$0xf]
        %v2738 = vld [vmem:[#allocation5 + $0x74] sm:$0xf]
        %v2739 = vld [vmem:[#allocation5 + $0x78] sm:$0xf]
        %v2740 = vld [vmem:[#allocation5 + $0x7c] sm:$0xf]
        %v2741 = vld [vmem:[#allocation5 + $0x80] sm:$0xf]
        %v2742 = vld [vmem:[#allocation5 + $0x84] sm:$0xf]
        %v2743 = vld [vmem:[#allocation5 + $0x88] sm:$0xf]
        %v2744 = vld [vmem:[#allocation5 + $0x8c] sm:$0xf]
        %v2745 = vld [vmem:[#allocation5 + $0x90] sm:$0xf]
        %v2746 = vld [vmem:[#allocation5 + $0x94] sm:$0xf]
        %v2747 = vld [vmem:[#allocation5 + $0x98] sm:$0xf]
        %v2748 = vld [vmem:[#allocation5 + $0x9c] sm:$0xf]
        %v2749 = vld [vmem:[#allocation5 + $0xa0] sm:$0xf]
        %v2750 = vld [vmem:[#allocation5 + $0xa4] sm:$0xf]
        %v2751 = vld [vmem:[#allocation5 + $0xa8] sm:$0xf]
        %v2752 = vld [vmem:[#allocation5 + $0xac] sm:$0xf]
        %v2753 = vld [vmem:[#allocation5 + $0xb0] sm:$0xf]
        %v2754 = vld [vmem:[#allocation5 + $0xb4] sm:$0xf]
        %v2755 = vld [vmem:[#allocation5 + $0xb8] sm:$0xf]
        %v2756 = vld [vmem:[#allocation5 + $0xbc] sm:$0xf]
        %v2757 = vld [vmem:[#allocation5 + $0xc0] sm:$0xf]
        %v2758 = vld [vmem:[#allocation5 + $0xc4] sm:$0xf]
        %v2759 = vld [vmem:[#allocation5 + $0xc8] sm:$0xf]
        %v2760 = vld [vmem:[#allocation5 + $0xcc] sm:$0xf]
        %v2761 = vld [vmem:[#allocation5 + $0xd0] sm:$0xf]
        %v2762 = vld [vmem:[#allocation5 + $0xd4] sm:$0xf]
        %v2763 = vld [vmem:[#allocation5 + $0xd8] sm:$0xf]
        %v2764 = vld [vmem:[#allocation5 + $0xdc] sm:$0xf]
        %v2765 = vld [vmem:[#allocation5 + $0xe0] sm:$0xf]
        %v2766 = vld [vmem:[#allocation5 + $0xe4] sm:$0xf]
        %v2767 = vld [vmem:[#allocation5 + $0xe8] sm:$0xf]
        %v2768 = vld [vmem:[#allocation5 + $0xec] sm:$0xf]
        %v2769 = vld [vmem:[#allocation5 + $0xf0] sm:$0xf]
        %v2770 = vld [vmem:[#allocation5 + $0xf4] sm:$0xf]
        %v2771 = vld [vmem:[#allocation5 + $0xf8] sm:$0xf]
        %v2772 = vld [vmem:[#allocation5 + $0xfc] sm:$0xf]
        %v2773 = vld [vmem:[#allocation5 + $0x100] sm:$0xf]
        %v2774 = vld [vmem:[#allocation5 + $0x104] sm:$0xf]
        %v2775 = vld [vmem:[#allocation5 + $0x108] sm:$0xf]
        %v2776 = vld [vmem:[#allocation5 + $0x10c] sm:$0xf]
        %v2777 = vld [vmem:[#allocation5 + $0x110] sm:$0xf]
        %v2778 = vld [vmem:[#allocation5 + $0x114] sm:$0xf]
        %v2779 = vld [vmem:[#allocation5 + $0x118] sm:$0xf]
        %v2780 = vld [vmem:[#allocation5 + $0x11c] sm:$0xf]
        %v2781 = vld [vmem:[#allocation5 + $0x120] sm:$0xf]
        %v2782 = vld [vmem:[#allocation5 + $0x124] sm:$0xf]
        %v2783 = vld [vmem:[#allocation5 + $0x128] sm:$0xf]
        %v2784 = vld [vmem:[#allocation5 + $0x12c] sm:$0xf]
        %v2785 = vld [vmem:[#allocation5 + $0x130] sm:$0xf]
        %v2786 = vld [vmem:[#allocation5 + $0x134] sm:$0xf]
        %v2787 = vld [vmem:[#allocation5 + $0x138] sm:$0xf]
        %v2788 = vld [vmem:[#allocation5 + $0x13c] sm:$0xf]
        %v2789 = vld [vmem:[#allocation5 + $0x140] sm:$0xf]
        %v2790 = vld [vmem:[#allocation5 + $0x144] sm:$0xf]
        %v2791 = vld [vmem:[#allocation5 + $0x148] sm:$0xf]
        %v2792 = vld [vmem:[#allocation5 + $0x14c] sm:$0xf]
        %v2793 = vld [vmem:[#allocation5 + $0x150] sm:$0xf]
        %v2794 = vld [vmem:[#allocation5 + $0x154] sm:$0xf]
        %v2795 = vld [vmem:[#allocation5 + $0x158] sm:$0xf]
        %v2796 = vld [vmem:[#allocation5 + $0x15c] sm:$0xf]
        %v2797 = vld [vmem:[#allocation5 + $0x160] sm:$0xf]
        %v2798 = vld [vmem:[#allocation5 + $0x164] sm:$0xf]
        %v2799 = vld [vmem:[#allocation5 + $0x168] sm:$0xf]
        %v2800 = vld [vmem:[#allocation5 + $0x16c] sm:$0xf]
        %v2801 = vld [vmem:[#allocation5 + $0x170] sm:$0xf]
        %v2802 = vld [vmem:[#allocation5 + $0x174] sm:$0xf]
        %v2803 = vld [vmem:[#allocation5 + $0x178] sm:$0xf]
        %v2804 = vld [vmem:[#allocation5 + $0x17c] sm:$0xf]
        %v2805 = vld [vmem:[#allocation5 + $0x180] sm:$0xf]
        %v2806 = vld [vmem:[#allocation5 + $0x184] sm:$0xf]
        %v2807 = vld [vmem:[#allocation5 + $0x188] sm:$0xf]
        %v2808 = vld [vmem:[#allocation5 + $0x18c] sm:$0xf]
        %v2809 = vld [vmem:[#allocation5 + $0x190] sm:$0xf]
        %v2810 = vld [vmem:[#allocation5 + $0x194] sm:$0xf]
        %v2811 = vld [vmem:[#allocation5 + $0x198] sm:$0xf]
        %v2812 = vld [vmem:[#allocation5 + $0x19c] sm:$0xf]
        %v2813 = vld [vmem:[#allocation5 + $0x1a0] sm:$0xf]
        %v2814 = vld [vmem:[#allocation5 + $0x1a4] sm:$0xf]
        %v2815 = vld [vmem:[#allocation5 + $0x1a8] sm:$0xf]
        %v2816 = vld [vmem:[#allocation5 + $0x1ac] sm:$0xf]
        %v2817 = vld [vmem:[#allocation5 + $0x1b0] sm:$0xf]
        %v2818 = vld [vmem:[#allocation5 + $0x1b4] sm:$0xf]
        %v2819 = vld [vmem:[#allocation5 + $0x1b8] sm:$0xf]
        %v2820 = vld [vmem:[#allocation5 + $0x1bc] sm:$0xf]
        %v2821 = vld [vmem:[#allocation5 + $0x1c0] sm:$0xf]
        %v2822 = vld [vmem:[#allocation5 + $0x1c4] sm:$0xf]
        %v2823 = vld [vmem:[#allocation5 + $0x1c8] sm:$0xf]
        %v2824 = vld [vmem:[#allocation5 + $0x1cc] sm:$0xf]
        %v2825 = vld [vmem:[#allocation5 + $0x1d0] sm:$0xf]
        %v2826 = vld [vmem:[#allocation5 + $0x1d4] sm:$0xf]
        %v2827 = vld [vmem:[#allocation5 + $0x1d8] sm:$0xf]
        %v2828 = vld [vmem:[#allocation5 + $0x1dc] sm:$0xf]
        %v2829 = vld [vmem:[#allocation5 + $0x1e0] sm:$0xf]
        %v2830 = vld [vmem:[#allocation5 + $0x1e4] sm:$0xf]
        %v2831 = vld [vmem:[#allocation5 + $0x1e8] sm:$0xf]
        %v2832 = vld [vmem:[#allocation5 + $0x1ec] sm:$0xf]
        %v2833 = vld [vmem:[#allocation5 + $0x1f0] sm:$0xf]
        %v2834 = vld [vmem:[#allocation5 + $0x1f4] sm:$0xf]
        %v2835 = vld [vmem:[#allocation5 + $0x1f8] sm:$0xf]
        %v2836 = vld [vmem:[#allocation5 + $0x1fc] sm:$0xf]
        %v2837 = vld [vmem:[#allocation5 + $0x200] sm:$0xf]
        %v2838 = vld [vmem:[#allocation5 + $0x204] sm:$0xf]
        %v2839 = vld [vmem:[#allocation5 + $0x208] sm:$0xf]
        %v2840 = vld [vmem:[#allocation5 + $0x20c] sm:$0xf]
        %v2841 = vld [vmem:[#allocation5 + $0x210] sm:$0xf]
        %v2842 = vld [vmem:[#allocation5 + $0x214] sm:$0xf]
        %v2843 = vld [vmem:[#allocation5 + $0x218] sm:$0xf]
        %v2844 = vld [vmem:[#allocation5 + $0x21c] sm:$0xf]
        %v2845 = vld [vmem:[#allocation5 + $0x220] sm:$0xf]
        %v2846 = vld [vmem:[#allocation5 + $0x224] sm:$0xf]
        %v2847 = vld [vmem:[#allocation5 + $0x228] sm:$0xf]
        %v2848 = vld [vmem:[#allocation5 + $0x22c] sm:$0xf]
        %v2849 = vld [vmem:[#allocation5 + $0x230] sm:$0xf]
        %v2850 = vld [vmem:[#allocation5 + $0x234] sm:$0xf]
        %v2851 = vld [vmem:[#allocation5 + $0x238] sm:$0xf]
        %v2852 = vld [vmem:[#allocation5 + $0x23c] sm:$0xf]
        %v2997 = vunpack.c.l.b16 %v2709
        %v2998 = vunpack.c.l.b16 %v2710
        %v2999 = vunpack.c.l.b16 %v2711
        %v3000 = vunpack.c.l.b16 %v2712
        %v3001 = vunpack.c.l.b16 %v2713
        %v3002 = vunpack.c.l.b16 %v2714
        %v3003 = vunpack.c.l.b16 %v2715
        %v3004 = vunpack.c.l.b16 %v2716
        %v3005 = vunpack.c.l.b16 %v2717
        %v3006 = vunpack.c.l.b16 %v2718
        %v3007 = vunpack.c.l.b16 %v2719
        %v3008 = vunpack.c.l.b16 %v2720
        %v3009 = vunpack.c.l.b16 %v2721
        %v3010 = vunpack.c.l.b16 %v2722
        %v3011 = vunpack.c.l.b16 %v2723
        %v3012 = vunpack.c.l.b16 %v2724
        %v3013 = vunpack.c.l.b16 %v2725
        %v3014 = vunpack.c.l.b16 %v2726
        %v3015 = vunpack.c.l.b16 %v2727
        %v3016 = vunpack.c.l.b16 %v2728
        %v3017 = vunpack.c.l.b16 %v2729
        %v3018 = vunpack.c.l.b16 %v2730
        %v3019 = vunpack.c.l.b16 %v2731
        %v3020 = vunpack.c.l.b16 %v2732
        %v3021 = vunpack.c.l.b16 %v2733
        %v3022 = vunpack.c.l.b16 %v2734
        %v3023 = vunpack.c.l.b16 %v2735
        %v3024 = vunpack.c.l.b16 %v2736
        %v3025 = vunpack.c.l.b16 %v2737
        %v3026 = vunpack.c.l.b16 %v2738
        %v3027 = vunpack.c.l.b16 %v2739
        %v3028 = vunpack.c.l.b16 %v2740
        %v3029 = vunpack.c.l.b16 %v2741
        %v3030 = vunpack.c.l.b16 %v2742
        %v3031 = vunpack.c.l.b16 %v2743
        %v3032 = vunpack.c.l.b16 %v2744
        %v3033 = vunpack.c.l.b16 %v2745
        %v3034 = vunpack.c.l.b16 %v2746
        %v3035 = vunpack.c.l.b16 %v2747
        %v3036 = vunpack.c.l.b16 %v2748
        %v3037 = vunpack.c.l.b16 %v2749
        %v3038 = vunpack.c.l.b16 %v2750
        %v3039 = vunpack.c.l.b16 %v2751
        %v3040 = vunpack.c.l.b16 %v2752
        %v3041 = vunpack.c.l.b16 %v2753
        %v3042 = vunpack.c.l.b16 %v2754
        %v3043 = vunpack.c.l.b16 %v2755
        %v3044 = vunpack.c.l.b16 %v2756
        %v3045 = vunpack.c.l.b16 %v2757
        %v3046 = vunpack.c.l.b16 %v2758
        %v3047 = vunpack.c.l.b16 %v2759
        %v3048 = vunpack.c.l.b16 %v2760
        %v3049 = vunpack.c.l.b16 %v2761
        %v3050 = vunpack.c.l.b16 %v2762
        %v3051 = vunpack.c.l.b16 %v2763
        %v3052 = vunpack.c.l.b16 %v2764
        %v3053 = vunpack.c.l.b16 %v2765
        %v3054 = vunpack.c.l.b16 %v2766
        %v3055 = vunpack.c.l.b16 %v2767
        %v3056 = vunpack.c.l.b16 %v2768
        %v3057 = vunpack.c.l.b16 %v2769
        %v3058 = vunpack.c.l.b16 %v2770
        %v3059 = vunpack.c.l.b16 %v2771
        %v3060 = vunpack.c.l.b16 %v2772
        %v3061 = vunpack.c.l.b16 %v2773
        %v3062 = vunpack.c.l.b16 %v2774
        %v3063 = vunpack.c.l.b16 %v2775
        %v3064 = vunpack.c.l.b16 %v2776
        %v3065 = vunpack.c.l.b16 %v2777
        %v3066 = vunpack.c.l.b16 %v2778
        %v3067 = vunpack.c.l.b16 %v2779
        %v3068 = vunpack.c.l.b16 %v2780
        %v3069 = vunpack.c.l.b16 %v2781
        %v3070 = vunpack.c.l.b16 %v2782
        %v3071 = vunpack.c.l.b16 %v2783
        %v3072 = vunpack.c.l.b16 %v2784
        %v3073 = vunpack.c.l.b16 %v2785
        %v3074 = vunpack.c.l.b16 %v2786
        %v3075 = vunpack.c.l.b16 %v2787
        %v3076 = vunpack.c.l.b16 %v2788
        %v3077 = vunpack.c.l.b16 %v2789
        %v3078 = vunpack.c.l.b16 %v2790
        %v3079 = vunpack.c.l.b16 %v2791
        %v3080 = vunpack.c.l.b16 %v2792
        %v3081 = vunpack.c.l.b16 %v2793
        %v3082 = vunpack.c.l.b16 %v2794
        %v3083 = vunpack.c.l.b16 %v2795
        %v3084 = vunpack.c.l.b16 %v2796
        %v3085 = vunpack.c.l.b16 %v2797
        %v3086 = vunpack.c.l.b16 %v2798
        %v3087 = vunpack.c.l.b16 %v2799
        %v3088 = vunpack.c.l.b16 %v2800
        %v3089 = vunpack.c.l.b16 %v2801
        %v3090 = vunpack.c.l.b16 %v2802
        %v3091 = vunpack.c.l.b16 %v2803
        %v3092 = vunpack.c.l.b16 %v2804
        %v3093 = vunpack.c.l.b16 %v2805
        %v3094 = vunpack.c.l.b16 %v2806
        %v3095 = vunpack.c.l.b16 %v2807
        %v3096 = vunpack.c.l.b16 %v2808
        %v3097 = vunpack.c.l.b16 %v2809
        %v3098 = vunpack.c.l.b16 %v2810
        %v3099 = vunpack.c.l.b16 %v2811
        %v3100 = vunpack.c.l.b16 %v2812
        %v3101 = vunpack.c.l.b16 %v2813
        %v3102 = vunpack.c.l.b16 %v2814
        %v3103 = vunpack.c.l.b16 %v2815
        %v3104 = vunpack.c.l.b16 %v2816
        %v3105 = vunpack.c.l.b16 %v2817
        %v3106 = vunpack.c.l.b16 %v2818
        %v3107 = vunpack.c.l.b16 %v2819
        %v3108 = vunpack.c.l.b16 %v2820
        %v3109 = vunpack.c.l.b16 %v2821
        %v3110 = vunpack.c.l.b16 %v2822
        %v3111 = vunpack.c.l.b16 %v2823
        %v3112 = vunpack.c.l.b16 %v2824
        %v3113 = vunpack.c.l.b16 %v2825
        %v3114 = vunpack.c.l.b16 %v2826
        %v3115 = vunpack.c.l.b16 %v2827
        %v3116 = vunpack.c.l.b16 %v2828
        %v3117 = vunpack.c.l.b16 %v2829
        %v3118 = vunpack.c.l.b16 %v2830
        %v3119 = vunpack.c.l.b16 %v2831
        %v3120 = vunpack.c.l.b16 %v2832
        %v3121 = vunpack.c.l.b16 %v2833
        %v3122 = vunpack.c.l.b16 %v2834
        %v3123 = vunpack.c.l.b16 %v2835
        %v3124 = vunpack.c.l.b16 %v2836
        %v3125 = vunpack.c.l.b16 %v2837
        %v3126 = vunpack.c.l.b16 %v2838
        %v3127 = vunpack.c.l.b16 %v2839
        %v3128 = vunpack.c.l.b16 %v2840
        %v3129 = vunpack.c.l.b16 %v2841
        %v3130 = vunpack.c.l.b16 %v2842
        %v3131 = vunpack.c.l.b16 %v2843
        %v3132 = vunpack.c.l.b16 %v2844
        %v3133 = vunpack.c.l.b16 %v2845
        %v3134 = vunpack.c.l.b16 %v2846
        %v3135 = vunpack.c.l.b16 %v2847
        %v3136 = vunpack.c.l.b16 %v2848
        %v3137 = vunpack.c.l.b16 %v2849
        %v3138 = vunpack.c.l.b16 %v2850
        %v3139 = vunpack.c.l.b16 %v2851
        %v3140 = vunpack.c.l.b16 %v2852
        %v3141 = vpack.c.b16 %v2998, %v2997
        %v3142 = vpack.c.b16 %v3000, %v2999
        %v3143 = vpack.c.b16 %v3002, %v3001
        %v3144 = vpack.c.b16 %v3004, %v3003
        %v3145 = vpack.c.b16 %v3006, %v3005
        %v3146 = vpack.c.b16 %v3008, %v3007
        %v3147 = vpack.c.b16 %v3010, %v3009
        %v3148 = vpack.c.b16 %v3012, %v3011
        %v3149 = vpack.c.b16 %v3014, %v3013
        %v3150 = vpack.c.b16 %v3016, %v3015
        %v3151 = vpack.c.b16 %v3018, %v3017
        %v3152 = vpack.c.b16 %v3020, %v3019
        %v3153 = vpack.c.b16 %v3022, %v3021
        %v3154 = vpack.c.b16 %v3024, %v3023
        %v3155 = vpack.c.b16 %v3026, %v3025
        %v3156 = vpack.c.b16 %v3028, %v3027
        %v3157 = vpack.c.b16 %v3030, %v3029
        %v3158 = vpack.c.b16 %v3032, %v3031
        %v3159 = vpack.c.b16 %v3034, %v3033
        %v3160 = vpack.c.b16 %v3036, %v3035
        %v3161 = vpack.c.b16 %v3038, %v3037
        %v3162 = vpack.c.b16 %v3040, %v3039
        %v3163 = vpack.c.b16 %v3042, %v3041
        %v3164 = vpack.c.b16 %v3044, %v3043
        %v3165 = vpack.c.b16 %v3046, %v3045
        %v3166 = vpack.c.b16 %v3048, %v3047
        %v3167 = vpack.c.b16 %v3050, %v3049
        %v3168 = vpack.c.b16 %v3052, %v3051
        %v3169 = vpack.c.b16 %v3054, %v3053
        %v3170 = vpack.c.b16 %v3056, %v3055
        %v3171 = vpack.c.b16 %v3058, %v3057
        %v3172 = vpack.c.b16 %v3060, %v3059
        %v3173 = vpack.c.b16 %v3062, %v3061
        %v3174 = vpack.c.b16 %v3064, %v3063
        %v3175 = vpack.c.b16 %v3066, %v3065
        %v3176 = vpack.c.b16 %v3068, %v3067
        %v3177 = vpack.c.b16 %v3070, %v3069
        %v3178 = vpack.c.b16 %v3072, %v3071
        %v3179 = vpack.c.b16 %v3074, %v3073
        %v3180 = vpack.c.b16 %v3076, %v3075
        %v3181 = vpack.c.b16 %v3078, %v3077
        %v3182 = vpack.c.b16 %v3080, %v3079
        %v3183 = vpack.c.b16 %v3082, %v3081
        %v3184 = vpack.c.b16 %v3084, %v3083
        %v3185 = vpack.c.b16 %v3086, %v3085
        %v3186 = vpack.c.b16 %v3088, %v3087
        %v3187 = vpack.c.b16 %v3090, %v3089
        %v3188 = vpack.c.b16 %v3092, %v3091
        %v3189 = vpack.c.b16 %v3094, %v3093
        %v3190 = vpack.c.b16 %v3096, %v3095
        %v3191 = vpack.c.b16 %v3098, %v3097
        %v3192 = vpack.c.b16 %v3100, %v3099
        %v3193 = vpack.c.b16 %v3102, %v3101
        %v3194 = vpack.c.b16 %v3104, %v3103
        %v3195 = vpack.c.b16 %v3106, %v3105
        %v3196 = vpack.c.b16 %v3108, %v3107
        %v3197 = vpack.c.b16 %v3110, %v3109
        %v3198 = vpack.c.b16 %v3112, %v3111
        %v3199 = vpack.c.b16 %v3114, %v3113
        %v3200 = vpack.c.b16 %v3116, %v3115
        %v3201 = vpack.c.b16 %v3118, %v3117
        %v3202 = vpack.c.b16 %v3120, %v3119
        %v3203 = vpack.c.b16 %v3122, %v3121
        %v3204 = vpack.c.b16 %v3124, %v3123
        %v3205 = vpack.c.b16 %v3126, %v3125
        %v3206 = vpack.c.b16 %v3128, %v3127
        %v3207 = vpack.c.b16 %v3130, %v3129
        %v3208 = vpack.c.b16 %v3132, %v3131
        %v3209 = vpack.c.b16 %v3134, %v3133
        %v3210 = vpack.c.b16 %v3136, %v3135
        %v3211 = vpack.c.b16 %v3138, %v3137
        %v3212 = vpack.c.b16 %v3140, %v3139
        %3285 = vmatprep.subr.bf16.mxu0 0
        %3286 = vmatpush1.bf16.msra.mxu0 %v3141
        %3287 = vmatprep.subr.bf16.mxu0 0
        %3288 = vmatpush1.bf16.msra.mxu0 %v3142
        %3289 = vmatprep.subr.bf16.mxu0 0
        %3290 = vmatpush1.bf16.msra.mxu0 %v3143
        %3291 = vmatprep.subr.bf16.mxu0 0
        %3292 = vmatpush1.bf16.msra.mxu0 %v3144
        %3293 = vmatprep.subr.bf16.mxu0 0
        %3294 = vmatpush1.bf16.msra.mxu0 %v3145
        %3295 = vmatprep.subr.bf16.mxu0 0
        %3296 = vmatpush1.bf16.msra.mxu0 %v3146
        %3297 = vmatprep.subr.bf16.mxu0 0
        %3298 = vmatpush1.bf16.msra.mxu0 %v3147
        %3299 = vmatprep.subr.bf16.mxu0 0
        %3300 = vmatpush1.bf16.msra.mxu0 %v3148
        %3301 = vmatprep.subr.bf16.mxu0 0
        %3302 = vmatpush1.bf16.msra.mxu0 %v3149
        %3303 = vmatprep.subr.bf16.mxu0 0
        %3304 = vmatpush1.bf16.msra.mxu0 %v3150
        %3305 = vmatprep.subr.bf16.mxu0 0
        %3306 = vmatpush1.bf16.msra.mxu0 %v3151
        %3307 = vmatprep.subr.bf16.mxu0 0
        %3308 = vmatpush1.bf16.msra.mxu0 %v3152
        %3309 = vmatprep.subr.bf16.mxu0 0
        %3310 = vmatpush1.bf16.msra.mxu0 %v3153
        %3311 = vmatprep.subr.bf16.mxu0 0
        %3312 = vmatpush1.bf16.msra.mxu0 %v3154
        %3313 = vmatprep.subr.bf16.mxu0 0
        %3314 = vmatpush1.bf16.msra.mxu0 %v3155
        %3315 = vmatprep.subr.bf16.mxu0 0
        %3316 = vmatpush1.bf16.msra.mxu0 %v3156
        %3317 = vmatprep.mubr.bf16.mxu0 %v2584
        %3318 = vmatmul.mubr.bf16.gmra.mrb[0].mxu0 %v2583
        %v3319 = vpop.f32.mrb[0].mxu0
        %v3320 = vadd.f32 0.0, %v3319
        %v3321 = vpop.f32.mrb[0].mxu0
        %v3322 = vpop.f32.mrb[0].mxu0
        %v3323 = vadd.f32 0.0, %v3322
        %v3324 = vpop.f32.mrb[0].mxu0
        %3325 = vmatprep.mubr.bf16.mxu0 %v2585
        %3326 = vmatmul.mubr.bf16.gmra.mrb[0].mxu0 %v2584
        %v3327 = vpop.f32.mrb[0].mxu0
        %v3328 = vadd.f32 0.0, %v3327
        %v3329 = vpop.f32.mrb[0].mxu0
        %v3330 = vpop.f32.mrb[0].mxu0
        %v3331 = vadd.f32 0.0, %v3330
        %v3332 = vpop.f32.mrb[0].mxu0
        %3333 = vmatprep.mubr.bf16.mxu0 %v2586
        %3334 = vmatmul.mubr.bf16.gmra.mrb[0].mxu0 %v2585
        %v3335 = vpop.f32.mrb[0].mxu0
        %v3336 = vadd.f32 0.0, %v3335
        %v3337 = vpop.f32.mrb[0].mxu0
        %v3338 = vpop.f32.mrb[0].mxu0
        %v3339 = vadd.f32 0.0, %v3338
        %v3340 = vpop.f32.mrb[0].mxu0
        %3341 = vmatprep.mubr.bf16.mxu0 %v2587
        %3342 = vmatmul.mubr.bf16.gmra.mrb[0].mxu0 %v2586
        %v3343 = vpop.f32.mrb[0].mxu0
        %v3344 = vadd.f32 0.0, %v3343
        %v3345 = vpop.f32.mrb[0].mxu0
        %v3346 = vpop.f32.mrb[0].mxu0
        %v3347 = vadd.f32 0.0, %v3346
        %v3348 = vpop.f32.mrb[0].mxu0
        %3349 = vmatprep.mubr.bf16.mxu0 %v2588
        %3350 = vmatmul.mubr.bf16.gmra.mrb[0].mxu0 %v2587
        %v3351 = vpop.f32.mrb[0].mxu0
        %v3352 = vadd.f32 0.0, %v3351
        %v3353 = vpop.f32.mrb[0].mxu0
        %v3354 = vpop.f32.mrb[0].mxu0
        %v3355 = vadd.f32 0.0, %v3354
        %v3356 = vpop.f32.mrb[0].mxu0
        %3357 = vmatprep.mubr.bf16.mxu0 %v2589
        %3358 = vmatmul.mubr.bf16.gmra.mrb[0].mxu0 %v2588
        %v3359 = vpop.f32.mrb[0].mxu0
        %v3360 = vadd.f32 0.0, %v3359
        %v3361 = vpop.f32.mrb[0].mxu0
        %v3362 = vpop.f32.mrb[0].mxu0
        %v3363 = vadd.f32 0.0, %v3362
        %v3364 = vpop.f32.mrb[0].mxu0
        %3365 = vmatprep.mubr.bf16.mxu0 %v2590
        %3366 = vmatmul.mubr.bf16.gmra.mrb[0].mxu0 %v2589
        %v3367 = vpop.f32.mrb[0].mxu0
        %v3368 = vadd.f32 0.0, %v3367
        %v3369 = vpop.f32.mrb[0].mxu0
        %v3370 = vpop.f32.mrb[0].mxu0
        %v3371 = vadd.f32 0.0, %v3370
        %v3372 = vpop.f32.mrb[0].mxu0
        %3373 = vmatprep.mubr.bf16.mxu0 %v2591
        %3374 = vmatmul.mubr.bf16.gmra.mrb[0].mxu0 %v2590
        %v3375 = vpop.f32.mrb[0].mxu0
        %v3376 = vadd.f32 0.0, %v3375
        %v3377 = vpop.f32.mrb[0].mxu0
        %v3378 = vpop.f32.mrb[0].mxu0
        %v3379 = vadd.f32 0.0, %v3378
        %v3380 = vpop.f32.mrb[0].mxu0
        %3381 = vmatprep.mubr.bf16.mxu0 %v2592
        %3382 = vmatmul.mubr.bf16.gmra.mrb[0].mxu0 %v2591
        %v3383 = vpop.f32.mrb[0].mxu0
        %v3384 = vadd.f32 0.0, %v3383
        %v3385 = vpop.f32.mrb[0].mxu0
        %v3386 = vpop.f32.mrb[0].mxu0
        %v3387 = vadd.f32 0.0, %v3386
        %v3388 = vpop.f32.mrb[0].mxu0
        %3389 = vmatprep.mubr.bf16.mxu0 %v2593
        %3390 = vmatmul.mubr.bf16.gmra.mrb[0].mxu0 %v2592
        %v3391 = vpop.f32.mrb[0].mxu0
        %v3392 = vadd.f32 0.0, %v3391
        %v3393 = vpop.f32.mrb[0].mxu0
        %v3394 = vpop.f32.mrb[0].mxu0
        %v3395 = vadd.f32 0.0, %v3394
        %v3396 = vpop.f32.mrb[0].mxu0
        %3397 = vmatprep.mubr.bf16.mxu0 %v2594
        %3398 = vmatmul.mubr.bf16.gmra.mrb[0].mxu0 %v2593
        %v3399 = vpop.f32.mrb[0].mxu0
        %v3400 = vadd.f32 0.0, %v3399
        %v3401 = vpop.f32.mrb[0].mxu0
        %v3402 = vpop.f32.mrb[0].mxu0
        %v3403 = vadd.f32 0.0, %v3402
        %v3404 = vpop.f32.mrb[0].mxu0
        %3405 = vmatprep.mubr.bf16.mxu0 %v2595
        %3406 = vmatmul.mubr.bf16.gmra.mrb[0].mxu0 %v2594
        %v3407 = vpop.f32.mrb[0].mxu0
        %v3408 = vadd.f32 0.0, %v3407
        %v3409 = vpop.f32.mrb[0].mxu0
        %v3410 = vpop.f32.mrb[0].mxu0
        %v3411 = vadd.f32 0.0, %v3410
        %v3412 = vpop.f32.mrb[0].mxu0
        %3413 = vmatprep.mubr.bf16.mxu0 %v2596
        %3414 = vmatmul.mubr.bf16.gmra.mrb[0].mxu0 %v2595
        %v3415 = vpop.f32.mrb[0].mxu0
        %v3416 = vadd.f32 0.0, %v3415
        %v3417 = vpop.f32.mrb[0].mxu0
        %v3418 = vpop.f32.mrb[0].mxu0
        %v3419 = vadd.f32 0.0, %v3418
        %v3420 = vpop.f32.mrb[0].mxu0
        %3421 = vmatprep.mubr.bf16.mxu0 %v2597
        %3422 = vmatmul.mubr.bf16.gmra.mrb[0].mxu0 %v2596
        %v3423 = vpop.f32.mrb[0].mxu0
        %v3424 = vadd.f32 0.0, %v3423
        %v3425 = vpop.f32.mrb[0].mxu0
        %v3426 = vpop.f32.mrb[0].mxu0
        %v3427 = vadd.f32 0.0, %v3426
        %v3428 = vpop.f32.mrb[0].mxu0
        %3429 = vmatprep.mubr.bf16.mxu0 %v2598
        %3430 = vmatmul.mubr.bf16.gmra.mrb[0].mxu0 %v2597
        %v3431 = vpop.f32.mrb[0].mxu0
        %v3432 = vadd.f32 0.0, %v3431
        %v3433 = vpop.f32.mrb[0].mxu0
        %v3434 = vpop.f32.mrb[0].mxu0
        %v3435 = vadd.f32 0.0, %v3434
        %v3436 = vpop.f32.mrb[0].mxu0
        %3437 = vmatprep.mubr.bf16.mxu0 %v2599
        %3438 = vmatmul.mubr.bf16.gmra.mrb[0].mxu0 %v2598
        %v3439 = vpop.f32.mrb[0].mxu0
        %v3440 = vadd.f32 0.0, %v3439
        %v3441 = vpop.f32.mrb[0].mxu0
        %v3442 = vpop.f32.mrb[0].mxu0
        %v3443 = vadd.f32 0.0, %v3442
        %v3444 = vpop.f32.mrb[0].mxu0
        %3445 = vdwg.mxu0
        %3446 = vmatprep.subr.bf16.mxu0 0
        %3447 = vmatpush1.bf16.msra.mxu0 %v3157
        %3448 = vmatprep.subr.bf16.mxu0 0
        %3449 = vmatpush1.bf16.msra.mxu0 %v3158
        %3450 = vmatprep.subr.bf16.mxu0 0
        %3451 = vmatpush1.bf16.msra.mxu0 %v3159
        %3452 = vmatprep.subr.bf16.mxu0 0
        %3453 = vmatpush1.bf16.msra.mxu0 %v3160
        %3454 = vmatprep.subr.bf16.mxu0 0
        %3455 = vmatpush1.bf16.msra.mxu0 %v3161
        %3456 = vmatprep.subr.bf16.mxu0 0
        %3457 = vmatpush1.bf16.msra.mxu0 %v3162
        %3458 = vmatprep.subr.bf16.mxu0 0
        %3459 = vmatpush1.bf16.msra.mxu0 %v3163
        %3460 = vmatprep.subr.bf16.mxu0 0
        %3461 = vmatpush1.bf16.msra.mxu0 %v3164
        %3462 = vmatprep.subr.bf16.mxu0 0
        %3463 = vmatpush1.bf16.msra.mxu0 %v3165
        %3464 = vmatprep.subr.bf16.mxu0 0
        %3465 = vmatpush1.bf16.msra.mxu0 %v3166
        %3466 = vmatprep.subr.bf16.mxu0 0
        %3467 = vmatpush1.bf16.msra.mxu0 %v3167
        %3468 = vmatprep.subr.bf16.mxu0 0
        %3469 = vmatpush1.bf16.msra.mxu0 %v3168
        %3470 = vmatprep.subr.bf16.mxu0 0
        %3471 = vmatpush1.bf16.msra.mxu0 %v3169
        %3472 = vmatprep.subr.bf16.mxu0 0
        %3473 = vmatpush1.bf16.msra.mxu0 %v3170
        %3474 = vmatprep.subr.bf16.mxu0 0
        %3475 = vmatpush1.bf16.msra.mxu0 %v3171
        %3476 = vmatprep.subr.bf16.mxu0 0
        %3477 = vmatpush1.bf16.msra.mxu0 %v3172
        %3478 = vmatprep.mubr.bf16.mxu0 %v2637
        %3479 = vmatmul.mubr.bf16.gmra.mrb[0].mxu0 %v2585
        %v3480 = vpop.f32.mrb[0].mxu0
        %v3481 = vadd.f32 %v3320, %v3480
        %v3482 = vpop.f32.mrb[0].mxu0
        %v3483 = vpop.f32.mrb[0].mxu0
        %v3484 = vadd.f32 %v3323, %v3483
        %v3485 = vpop.f32.mrb[0].mxu0
        %3486 = vmatprep.mubr.bf16.mxu0 %v2638
        %3487 = vmatmul.mubr.bf16.gmra.mrb[0].mxu0 %v2586
        %v3488 = vpop.f32.mrb[0].mxu0
        %v3489 = vadd.f32 %v3328, %v3488
        %v3490 = vpop.f32.mrb[0].mxu0
        %v3491 = vpop.f32.mrb[0].mxu0
        %v3492 = vadd.f32 %v3331, %v3491
        %v3493 = vpop.f32.mrb[0].mxu0
        %3494 = vmatprep.mubr.bf16.mxu0 %v2639
        %3495 = vmatmul.mubr.bf16.gmra.mrb[0].mxu0 %v2587
        %v3496 = vpop.f32.mrb[0].mxu0
        %v3497 = vadd.f32 %v3336, %v3496
        %v3498 = vpop.f32.mrb[0].mxu0
        %v3499 = vpop.f32.mrb[0].mxu0
        %v3500 = vadd.f32 %v3339, %v3499
        %v3501 = vpop.f32.mrb[0].mxu0
        %3502 = vmatprep.mubr.bf16.mxu0 %v2640
        %3503 = vmatmul.mubr.bf16.gmra.mrb[0].mxu0 %v2588
        %v3504 = vpop.f32.mrb[0].mxu0
        %v3505 = vadd.f32 %v3344, %v3504
        %v3506 = vpop.f32.mrb[0].mxu0
        %v3507 = vpop.f32.mrb[0].mxu0
        %v3508 = vadd.f32 %v3347, %v3507
        %v3509 = vpop.f32.mrb[0].mxu0
        %3510 = vmatprep.mubr.bf16.mxu0 %v2641
        %3511 = vmatmul.mubr.bf16.gmra.mrb[0].mxu0 %v2589
        %v3512 = vpop.f32.mrb[0].mxu0
        %v3513 = vadd.f32 %v3352, %v3512
        %v3514 = vpop.f32.mrb[0].mxu0
        %v3515 = vpop.f32.mrb[0].mxu0
        %v3516 = vadd.f32 %v3355, %v3515
        %v3517 = vpop.f32.mrb[0].mxu0
        %3518 = vmatprep.mubr.bf16.mxu0 %v2642
        %3519 = vmatmul.mubr.bf16.gmra.mrb[0].mxu0 %v2590
        %v3520 = vpop.f32.mrb[0].mxu0
        %v3521 = vadd.f32 %v3360, %v3520
        %v3522 = vpop.f32.mrb[0].mxu0
        %v3523 = vpop.f32.mrb[0].mxu0
        %v3524 = vadd.f32 %v3363, %v3523
        %v3525 = vpop.f32.mrb[0].mxu0
        %3526 = vmatprep.mubr.bf16.mxu0 %v2643
        %3527 = vmatmul.mubr.bf16.gmra.mrb[0].mxu0 %v2591
        %v3528 = vpop.f32.mrb[0].mxu0
        %v3529 = vadd.f32 %v3368, %v3528
        %v3530 = vpop.f32.mrb[0].mxu0
        %v3531 = vpop.f32.mrb[0].mxu0
        %v3532 = vadd.f32 %v3371, %v3531
        %v3533 = vpop.f32.mrb[0].mxu0
        %3534 = vmatprep.mubr.bf16.mxu0 %v2644
        %3535 = vmatmul.mubr.bf16.gmra.mrb[0].mxu0 %v2592
        %v3536 = vpop.f32.mrb[0].mxu0
        %v3537 = vadd.f32 %v3376, %v3536
        %v3538 = vpop.f32.mrb[0].mxu0
        %v3539 = vpop.f32.mrb[0].mxu0
        %v3540 = vadd.f32 %v3379, %v3539
        %v3541 = vpop.f32.mrb[0].mxu0
        %3542 = vmatprep.mubr.bf16.mxu0 %v2645
        %3543 = vmatmul.mubr.bf16.gmra.mrb[0].mxu0 %v2593
        %v3544 = vpop.f32.mrb[0].mxu0
        %v3545 = vadd.f32 %v3384, %v3544
        %v3546 = vpop.f32.mrb[0].mxu0
        %v3547 = vpop.f32.mrb[0].mxu0
        %v3548 = vadd.f32 %v3387, %v3547
        %v3549 = vpop.f32.mrb[0].mxu0
        %3550 = vmatprep.mubr.bf16.mxu0 %v2646
        %3551 = vmatmul.mubr.bf16.gmra.mrb[0].mxu0 %v2594
        %v3552 = vpop.f32.mrb[0].mxu0
        %v3553 = vadd.f32 %v3392, %v3552
        %v3554 = vpop.f32.mrb[0].mxu0
        %v3555 = vpop.f32.mrb[0].mxu0
        %v3556 = vadd.f32 %v3395, %v3555
        %v3557 = vpop.f32.mrb[0].mxu0
        %3558 = vmatprep.mubr.bf16.mxu0 %v2647
        %3559 = vmatmul.mubr.bf16.gmra.mrb[0].mxu0 %v2595
        %v3560 = vpop.f32.mrb[0].mxu0
        %v3561 = vadd.f32 %v3400, %v3560
        %v3562 = vpop.f32.mrb[0].mxu0
        %v3563 = vpop.f32.mrb[0].mxu0
        %v3564 = vadd.f32 %v3403, %v3563
        %v3565 = vpop.f32.mrb[0].mxu0
        %3566 = vmatprep.mubr.bf16.mxu0 %v2648
        %3567 = vmatmul.mubr.bf16.gmra.mrb[0].mxu0 %v2596
        %v3568 = vpop.f32.mrb[0].mxu0
        %v3569 = vadd.f32 %v3408, %v3568
        %v3570 = vpop.f32.mrb[0].mxu0
        %v3571 = vpop.f32.mrb[0].mxu0
        %v3572 = vadd.f32 %v3411, %v3571
        %v3573 = vpop.f32.mrb[0].mxu0
        %3574 = vmatprep.mubr.bf16.mxu0 %v2649
        %3575 = vmatmul.mubr.bf16.gmra.mrb[0].mxu0 %v2597
        %v3576 = vpop.f32.mrb[0].mxu0
        %v3577 = vadd.f32 %v3416, %v3576
        %v3578 = vpop.f32.mrb[0].mxu0
        %v3579 = vpop.f32.mrb[0].mxu0
        %v3580 = vadd.f32 %v3419, %v3579
        %v3581 = vpop.f32.mrb[0].mxu0
        %3582 = vmatprep.mubr.bf16.mxu0 %v2650
        %3583 = vmatmul.mubr.bf16.gmra.mrb[0].mxu0 %v2598
        %v3584 = vpop.f32.mrb[0].mxu0
        %v3585 = vadd.f32 %v3424, %v3584
        %v3586 = vpop.f32.mrb[0].mxu0
        %v3587 = vpop.f32.mrb[0].mxu0
        %v3588 = vadd.f32 %v3427, %v3587
        %v3589 = vpop.f32.mrb[0].mxu0
        %3590 = vmatprep.mubr.bf16.mxu0 %v2651
        %3591 = vmatmul.mubr.bf16.gmra.mrb[0].mxu0 %v2599
        %v3592 = vpop.f32.mrb[0].mxu0
        %v3593 = vadd.f32 %v3432, %v3592
        %v3594 = vpop.f32.mrb[0].mxu0
        %v3595 = vpop.f32.mrb[0].mxu0
        %v3596 = vadd.f32 %v3435, %v3595
        %v3597 = vpop.f32.mrb[0].mxu0
        %3598 = vmatprep.mubr.bf16.mxu0 %v2652
        %3599 = vmatmul.mubr.bf16.gmra.mrb[0].mxu0 %v2600
        %v3600 = vpop.f32.mrb[0].mxu0
        %v3601 = vadd.f32 %v3440, %v3600
        %v3602 = vpop.f32.mrb[0].mxu0
        %v3603 = vpop.f32.mrb[0].mxu0
        %v3604 = vadd.f32 %v3443, %v3603
        %v3605 = vpop.f32.mrb[0].mxu0
        %3606 = vdwg.mxu0
        %3607 = vmatprep.subr.bf16.mxu0 0
        %3608 = vmatpush1.bf16.msra.mxu0 %v3173
        %3609 = vmatprep.subr.bf16.mxu0 0
        %3610 = vmatpush1.bf16.msra.mxu0 %v3174
        %3611 = vmatprep.subr.bf16.mxu0 0
        %3612 = vmatpush1.bf16.msra.mxu0 %v3175
        %3613 = vmatprep.subr.bf16.mxu0 0
        %3614 = vmatpush1.bf16.msra.mxu0 %v3176
        %3615 = vmatprep.subr.bf16.mxu0 0
        %3616 = vmatpush1.bf16.msra.mxu0 %v3177
        %3617 = vmatprep.subr.bf16.mxu0 0
        %3618 = vmatpush1.bf16.msra.mxu0 %v3178
        %3619 = vmatprep.subr.bf16.mxu0 0
        %3620 = vmatpush1.bf16.msra.mxu0 %v3179
        %3621 = vmatprep.subr.bf16.mxu0 0
        %3622 = vmatpush1.bf16.msra.mxu0 %v3180
        %3623 = vmatprep.subr.bf16.mxu0 0
        %3624 = vmatpush1.bf16.msra.mxu0 %v3181
        %3625 = vmatprep.subr.bf16.mxu0 0
        %3626 = vmatpush1.bf16.msra.mxu0 %v3182
        %3627 = vmatprep.subr.bf16.mxu0 0
        %3628 = vmatpush1.bf16.msra.mxu0 %v3183
        %3629 = vmatprep.subr.bf16.mxu0 0
        %3630 = vmatpush1.bf16.msra.mxu0 %v3184
        %3631 = vmatprep.subr.bf16.mxu0 0
        %3632 = vmatpush1.bf16.msra.mxu0 %v3185
        %3633 = vmatprep.subr.bf16.mxu0 0
        %3634 = vmatpush1.bf16.msra.mxu0 %v3186
        %3635 = vmatprep.subr.bf16.mxu0 0
        %3636 = vmatpush1.bf16.msra.mxu0 %v3187
        %3637 = vmatprep.subr.bf16.mxu0 0
        %3638 = vmatpush1.bf16.msra.mxu0 %v3188
        %3639 = vmatprep.mubr.bf16.mxu0 %v2639
        %3640 = vmatmul.mubr.bf16.gmra.mrb[0].mxu0 %v2638
        %v3641 = vpop.f32.mrb[0].mxu0
        %v3642 = vadd.f32 %v3481, %v3641
        %v3643 = vpop.f32.mrb[0].mxu0
        %v3644 = vpop.f32.mrb[0].mxu0
        %v3645 = vadd.f32 %v3484, %v3644
        %v3646 = vpop.f32.mrb[0].mxu0
        %3647 = vmatprep.mubr.bf16.mxu0 %v2640
        %3648 = vmatmul.mubr.bf16.gmra.mrb[0].mxu0 %v2639
        %v3649 = vpop.f32.mrb[0].mxu0
        %v3650 = vadd.f32 %v3489, %v3649
        %v3651 = vpop.f32.mrb[0].mxu0
        %v3652 = vpop.f32.mrb[0].mxu0
        %v3653 = vadd.f32 %v3492, %v3652
        %v3654 = vpop.f32.mrb[0].mxu0
        %3655 = vmatprep.mubr.bf16.mxu0 %v2641
        %3656 = vmatmul.mubr.bf16.gmra.mrb[0].mxu0 %v2640
        %v3657 = vpop.f32.mrb[0].mxu0
        %v3658 = vadd.f32 %v3497, %v3657
        %v3659 = vpop.f32.mrb[0].mxu0
        %v3660 = vpop.f32.mrb[0].mxu0
        %v3661 = vadd.f32 %v3500, %v3660
        %v3662 = vpop.f32.mrb[0].mxu0
        %3663 = vmatprep.mubr.bf16.mxu0 %v2642
        %3664 = vmatmul.mubr.bf16.gmra.mrb[0].mxu0 %v2641
        %v3665 = vpop.f32.mrb[0].mxu0
        %v3666 = vadd.f32 %v3505, %v3665
        %v3667 = vpop.f32.mrb[0].mxu0
        %v3668 = vpop.f32.mrb[0].mxu0
        %v3669 = vadd.f32 %v3508, %v3668
        %v3670 = vpop.f32.mrb[0].mxu0
        %3671 = vmatprep.mubr.bf16.mxu0 %v2643
        %3672 = vmatmul.mubr.bf16.gmra.mrb[0].mxu0 %v2642
        %v3673 = vpop.f32.mrb[0].mxu0
        %v3674 = vadd.f32 %v3513, %v3673
        %v3675 = vpop.f32.mrb[0].mxu0
        %v3676 = vpop.f32.mrb[0].mxu0
        %v3677 = vadd.f32 %v3516, %v3676
        %v3678 = vpop.f32.mrb[0].mxu0
        %3679 = vmatprep.mubr.bf16.mxu0 %v2644
        %3680 = vmatmul.mubr.bf16.gmra.mrb[0].mxu0 %v2643
        %v3681 = vpop.f32.mrb[0].mxu0
        %v3682 = vadd.f32 %v3521, %v3681
        %v3683 = vpop.f32.mrb[0].mxu0
        %v3684 = vpop.f32.mrb[0].mxu0
        %v3685 = vadd.f32 %v3524, %v3684
        %v3686 = vpop.f32.mrb[0].mxu0
        %3687 = vmatprep.mubr.bf16.mxu0 %v2645
        %3688 = vmatmul.mubr.bf16.gmra.mrb[0].mxu0 %v2644
        %v3689 = vpop.f32.mrb[0].mxu0
        %v3690 = vadd.f32 %v3529, %v3689
        %v3691 = vpop.f32.mrb[0].mxu0
        %v3692 = vpop.f32.mrb[0].mxu0
        %v3693 = vadd.f32 %v3532, %v3692
        %v3694 = vpop.f32.mrb[0].mxu0
        %3695 = vmatprep.mubr.bf16.mxu0 %v2646
        %3696 = vmatmul.mubr.bf16.gmra.mrb[0].mxu0 %v2645
        %v3697 = vpop.f32.mrb[0].mxu0
        %v3698 = vadd.f32 %v3537, %v3697
        %v3699 = vpop.f32.mrb[0].mxu0
        %v3700 = vpop.f32.mrb[0].mxu0
        %v3701 = vadd.f32 %v3540, %v3700
        %v3702 = vpop.f32.mrb[0].mxu0
        %3703 = vmatprep.mubr.bf16.mxu0 %v2647
        %3704 = vmatmul.mubr.bf16.gmra.mrb[0].mxu0 %v2646
        %v3705 = vpop.f32.mrb[0].mxu0
        %v3706 = vadd.f32 %v3545, %v3705
        %v3707 = vpop.f32.mrb[0].mxu0
        %v3708 = vpop.f32.mrb[0].mxu0
        %v3709 = vadd.f32 %v3548, %v3708
        %v3710 = vpop.f32.mrb[0].mxu0
        %3711 = vmatprep.mubr.bf16.mxu0 %v2648
        %3712 = vmatmul.mubr.bf16.gmra.mrb[0].mxu0 %v2647
        %v3713 = vpop.f32.mrb[0].mxu0
        %v3714 = vadd.f32 %v3553, %v3713
        %v3715 = vpop.f32.mrb[0].mxu0
        %v3716 = vpop.f32.mrb[0].mxu0
        %v3717 = vadd.f32 %v3556, %v3716
        %v3718 = vpop.f32.mrb[0].mxu0
        %3719 = vmatprep.mubr.bf16.mxu0 %v2649
        %3720 = vmatmul.mubr.bf16.gmra.mrb[0].mxu0 %v2648
        %v3721 = vpop.f32.mrb[0].mxu0
        %v3722 = vadd.f32 %v3561, %v3721
        %v3723 = vpop.f32.mrb[0].mxu0
        %v3724 = vpop.f32.mrb[0].mxu0
        %v3725 = vadd.f32 %v3564, %v3724
        %v3726 = vpop.f32.mrb[0].mxu0
        %3727 = vmatprep.mubr.bf16.mxu0 %v2650
        %3728 = vmatmul.mubr.bf16.gmra.mrb[0].mxu0 %v2649
        %v3729 = vpop.f32.mrb[0].mxu0
        %v3730 = vadd.f32 %v3569, %v3729
        %v3731 = vpop.f32.mrb[0].mxu0
        %v3732 = vpop.f32.mrb[0].mxu0
        %v3733 = vadd.f32 %v3572, %v3732
        %v3734 = vpop.f32.mrb[0].mxu0
        %3735 = vmatprep.mubr.bf16.mxu0 %v2651
        %3736 = vmatmul.mubr.bf16.gmra.mrb[0].mxu0 %v2650
        %v3737 = vpop.f32.mrb[0].mxu0
        %v3738 = vadd.f32 %v3577, %v3737
        %v3739 = vpop.f32.mrb[0].mxu0
        %v3740 = vpop.f32.mrb[0].mxu0
        %v3741 = vadd.f32 %v3580, %v3740
        %v3742 = vpop.f32.mrb[0].mxu0
        %3743 = vmatprep.mubr.bf16.mxu0 %v2652
        %3744 = vmatmul.mubr.bf16.gmra.mrb[0].mxu0 %v2651
        %v3745 = vpop.f32.mrb[0].mxu0
        %v3746 = vadd.f32 %v3585, %v3745
        %v3747 = vpop.f32.mrb[0].mxu0
        %v3748 = vpop.f32.mrb[0].mxu0
        %v3749 = vadd.f32 %v3588, %v3748
        %v3750 = vpop.f32.mrb[0].mxu0
        %3751 = vmatprep.mubr.bf16.mxu0 %v2653
        %3752 = vmatmul.mubr.bf16.gmra.mrb[0].mxu0 %v2652
        %v3753 = vpop.f32.mrb[0].mxu0
        %v3754 = vadd.f32 %v3593, %v3753
        %v3755 = vpop.f32.mrb[0].mxu0
        %v3756 = vpop.f32.mrb[0].mxu0
        %v3757 = vadd.f32 %v3596, %v3756
        %v3758 = vpop.f32.mrb[0].mxu0
        %3759 = vmatprep.mubr.bf16.mxu0 %v2654
        %3760 = vmatmul.mubr.bf16.gmra.mrb[0].mxu0 %v2653
        %v3761 = vpop.f32.mrb[0].mxu0
        %v3762 = vadd.f32 %v3601, %v3761
        %v3763 = vpop.f32.mrb[0].mxu0
        %v3764 = vpop.f32.mrb[0].mxu0
        %v3765 = vadd.f32 %v3604, %v3764
        %v3766 = vpop.f32.mrb[0].mxu0
        %3767 = vdwg.mxu0
        %3768 = vmatprep.subr.bf16.mxu0 0
        %3769 = vmatpush1.bf16.msra.mxu0 %v3189
        %3770 = vmatprep.subr.bf16.mxu0 0
        %3771 = vmatpush1.bf16.msra.mxu0 %v3190
        %3772 = vmatprep.subr.bf16.mxu0 0
        %3773 = vmatpush1.bf16.msra.mxu0 %v3191
        %3774 = vmatprep.subr.bf16.mxu0 0
        %3775 = vmatpush1.bf16.msra.mxu0 %v3192
        %3776 = vmatprep.subr.bf16.mxu0 0
        %3777 = vmatpush1.bf16.msra.mxu0 %v3193
        %3778 = vmatprep.subr.bf16.mxu0 0
        %3779 = vmatpush1.bf16.msra.mxu0 %v3194
        %3780 = vmatprep.subr.bf16.mxu0 0
        %3781 = vmatpush1.bf16.msra.mxu0 %v3195
        %3782 = vmatprep.subr.bf16.mxu0 0
        %3783 = vmatpush1.bf16.msra.mxu0 %v3196
        %3784 = vmatprep.subr.bf16.mxu0 0
        %3785 = vmatpush1.bf16.msra.mxu0 %v3197
        %3786 = vmatprep.subr.bf16.mxu0 0
        %3787 = vmatpush1.bf16.msra.mxu0 %v3198
        %3788 = vmatprep.subr.bf16.mxu0 0
        %3789 = vmatpush1.bf16.msra.mxu0 %v3199
        %3790 = vmatprep.subr.bf16.mxu0 0
        %3791 = vmatpush1.bf16.msra.mxu0 %v3200
        %3792 = vmatprep.subr.bf16.mxu0 0
        %3793 = vmatpush1.bf16.msra.mxu0 %v3201
        %3794 = vmatprep.subr.bf16.mxu0 0
        %3795 = vmatpush1.bf16.msra.mxu0 %v3202
        %3796 = vmatprep.subr.bf16.mxu0 0
        %3797 = vmatpush1.bf16.msra.mxu0 %v3203
        %3798 = vmatprep.subr.bf16.mxu0 0
        %3799 = vmatpush1.bf16.msra.mxu0 %v3204
        %3800 = vmatprep.mubr.bf16.mxu0 %v2692
        %3801 = vmatmul.mubr.bf16.gmra.mrb[0].mxu0 %v2691
        %v3802 = vpop.f32.mrb[0].mxu0
        %v3803 = vadd.f32 %v3642, %v3802
        %v3804 = vpop.f32.mrb[0].mxu0
        %v3805 = vpop.f32.mrb[0].mxu0
        %v3806 = vadd.f32 %v3645, %v3805
        %v3807 = vpop.f32.mrb[0].mxu0
        %3808 = vmatprep.mubr.bf16.mxu0 %v2693
        %3809 = vmatmul.mubr.bf16.gmra.mrb[0].mxu0 %v2692
        %v3810 = vpop.f32.mrb[0].mxu0
        %v3811 = vadd.f32 %v3650, %v3810
        %v3812 = vpop.f32.mrb[0].mxu0
        %v3813 = vpop.f32.mrb[0].mxu0
        %v3814 = vadd.f32 %v3653, %v3813
        %v3815 = vpop.f32.mrb[0].mxu0
        %3816 = vmatprep.mubr.bf16.mxu0 %v2694
        %3817 = vmatmul.mubr.bf16.gmra.mrb[0].mxu0 %v2693
        %v3818 = vpop.f32.mrb[0].mxu0
        %v3819 = vadd.f32 %v3658, %v3818
        %v3820 = vpop.f32.mrb[0].mxu0
        %v3821 = vpop.f32.mrb[0].mxu0
        %v3822 = vadd.f32 %v3661, %v3821
        %v3823 = vpop.f32.mrb[0].mxu0
        %3824 = vmatprep.mubr.bf16.mxu0 %v2695
        %3825 = vmatmul.mubr.bf16.gmra.mrb[0].mxu0 %v2694
        %v3826 = vpop.f32.mrb[0].mxu0
        %v3827 = vadd.f32 %v3666, %v3826
        %v3828 = vpop.f32.mrb[0].mxu0
        %v3829 = vpop.f32.mrb[0].mxu0
        %v3830 = vadd.f32 %v3669, %v3829
        %v3831 = vpop.f32.mrb[0].mxu0
        %3832 = vmatprep.mubr.bf16.mxu0 %v2696
        %3833 = vmatmul.mubr.bf16.gmra.mrb[0].mxu0 %v2695
        %v3834 = vpop.f32.mrb[0].mxu0
        %v3835 = vadd.f32 %v3674, %v3834
        %v3836 = vpop.f32.mrb[0].mxu0
        %v3837 = vpop.f32.mrb[0].mxu0
        %v3838 = vadd.f32 %v3677, %v3837
        %v3839 = vpop.f32.mrb[0].mxu0
        %3840 = vmatprep.mubr.bf16.mxu0 %v2697
        %3841 = vmatmul.mubr.bf16.gmra.mrb[0].mxu0 %v2696
        %v3842 = vpop.f32.mrb[0].mxu0
        %v3843 = vadd.f32 %v3682, %v3842
        %v3844 = vpop.f32.mrb[0].mxu0
        %v3845 = vpop.f32.mrb[0].mxu0
        %v3846 = vadd.f32 %v3685, %v3845
        %v3847 = vpop.f32.mrb[0].mxu0
        %3848 = vmatprep.mubr.bf16.mxu0 %v2698
        %3849 = vmatmul.mubr.bf16.gmra.mrb[0].mxu0 %v2697
        %v3850 = vpop.f32.mrb[0].mxu0
        %v3851 = vadd.f32 %v3690, %v3850
        %v3852 = vpop.f32.mrb[0].mxu0
        %v3853 = vpop.f32.mrb[0].mxu0
        %v3854 = vadd.f32 %v3693, %v3853
        %v3855 = vpop.f32.mrb[0].mxu0
        %3856 = vmatprep.mubr.bf16.mxu0 %v2699
        %3857 = vmatmul.mubr.bf16.gmra.mrb[0].mxu0 %v2698
        %v3858 = vpop.f32.mrb[0].mxu0
        %v3859 = vadd.f32 %v3698, %v3858
        %v3860 = vpop.f32.mrb[0].mxu0
        %v3861 = vpop.f32.mrb[0].mxu0
        %v3862 = vadd.f32 %v3701, %v3861
        %v3863 = vpop.f32.mrb[0].mxu0
        %3864 = vmatprep.mubr.bf16.mxu0 %v2700
        %3865 = vmatmul.mubr.bf16.gmra.mrb[0].mxu0 %v2699
        %v3866 = vpop.f32.mrb[0].mxu0
        %v3867 = vadd.f32 %v3706, %v3866
        %v3868 = vpop.f32.mrb[0].mxu0
        %v3869 = vpop.f32.mrb[0].mxu0
        %v3870 = vadd.f32 %v3709, %v3869
        %v3871 = vpop.f32.mrb[0].mxu0
        %3872 = vmatprep.mubr.bf16.mxu0 %v2701
        %3873 = vmatmul.mubr.bf16.gmra.mrb[0].mxu0 %v2700
        %v3874 = vpop.f32.mrb[0].mxu0
        %v3875 = vadd.f32 %v3714, %v3874
        %v3876 = vpop.f32.mrb[0].mxu0
        %v3877 = vpop.f32.mrb[0].mxu0
        %v3878 = vadd.f32 %v3717, %v3877
        %v3879 = vpop.f32.mrb[0].mxu0
        %3880 = vmatprep.mubr.bf16.mxu0 %v2702
        %3881 = vmatmul.mubr.bf16.gmra.mrb[0].mxu0 %v2701
        %v3882 = vpop.f32.mrb[0].mxu0
        %v3883 = vadd.f32 %v3722, %v3882
        %v3884 = vpop.f32.mrb[0].mxu0
        %v3885 = vpop.f32.mrb[0].mxu0
        %v3886 = vadd.f32 %v3725, %v3885
        %v3887 = vpop.f32.mrb[0].mxu0
        %3888 = vmatprep.mubr.bf16.mxu0 %v2703
        %3889 = vmatmul.mubr.bf16.gmra.mrb[0].mxu0 %v2702
        %v3890 = vpop.f32.mrb[0].mxu0
        %v3891 = vadd.f32 %v3730, %v3890
        %v3892 = vpop.f32.mrb[0].mxu0
        %v3893 = vpop.f32.mrb[0].mxu0
        %v3894 = vadd.f32 %v3733, %v3893
        %v3895 = vpop.f32.mrb[0].mxu0
        %3896 = vmatprep.mubr.bf16.mxu0 %v2704
        %3897 = vmatmul.mubr.bf16.gmra.mrb[0].mxu0 %v2703
        %v3898 = vpop.f32.mrb[0].mxu0
        %v3899 = vadd.f32 %v3738, %v3898
        %v3900 = vpop.f32.mrb[0].mxu0
        %v3901 = vpop.f32.mrb[0].mxu0
        %v3902 = vadd.f32 %v3741, %v3901
        %v3903 = vpop.f32.mrb[0].mxu0
        %3904 = vmatprep.mubr.bf16.mxu0 %v2705
        %3905 = vmatmul.mubr.bf16.gmra.mrb[0].mxu0 %v2704
        %v3906 = vpop.f32.mrb[0].mxu0
        %v3907 = vadd.f32 %v3746, %v3906
        %v3908 = vpop.f32.mrb[0].mxu0
        %v3909 = vpop.f32.mrb[0].mxu0
        %v3910 = vadd.f32 %v3749, %v3909
        %v3911 = vpop.f32.mrb[0].mxu0
        %3912 = vmatprep.mubr.bf16.mxu0 %v2706
        %3913 = vmatmul.mubr.bf16.gmra.mrb[0].mxu0 %v2705
        %v3914 = vpop.f32.mrb[0].mxu0
        %v3915 = vadd.f32 %v3754, %v3914
        %v3916 = vpop.f32.mrb[0].mxu0
        %v3917 = vpop.f32.mrb[0].mxu0
        %v3918 = vadd.f32 %v3757, %v3917
        %v3919 = vpop.f32.mrb[0].mxu0
        %3920 = vmatprep.mubr.bf16.mxu0 %v2707
        %3921 = vmatmul.mubr.bf16.gmra.mrb[0].mxu0 %v2706
        %v3922 = vpop.f32.mrb[0].mxu0
        %v3923 = vadd.f32 %v3762, %v3922
        %v3924 = vpop.f32.mrb[0].mxu0
        %v3925 = vpop.f32.mrb[0].mxu0
        %v3926 = vadd.f32 %v3765, %v3925
        %v3927 = vpop.f32.mrb[0].mxu0
        %3928 = vdwg.mxu0
        %3929 = vmatprep.subr.bf16.mxu0 0
        %3930 = vmatpush1.bf16.msra.mxu0 %v3205
        %3931 = vmatprep.subr.bf16.mxu0 0
        %3932 = vmatpush1.bf16.msra.mxu0 %v3206
        %3933 = vmatprep.subr.bf16.mxu0 0
        %3934 = vmatpush1.bf16.msra.mxu0 %v3207
        %3935 = vmatprep.subr.bf16.mxu0 0
        %3936 = vmatpush1.bf16.msra.mxu0 %v3208
        %3937 = vmatprep.subr.bf16.mxu0 0
        %3938 = vmatpush1.bf16.msra.mxu0 %v3209
        %3939 = vmatprep.subr.bf16.mxu0 0
        %3940 = vmatpush1.bf16.msra.mxu0 %v3210
        %3941 = vmatprep.subr.bf16.mxu0 0
        %3942 = vmatpush1.bf16.msra.mxu0 %v3211
        %3943 = vmatprep.subr.bf16.mxu0 0
        %3944 = vmatpush1.bf16.msra.mxu0 %v3212
        %3945 = vmatprep.subr.bf16.mxu0 0
        %3946 = vmatpush1.bf16.msra.mxu0 0
        %3947 = vmatprep.subr.bf16.mxu0 0
        %3948 = vmatpush1.bf16.msra.mxu0 0
        %3949 = vmatprep.subr.bf16.mxu0 0
        %3950 = vmatpush1.bf16.msra.mxu0 0
        %3951 = vmatprep.subr.bf16.mxu0 0
        %3952 = vmatpush1.bf16.msra.mxu0 0
        %3953 = vmatprep.subr.bf16.mxu0 0
        %3954 = vmatpush1.bf16.msra.mxu0 0
        %3955 = vmatprep.subr.bf16.mxu0 0
        %3956 = vmatpush1.bf16.msra.mxu0 0
        %3957 = vmatprep.subr.bf16.mxu0 0
        %3958 = vmatpush1.bf16.msra.mxu0 0
        %3959 = vmatprep.subr.bf16.mxu0 0
        %3960 = vmatpush1.bf16.msra.mxu0 0
        %3961 = vmatprep.mubr.bf16.mxu0 0
        %3962 = vmatmul.mubr.bf16.gmra.mrb[0].mxu0 %v2693
        %v3963 = vpop.f32.mrb[0].mxu0
        %v3964 = vadd.f32 %v3803, %v3963
        %v3965 = vpop.f32.mrb[0].mxu0
        %v3966 = vpop.f32.mrb[0].mxu0
        %v3967 = vadd.f32 %v3806, %v3966
        %v3968 = vpop.f32.mrb[0].mxu0
        %3969 = vmatprep.mubr.bf16.mxu0 0
        %3970 = vmatmul.mubr.bf16.gmra.mrb[0].mxu0 %v2694
        %v3971 = vpop.f32.mrb[0].mxu0
        %v3972 = vadd.f32 %v3811, %v3971
        %v3973 = vpop.f32.mrb[0].mxu0
        %v3974 = vpop.f32.mrb[0].mxu0
        %v3975 = vadd.f32 %v3814, %v3974
        %v3976 = vpop.f32.mrb[0].mxu0
        %3977 = vmatprep.mubr.bf16.mxu0 0
        %3978 = vmatmul.mubr.bf16.gmra.mrb[0].mxu0 %v2695
        %v3979 = vpop.f32.mrb[0].mxu0
        %v3980 = vadd.f32 %v3819, %v3979
        %v3981 = vpop.f32.mrb[0].mxu0
        %v3982 = vpop.f32.mrb[0].mxu0
        %v3983 = vadd.f32 %v3822, %v3982
        %v3984 = vpop.f32.mrb[0].mxu0
        %3985 = vmatprep.mubr.bf16.mxu0 0
        %3986 = vmatmul.mubr.bf16.gmra.mrb[0].mxu0 %v2696
        %v3987 = vpop.f32.mrb[0].mxu0
        %v3988 = vadd.f32 %v3827, %v3987
        %v3989 = vpop.f32.mrb[0].mxu0
        %v3990 = vpop.f32.mrb[0].mxu0
        %v3991 = vadd.f32 %v3830, %v3990
        %v3992 = vpop.f32.mrb[0].mxu0
        %3993 = vmatprep.mubr.bf16.mxu0 0
        %3994 = vmatmul.mubr.bf16.gmra.mrb[0].mxu0 %v2697
        %v3995 = vpop.f32.mrb[0].mxu0
        %v3996 = vadd.f32 %v3835, %v3995
        %v3997 = vpop.f32.mrb[0].mxu0
        %v3998 = vpop.f32.mrb[0].mxu0
        %v3999 = vadd.f32 %v3838, %v3998
        %v4000 = vpop.f32.mrb[0].mxu0
        %4001 = vmatprep.mubr.bf16.mxu0 0
        %4002 = vmatmul.mubr.bf16.gmra.mrb[0].mxu0 %v2698
        %v4003 = vpop.f32.mrb[0].mxu0
        %v4004 = vadd.f32 %v3843, %v4003
        %v4005 = vpop.f32.mrb[0].mxu0
        %v4006 = vpop.f32.mrb[0].mxu0
        %v4007 = vadd.f32 %v3846, %v4006
        %v4008 = vpop.f32.mrb[0].mxu0
        %4009 = vmatprep.mubr.bf16.mxu0 0
        %4010 = vmatmul.mubr.bf16.gmra.mrb[0].mxu0 %v2699
        %v4011 = vpop.f32.mrb[0].mxu0
        %v4012 = vadd.f32 %v3851, %v4011
        %v4013 = vpop.f32.mrb[0].mxu0
        %v4014 = vpop.f32.mrb[0].mxu0
        %v4015 = vadd.f32 %v3854, %v4014
        %v4016 = vpop.f32.mrb[0].mxu0
        %4017 = vmatprep.mubr.bf16.mxu0 0
        %4018 = vmatmul.mubr.bf16.gmra.mrb[0].mxu0 %v2700
        %v4019 = vpop.f32.mrb[0].mxu0
        %v4020 = vadd.f32 %v3859, %v4019
        %v4021 = vpop.f32.mrb[0].mxu0
        %v4022 = vpop.f32.mrb[0].mxu0
        %v4023 = vadd.f32 %v3862, %v4022
        %v4024 = vpop.f32.mrb[0].mxu0
        %4025 = vmatprep.mubr.bf16.mxu0 0
        %4026 = vmatmul.mubr.bf16.gmra.mrb[0].mxu0 %v2701
        %v4027 = vpop.f32.mrb[0].mxu0
        %v4028 = vadd.f32 %v3867, %v4027
        %v4029 = vpop.f32.mrb[0].mxu0
        %v4030 = vpop.f32.mrb[0].mxu0
        %v4031 = vadd.f32 %v3870, %v4030
        %v4032 = vpop.f32.mrb[0].mxu0
        %4033 = vmatprep.mubr.bf16.mxu0 0
        %4034 = vmatmul.mubr.bf16.gmra.mrb[0].mxu0 %v2702
        %v4035 = vpop.f32.mrb[0].mxu0
        %v4036 = vadd.f32 %v3875, %v4035
        %v4037 = vpop.f32.mrb[0].mxu0
        %v4038 = vpop.f32.mrb[0].mxu0
        %v4039 = vadd.f32 %v3878, %v4038
        %v4040 = vpop.f32.mrb[0].mxu0
        %4041 = vmatprep.mubr.bf16.mxu0 0
        %4042 = vmatmul.mubr.bf16.gmra.mrb[0].mxu0 %v2703
        %v4043 = vpop.f32.mrb[0].mxu0
        %v4044 = vadd.f32 %v3883, %v4043
        %v4045 = vpop.f32.mrb[0].mxu0
        %v4046 = vpop.f32.mrb[0].mxu0
        %v4047 = vadd.f32 %v3886, %v4046
        %v4048 = vpop.f32.mrb[0].mxu0
        %4049 = vmatprep.mubr.bf16.mxu0 0
        %4050 = vmatmul.mubr.bf16.gmra.mrb[0].mxu0 %v2704
        %v4051 = vpop.f32.mrb[0].mxu0
        %v4052 = vadd.f32 %v3891, %v4051
        %v4053 = vpop.f32.mrb[0].mxu0
        %v4054 = vpop.f32.mrb[0].mxu0
        %v4055 = vadd.f32 %v3894, %v4054
        %v4056 = vpop.f32.mrb[0].mxu0
        %4057 = vmatprep.mubr.bf16.mxu0 0
        %4058 = vmatmul.mubr.bf16.gmra.mrb[0].mxu0 %v2705
        %v4059 = vpop.f32.mrb[0].mxu0
        %v4060 = vadd.f32 %v3899, %v4059
        %v4061 = vpop.f32.mrb[0].mxu0
        %v4062 = vpop.f32.mrb[0].mxu0
        %v4063 = vadd.f32 %v3902, %v4062
        %v4064 = vpop.f32.mrb[0].mxu0
        %4065 = vmatprep.mubr.bf16.mxu0 0
        %4066 = vmatmul.mubr.bf16.gmra.mrb[0].mxu0 %v2706
        %v4067 = vpop.f32.mrb[0].mxu0
        %v4068 = vadd.f32 %v3907, %v4067
        %v4069 = vpop.f32.mrb[0].mxu0
        %v4070 = vpop.f32.mrb[0].mxu0
        %v4071 = vadd.f32 %v3910, %v4070
        %v4072 = vpop.f32.mrb[0].mxu0
        %4073 = vmatprep.mubr.bf16.mxu0 0
        %4074 = vmatmul.mubr.bf16.gmra.mrb[0].mxu0 %v2707
        %v4075 = vpop.f32.mrb[0].mxu0
        %v4076 = vadd.f32 %v3915, %v4075
        %v4077 = vpop.f32.mrb[0].mxu0
        %v4078 = vpop.f32.mrb[0].mxu0
        %v4079 = vadd.f32 %v3918, %v4078
        %v4080 = vpop.f32.mrb[0].mxu0
        %4081 = vmatprep.mubr.bf16.mxu0 0
        %4082 = vmatmul.mubr.bf16.gmra.mrb[0].mxu0 %v2708
        %v4083 = vpop.f32.mrb[0].mxu0
        %v4084 = vadd.f32 %v3923, %v4083
        %v4085 = vpop.f32.mrb[0].mxu0
        %v4086 = vpop.f32.mrb[0].mxu0
        %v4087 = vadd.f32 %v3926, %v4086
        %v4088 = vpop.f32.mrb[0].mxu0
        %4089 = vdwg.mxu0
        %v4090 = vld [vmem:[%s8] sm:$0x1]
        %v4092 = vlaneseq
        %v4093 = vshrl.u32 %v4092, 7
        %v4094 = vsub.s32 0, %v4093
        %v4095 = vrot.slane %v4090, %v4094
        %v4097 = vmul.f32 %v3964, %v4095
        %v4098 = vmul.f32 %v3967, %v4095
        %v4099 = vmul.f32 %v3972, %v4095
        %v4100 = vmul.f32 %v3975, %v4095
        %v4101 = vmul.f32 %v3980, %v4095
        %v4102 = vmul.f32 %v3983, %v4095
        %v4103 = vmul.f32 %v3988, %v4095
        %v4104 = vmul.f32 %v3991, %v4095
        %v4105 = vmul.f32 %v3996, %v4095
        %v4106 = vmul.f32 %v3999, %v4095
        %v4107 = vmul.f32 %v4004, %v4095
        %v4108 = vmul.f32 %v4007, %v4095
        %v4109 = vmul.f32 %v4012, %v4095
        %v4110 = vmul.f32 %v4015, %v4095
        %v4111 = vmul.f32 %v4020, %v4095
        %v4112 = vmul.f32 %v4023, %v4095
        %v4113 = vmul.f32 %v4028, %v4095
        %v4114 = vmul.f32 %v4031, %v4095
        %v4115 = vmul.f32 %v4036, %v4095
        %v4116 = vmul.f32 %v4039, %v4095
        %v4117 = vmul.f32 %v4044, %v4095
        %v4118 = vmul.f32 %v4047, %v4095
        %v4119 = vmul.f32 %v4052, %v4095
        %v4120 = vmul.f32 %v4055, %v4095
        %v4121 = vmul.f32 %v4060, %v4095
        %v4122 = vmul.f32 %v4063, %v4095
        %v4123 = vmul.f32 %v4068, %v4095
        %v4124 = vmul.f32 %v4071, %v4095
        %v4125 = vmul.f32 %v4076, %v4095
        %v4126 = vmul.f32 %v4079, %v4095
        %v4127 = vmul.f32 %v4084, %v4095
        %v4128 = vmul.f32 %v4087, %v4095
        %v4129 = vld [vmem:[%s9] sm:$0x1]
        %v4131 = vlaneseq
        %v4132 = vshrl.u32 %v4131, 7
        %v4133 = vsub.s32 0, %v4132
        %v4134 = vrot.slane %v4129, %v4133
        %v4136 = vadd.f32 %v4097, %v4134
        %v4137 = vadd.f32 %v4098, %v4134
        %v4138 = vadd.f32 %v4099, %v4134
        %v4139 = vadd.f32 %v4100, %v4134
        %v4140 = vadd.f32 %v4101, %v4134
        %v4141 = vadd.f32 %v4102, %v4134
        %v4142 = vadd.f32 %v4103, %v4134
        %v4143 = vadd.f32 %v4104, %v4134
        %v4144 = vadd.f32 %v4105, %v4134
        %v4145 = vadd.f32 %v4106, %v4134
        %v4146 = vadd.f32 %v4107, %v4134
        %v4147 = vadd.f32 %v4108, %v4134
        %v4148 = vadd.f32 %v4109, %v4134
        %v4149 = vadd.f32 %v4110, %v4134
        %v4150 = vadd.f32 %v4111, %v4134
        %v4151 = vadd.f32 %v4112, %v4134
        %v4152 = vadd.f32 %v4113, %v4134
        %v4153 = vadd.f32 %v4114, %v4134
        %v4154 = vadd.f32 %v4115, %v4134
        %v4155 = vadd.f32 %v4116, %v4134
        %v4156 = vadd.f32 %v4117, %v4134
        %v4157 = vadd.f32 %v4118, %v4134
        %v4158 = vadd.f32 %v4119, %v4134
        %v4159 = vadd.f32 %v4120, %v4134
        %v4160 = vadd.f32 %v4121, %v4134
        %v4161 = vadd.f32 %v4122, %v4134
        %v4162 = vadd.f32 %v4123, %v4134
        %v4163 = vadd.f32 %v4124, %v4134
        %v4164 = vadd.f32 %v4125, %v4134
        %v4165 = vadd.f32 %v4126, %v4134
        %v4166 = vadd.f32 %v4127, %v4134
        %v4167 = vadd.f32 %v4128, %v4134
        %v4168 = vmax.f32 %v4136, 0.0
        %v4169 = vmax.f32 %v4137, 0.0
        %v4170 = vmax.f32 %v4138, 0.0
        %v4171 = vmax.f32 %v4139, 0.0
        %v4172 = vmax.f32 %v4140, 0.0
        %v4173 = vmax.f32 %v4141, 0.0
        %v4174 = vmax.f32 %v4142, 0.0
        %v4175 = vmax.f32 %v4143, 0.0
        %v4176 = vmax.f32 %v4144, 0.0
        %v4177 = vmax.f32 %v4145, 0.0
        %v4178 = vmax.f32 %v4146, 0.0
        %v4179 = vmax.f32 %v4147, 0.0
        %v4180 = vmax.f32 %v4148, 0.0
        %v4181 = vmax.f32 %v4149, 0.0
        %v4182 = vmax.f32 %v4150, 0.0
        %v4183 = vmax.f32 %v4151, 0.0
        %v4184 = vmax.f32 %v4152, 0.0
        %v4185 = vmax.f32 %v4153, 0.0
        %v4186 = vmax.f32 %v4154, 0.0
        %v4187 = vmax.f32 %v4155, 0.0
        %v4188 = vmax.f32 %v4156, 0.0
        %v4189 = vmax.f32 %v4157, 0.0
        %v4190 = vmax.f32 %v4158, 0.0
        %v4191 = vmax.f32 %v4159, 0.0
        %v4192 = vmax.f32 %v4160, 0.0
        %v4193 = vmax.f32 %v4161, 0.0
        %v4194 = vmax.f32 %v4162, 0.0
        %v4195 = vmax.f32 %v4163, 0.0
        %v4196 = vmax.f32 %v4164, 0.0
        %v4197 = vmax.f32 %v4165, 0.0
        %v4198 = vmax.f32 %v4166, 0.0
        %v4199 = vmax.f32 %v4167, 0.0
        %s4200 = scalar_lea.vmem [#allocation4], 32
        %4201 = vst [vmem:[%s4200 + $0x8] sm:$0xff] %v4168
        %4202 = vst [vmem:[%s4200 + $0x10] sm:$0xff] %v4169
        %4203 = vst [vmem:[%s4200 + $0x28] sm:$0xff] %v4170
        %4204 = vst [vmem:[%s4200 + $0x30] sm:$0xff] %v4171
        %4205 = vst [vmem:[%s4200 + $0x48] sm:$0xff] %v4172
        %4206 = vst [vmem:[%s4200 + $0x50] sm:$0xff] %v4173
        %4207 = vst [vmem:[%s4200 + $0x68] sm:$0xff] %v4174
        %4208 = vst [vmem:[%s4200 + $0x70] sm:$0xff] %v4175
        %4209 = vst [vmem:[%s4200 + $0x88] sm:$0xff] %v4176
        %4210 = vst [vmem:[%s4200 + $0x90] sm:$0xff] %v4177
        %4211 = vst [vmem:[%s4200 + $0xa8] sm:$0xff] %v4178
        %4212 = vst [vmem:[%s4200 + $0xb0] sm:$0xff] %v4179
        %4213 = vst [vmem:[%s4200 + $0xc8] sm:$0xff] %v4180
        %4214 = vst [vmem:[%s4200 + $0xd0] sm:$0xff] %v4181
        %4215 = vst [vmem:[%s4200 + $0xe8] sm:$0xff] %v4182
        %4216 = vst [vmem:[%s4200 + $0xf0] sm:$0xff] %v4183
        %4217 = vst [vmem:[%s4200 + $0x108] sm:$0xff] %v4184
        %4218 = vst [vmem:[%s4200 + $0x110] sm:$0xff] %v4185
        %4219 = vst [vmem:[%s4200 + $0x128] sm:$0xff] %v4186
        %4220 = vst [vmem:[%s4200 + $0x130] sm:$0xff] %v4187
        %4221 = vst [vmem:[%s4200 + $0x148] sm:$0xff] %v4188
        %4222 = vst [vmem:[%s4200 + $0x150] sm:$0xff] %v4189
        %4223 = vst [vmem:[%s4200 + $0x168] sm:$0xff] %v4190
        %4224 = vst [vmem:[%s4200 + $0x170] sm:$0xff] %v4191
        %4225 = vst [vmem:[%s4200 + $0x188] sm:$0xff] %v4192
        %4226 = vst [vmem:[%s4200 + $0x190] sm:$0xff] %v4193
        %4227 = vst [vmem:[%s4200 + $0x1a8] sm:$0xff] %v4194
        %4228 = vst [vmem:[%s4200 + $0x1b0] sm:$0xff] %v4195
        %4229 = vst [vmem:[%s4200 + $0x1c8] sm:$0xff] %v4196
        %4230 = vst [vmem:[%s4200 + $0x1d0] sm:$0xff] %v4197
        %4231 = vst [vmem:[%s4200 + $0x1e8] sm:$0xff] %v4198
        %4232 = vst [vmem:[%s4200 + $0x1f0] sm:$0xff] %v4199
        %v4233 = vld [vmem:[#allocation4 + $0x7] sm:$0xff]
        %v4234 = vld [vmem:[#allocation4 + $0xf] sm:$0xff]
        %v4235 = vld [vmem:[#allocation4 + $0x27] sm:$0xff]
        %v4236 = vld [vmem:[#allocation4 + $0x2f] sm:$0xff]
        %v4237 = vld [vmem:[#allocation4 + $0x47] sm:$0xff]
        %v4238 = vld [vmem:[#allocation4 + $0x4f] sm:$0xff]
        %v4239 = vld [vmem:[#allocation4 + $0x67] sm:$0xff]
        %v4240 = vld [vmem:[#allocation4 + $0x6f] sm:$0xff]
        %v4241 = vld [vmem:[#allocation4 + $0x87] sm:$0xff]
        %v4242 = vld [vmem:[#allocation4 + $0x8f] sm:$0xff]
        %v4243 = vld [vmem:[#allocation4 + $0xa7] sm:$0xff]
        %v4244 = vld [vmem:[#allocation4 + $0xaf] sm:$0xff]
        %v4245 = vld [vmem:[#allocation4 + $0xc7] sm:$0xff]
        %v4246 = vld [vmem:[#allocation4 + $0xcf] sm:$0xff]
        %v4247 = vld [vmem:[#allocation4 + $0xe7] sm:$0xff]
        %v4248 = vld [vmem:[#allocation4 + $0xef] sm:$0xff]
        %v4249 = vld [vmem:[#allocation4 + $0x107] sm:$0xff]
        %v4250 = vld [vmem:[#allocation4 + $0x10f] sm:$0xff]
        %v4251 = vld [vmem:[#allocation4 + $0x127] sm:$0xff]
        %v4252 = vld [vmem:[#allocation4 + $0x12f] sm:$0xff]
        %v4253 = vld [vmem:[#allocation4 + $0x147] sm:$0xff]
        %v4254 = vld [vmem:[#allocation4 + $0x14f] sm:$0xff]
        %v4255 = vld [vmem:[#allocation4 + $0x167] sm:$0xff]
        %v4256 = vld [vmem:[#allocation4 + $0x16f] sm:$0xff]
        %v4257 = vld [vmem:[#allocation4 + $0x187] sm:$0xff]
        %v4258 = vld [vmem:[#allocation4 + $0x18f] sm:$0xff]
        %v4259 = vld [vmem:[#allocation4 + $0x1a7] sm:$0xff]
        %v4260 = vld [vmem:[#allocation4 + $0x1af] sm:$0xff]
        %v4261 = vld [vmem:[#allocation4 + $0x1c7] sm:$0xff]
        %v4262 = vld [vmem:[#allocation4 + $0x1cf] sm:$0xff]
        %v4263 = vld [vmem:[#allocation4 + $0x1e7] sm:$0xff]
        %v4264 = vld [vmem:[#allocation4 + $0x1ef] sm:$0xff]
        %v4265 = vld [vmem:[#allocation4 + $0x207] sm:$0xff]
        %v4266 = vld [vmem:[#allocation4 + $0x20f] sm:$0xff]
        %v4267 = vld [vmem:[#allocation4 + $0x227] sm:$0xff]
        %v4268 = vld [vmem:[#allocation4 + $0x22f] sm:$0xff]
        %v4269 = vpack.c.bf16 %v4234, %v4233
        %v4270 = vpack.c.bf16 %v4236, %v4235
        %v4271 = vpack.c.bf16 %v4238, %v4237
        %v4272 = vpack.c.bf16 %v4240, %v4239
        %v4273 = vpack.c.bf16 %v4242, %v4241
        %v4274 = vpack.c.bf16 %v4244, %v4243
        %v4275 = vpack.c.bf16 %v4246, %v4245
        %v4276 = vpack.c.bf16 %v4248, %v4247
        %v4277 = vpack.c.bf16 %v4250, %v4249
        %v4278 = vpack.c.bf16 %v4252, %v4251
        %v4279 = vpack.c.bf16 %v4254, %v4253
        %v4280 = vpack.c.bf16 %v4256, %v4255
        %v4281 = vpack.c.bf16 %v4258, %v4257
        %v4282 = vpack.c.bf16 %v4260, %v4259
        %v4283 = vpack.c.bf16 %v4262, %v4261
        %v4284 = vpack.c.bf16 %v4264, %v4263
        %v4285 = vpack.c.bf16 %v4266, %v4265
        %v4286 = vpack.c.bf16 %v4268, %v4267
        %v4287 = vld [vmem:[#allocation4 + $0x8] sm:$0xff]
        %v4288 = vld [vmem:[#allocation4 + $0x10] sm:$0xff]
        %v4289 = vld [vmem:[#allocation4 + $0x28] sm:$0xff]
        %v4290 = vld [vmem:[#allocation4 + $0x30] sm:$0xff]
        %v4291 = vld [vmem:[#allocation4 + $0x48] sm:$0xff]
        %v4292 = vld [vmem:[#allocation4 + $0x50] sm:$0xff]
        %v4293 = vld [vmem:[#allocation4 + $0x68] sm:$0xff]
        %v4294 = vld [vmem:[#allocation4 + $0x70] sm:$0xff]
        %v4295 = vld [vmem:[#allocation4 + $0x88] sm:$0xff]
        %v4296 = vld [vmem:[#allocation4 + $0x90] sm:$0xff]
        %v4297 = vld [vmem:[#allocation4 + $0xa8] sm:$0xff]
        %v4298 = vld [vmem:[#allocation4 + $0xb0] sm:$0xff]
        %v4299 = vld [vmem:[#allocation4 + $0xc8] sm:$0xff]
        %v4300 = vld [vmem:[#allocation4 + $0xd0] sm:$0xff]
        %v4301 = vld [vmem:[#allocation4 + $0xe8] sm:$0xff]
        %v4302 = vld [vmem:[#allocation4 + $0xf0] sm:$0xff]
        %v4303 = vld [vmem:[#allocation4 + $0x108] sm:$0xff]
        %v4304 = vld [vmem:[#allocation4 + $0x110] sm:$0xff]
        %v4305 = vld [vmem:[#allocation4 + $0x128] sm:$0xff]
        %v4306 = vld [vmem:[#allocation4 + $0x130] sm:$0xff]
        %v4307 = vld [vmem:[#allocation4 + $0x148] sm:$0xff]
        %v4308 = vld [vmem:[#allocation4 + $0x150] sm:$0xff]
        %v4309 = vld [vmem:[#allocation4 + $0x168] sm:$0xff]
        %v4310 = vld [vmem:[#allocation4 + $0x170] sm:$0xff]
        %v4311 = vld [vmem:[#allocation4 + $0x188] sm:$0xff]
        %v4312 = vld [vmem:[#allocation4 + $0x190] sm:$0xff]
        %v4313 = vld [vmem:[#allocation4 + $0x1a8] sm:$0xff]
        %v4314 = vld [vmem:[#allocation4 + $0x1b0] sm:$0xff]
        %v4315 = vld [vmem:[#allocation4 + $0x1c8] sm:$0xff]
        %v4316 = vld [vmem:[#allocation4 + $0x1d0] sm:$0xff]
        %v4317 = vld [vmem:[#allocation4 + $0x1e8] sm:$0xff]
        %v4318 = vld [vmem:[#allocation4 + $0x1f0] sm:$0xff]
        %v4319 = vld [vmem:[#allocation4 + $0x208] sm:$0xff]
        %v4320 = vld [vmem:[#allocation4 + $0x210] sm:$0xff]
        %v4321 = vld [vmem:[#allocation4 + $0x228] sm:$0xff]
        %v4322 = vld [vmem:[#allocation4 + $0x230] sm:$0xff]
        %v4323 = vpack.c.bf16 %v4288, %v4287
        %v4324 = vpack.c.bf16 %v4290, %v4289
        %v4325 = vpack.c.bf16 %v4292, %v4291
        %v4326 = vpack.c.bf16 %v4294, %v4293
        %v4327 = vpack.c.bf16 %v4296, %v4295
        %v4328 = vpack.c.bf16 %v4298, %v4297
        %v4329 = vpack.c.bf16 %v4300, %v4299
        %v4330 = vpack.c.bf16 %v4302, %v4301
        %v4331 = vpack.c.bf16 %v4304, %v4303
        %v4332 = vpack.c.bf16 %v4306, %v4305
        %v4333 = vpack.c.bf16 %v4308, %v4307
        %v4334 = vpack.c.bf16 %v4310, %v4309
        %v4335 = vpack.c.bf16 %v4312, %v4311
        %v4336 = vpack.c.bf16 %v4314, %v4313
        %v4337 = vpack.c.bf16 %v4316, %v4315
        %v4338 = vpack.c.bf16 %v4318, %v4317
        %v4339 = vpack.c.bf16 %v4320, %v4319
        %v4340 = vpack.c.bf16 %v4322, %v4321
        %v4341 = vld [vmem:[#allocation4 + $0x9] sm:$0xff]
        %v4342 = vld [vmem:[#allocation4 + $0x11] sm:$0xff]
        %v4343 = vld [vmem:[#allocation4 + $0x29] sm:$0xff]
        %v4344 = vld [vmem:[#allocation4 + $0x31] sm:$0xff]
        %v4345 = vld [vmem:[#allocation4 + $0x49] sm:$0xff]
        %v4346 = vld [vmem:[#allocation4 + $0x51] sm:$0xff]
        %v4347 = vld [vmem:[#allocation4 + $0x69] sm:$0xff]
        %v4348 = vld [vmem:[#allocation4 + $0x71] sm:$0xff]
        %v4349 = vld [vmem:[#allocation4 + $0x89] sm:$0xff]
        %v4350 = vld [vmem:[#allocation4 + $0x91] sm:$0xff]
        %v4351 = vld [vmem:[#allocation4 + $0xa9] sm:$0xff]
        %v4352 = vld [vmem:[#allocation4 + $0xb1] sm:$0xff]
        %v4353 = vld [vmem:[#allocation4 + $0xc9] sm:$0xff]
        %v4354 = vld [vmem:[#allocation4 + $0xd1] sm:$0xff]
        %v4355 = vld [vmem:[#allocation4 + $0xe9] sm:$0xff]
        %v4356 = vld [vmem:[#allocation4 + $0xf1] sm:$0xff]
        %v4357 = vld [vmem:[#allocation4 + $0x109] sm:$0xff]
        %v4358 = vld [vmem:[#allocation4 + $0x111] sm:$0xff]
        %v4359 = vld [vmem:[#allocation4 + $0x129] sm:$0xff]
        %v4360 = vld [vmem:[#allocation4 + $0x131] sm:$0xff]
        %v4361 = vld [vmem:[#allocation4 + $0x149] sm:$0xff]
        %v4362 = vld [vmem:[#allocation4 + $0x151] sm:$0xff]
        %v4363 = vld [vmem:[#allocation4 + $0x169] sm:$0xff]
        %v4364 = vld [vmem:[#allocation4 + $0x171] sm:$0xff]
        %v4365 = vld [vmem:[#allocation4 + $0x189] sm:$0xff]
        %v4366 = vld [vmem:[#allocation4 + $0x191] sm:$0xff]
        %v4367 = vld [vmem:[#allocation4 + $0x1a9] sm:$0xff]
        %v4368 = vld [vmem:[#allocation4 + $0x1b1] sm:$0xff]
        %v4369 = vld [vmem:[#allocation4 + $0x1c9] sm:$0xff]
        %v4370 = vld [vmem:[#allocation4 + $0x1d1] sm:$0xff]
        %v4371 = vld [vmem:[#allocation4 + $0x1e9] sm:$0xff]
        %v4372 = vld [vmem:[#allocation4 + $0x1f1] sm:$0xff]
        %v4373 = vld [vmem:[#allocation4 + $0x209] sm:$0xff]
        %v4374 = vld [vmem:[#allocation4 + $0x211] sm:$0xff]
        %v4375 = vld [vmem:[#allocation4 + $0x229] sm:$0xff]
        %v4376 = vld [vmem:[#allocation4 + $0x231] sm:$0xff]
        %v4377 = vpack.c.bf16 %v4342, %v4341
        %v4378 = vpack.c.bf16 %v4344, %v4343
        %v4379 = vpack.c.bf16 %v4346, %v4345
        %v4380 = vpack.c.bf16 %v4348, %v4347
        %v4381 = vpack.c.bf16 %v4350, %v4349
        %v4382 = vpack.c.bf16 %v4352, %v4351
        %v4383 = vpack.c.bf16 %v4354, %v4353
        %v4384 = vpack.c.bf16 %v4356, %v4355
        %v4385 = vpack.c.bf16 %v4358, %v4357
        %v4386 = vpack.c.bf16 %v4360, %v4359
        %v4387 = vpack.c.bf16 %v4362, %v4361
        %v4388 = vpack.c.bf16 %v4364, %v4363
        %v4389 = vpack.c.bf16 %v4366, %v4365
        %v4390 = vpack.c.bf16 %v4368, %v4367
        %v4391 = vpack.c.bf16 %v4370, %v4369
        %v4392 = vpack.c.bf16 %v4372, %v4371
        %v4393 = vpack.c.bf16 %v4374, %v4373
        %v4394 = vpack.c.bf16 %v4376, %v4375
        %v4395 = vld [vmem:[#allocation8] sm:$0xf]
        %v4396 = vld [vmem:[#allocation8 + $0x4] sm:$0xf]
        %v4397 = vld [vmem:[#allocation8 + $0x8] sm:$0xf]
        %v4398 = vld [vmem:[#allocation8 + $0xc] sm:$0xf]
        %v4399 = vld [vmem:[#allocation8 + $0x10] sm:$0xf]
        %v4400 = vld [vmem:[#allocation8 + $0x14] sm:$0xf]
        %v4401 = vld [vmem:[#allocation8 + $0x18] sm:$0xf]
        %v4402 = vld [vmem:[#allocation8 + $0x1c] sm:$0xf]
        %v4403 = vld [vmem:[#allocation8 + $0x20] sm:$0xf]
        %v4404 = vld [vmem:[#allocation8 + $0x24] sm:$0xf]
        %v4405 = vld [vmem:[#allocation8 + $0x28] sm:$0xf]
        %v4406 = vld [vmem:[#allocation8 + $0x2c] sm:$0xf]
        %v4407 = vld [vmem:[#allocation8 + $0x30] sm:$0xf]
        %v4408 = vld [vmem:[#allocation8 + $0x34] sm:$0xf]
        %v4409 = vld [vmem:[#allocation8 + $0x38] sm:$0xf]
        %v4410 = vld [vmem:[#allocation8 + $0x3c] sm:$0xf]
        %v4411 = vld [vmem:[#allocation8 + $0x40] sm:$0xf]
        %v4412 = vld [vmem:[#allocation8 + $0x44] sm:$0xf]
        %v4413 = vld [vmem:[#allocation8 + $0x48] sm:$0xf]
        %v4414 = vld [vmem:[#allocation8 + $0x4c] sm:$0xf]
        %v4415 = vld [vmem:[#allocation8 + $0x50] sm:$0xf]
        %v4416 = vld [vmem:[#allocation8 + $0x54] sm:$0xf]
        %v4417 = vld [vmem:[#allocation8 + $0x58] sm:$0xf]
        %v4418 = vld [vmem:[#allocation8 + $0x5c] sm:$0xf]
        %v4419 = vld [vmem:[#allocation8 + $0x60] sm:$0xf]
        %v4420 = vld [vmem:[#allocation8 + $0x64] sm:$0xf]
        %v4421 = vld [vmem:[#allocation8 + $0x68] sm:$0xf]
        %v4422 = vld [vmem:[#allocation8 + $0x6c] sm:$0xf]
        %v4423 = vld [vmem:[#allocation8 + $0x70] sm:$0xf]
        %v4424 = vld [vmem:[#allocation8 + $0x74] sm:$0xf]
        %v4425 = vld [vmem:[#allocation8 + $0x78] sm:$0xf]
        %v4426 = vld [vmem:[#allocation8 + $0x7c] sm:$0xf]
        %v4427 = vld [vmem:[#allocation8 + $0x80] sm:$0xf]
        %v4428 = vld [vmem:[#allocation8 + $0x84] sm:$0xf]
        %v4429 = vld [vmem:[#allocation8 + $0x88] sm:$0xf]
        %v4430 = vld [vmem:[#allocation8 + $0x8c] sm:$0xf]
        %v4431 = vld [vmem:[#allocation8 + $0x90] sm:$0xf]
        %v4432 = vld [vmem:[#allocation8 + $0x94] sm:$0xf]
        %v4433 = vld [vmem:[#allocation8 + $0x98] sm:$0xf]
        %v4434 = vld [vmem:[#allocation8 + $0x9c] sm:$0xf]
        %v4435 = vld [vmem:[#allocation8 + $0xa0] sm:$0xf]
        %v4436 = vld [vmem:[#allocation8 + $0xa4] sm:$0xf]
        %v4437 = vld [vmem:[#allocation8 + $0xa8] sm:$0xf]
        %v4438 = vld [vmem:[#allocation8 + $0xac] sm:$0xf]
        %v4439 = vld [vmem:[#allocation8 + $0xb0] sm:$0xf]
        %v4440 = vld [vmem:[#allocation8 + $0xb4] sm:$0xf]
        %v4441 = vld [vmem:[#allocation8 + $0xb8] sm:$0xf]
        %v4442 = vld [vmem:[#allocation8 + $0xbc] sm:$0xf]
        %v4443 = vld [vmem:[#allocation8 + $0xc0] sm:$0xf]
        %v4444 = vld [vmem:[#allocation8 + $0xc4] sm:$0xf]
        %v4445 = vld [vmem:[#allocation8 + $0xc8] sm:$0xf]
        %v4446 = vld [vmem:[#allocation8 + $0xcc] sm:$0xf]
        %v4447 = vld [vmem:[#allocation8 + $0xd0] sm:$0xf]
        %v4448 = vld [vmem:[#allocation8 + $0xd4] sm:$0xf]
        %v4449 = vld [vmem:[#allocation8 + $0xd8] sm:$0xf]
        %v4450 = vld [vmem:[#allocation8 + $0xdc] sm:$0xf]
        %v4451 = vld [vmem:[#allocation8 + $0xe0] sm:$0xf]
        %v4452 = vld [vmem:[#allocation8 + $0xe4] sm:$0xf]
        %v4453 = vld [vmem:[#allocation8 + $0xe8] sm:$0xf]
        %v4454 = vld [vmem:[#allocation8 + $0xec] sm:$0xf]
        %v4455 = vld [vmem:[#allocation8 + $0xf0] sm:$0xf]
        %v4456 = vld [vmem:[#allocation8 + $0xf4] sm:$0xf]
        %v4457 = vld [vmem:[#allocation8 + $0xf8] sm:$0xf]
        %v4458 = vld [vmem:[#allocation8 + $0xfc] sm:$0xf]
        %v4459 = vld [vmem:[#allocation8 + $0x100] sm:$0xf]
        %v4460 = vld [vmem:[#allocation8 + $0x104] sm:$0xf]
        %v4461 = vld [vmem:[#allocation8 + $0x108] sm:$0xf]
        %v4462 = vld [vmem:[#allocation8 + $0x10c] sm:$0xf]
        %v4463 = vld [vmem:[#allocation8 + $0x110] sm:$0xf]
        %v4464 = vld [vmem:[#allocation8 + $0x114] sm:$0xf]
        %v4465 = vld [vmem:[#allocation8 + $0x118] sm:$0xf]
        %v4466 = vld [vmem:[#allocation8 + $0x11c] sm:$0xf]
        %v4467 = vld [vmem:[#allocation8 + $0x120] sm:$0xf]
        %v4468 = vld [vmem:[#allocation8 + $0x124] sm:$0xf]
        %v4469 = vld [vmem:[#allocation8 + $0x128] sm:$0xf]
        %v4470 = vld [vmem:[#allocation8 + $0x12c] sm:$0xf]
        %v4471 = vld [vmem:[#allocation8 + $0x130] sm:$0xf]
        %v4472 = vld [vmem:[#allocation8 + $0x134] sm:$0xf]
        %v4473 = vld [vmem:[#allocation8 + $0x138] sm:$0xf]
        %v4474 = vld [vmem:[#allocation8 + $0x13c] sm:$0xf]
        %v4475 = vld [vmem:[#allocation8 + $0x140] sm:$0xf]
        %v4476 = vld [vmem:[#allocation8 + $0x144] sm:$0xf]
        %v4477 = vld [vmem:[#allocation8 + $0x148] sm:$0xf]
        %v4478 = vld [vmem:[#allocation8 + $0x14c] sm:$0xf]
        %v4479 = vld [vmem:[#allocation8 + $0x150] sm:$0xf]
        %v4480 = vld [vmem:[#allocation8 + $0x154] sm:$0xf]
        %v4481 = vld [vmem:[#allocation8 + $0x158] sm:$0xf]
        %v4482 = vld [vmem:[#allocation8 + $0x15c] sm:$0xf]
        %v4483 = vld [vmem:[#allocation8 + $0x160] sm:$0xf]
        %v4484 = vld [vmem:[#allocation8 + $0x164] sm:$0xf]
        %v4485 = vld [vmem:[#allocation8 + $0x168] sm:$0xf]
        %v4486 = vld [vmem:[#allocation8 + $0x16c] sm:$0xf]
        %v4487 = vld [vmem:[#allocation8 + $0x170] sm:$0xf]
        %v4488 = vld [vmem:[#allocation8 + $0x174] sm:$0xf]
        %v4489 = vld [vmem:[#allocation8 + $0x178] sm:$0xf]
        %v4490 = vld [vmem:[#allocation8 + $0x17c] sm:$0xf]
        %v4491 = vld [vmem:[#allocation8 + $0x180] sm:$0xf]
        %v4492 = vld [vmem:[#allocation8 + $0x184] sm:$0xf]
        %v4493 = vld [vmem:[#allocation8 + $0x188] sm:$0xf]
        %v4494 = vld [vmem:[#allocation8 + $0x18c] sm:$0xf]
        %v4495 = vld [vmem:[#allocation8 + $0x190] sm:$0xf]
        %v4496 = vld [vmem:[#allocation8 + $0x194] sm:$0xf]
        %v4497 = vld [vmem:[#allocation8 + $0x198] sm:$0xf]
        %v4498 = vld [vmem:[#allocation8 + $0x19c] sm:$0xf]
        %v4499 = vld [vmem:[#allocation8 + $0x1a0] sm:$0xf]
        %v4500 = vld [vmem:[#allocation8 + $0x1a4] sm:$0xf]
        %v4501 = vld [vmem:[#allocation8 + $0x1a8] sm:$0xf]
        %v4502 = vld [vmem:[#allocation8 + $0x1ac] sm:$0xf]
        %v4503 = vld [vmem:[#allocation8 + $0x1b0] sm:$0xf]
        %v4504 = vld [vmem:[#allocation8 + $0x1b4] sm:$0xf]
        %v4505 = vld [vmem:[#allocation8 + $0x1b8] sm:$0xf]
        %v4506 = vld [vmem:[#allocation8 + $0x1bc] sm:$0xf]
        %v4507 = vld [vmem:[#allocation8 + $0x1c0] sm:$0xf]
        %v4508 = vld [vmem:[#allocation8 + $0x1c4] sm:$0xf]
        %v4509 = vld [vmem:[#allocation8 + $0x1c8] sm:$0xf]
        %v4510 = vld [vmem:[#allocation8 + $0x1cc] sm:$0xf]
        %v4511 = vld [vmem:[#allocation8 + $0x1d0] sm:$0xf]
        %v4512 = vld [vmem:[#allocation8 + $0x1d4] sm:$0xf]
        %v4513 = vld [vmem:[#allocation8 + $0x1d8] sm:$0xf]
        %v4514 = vld [vmem:[#allocation8 + $0x1dc] sm:$0xf]
        %v4515 = vld [vmem:[#allocation8 + $0x1e0] sm:$0xf]
        %v4516 = vld [vmem:[#allocation8 + $0x1e4] sm:$0xf]
        %v4517 = vld [vmem:[#allocation8 + $0x1e8] sm:$0xf]
        %v4518 = vld [vmem:[#allocation8 + $0x1ec] sm:$0xf]
        %v4519 = vld [vmem:[#allocation8 + $0x1f0] sm:$0xf]
        %v4520 = vld [vmem:[#allocation8 + $0x1f4] sm:$0xf]
        %v4521 = vld [vmem:[#allocation8 + $0x1f8] sm:$0xf]
        %v4522 = vld [vmem:[#allocation8 + $0x1fc] sm:$0xf]
        %v4523 = vld [vmem:[#allocation8 + $0x200] sm:$0xf]
        %v4524 = vld [vmem:[#allocation8 + $0x204] sm:$0xf]
        %v4525 = vld [vmem:[#allocation8 + $0x208] sm:$0xf]
        %v4526 = vld [vmem:[#allocation8 + $0x20c] sm:$0xf]
        %v4527 = vld [vmem:[#allocation8 + $0x210] sm:$0xf]
        %v4528 = vld [vmem:[#allocation8 + $0x214] sm:$0xf]
        %v4529 = vld [vmem:[#allocation8 + $0x218] sm:$0xf]
        %v4530 = vld [vmem:[#allocation8 + $0x21c] sm:$0xf]
        %v4531 = vld [vmem:[#allocation8 + $0x220] sm:$0xf]
        %v4532 = vld [vmem:[#allocation8 + $0x224] sm:$0xf]
        %v4533 = vld [vmem:[#allocation8 + $0x228] sm:$0xf]
        %v4534 = vld [vmem:[#allocation8 + $0x22c] sm:$0xf]
        %v4535 = vld [vmem:[#allocation8 + $0x230] sm:$0xf]
        %v4536 = vld [vmem:[#allocation8 + $0x234] sm:$0xf]
        %v4537 = vld [vmem:[#allocation8 + $0x238] sm:$0xf]
        %v4538 = vld [vmem:[#allocation8 + $0x23c] sm:$0xf]
        %v4683 = vunpack.c.l.b16 %v4395
        %v4684 = vunpack.c.l.b16 %v4396
        %v4685 = vunpack.c.l.b16 %v4397
        %v4686 = vunpack.c.l.b16 %v4398
        %v4687 = vunpack.c.l.b16 %v4399
        %v4688 = vunpack.c.l.b16 %v4400
        %v4689 = vunpack.c.l.b16 %v4401
        %v4690 = vunpack.c.l.b16 %v4402
        %v4691 = vunpack.c.l.b16 %v4403
        %v4692 = vunpack.c.l.b16 %v4404
        %v4693 = vunpack.c.l.b16 %v4405
        %v4694 = vunpack.c.l.b16 %v4406
        %v4695 = vunpack.c.l.b16 %v4407
        %v4696 = vunpack.c.l.b16 %v4408
        %v4697 = vunpack.c.l.b16 %v4409
        %v4698 = vunpack.c.l.b16 %v4410
        %v4699 = vunpack.c.l.b16 %v4411
        %v4700 = vunpack.c.l.b16 %v4412
        %v4701 = vunpack.c.l.b16 %v4413
        %v4702 = vunpack.c.l.b16 %v4414
        %v4703 = vunpack.c.l.b16 %v4415
        %v4704 = vunpack.c.l.b16 %v4416
        %v4705 = vunpack.c.l.b16 %v4417
        %v4706 = vunpack.c.l.b16 %v4418
        %v4707 = vunpack.c.l.b16 %v4419
        %v4708 = vunpack.c.l.b16 %v4420
        %v4709 = vunpack.c.l.b16 %v4421
        %v4710 = vunpack.c.l.b16 %v4422
        %v4711 = vunpack.c.l.b16 %v4423
        %v4712 = vunpack.c.l.b16 %v4424
        %v4713 = vunpack.c.l.b16 %v4425
        %v4714 = vunpack.c.l.b16 %v4426
        %v4715 = vunpack.c.l.b16 %v4427
        %v4716 = vunpack.c.l.b16 %v4428
        %v4717 = vunpack.c.l.b16 %v4429
        %v4718 = vunpack.c.l.b16 %v4430
        %v4719 = vunpack.c.l.b16 %v4431
        %v4720 = vunpack.c.l.b16 %v4432
        %v4721 = vunpack.c.l.b16 %v4433
        %v4722 = vunpack.c.l.b16 %v4434
        %v4723 = vunpack.c.l.b16 %v4435
        %v4724 = vunpack.c.l.b16 %v4436
        %v4725 = vunpack.c.l.b16 %v4437
        %v4726 = vunpack.c.l.b16 %v4438
        %v4727 = vunpack.c.l.b16 %v4439
        %v4728 = vunpack.c.l.b16 %v4440
        %v4729 = vunpack.c.l.b16 %v4441
        %v4730 = vunpack.c.l.b16 %v4442
        %v4731 = vunpack.c.l.b16 %v4443
        %v4732 = vunpack.c.l.b16 %v4444
        %v4733 = vunpack.c.l.b16 %v4445
        %v4734 = vunpack.c.l.b16 %v4446
        %v4735 = vunpack.c.l.b16 %v4447
        %v4736 = vunpack.c.l.b16 %v4448
        %v4737 = vunpack.c.l.b16 %v4449
        %v4738 = vunpack.c.l.b16 %v4450
        %v4739 = vunpack.c.l.b16 %v4451
        %v4740 = vunpack.c.l.b16 %v4452
        %v4741 = vunpack.c.l.b16 %v4453
        %v4742 = vunpack.c.l.b16 %v4454
        %v4743 = vunpack.c.l.b16 %v4455
        %v4744 = vunpack.c.l.b16 %v4456
        %v4745 = vunpack.c.l.b16 %v4457
        %v4746 = vunpack.c.l.b16 %v4458
        %v4747 = vunpack.c.l.b16 %v4459
        %v4748 = vunpack.c.l.b16 %v4460
        %v4749 = vunpack.c.l.b16 %v4461
        %v4750 = vunpack.c.l.b16 %v4462
        %v4751 = vunpack.c.l.b16 %v4463
        %v4752 = vunpack.c.l.b16 %v4464
        %v4753 = vunpack.c.l.b16 %v4465
        %v4754 = vunpack.c.l.b16 %v4466
        %v4755 = vunpack.c.l.b16 %v4467
        %v4756 = vunpack.c.l.b16 %v4468
        %v4757 = vunpack.c.l.b16 %v4469
        %v4758 = vunpack.c.l.b16 %v4470
        %v4759 = vunpack.c.l.b16 %v4471
        %v4760 = vunpack.c.l.b16 %v4472
        %v4761 = vunpack.c.l.b16 %v4473
        %v4762 = vunpack.c.l.b16 %v4474
        %v4763 = vunpack.c.l.b16 %v4475
        %v4764 = vunpack.c.l.b16 %v4476
        %v4765 = vunpack.c.l.b16 %v4477
        %v4766 = vunpack.c.l.b16 %v4478
        %v4767 = vunpack.c.l.b16 %v4479
        %v4768 = vunpack.c.l.b16 %v4480
        %v4769 = vunpack.c.l.b16 %v4481
        %v4770 = vunpack.c.l.b16 %v4482
        %v4771 = vunpack.c.l.b16 %v4483
        %v4772 = vunpack.c.l.b16 %v4484
        %v4773 = vunpack.c.l.b16 %v4485
        %v4774 = vunpack.c.l.b16 %v4486
        %v4775 = vunpack.c.l.b16 %v4487
        %v4776 = vunpack.c.l.b16 %v4488
        %v4777 = vunpack.c.l.b16 %v4489
        %v4778 = vunpack.c.l.b16 %v4490
        %v4779 = vunpack.c.l.b16 %v4491
        %v4780 = vunpack.c.l.b16 %v4492
        %v4781 = vunpack.c.l.b16 %v4493
        %v4782 = vunpack.c.l.b16 %v4494
        %v4783 = vunpack.c.l.b16 %v4495
        %v4784 = vunpack.c.l.b16 %v4496
        %v4785 = vunpack.c.l.b16 %v4497
        %v4786 = vunpack.c.l.b16 %v4498
        %v4787 = vunpack.c.l.b16 %v4499
        %v4788 = vunpack.c.l.b16 %v4500
        %v4789 = vunpack.c.l.b16 %v4501
        %v4790 = vunpack.c.l.b16 %v4502
        %v4791 = vunpack.c.l.b16 %v4503
        %v4792 = vunpack.c.l.b16 %v4504
        %v4793 = vunpack.c.l.b16 %v4505
        %v4794 = vunpack.c.l.b16 %v4506
        %v4795 = vunpack.c.l.b16 %v4507
        %v4796 = vunpack.c.l.b16 %v4508
        %v4797 = vunpack.c.l.b16 %v4509
        %v4798 = vunpack.c.l.b16 %v4510
        %v4799 = vunpack.c.l.b16 %v4511
        %v4800 = vunpack.c.l.b16 %v4512
        %v4801 = vunpack.c.l.b16 %v4513
        %v4802 = vunpack.c.l.b16 %v4514
        %v4803 = vunpack.c.l.b16 %v4515
        %v4804 = vunpack.c.l.b16 %v4516
        %v4805 = vunpack.c.l.b16 %v4517
        %v4806 = vunpack.c.l.b16 %v4518
        %v4807 = vunpack.c.l.b16 %v4519
        %v4808 = vunpack.c.l.b16 %v4520
        %v4809 = vunpack.c.l.b16 %v4521
        %v4810 = vunpack.c.l.b16 %v4522
        %v4811 = vunpack.c.l.b16 %v4523
        %v4812 = vunpack.c.l.b16 %v4524
        %v4813 = vunpack.c.l.b16 %v4525
        %v4814 = vunpack.c.l.b16 %v4526
        %v4815 = vunpack.c.l.b16 %v4527
        %v4816 = vunpack.c.l.b16 %v4528
        %v4817 = vunpack.c.l.b16 %v4529
        %v4818 = vunpack.c.l.b16 %v4530
        %v4819 = vunpack.c.l.b16 %v4531
        %v4820 = vunpack.c.l.b16 %v4532
        %v4821 = vunpack.c.l.b16 %v4533
        %v4822 = vunpack.c.l.b16 %v4534
        %v4823 = vunpack.c.l.b16 %v4535
        %v4824 = vunpack.c.l.b16 %v4536
        %v4825 = vunpack.c.l.b16 %v4537
        %v4826 = vunpack.c.l.b16 %v4538
        %v4827 = vpack.c.b16 %v4684, %v4683
        %v4828 = vpack.c.b16 %v4686, %v4685
        %v4829 = vpack.c.b16 %v4688, %v4687
        %v4830 = vpack.c.b16 %v4690, %v4689
        %v4831 = vpack.c.b16 %v4692, %v4691
        %v4832 = vpack.c.b16 %v4694, %v4693
        %v4833 = vpack.c.b16 %v4696, %v4695
        %v4834 = vpack.c.b16 %v4698, %v4697
        %v4835 = vpack.c.b16 %v4700, %v4699
        %v4836 = vpack.c.b16 %v4702, %v4701
        %v4837 = vpack.c.b16 %v4704, %v4703
        %v4838 = vpack.c.b16 %v4706, %v4705
        %v4839 = vpack.c.b16 %v4708, %v4707
        %v4840 = vpack.c.b16 %v4710, %v4709
        %v4841 = vpack.c.b16 %v4712, %v4711
        %v4842 = vpack.c.b16 %v4714, %v4713
        %v4843 = vpack.c.b16 %v4716, %v4715
        %v4844 = vpack.c.b16 %v4718, %v4717
        %v4845 = vpack.c.b16 %v4720, %v4719
        %v4846 = vpack.c.b16 %v4722, %v4721
        %v4847 = vpack.c.b16 %v4724, %v4723
        %v4848 = vpack.c.b16 %v4726, %v4725
        %v4849 = vpack.c.b16 %v4728, %v4727
        %v4850 = vpack.c.b16 %v4730, %v4729
        %v4851 = vpack.c.b16 %v4732, %v4731
        %v4852 = vpack.c.b16 %v4734, %v4733
        %v4853 = vpack.c.b16 %v4736, %v4735
        %v4854 = vpack.c.b16 %v4738, %v4737
        %v4855 = vpack.c.b16 %v4740, %v4739
        %v4856 = vpack.c.b16 %v4742, %v4741
        %v4857 = vpack.c.b16 %v4744, %v4743
        %v4858 = vpack.c.b16 %v4746, %v4745
        %v4859 = vpack.c.b16 %v4748, %v4747
        %v4860 = vpack.c.b16 %v4750, %v4749
        %v4861 = vpack.c.b16 %v4752, %v4751
        %v4862 = vpack.c.b16 %v4754, %v4753
        %v4863 = vpack.c.b16 %v4756, %v4755
        %v4864 = vpack.c.b16 %v4758, %v4757
        %v4865 = vpack.c.b16 %v4760, %v4759
        %v4866 = vpack.c.b16 %v4762, %v4761
        %v4867 = vpack.c.b16 %v4764, %v4763
        %v4868 = vpack.c.b16 %v4766, %v4765
        %v4869 = vpack.c.b16 %v4768, %v4767
        %v4870 = vpack.c.b16 %v4770, %v4769
        %v4871 = vpack.c.b16 %v4772, %v4771
        %v4872 = vpack.c.b16 %v4774, %v4773
        %v4873 = vpack.c.b16 %v4776, %v4775
        %v4874 = vpack.c.b16 %v4778, %v4777
        %v4875 = vpack.c.b16 %v4780, %v4779
        %v4876 = vpack.c.b16 %v4782, %v4781
        %v4877 = vpack.c.b16 %v4784, %v4783
        %v4878 = vpack.c.b16 %v4786, %v4785
        %v4879 = vpack.c.b16 %v4788, %v4787
        %v4880 = vpack.c.b16 %v4790, %v4789
        %v4881 = vpack.c.b16 %v4792, %v4791
        %v4882 = vpack.c.b16 %v4794, %v4793
        %v4883 = vpack.c.b16 %v4796, %v4795
        %v4884 = vpack.c.b16 %v4798, %v4797
        %v4885 = vpack.c.b16 %v4800, %v4799
        %v4886 = vpack.c.b16 %v4802, %v4801
        %v4887 = vpack.c.b16 %v4804, %v4803
        %v4888 = vpack.c.b16 %v4806, %v4805
        %v4889 = vpack.c.b16 %v4808, %v4807
        %v4890 = vpack.c.b16 %v4810, %v4809
        %v4891 = vpack.c.b16 %v4812, %v4811
        %v4892 = vpack.c.b16 %v4814, %v4813
        %v4893 = vpack.c.b16 %v4816, %v4815
        %v4894 = vpack.c.b16 %v4818, %v4817
        %v4895 = vpack.c.b16 %v4820, %v4819
        %v4896 = vpack.c.b16 %v4822, %v4821
        %v4897 = vpack.c.b16 %v4824, %v4823
        %v4898 = vpack.c.b16 %v4826, %v4825
        %4971 = vmatprep.subr.bf16.mxu0 0
        %4972 = vmatpush1.bf16.msra.mxu0 %v4827
        %4973 = vmatprep.subr.bf16.mxu0 0
        %4974 = vmatpush1.bf16.msra.mxu0 %v4828
        %4975 = vmatprep.subr.bf16.mxu0 0
        %4976 = vmatpush1.bf16.msra.mxu0 %v4829
        %4977 = vmatprep.subr.bf16.mxu0 0
        %4978 = vmatpush1.bf16.msra.mxu0 %v4830
        %4979 = vmatprep.subr.bf16.mxu0 0
        %4980 = vmatpush1.bf16.msra.mxu0 %v4831
        %4981 = vmatprep.subr.bf16.mxu0 0
        %4982 = vmatpush1.bf16.msra.mxu0 %v4832
        %4983 = vmatprep.subr.bf16.mxu0 0
        %4984 = vmatpush1.bf16.msra.mxu0 %v4833
        %4985 = vmatprep.subr.bf16.mxu0 0
        %4986 = vmatpush1.bf16.msra.mxu0 %v4834
        %4987 = vmatprep.subr.bf16.mxu0 0
        %4988 = vmatpush1.bf16.msra.mxu0 %v4835
        %4989 = vmatprep.subr.bf16.mxu0 0
        %4990 = vmatpush1.bf16.msra.mxu0 %v4836
        %4991 = vmatprep.subr.bf16.mxu0 0
        %4992 = vmatpush1.bf16.msra.mxu0 %v4837
        %4993 = vmatprep.subr.bf16.mxu0 0
        %4994 = vmatpush1.bf16.msra.mxu0 %v4838
        %4995 = vmatprep.subr.bf16.mxu0 0
        %4996 = vmatpush1.bf16.msra.mxu0 %v4839
        %4997 = vmatprep.subr.bf16.mxu0 0
        %4998 = vmatpush1.bf16.msra.mxu0 %v4840
        %4999 = vmatprep.subr.bf16.mxu0 0
        %5000 = vmatpush1.bf16.msra.mxu0 %v4841
        %5001 = vmatprep.subr.bf16.mxu0 0
        %5002 = vmatpush1.bf16.msra.mxu0 %v4842
        %5003 = vmatprep.mubr.bf16.mxu0 %v4270
        %5004 = vmatmul.mubr.bf16.gmra.mrb[0].mxu0 %v4269
        %v5005 = vpop.f32.mrb[0].mxu0
        %v5006 = vadd.f32 0.0, %v5005
        %v5007 = vpop.f32.mrb[0].mxu0
        %v5008 = vpop.f32.mrb[0].mxu0
        %v5009 = vadd.f32 0.0, %v5008
        %v5010 = vpop.f32.mrb[0].mxu0
        %5011 = vmatprep.mubr.bf16.mxu0 %v4271
        %5012 = vmatmul.mubr.bf16.gmra.mrb[0].mxu0 %v4270
        %v5013 = vpop.f32.mrb[0].mxu0
        %v5014 = vadd.f32 0.0, %v5013
        %v5015 = vpop.f32.mrb[0].mxu0
        %v5016 = vpop.f32.mrb[0].mxu0
        %v5017 = vadd.f32 0.0, %v5016
        %v5018 = vpop.f32.mrb[0].mxu0
        %5019 = vmatprep.mubr.bf16.mxu0 %v4272
        %5020 = vmatmul.mubr.bf16.gmra.mrb[0].mxu0 %v4271
        %v5021 = vpop.f32.mrb[0].mxu0
        %v5022 = vadd.f32 0.0, %v5021
        %v5023 = vpop.f32.mrb[0].mxu0
        %v5024 = vpop.f32.mrb[0].mxu0
        %v5025 = vadd.f32 0.0, %v5024
        %v5026 = vpop.f32.mrb[0].mxu0
        %5027 = vmatprep.mubr.bf16.mxu0 %v4273
        %5028 = vmatmul.mubr.bf16.gmra.mrb[0].mxu0 %v4272
        %v5029 = vpop.f32.mrb[0].mxu0
        %v5030 = vadd.f32 0.0, %v5029
        %v5031 = vpop.f32.mrb[0].mxu0
        %v5032 = vpop.f32.mrb[0].mxu0
        %v5033 = vadd.f32 0.0, %v5032
        %v5034 = vpop.f32.mrb[0].mxu0
        %5035 = vmatprep.mubr.bf16.mxu0 %v4274
        %5036 = vmatmul.mubr.bf16.gmra.mrb[0].mxu0 %v4273
        %v5037 = vpop.f32.mrb[0].mxu0
        %v5038 = vadd.f32 0.0, %v5037
        %v5039 = vpop.f32.mrb[0].mxu0
        %v5040 = vpop.f32.mrb[0].mxu0
        %v5041 = vadd.f32 0.0, %v5040
        %v5042 = vpop.f32.mrb[0].mxu0
        %5043 = vmatprep.mubr.bf16.mxu0 %v4275
        %5044 = vmatmul.mubr.bf16.gmra.mrb[0].mxu0 %v4274
        %v5045 = vpop.f32.mrb[0].mxu0
        %v5046 = vadd.f32 0.0, %v5045
        %v5047 = vpop.f32.mrb[0].mxu0
        %v5048 = vpop.f32.mrb[0].mxu0
        %v5049 = vadd.f32 0.0, %v5048
        %v5050 = vpop.f32.mrb[0].mxu0
        %5051 = vmatprep.mubr.bf16.mxu0 %v4276
        %5052 = vmatmul.mubr.bf16.gmra.mrb[0].mxu0 %v4275
        %v5053 = vpop.f32.mrb[0].mxu0
        %v5054 = vadd.f32 0.0, %v5053
        %v5055 = vpop.f32.mrb[0].mxu0
        %v5056 = vpop.f32.mrb[0].mxu0
        %v5057 = vadd.f32 0.0, %v5056
        %v5058 = vpop.f32.mrb[0].mxu0
        %5059 = vmatprep.mubr.bf16.mxu0 %v4277
        %5060 = vmatmul.mubr.bf16.gmra.mrb[0].mxu0 %v4276
        %v5061 = vpop.f32.mrb[0].mxu0
        %v5062 = vadd.f32 0.0, %v5061
        %v5063 = vpop.f32.mrb[0].mxu0
        %v5064 = vpop.f32.mrb[0].mxu0
        %v5065 = vadd.f32 0.0, %v5064
        %v5066 = vpop.f32.mrb[0].mxu0
        %5067 = vmatprep.mubr.bf16.mxu0 %v4278
        %5068 = vmatmul.mubr.bf16.gmra.mrb[0].mxu0 %v4277
        %v5069 = vpop.f32.mrb[0].mxu0
        %v5070 = vadd.f32 0.0, %v5069
        %v5071 = vpop.f32.mrb[0].mxu0
        %v5072 = vpop.f32.mrb[0].mxu0
        %v5073 = vadd.f32 0.0, %v5072
        %v5074 = vpop.f32.mrb[0].mxu0
        %5075 = vmatprep.mubr.bf16.mxu0 %v4279
        %5076 = vmatmul.mubr.bf16.gmra.mrb[0].mxu0 %v4278
        %v5077 = vpop.f32.mrb[0].mxu0
        %v5078 = vadd.f32 0.0, %v5077
        %v5079 = vpop.f32.mrb[0].mxu0
        %v5080 = vpop.f32.mrb[0].mxu0
        %v5081 = vadd.f32 0.0, %v5080
        %v5082 = vpop.f32.mrb[0].mxu0
        %5083 = vmatprep.mubr.bf16.mxu0 %v4280
        %5084 = vmatmul.mubr.bf16.gmra.mrb[0].mxu0 %v4279
        %v5085 = vpop.f32.mrb[0].mxu0
        %v5086 = vadd.f32 0.0, %v5085
        %v5087 = vpop.f32.mrb[0].mxu0
        %v5088 = vpop.f32.mrb[0].mxu0
        %v5089 = vadd.f32 0.0, %v5088
        %v5090 = vpop.f32.mrb[0].mxu0
        %5091 = vmatprep.mubr.bf16.mxu0 %v4281
        %5092 = vmatmul.mubr.bf16.gmra.mrb[0].mxu0 %v4280
        %v5093 = vpop.f32.mrb[0].mxu0
        %v5094 = vadd.f32 0.0, %v5093
        %v5095 = vpop.f32.mrb[0].mxu0
        %v5096 = vpop.f32.mrb[0].mxu0
        %v5097 = vadd.f32 0.0, %v5096
        %v5098 = vpop.f32.mrb[0].mxu0
        %5099 = vmatprep.mubr.bf16.mxu0 %v4282
        %5100 = vmatmul.mubr.bf16.gmra.mrb[0].mxu0 %v4281
        %v5101 = vpop.f32.mrb[0].mxu0
        %v5102 = vadd.f32 0.0, %v5101
        %v5103 = vpop.f32.mrb[0].mxu0
        %v5104 = vpop.f32.mrb[0].mxu0
        %v5105 = vadd.f32 0.0, %v5104
        %v5106 = vpop.f32.mrb[0].mxu0
        %5107 = vmatprep.mubr.bf16.mxu0 %v4283
        %5108 = vmatmul.mubr.bf16.gmra.mrb[0].mxu0 %v4282
        %v5109 = vpop.f32.mrb[0].mxu0
        %v5110 = vadd.f32 0.0, %v5109
        %v5111 = vpop.f32.mrb[0].mxu0
        %v5112 = vpop.f32.mrb[0].mxu0
        %v5113 = vadd.f32 0.0, %v5112
        %v5114 = vpop.f32.mrb[0].mxu0
        %5115 = vmatprep.mubr.bf16.mxu0 %v4284
        %5116 = vmatmul.mubr.bf16.gmra.mrb[0].mxu0 %v4283
        %v5117 = vpop.f32.mrb[0].mxu0
        %v5118 = vadd.f32 0.0, %v5117
        %v5119 = vpop.f32.mrb[0].mxu0
        %v5120 = vpop.f32.mrb[0].mxu0
        %v5121 = vadd.f32 0.0, %v5120
        %v5122 = vpop.f32.mrb[0].mxu0
        %5123 = vmatprep.mubr.bf16.mxu0 %v4285
        %5124 = vmatmul.mubr.bf16.gmra.mrb[0].mxu0 %v4284
        %v5125 = vpop.f32.mrb[0].mxu0
        %v5126 = vadd.f32 0.0, %v5125
        %v5127 = vpop.f32.mrb[0].mxu0
        %v5128 = vpop.f32.mrb[0].mxu0
        %v5129 = vadd.f32 0.0, %v5128
        %v5130 = vpop.f32.mrb[0].mxu0
        %5131 = vdwg.mxu0
        %5132 = vmatprep.subr.bf16.mxu0 0
        %5133 = vmatpush1.bf16.msra.mxu0 %v4843
        %5134 = vmatprep.subr.bf16.mxu0 0
        %5135 = vmatpush1.bf16.msra.mxu0 %v4844
        %5136 = vmatprep.subr.bf16.mxu0 0
        %5137 = vmatpush1.bf16.msra.mxu0 %v4845
        %5138 = vmatprep.subr.bf16.mxu0 0
        %5139 = vmatpush1.bf16.msra.mxu0 %v4846
        %5140 = vmatprep.subr.bf16.mxu0 0
        %5141 = vmatpush1.bf16.msra.mxu0 %v4847
        %5142 = vmatprep.subr.bf16.mxu0 0
        %5143 = vmatpush1.bf16.msra.mxu0 %v4848
        %5144 = vmatprep.subr.bf16.mxu0 0
        %5145 = vmatpush1.bf16.msra.mxu0 %v4849
        %5146 = vmatprep.subr.bf16.mxu0 0
        %5147 = vmatpush1.bf16.msra.mxu0 %v4850
        %5148 = vmatprep.subr.bf16.mxu0 0
        %5149 = vmatpush1.bf16.msra.mxu0 %v4851
        %5150 = vmatprep.subr.bf16.mxu0 0
        %5151 = vmatpush1.bf16.msra.mxu0 %v4852
        %5152 = vmatprep.subr.bf16.mxu0 0
        %5153 = vmatpush1.bf16.msra.mxu0 %v4853
        %5154 = vmatprep.subr.bf16.mxu0 0
        %5155 = vmatpush1.bf16.msra.mxu0 %v4854
        %5156 = vmatprep.subr.bf16.mxu0 0
        %5157 = vmatpush1.bf16.msra.mxu0 %v4855
        %5158 = vmatprep.subr.bf16.mxu0 0
        %5159 = vmatpush1.bf16.msra.mxu0 %v4856
        %5160 = vmatprep.subr.bf16.mxu0 0
        %5161 = vmatpush1.bf16.msra.mxu0 %v4857
        %5162 = vmatprep.subr.bf16.mxu0 0
        %5163 = vmatpush1.bf16.msra.mxu0 %v4858
        %5164 = vmatprep.mubr.bf16.mxu0 %v4323
        %5165 = vmatmul.mubr.bf16.gmra.mrb[0].mxu0 %v4271
        %v5166 = vpop.f32.mrb[0].mxu0
        %v5167 = vadd.f32 %v5006, %v5166
        %v5168 = vpop.f32.mrb[0].mxu0
        %v5169 = vpop.f32.mrb[0].mxu0
        %v5170 = vadd.f32 %v5009, %v5169
        %v5171 = vpop.f32.mrb[0].mxu0
        %5172 = vmatprep.mubr.bf16.mxu0 %v4324
        %5173 = vmatmul.mubr.bf16.gmra.mrb[0].mxu0 %v4272
        %v5174 = vpop.f32.mrb[0].mxu0
        %v5175 = vadd.f32 %v5014, %v5174
        %v5176 = vpop.f32.mrb[0].mxu0
        %v5177 = vpop.f32.mrb[0].mxu0
        %v5178 = vadd.f32 %v5017, %v5177
        %v5179 = vpop.f32.mrb[0].mxu0
        %5180 = vmatprep.mubr.bf16.mxu0 %v4325
        %5181 = vmatmul.mubr.bf16.gmra.mrb[0].mxu0 %v4273
        %v5182 = vpop.f32.mrb[0].mxu0
        %v5183 = vadd.f32 %v5022, %v5182
        %v5184 = vpop.f32.mrb[0].mxu0
        %v5185 = vpop.f32.mrb[0].mxu0
        %v5186 = vadd.f32 %v5025, %v5185
        %v5187 = vpop.f32.mrb[0].mxu0
        %5188 = vmatprep.mubr.bf16.mxu0 %v4326
        %5189 = vmatmul.mubr.bf16.gmra.mrb[0].mxu0 %v4274
        %v5190 = vpop.f32.mrb[0].mxu0
        %v5191 = vadd.f32 %v5030, %v5190
        %v5192 = vpop.f32.mrb[0].mxu0
        %v5193 = vpop.f32.mrb[0].mxu0
        %v5194 = vadd.f32 %v5033, %v5193
        %v5195 = vpop.f32.mrb[0].mxu0
        %5196 = vmatprep.mubr.bf16.mxu0 %v4327
        %5197 = vmatmul.mubr.bf16.gmra.mrb[0].mxu0 %v4275
        %v5198 = vpop.f32.mrb[0].mxu0
        %v5199 = vadd.f32 %v5038, %v5198
        %v5200 = vpop.f32.mrb[0].mxu0
        %v5201 = vpop.f32.mrb[0].mxu0
        %v5202 = vadd.f32 %v5041, %v5201
        %v5203 = vpop.f32.mrb[0].mxu0
        %5204 = vmatprep.mubr.bf16.mxu0 %v4328
        %5205 = vmatmul.mubr.bf16.gmra.mrb[0].mxu0 %v4276
        %v5206 = vpop.f32.mrb[0].mxu0
        %v5207 = vadd.f32 %v5046, %v5206
        %v5208 = vpop.f32.mrb[0].mxu0
        %v5209 = vpop.f32.mrb[0].mxu0
        %v5210 = vadd.f32 %v5049, %v5209
        %v5211 = vpop.f32.mrb[0].mxu0
        %5212 = vmatprep.mubr.bf16.mxu0 %v4329
        %5213 = vmatmul.mubr.bf16.gmra.mrb[0].mxu0 %v4277
        %v5214 = vpop.f32.mrb[0].mxu0
        %v5215 = vadd.f32 %v5054, %v5214
        %v5216 = vpop.f32.mrb[0].mxu0
        %v5217 = vpop.f32.mrb[0].mxu0
        %v5218 = vadd.f32 %v5057, %v5217
        %v5219 = vpop.f32.mrb[0].mxu0
        %5220 = vmatprep.mubr.bf16.mxu0 %v4330
        %5221 = vmatmul.mubr.bf16.gmra.mrb[0].mxu0 %v4278
        %v5222 = vpop.f32.mrb[0].mxu0
        %v5223 = vadd.f32 %v5062, %v5222
        %v5224 = vpop.f32.mrb[0].mxu0
        %v5225 = vpop.f32.mrb[0].mxu0
        %v5226 = vadd.f32 %v5065, %v5225
        %v5227 = vpop.f32.mrb[0].mxu0
        %5228 = vmatprep.mubr.bf16.mxu0 %v4331
        %5229 = vmatmul.mubr.bf16.gmra.mrb[0].mxu0 %v4279
        %v5230 = vpop.f32.mrb[0].mxu0
        %v5231 = vadd.f32 %v5070, %v5230
        %v5232 = vpop.f32.mrb[0].mxu0
        %v5233 = vpop.f32.mrb[0].mxu0
        %v5234 = vadd.f32 %v5073, %v5233
        %v5235 = vpop.f32.mrb[0].mxu0
        %5236 = vmatprep.mubr.bf16.mxu0 %v4332
        %5237 = vmatmul.mubr.bf16.gmra.mrb[0].mxu0 %v4280
        %v5238 = vpop.f32.mrb[0].mxu0
        %v5239 = vadd.f32 %v5078, %v5238
        %v5240 = vpop.f32.mrb[0].mxu0
        %v5241 = vpop.f32.mrb[0].mxu0
        %v5242 = vadd.f32 %v5081, %v5241
        %v5243 = vpop.f32.mrb[0].mxu0
        %5244 = vmatprep.mubr.bf16.mxu0 %v4333
        %5245 = vmatmul.mubr.bf16.gmra.mrb[0].mxu0 %v4281
        %v5246 = vpop.f32.mrb[0].mxu0
        %v5247 = vadd.f32 %v5086, %v5246
        %v5248 = vpop.f32.mrb[0].mxu0
        %v5249 = vpop.f32.mrb[0].mxu0
        %v5250 = vadd.f32 %v5089, %v5249
        %v5251 = vpop.f32.mrb[0].mxu0
        %5252 = vmatprep.mubr.bf16.mxu0 %v4334
        %5253 = vmatmul.mubr.bf16.gmra.mrb[0].mxu0 %v4282
        %v5254 = vpop.f32.mrb[0].mxu0
        %v5255 = vadd.f32 %v5094, %v5254
        %v5256 = vpop.f32.mrb[0].mxu0
        %v5257 = vpop.f32.mrb[0].mxu0
        %v5258 = vadd.f32 %v5097, %v5257
        %v5259 = vpop.f32.mrb[0].mxu0
        %5260 = vmatprep.mubr.bf16.mxu0 %v4335
        %5261 = vmatmul.mubr.bf16.gmra.mrb[0].mxu0 %v4283
        %v5262 = vpop.f32.mrb[0].mxu0
        %v5263 = vadd.f32 %v5102, %v5262
        %v5264 = vpop.f32.mrb[0].mxu0
        %v5265 = vpop.f32.mrb[0].mxu0
        %v5266 = vadd.f32 %v5105, %v5265
        %v5267 = vpop.f32.mrb[0].mxu0
        %5268 = vmatprep.mubr.bf16.mxu0 %v4336
        %5269 = vmatmul.mubr.bf16.gmra.mrb[0].mxu0 %v4284
        %v5270 = vpop.f32.mrb[0].mxu0
        %v5271 = vadd.f32 %v5110, %v5270
        %v5272 = vpop.f32.mrb[0].mxu0
        %v5273 = vpop.f32.mrb[0].mxu0
        %v5274 = vadd.f32 %v5113, %v5273
        %v5275 = vpop.f32.mrb[0].mxu0
        %5276 = vmatprep.mubr.bf16.mxu0 %v4337
        %5277 = vmatmul.mubr.bf16.gmra.mrb[0].mxu0 %v4285
        %v5278 = vpop.f32.mrb[0].mxu0
        %v5279 = vadd.f32 %v5118, %v5278
        %v5280 = vpop.f32.mrb[0].mxu0
        %v5281 = vpop.f32.mrb[0].mxu0
        %v5282 = vadd.f32 %v5121, %v5281
        %v5283 = vpop.f32.mrb[0].mxu0
        %5284 = vmatprep.mubr.bf16.mxu0 %v4338
        %5285 = vmatmul.mubr.bf16.gmra.mrb[0].mxu0 %v4286
        %v5286 = vpop.f32.mrb[0].mxu0
        %v5287 = vadd.f32 %v5126, %v5286
        %v5288 = vpop.f32.mrb[0].mxu0
        %v5289 = vpop.f32.mrb[0].mxu0
        %v5290 = vadd.f32 %v5129, %v5289
        %v5291 = vpop.f32.mrb[0].mxu0
        %5292 = vdwg.mxu0
        %5293 = vmatprep.subr.bf16.mxu0 0
        %5294 = vmatpush1.bf16.msra.mxu0 %v4859
        %5295 = vmatprep.subr.bf16.mxu0 0
        %5296 = vmatpush1.bf16.msra.mxu0 %v4860
        %5297 = vmatprep.subr.bf16.mxu0 0
        %5298 = vmatpush1.bf16.msra.mxu0 %v4861
        %5299 = vmatprep.subr.bf16.mxu0 0
        %5300 = vmatpush1.bf16.msra.mxu0 %v4862
        %5301 = vmatprep.subr.bf16.mxu0 0
        %5302 = vmatpush1.bf16.msra.mxu0 %v4863
        %5303 = vmatprep.subr.bf16.mxu0 0
        %5304 = vmatpush1.bf16.msra.mxu0 %v4864
        %5305 = vmatprep.subr.bf16.mxu0 0
        %5306 = vmatpush1.bf16.msra.mxu0 %v4865
        %5307 = vmatprep.subr.bf16.mxu0 0
        %5308 = vmatpush1.bf16.msra.mxu0 %v4866
        %5309 = vmatprep.subr.bf16.mxu0 0
        %5310 = vmatpush1.bf16.msra.mxu0 %v4867
        %5311 = vmatprep.subr.bf16.mxu0 0
        %5312 = vmatpush1.bf16.msra.mxu0 %v4868
        %5313 = vmatprep.subr.bf16.mxu0 0
        %5314 = vmatpush1.bf16.msra.mxu0 %v4869
        %5315 = vmatprep.subr.bf16.mxu0 0
        %5316 = vmatpush1.bf16.msra.mxu0 %v4870
        %5317 = vmatprep.subr.bf16.mxu0 0
        %5318 = vmatpush1.bf16.msra.mxu0 %v4871
        %5319 = vmatprep.subr.bf16.mxu0 0
        %5320 = vmatpush1.bf16.msra.mxu0 %v4872
        %5321 = vmatprep.subr.bf16.mxu0 0
        %5322 = vmatpush1.bf16.msra.mxu0 %v4873
        %5323 = vmatprep.subr.bf16.mxu0 0
        %5324 = vmatpush1.bf16.msra.mxu0 %v4874
        %5325 = vmatprep.mubr.bf16.mxu0 %v4325
        %5326 = vmatmul.mubr.bf16.gmra.mrb[0].mxu0 %v4324
        %v5327 = vpop.f32.mrb[0].mxu0
        %v5328 = vadd.f32 %v5167, %v5327
        %v5329 = vpop.f32.mrb[0].mxu0
        %v5330 = vpop.f32.mrb[0].mxu0
        %v5331 = vadd.f32 %v5170, %v5330
        %v5332 = vpop.f32.mrb[0].mxu0
        %5333 = vmatprep.mubr.bf16.mxu0 %v4326
        %5334 = vmatmul.mubr.bf16.gmra.mrb[0].mxu0 %v4325
        %v5335 = vpop.f32.mrb[0].mxu0
        %v5336 = vadd.f32 %v5175, %v5335
        %v5337 = vpop.f32.mrb[0].mxu0
        %v5338 = vpop.f32.mrb[0].mxu0
        %v5339 = vadd.f32 %v5178, %v5338
        %v5340 = vpop.f32.mrb[0].mxu0
        %5341 = vmatprep.mubr.bf16.mxu0 %v4327
        %5342 = vmatmul.mubr.bf16.gmra.mrb[0].mxu0 %v4326
        %v5343 = vpop.f32.mrb[0].mxu0
        %v5344 = vadd.f32 %v5183, %v5343
        %v5345 = vpop.f32.mrb[0].mxu0
        %v5346 = vpop.f32.mrb[0].mxu0
        %v5347 = vadd.f32 %v5186, %v5346
        %v5348 = vpop.f32.mrb[0].mxu0
        %5349 = vmatprep.mubr.bf16.mxu0 %v4328
        %5350 = vmatmul.mubr.bf16.gmra.mrb[0].mxu0 %v4327
        %v5351 = vpop.f32.mrb[0].mxu0
        %v5352 = vadd.f32 %v5191, %v5351
        %v5353 = vpop.f32.mrb[0].mxu0
        %v5354 = vpop.f32.mrb[0].mxu0
        %v5355 = vadd.f32 %v5194, %v5354
        %v5356 = vpop.f32.mrb[0].mxu0
        %5357 = vmatprep.mubr.bf16.mxu0 %v4329
        %5358 = vmatmul.mubr.bf16.gmra.mrb[0].mxu0 %v4328
        %v5359 = vpop.f32.mrb[0].mxu0
        %v5360 = vadd.f32 %v5199, %v5359
        %v5361 = vpop.f32.mrb[0].mxu0
        %v5362 = vpop.f32.mrb[0].mxu0
        %v5363 = vadd.f32 %v5202, %v5362
        %v5364 = vpop.f32.mrb[0].mxu0
        %5365 = vmatprep.mubr.bf16.mxu0 %v4330
        %5366 = vmatmul.mubr.bf16.gmra.mrb[0].mxu0 %v4329
        %v5367 = vpop.f32.mrb[0].mxu0
        %v5368 = vadd.f32 %v5207, %v5367
        %v5369 = vpop.f32.mrb[0].mxu0
        %v5370 = vpop.f32.mrb[0].mxu0
        %v5371 = vadd.f32 %v5210, %v5370
        %v5372 = vpop.f32.mrb[0].mxu0
        %5373 = vmatprep.mubr.bf16.mxu0 %v4331
        %5374 = vmatmul.mubr.bf16.gmra.mrb[0].mxu0 %v4330
        %v5375 = vpop.f32.mrb[0].mxu0
        %v5376 = vadd.f32 %v5215, %v5375
        %v5377 = vpop.f32.mrb[0].mxu0
        %v5378 = vpop.f32.mrb[0].mxu0
        %v5379 = vadd.f32 %v5218, %v5378
        %v5380 = vpop.f32.mrb[0].mxu0
        %5381 = vmatprep.mubr.bf16.mxu0 %v4332
        %5382 = vmatmul.mubr.bf16.gmra.mrb[0].mxu0 %v4331
        %v5383 = vpop.f32.mrb[0].mxu0
        %v5384 = vadd.f32 %v5223, %v5383
        %v5385 = vpop.f32.mrb[0].mxu0
        %v5386 = vpop.f32.mrb[0].mxu0
        %v5387 = vadd.f32 %v5226, %v5386
        %v5388 = vpop.f32.mrb[0].mxu0
        %5389 = vmatprep.mubr.bf16.mxu0 %v4333
        %5390 = vmatmul.mubr.bf16.gmra.mrb[0].mxu0 %v4332
        %v5391 = vpop.f32.mrb[0].mxu0
        %v5392 = vadd.f32 %v5231, %v5391
        %v5393 = vpop.f32.mrb[0].mxu0
        %v5394 = vpop.f32.mrb[0].mxu0
        %v5395 = vadd.f32 %v5234, %v5394
        %v5396 = vpop.f32.mrb[0].mxu0
        %5397 = vmatprep.mubr.bf16.mxu0 %v4334
        %5398 = vmatmul.mubr.bf16.gmra.mrb[0].mxu0 %v4333
        %v5399 = vpop.f32.mrb[0].mxu0
        %v5400 = vadd.f32 %v5239, %v5399
        %v5401 = vpop.f32.mrb[0].mxu0
        %v5402 = vpop.f32.mrb[0].mxu0
        %v5403 = vadd.f32 %v5242, %v5402
        %v5404 = vpop.f32.mrb[0].mxu0
        %5405 = vmatprep.mubr.bf16.mxu0 %v4335
        %5406 = vmatmul.mubr.bf16.gmra.mrb[0].mxu0 %v4334
        %v5407 = vpop.f32.mrb[0].mxu0
        %v5408 = vadd.f32 %v5247, %v5407
        %v5409 = vpop.f32.mrb[0].mxu0
        %v5410 = vpop.f32.mrb[0].mxu0
        %v5411 = vadd.f32 %v5250, %v5410
        %v5412 = vpop.f32.mrb[0].mxu0
        %5413 = vmatprep.mubr.bf16.mxu0 %v4336
        %5414 = vmatmul.mubr.bf16.gmra.mrb[0].mxu0 %v4335
        %v5415 = vpop.f32.mrb[0].mxu0
        %v5416 = vadd.f32 %v5255, %v5415
        %v5417 = vpop.f32.mrb[0].mxu0
        %v5418 = vpop.f32.mrb[0].mxu0
        %v5419 = vadd.f32 %v5258, %v5418
        %v5420 = vpop.f32.mrb[0].mxu0
        %5421 = vmatprep.mubr.bf16.mxu0 %v4337
        %5422 = vmatmul.mubr.bf16.gmra.mrb[0].mxu0 %v4336
        %v5423 = vpop.f32.mrb[0].mxu0
        %v5424 = vadd.f32 %v5263, %v5423
        %v5425 = vpop.f32.mrb[0].mxu0
        %v5426 = vpop.f32.mrb[0].mxu0
        %v5427 = vadd.f32 %v5266, %v5426
        %v5428 = vpop.f32.mrb[0].mxu0
        %5429 = vmatprep.mubr.bf16.mxu0 %v4338
        %5430 = vmatmul.mubr.bf16.gmra.mrb[0].mxu0 %v4337
        %v5431 = vpop.f32.mrb[0].mxu0
        %v5432 = vadd.f32 %v5271, %v5431
        %v5433 = vpop.f32.mrb[0].mxu0
        %v5434 = vpop.f32.mrb[0].mxu0
        %v5435 = vadd.f32 %v5274, %v5434
        %v5436 = vpop.f32.mrb[0].mxu0
        %5437 = vmatprep.mubr.bf16.mxu0 %v4339
        %5438 = vmatmul.mubr.bf16.gmra.mrb[0].mxu0 %v4338
        %v5439 = vpop.f32.mrb[0].mxu0
        %v5440 = vadd.f32 %v5279, %v5439
        %v5441 = vpop.f32.mrb[0].mxu0
        %v5442 = vpop.f32.mrb[0].mxu0
        %v5443 = vadd.f32 %v5282, %v5442
        %v5444 = vpop.f32.mrb[0].mxu0
        %5445 = vmatprep.mubr.bf16.mxu0 %v4340
        %5446 = vmatmul.mubr.bf16.gmra.mrb[0].mxu0 %v4339
        %v5447 = vpop.f32.mrb[0].mxu0
        %v5448 = vadd.f32 %v5287, %v5447
        %v5449 = vpop.f32.mrb[0].mxu0
        %v5450 = vpop.f32.mrb[0].mxu0
        %v5451 = vadd.f32 %v5290, %v5450
        %v5452 = vpop.f32.mrb[0].mxu0
        %5453 = vdwg.mxu0
        %5454 = vmatprep.subr.bf16.mxu0 0
        %5455 = vmatpush1.bf16.msra.mxu0 %v4875
        %5456 = vmatprep.subr.bf16.mxu0 0
        %5457 = vmatpush1.bf16.msra.mxu0 %v4876
        %5458 = vmatprep.subr.bf16.mxu0 0
        %5459 = vmatpush1.bf16.msra.mxu0 %v4877
        %5460 = vmatprep.subr.bf16.mxu0 0
        %5461 = vmatpush1.bf16.msra.mxu0 %v4878
        %5462 = vmatprep.subr.bf16.mxu0 0
        %5463 = vmatpush1.bf16.msra.mxu0 %v4879
        %5464 = vmatprep.subr.bf16.mxu0 0
        %5465 = vmatpush1.bf16.msra.mxu0 %v4880
        %5466 = vmatprep.subr.bf16.mxu0 0
        %5467 = vmatpush1.bf16.msra.mxu0 %v4881
        %5468 = vmatprep.subr.bf16.mxu0 0
        %5469 = vmatpush1.bf16.msra.mxu0 %v4882
        %5470 = vmatprep.subr.bf16.mxu0 0
        %5471 = vmatpush1.bf16.msra.mxu0 %v4883
        %5472 = vmatprep.subr.bf16.mxu0 0
        %5473 = vmatpush1.bf16.msra.mxu0 %v4884
        %5474 = vmatprep.subr.bf16.mxu0 0
        %5475 = vmatpush1.bf16.msra.mxu0 %v4885
        %5476 = vmatprep.subr.bf16.mxu0 0
        %5477 = vmatpush1.bf16.msra.mxu0 %v4886
        %5478 = vmatprep.subr.bf16.mxu0 0
        %5479 = vmatpush1.bf16.msra.mxu0 %v4887
        %5480 = vmatprep.subr.bf16.mxu0 0
        %5481 = vmatpush1.bf16.msra.mxu0 %v4888
        %5482 = vmatprep.subr.bf16.mxu0 0
        %5483 = vmatpush1.bf16.msra.mxu0 %v4889
        %5484 = vmatprep.subr.bf16.mxu0 0
        %5485 = vmatpush1.bf16.msra.mxu0 %v4890
        %5486 = vmatprep.mubr.bf16.mxu0 %v4378
        %5487 = vmatmul.mubr.bf16.gmra.mrb[0].mxu0 %v4377
        %v5488 = vpop.f32.mrb[0].mxu0
        %v5489 = vadd.f32 %v5328, %v5488
        %v5490 = vpop.f32.mrb[0].mxu0
        %v5491 = vpop.f32.mrb[0].mxu0
        %v5492 = vadd.f32 %v5331, %v5491
        %v5493 = vpop.f32.mrb[0].mxu0
        %5494 = vmatprep.mubr.bf16.mxu0 %v4379
        %5495 = vmatmul.mubr.bf16.gmra.mrb[0].mxu0 %v4378
        %v5496 = vpop.f32.mrb[0].mxu0
        %v5497 = vadd.f32 %v5336, %v5496
        %v5498 = vpop.f32.mrb[0].mxu0
        %v5499 = vpop.f32.mrb[0].mxu0
        %v5500 = vadd.f32 %v5339, %v5499
        %v5501 = vpop.f32.mrb[0].mxu0
        %5502 = vmatprep.mubr.bf16.mxu0 %v4380
        %5503 = vmatmul.mubr.bf16.gmra.mrb[0].mxu0 %v4379
        %v5504 = vpop.f32.mrb[0].mxu0
        %v5505 = vadd.f32 %v5344, %v5504
        %v5506 = vpop.f32.mrb[0].mxu0
        %v5507 = vpop.f32.mrb[0].mxu0
        %v5508 = vadd.f32 %v5347, %v5507
        %v5509 = vpop.f32.mrb[0].mxu0
        %5510 = vmatprep.mubr.bf16.mxu0 %v4381
        %5511 = vmatmul.mubr.bf16.gmra.mrb[0].mxu0 %v4380
        %v5512 = vpop.f32.mrb[0].mxu0
        %v5513 = vadd.f32 %v5352, %v5512
        %v5514 = vpop.f32.mrb[0].mxu0
        %v5515 = vpop.f32.mrb[0].mxu0
        %v5516 = vadd.f32 %v5355, %v5515
        %v5517 = vpop.f32.mrb[0].mxu0
        %5518 = vmatprep.mubr.bf16.mxu0 %v4382
        %5519 = vmatmul.mubr.bf16.gmra.mrb[0].mxu0 %v4381
        %v5520 = vpop.f32.mrb[0].mxu0
        %v5521 = vadd.f32 %v5360, %v5520
        %v5522 = vpop.f32.mrb[0].mxu0
        %v5523 = vpop.f32.mrb[0].mxu0
        %v5524 = vadd.f32 %v5363, %v5523
        %v5525 = vpop.f32.mrb[0].mxu0
        %5526 = vmatprep.mubr.bf16.mxu0 %v4383
        %5527 = vmatmul.mubr.bf16.gmra.mrb[0].mxu0 %v4382
        %v5528 = vpop.f32.mrb[0].mxu0
        %v5529 = vadd.f32 %v5368, %v5528
        %v5530 = vpop.f32.mrb[0].mxu0
        %v5531 = vpop.f32.mrb[0].mxu0
        %v5532 = vadd.f32 %v5371, %v5531
        %v5533 = vpop.f32.mrb[0].mxu0
        %5534 = vmatprep.mubr.bf16.mxu0 %v4384
        %5535 = vmatmul.mubr.bf16.gmra.mrb[0].mxu0 %v4383
        %v5536 = vpop.f32.mrb[0].mxu0
        %v5537 = vadd.f32 %v5376, %v5536
        %v5538 = vpop.f32.mrb[0].mxu0
        %v5539 = vpop.f32.mrb[0].mxu0
        %v5540 = vadd.f32 %v5379, %v5539
        %v5541 = vpop.f32.mrb[0].mxu0
        %5542 = vmatprep.mubr.bf16.mxu0 %v4385
        %5543 = vmatmul.mubr.bf16.gmra.mrb[0].mxu0 %v4384
        %v5544 = vpop.f32.mrb[0].mxu0
        %v5545 = vadd.f32 %v5384, %v5544
        %v5546 = vpop.f32.mrb[0].mxu0
        %v5547 = vpop.f32.mrb[0].mxu0
        %v5548 = vadd.f32 %v5387, %v5547
        %v5549 = vpop.f32.mrb[0].mxu0
        %5550 = vmatprep.mubr.bf16.mxu0 %v4386
        %5551 = vmatmul.mubr.bf16.gmra.mrb[0].mxu0 %v4385
        %v5552 = vpop.f32.mrb[0].mxu0
        %v5553 = vadd.f32 %v5392, %v5552
        %v5554 = vpop.f32.mrb[0].mxu0
        %v5555 = vpop.f32.mrb[0].mxu0
        %v5556 = vadd.f32 %v5395, %v5555
        %v5557 = vpop.f32.mrb[0].mxu0
        %5558 = vmatprep.mubr.bf16.mxu0 %v4387
        %5559 = vmatmul.mubr.bf16.gmra.mrb[0].mxu0 %v4386
        %v5560 = vpop.f32.mrb[0].mxu0
        %v5561 = vadd.f32 %v5400, %v5560
        %v5562 = vpop.f32.mrb[0].mxu0
        %v5563 = vpop.f32.mrb[0].mxu0
        %v5564 = vadd.f32 %v5403, %v5563
        %v5565 = vpop.f32.mrb[0].mxu0
        %5566 = vmatprep.mubr.bf16.mxu0 %v4388
        %5567 = vmatmul.mubr.bf16.gmra.mrb[0].mxu0 %v4387
        %v5568 = vpop.f32.mrb[0].mxu0
        %v5569 = vadd.f32 %v5408, %v5568
        %v5570 = vpop.f32.mrb[0].mxu0
        %v5571 = vpop.f32.mrb[0].mxu0
        %v5572 = vadd.f32 %v5411, %v5571
        %v5573 = vpop.f32.mrb[0].mxu0
        %5574 = vmatprep.mubr.bf16.mxu0 %v4389
        %5575 = vmatmul.mubr.bf16.gmra.mrb[0].mxu0 %v4388
        %v5576 = vpop.f32.mrb[0].mxu0
        %v5577 = vadd.f32 %v5416, %v5576
        %v5578 = vpop.f32.mrb[0].mxu0
        %v5579 = vpop.f32.mrb[0].mxu0
        %v5580 = vadd.f32 %v5419, %v5579
        %v5581 = vpop.f32.mrb[0].mxu0
        %5582 = vmatprep.mubr.bf16.mxu0 %v4390
        %5583 = vmatmul.mubr.bf16.gmra.mrb[0].mxu0 %v4389
        %v5584 = vpop.f32.mrb[0].mxu0
        %v5585 = vadd.f32 %v5424, %v5584
        %v5586 = vpop.f32.mrb[0].mxu0
        %v5587 = vpop.f32.mrb[0].mxu0
        %v5588 = vadd.f32 %v5427, %v5587
        %v5589 = vpop.f32.mrb[0].mxu0
        %5590 = vmatprep.mubr.bf16.mxu0 %v4391
        %5591 = vmatmul.mubr.bf16.gmra.mrb[0].mxu0 %v4390
        %v5592 = vpop.f32.mrb[0].mxu0
        %v5593 = vadd.f32 %v5432, %v5592
        %v5594 = vpop.f32.mrb[0].mxu0
        %v5595 = vpop.f32.mrb[0].mxu0
        %v5596 = vadd.f32 %v5435, %v5595
        %v5597 = vpop.f32.mrb[0].mxu0
        %5598 = vmatprep.mubr.bf16.mxu0 %v4392
        %5599 = vmatmul.mubr.bf16.gmra.mrb[0].mxu0 %v4391
        %v5600 = vpop.f32.mrb[0].mxu0
        %v5601 = vadd.f32 %v5440, %v5600
        %v5602 = vpop.f32.mrb[0].mxu0
        %v5603 = vpop.f32.mrb[0].mxu0
        %v5604 = vadd.f32 %v5443, %v5603
        %v5605 = vpop.f32.mrb[0].mxu0
        %5606 = vmatprep.mubr.bf16.mxu0 %v4393
        %5607 = vmatmul.mubr.bf16.gmra.mrb[0].mxu0 %v4392
        %v5608 = vpop.f32.mrb[0].mxu0
        %v5609 = vadd.f32 %v5448, %v5608
        %v5610 = vpop.f32.mrb[0].mxu0
        %v5611 = vpop.f32.mrb[0].mxu0
        %v5612 = vadd.f32 %v5451, %v5611
        %v5613 = vpop.f32.mrb[0].mxu0
        %5614 = vdwg.mxu0
        %5615 = vmatprep.subr.bf16.mxu0 0
        %5616 = vmatpush1.bf16.msra.mxu0 %v4891
        %5617 = vmatprep.subr.bf16.mxu0 0
        %5618 = vmatpush1.bf16.msra.mxu0 %v4892
        %5619 = vmatprep.subr.bf16.mxu0 0
        %5620 = vmatpush1.bf16.msra.mxu0 %v4893
        %5621 = vmatprep.subr.bf16.mxu0 0
        %5622 = vmatpush1.bf16.msra.mxu0 %v4894
        %5623 = vmatprep.subr.bf16.mxu0 0
        %5624 = vmatpush1.bf16.msra.mxu0 %v4895
        %5625 = vmatprep.subr.bf16.mxu0 0
        %5626 = vmatpush1.bf16.msra.mxu0 %v4896
        %5627 = vmatprep.subr.bf16.mxu0 0
        %5628 = vmatpush1.bf16.msra.mxu0 %v4897
        %5629 = vmatprep.subr.bf16.mxu0 0
        %5630 = vmatpush1.bf16.msra.mxu0 %v4898
        %5631 = vmatprep.subr.bf16.mxu0 0
        %5632 = vmatpush1.bf16.msra.mxu0 0
        %5633 = vmatprep.subr.bf16.mxu0 0
        %5634 = vmatpush1.bf16.msra.mxu0 0
        %5635 = vmatprep.subr.bf16.mxu0 0
        %5636 = vmatpush1.bf16.msra.mxu0 0
        %5637 = vmatprep.subr.bf16.mxu0 0
        %5638 = vmatpush1.bf16.msra.mxu0 0
        %5639 = vmatprep.subr.bf16.mxu0 0
        %5640 = vmatpush1.bf16.msra.mxu0 0
        %5641 = vmatprep.subr.bf16.mxu0 0
        %5642 = vmatpush1.bf16.msra.mxu0 0
        %5643 = vmatprep.subr.bf16.mxu0 0
        %5644 = vmatpush1.bf16.msra.mxu0 0
        %5645 = vmatprep.subr.bf16.mxu0 0
        %5646 = vmatpush1.bf16.msra.mxu0 0
        %5647 = vmatprep.mubr.bf16.mxu0 0
        %5648 = vmatmul.mubr.bf16.gmra.mrb[0].mxu0 %v4379
        %v5649 = vpop.f32.mrb[0].mxu0
        %v5650 = vadd.f32 %v5489, %v5649
        %v5651 = vpop.f32.mrb[0].mxu0
        %v5652 = vpop.f32.mrb[0].mxu0
        %v5653 = vadd.f32 %v5492, %v5652
        %v5654 = vpop.f32.mrb[0].mxu0
        %5655 = vmatprep.mubr.bf16.mxu0 0
        %5656 = vmatmul.mubr.bf16.gmra.mrb[0].mxu0 %v4380
        %v5657 = vpop.f32.mrb[0].mxu0
        %v5658 = vadd.f32 %v5497, %v5657
        %v5659 = vpop.f32.mrb[0].mxu0
        %v5660 = vpop.f32.mrb[0].mxu0
        %v5661 = vadd.f32 %v5500, %v5660
        %v5662 = vpop.f32.mrb[0].mxu0
        %5663 = vmatprep.mubr.bf16.mxu0 0
        %5664 = vmatmul.mubr.bf16.gmra.mrb[0].mxu0 %v4381
        %v5665 = vpop.f32.mrb[0].mxu0
        %v5666 = vadd.f32 %v5505, %v5665
        %v5667 = vpop.f32.mrb[0].mxu0
        %v5668 = vpop.f32.mrb[0].mxu0
        %v5669 = vadd.f32 %v5508, %v5668
        %v5670 = vpop.f32.mrb[0].mxu0
        %5671 = vmatprep.mubr.bf16.mxu0 0
        %5672 = vmatmul.mubr.bf16.gmra.mrb[0].mxu0 %v4382
        %v5673 = vpop.f32.mrb[0].mxu0
        %v5674 = vadd.f32 %v5513, %v5673
        %v5675 = vpop.f32.mrb[0].mxu0
        %v5676 = vpop.f32.mrb[0].mxu0
        %v5677 = vadd.f32 %v5516, %v5676
        %v5678 = vpop.f32.mrb[0].mxu0
        %5679 = vmatprep.mubr.bf16.mxu0 0
        %5680 = vmatmul.mubr.bf16.gmra.mrb[0].mxu0 %v4383
        %v5681 = vpop.f32.mrb[0].mxu0
        %v5682 = vadd.f32 %v5521, %v5681
        %v5683 = vpop.f32.mrb[0].mxu0
        %v5684 = vpop.f32.mrb[0].mxu0
        %v5685 = vadd.f32 %v5524, %v5684
        %v5686 = vpop.f32.mrb[0].mxu0
        %5687 = vmatprep.mubr.bf16.mxu0 0
        %5688 = vmatmul.mubr.bf16.gmra.mrb[0].mxu0 %v4384
        %v5689 = vpop.f32.mrb[0].mxu0
        %v5690 = vadd.f32 %v5529, %v5689
        %v5691 = vpop.f32.mrb[0].mxu0
        %v5692 = vpop.f32.mrb[0].mxu0
        %v5693 = vadd.f32 %v5532, %v5692
        %v5694 = vpop.f32.mrb[0].mxu0
        %5695 = vmatprep.mubr.bf16.mxu0 0
        %5696 = vmatmul.mubr.bf16.gmra.mrb[0].mxu0 %v4385
        %v5697 = vpop.f32.mrb[0].mxu0
        %v5698 = vadd.f32 %v5537, %v5697
        %v5699 = vpop.f32.mrb[0].mxu0
        %v5700 = vpop.f32.mrb[0].mxu0
        %v5701 = vadd.f32 %v5540, %v5700
        %v5702 = vpop.f32.mrb[0].mxu0
        %5703 = vmatprep.mubr.bf16.mxu0 0
        %5704 = vmatmul.mubr.bf16.gmra.mrb[0].mxu0 %v4386
        %v5705 = vpop.f32.mrb[0].mxu0
        %v5706 = vadd.f32 %v5545, %v5705
        %v5707 = vpop.f32.mrb[0].mxu0
        %v5708 = vpop.f32.mrb[0].mxu0
        %v5709 = vadd.f32 %v5548, %v5708
        %v5710 = vpop.f32.mrb[0].mxu0
        %5711 = vmatprep.mubr.bf16.mxu0 0
        %5712 = vmatmul.mubr.bf16.gmra.mrb[0].mxu0 %v4387
        %v5713 = vpop.f32.mrb[0].mxu0
        %v5714 = vadd.f32 %v5553, %v5713
        %v5715 = vpop.f32.mrb[0].mxu0
        %v5716 = vpop.f32.mrb[0].mxu0
        %v5717 = vadd.f32 %v5556, %v5716
        %v5718 = vpop.f32.mrb[0].mxu0
        %5719 = vmatprep.mubr.bf16.mxu0 0
        %5720 = vmatmul.mubr.bf16.gmra.mrb[0].mxu0 %v4388
        %v5721 = vpop.f32.mrb[0].mxu0
        %v5722 = vadd.f32 %v5561, %v5721
        %v5723 = vpop.f32.mrb[0].mxu0
        %v5724 = vpop.f32.mrb[0].mxu0
        %v5725 = vadd.f32 %v5564, %v5724
        %v5726 = vpop.f32.mrb[0].mxu0
        %5727 = vmatprep.mubr.bf16.mxu0 0
        %5728 = vmatmul.mubr.bf16.gmra.mrb[0].mxu0 %v4389
        %v5729 = vpop.f32.mrb[0].mxu0
        %v5730 = vadd.f32 %v5569, %v5729
        %v5731 = vpop.f32.mrb[0].mxu0
        %v5732 = vpop.f32.mrb[0].mxu0
        %v5733 = vadd.f32 %v5572, %v5732
        %v5734 = vpop.f32.mrb[0].mxu0
        %5735 = vmatprep.mubr.bf16.mxu0 0
        %5736 = vmatmul.mubr.bf16.gmra.mrb[0].mxu0 %v4390
        %v5737 = vpop.f32.mrb[0].mxu0
        %v5738 = vadd.f32 %v5577, %v5737
        %v5739 = vpop.f32.mrb[0].mxu0
        %v5740 = vpop.f32.mrb[0].mxu0
        %v5741 = vadd.f32 %v5580, %v5740
        %v5742 = vpop.f32.mrb[0].mxu0
        %5743 = vmatprep.mubr.bf16.mxu0 0
        %5744 = vmatmul.mubr.bf16.gmra.mrb[0].mxu0 %v4391
        %v5745 = vpop.f32.mrb[0].mxu0
        %v5746 = vadd.f32 %v5585, %v5745
        %v5747 = vpop.f32.mrb[0].mxu0
        %v5748 = vpop.f32.mrb[0].mxu0
        %v5749 = vadd.f32 %v5588, %v5748
        %v5750 = vpop.f32.mrb[0].mxu0
        %5751 = vmatprep.mubr.bf16.mxu0 0
        %5752 = vmatmul.mubr.bf16.gmra.mrb[0].mxu0 %v4392
        %v5753 = vpop.f32.mrb[0].mxu0
        %v5754 = vadd.f32 %v5593, %v5753
        %v5755 = vpop.f32.mrb[0].mxu0
        %v5756 = vpop.f32.mrb[0].mxu0
        %v5757 = vadd.f32 %v5596, %v5756
        %v5758 = vpop.f32.mrb[0].mxu0
        %5759 = vmatprep.mubr.bf16.mxu0 0
        %5760 = vmatmul.mubr.bf16.gmra.mrb[0].mxu0 %v4393
        %v5761 = vpop.f32.mrb[0].mxu0
        %v5762 = vadd.f32 %v5601, %v5761
        %v5763 = vpop.f32.mrb[0].mxu0
        %v5764 = vpop.f32.mrb[0].mxu0
        %v5765 = vadd.f32 %v5604, %v5764
        %v5766 = vpop.f32.mrb[0].mxu0
        %5767 = vmatprep.mubr.bf16.mxu0 0
        %5768 = vmatmul.mubr.bf16.gmra.mrb[0].mxu0 %v4394
        %v5769 = vpop.f32.mrb[0].mxu0
        %v5770 = vadd.f32 %v5609, %v5769
        %v5771 = vpop.f32.mrb[0].mxu0
        %v5772 = vpop.f32.mrb[0].mxu0
        %v5773 = vadd.f32 %v5612, %v5772
        %v5774 = vpop.f32.mrb[0].mxu0
        %5775 = vdwg.mxu0
        %v5776 = vadd.f32 %v2278, %v3964
        %v5777 = vadd.f32 %v2281, %v3967
        %v5778 = vadd.f32 %v2286, %v3972
        %v5779 = vadd.f32 %v2289, %v3975
        %v5780 = vadd.f32 %v2294, %v3980
        %v5781 = vadd.f32 %v2297, %v3983
        %v5782 = vadd.f32 %v2302, %v3988
        %v5783 = vadd.f32 %v2305, %v3991
        %v5784 = vadd.f32 %v2310, %v3996
        %v5785 = vadd.f32 %v2313, %v3999
        %v5786 = vadd.f32 %v2318, %v4004
        %v5787 = vadd.f32 %v2321, %v4007
        %v5788 = vadd.f32 %v2326, %v4012
        %v5789 = vadd.f32 %v2329, %v4015
        %v5790 = vadd.f32 %v2334, %v4020
        %v5791 = vadd.f32 %v2337, %v4023
        %v5792 = vadd.f32 %v2342, %v4028
        %v5793 = vadd.f32 %v2345, %v4031
        %v5794 = vadd.f32 %v2350, %v4036
        %v5795 = vadd.f32 %v2353, %v4039
        %v5796 = vadd.f32 %v2358, %v4044
        %v5797 = vadd.f32 %v2361, %v4047
        %v5798 = vadd.f32 %v2366, %v4052
        %v5799 = vadd.f32 %v2369, %v4055
        %v5800 = vadd.f32 %v2374, %v4060
        %v5801 = vadd.f32 %v2377, %v4063
        %v5802 = vadd.f32 %v2382, %v4068
        %v5803 = vadd.f32 %v2385, %v4071
        %v5804 = vadd.f32 %v2390, %v4076
        %v5805 = vadd.f32 %v2393, %v4079
        %v5806 = vadd.f32 %v2398, %v4084
        %v5807 = vadd.f32 %v2401, %v4087
        %v5808 = vadd.f32 %v5776, %v5650
        %v5809 = vadd.f32 %v5777, %v5653
        %v5810 = vadd.f32 %v5778, %v5658
        %v5811 = vadd.f32 %v5779, %v5661
        %v5812 = vadd.f32 %v5780, %v5666
        %v5813 = vadd.f32 %v5781, %v5669
        %v5814 = vadd.f32 %v5782, %v5674
        %v5815 = vadd.f32 %v5783, %v5677
        %v5816 = vadd.f32 %v5784, %v5682
        %v5817 = vadd.f32 %v5785, %v5685
        %v5818 = vadd.f32 %v5786, %v5690
        %v5819 = vadd.f32 %v5787, %v5693
        %v5820 = vadd.f32 %v5788, %v5698
        %v5821 = vadd.f32 %v5789, %v5701
        %v5822 = vadd.f32 %v5790, %v5706
        %v5823 = vadd.f32 %v5791, %v5709
        %v5824 = vadd.f32 %v5792, %v5714
        %v5825 = vadd.f32 %v5793, %v5717
        %v5826 = vadd.f32 %v5794, %v5722
        %v5827 = vadd.f32 %v5795, %v5725
        %v5828 = vadd.f32 %v5796, %v5730
        %v5829 = vadd.f32 %v5797, %v5733
        %v5830 = vadd.f32 %v5798, %v5738
        %v5831 = vadd.f32 %v5799, %v5741
        %v5832 = vadd.f32 %v5800, %v5746
        %v5833 = vadd.f32 %v5801, %v5749
        %v5834 = vadd.f32 %v5802, %v5754
        %v5835 = vadd.f32 %v5803, %v5757
        %v5836 = vadd.f32 %v5804, %v5762
        %v5837 = vadd.f32 %v5805, %v5765
        %v5838 = vadd.f32 %v5806, %v5770
        %v5839 = vadd.f32 %v5807, %v5773
        %v5840 = vld [vmem:[%s11] sm:$0x1]
        %v5842 = vlaneseq
        %v5843 = vshrl.u32 %v5842, 7
        %v5844 = vsub.s32 0, %v5843
        %v5845 = vrot.slane %v5840, %v5844
        %v5847 = vmul.f32 %v686, %v5845
        %v5848 = vmul.f32 %v687, %v5845
        %v5849 = vmul.f32 %v688, %v5845
        %v5850 = vmul.f32 %v689, %v5845
        %v5851 = vmul.f32 %v690, %v5845
        %v5852 = vmul.f32 %v691, %v5845
        %v5853 = vmul.f32 %v692, %v5845
        %v5854 = vmul.f32 %v693, %v5845
        %v5855 = vmul.f32 %v694, %v5845
        %v5856 = vmul.f32 %v695, %v5845
        %v5857 = vmul.f32 %v696, %v5845
        %v5858 = vmul.f32 %v697, %v5845
        %v5859 = vmul.f32 %v698, %v5845
        %v5860 = vmul.f32 %v699, %v5845
        %v5861 = vmul.f32 %v700, %v5845
        %v5862 = vmul.f32 %v701, %v5845
        %v5863 = vmul.f32 %v702, %v5845
        %v5864 = vmul.f32 %v703, %v5845
        %v5865 = vmul.f32 %v704, %v5845
        %v5866 = vmul.f32 %v705, %v5845
        %v5867 = vmul.f32 %v706, %v5845
        %v5868 = vmul.f32 %v707, %v5845
        %v5869 = vmul.f32 %v708, %v5845
        %v5870 = vmul.f32 %v709, %v5845
        %v5871 = vmul.f32 %v710, %v5845
        %v5872 = vmul.f32 %v711, %v5845
        %v5873 = vmul.f32 %v712, %v5845
        %v5874 = vmul.f32 %v713, %v5845
        %v5875 = vmul.f32 %v714, %v5845
        %v5876 = vmul.f32 %v715, %v5845
        %v5877 = vmul.f32 %v716, %v5845
        %v5878 = vmul.f32 %v717, %v5845
        %v5879 = vld [vmem:[%s12] sm:$0x1]
        %v5881 = vlaneseq
        %v5882 = vshrl.u32 %v5881, 7
        %v5883 = vsub.s32 0, %v5882
        %v5884 = vrot.slane %v5879, %v5883
        %v5886 = vadd.f32 %v5847, %v5884
        %v5887 = vadd.f32 %v5848, %v5884
        %v5888 = vadd.f32 %v5849, %v5884
        %v5889 = vadd.f32 %v5850, %v5884
        %v5890 = vadd.f32 %v5851, %v5884
        %v5891 = vadd.f32 %v5852, %v5884
        %v5892 = vadd.f32 %v5853, %v5884
        %v5893 = vadd.f32 %v5854, %v5884
        %v5894 = vadd.f32 %v5855, %v5884
        %v5895 = vadd.f32 %v5856, %v5884
        %v5896 = vadd.f32 %v5857, %v5884
        %v5897 = vadd.f32 %v5858, %v5884
        %v5898 = vadd.f32 %v5859, %v5884
        %v5899 = vadd.f32 %v5860, %v5884
        %v5900 = vadd.f32 %v5861, %v5884
        %v5901 = vadd.f32 %v5862, %v5884
        %v5902 = vadd.f32 %v5863, %v5884
        %v5903 = vadd.f32 %v5864, %v5884
        %v5904 = vadd.f32 %v5865, %v5884
        %v5905 = vadd.f32 %v5866, %v5884
        %v5906 = vadd.f32 %v5867, %v5884
        %v5907 = vadd.f32 %v5868, %v5884
        %v5908 = vadd.f32 %v5869, %v5884
        %v5909 = vadd.f32 %v5870, %v5884
        %v5910 = vadd.f32 %v5871, %v5884
        %v5911 = vadd.f32 %v5872, %v5884
        %v5912 = vadd.f32 %v5873, %v5884
        %v5913 = vadd.f32 %v5874, %v5884
        %v5914 = vadd.f32 %v5875, %v5884
        %v5915 = vadd.f32 %v5876, %v5884
        %v5916 = vadd.f32 %v5877, %v5884
        %v5917 = vadd.f32 %v5878, %v5884
        %v5918 = vmax.f32 %v5886, 0.0
        %v5919 = vmax.f32 %v5887, 0.0
        %v5920 = vmax.f32 %v5888, 0.0
        %v5921 = vmax.f32 %v5889, 0.0
        %v5922 = vmax.f32 %v5890, 0.0
        %v5923 = vmax.f32 %v5891, 0.0
        %v5924 = vmax.f32 %v5892, 0.0
        %v5925 = vmax.f32 %v5893, 0.0
        %v5926 = vmax.f32 %v5894, 0.0
        %v5927 = vmax.f32 %v5895, 0.0
        %v5928 = vmax.f32 %v5896, 0.0
        %v5929 = vmax.f32 %v5897, 0.0
        %v5930 = vmax.f32 %v5898, 0.0
        %v5931 = vmax.f32 %v5899, 0.0
        %v5932 = vmax.f32 %v5900, 0.0
        %v5933 = vmax.f32 %v5901, 0.0
        %v5934 = vmax.f32 %v5902, 0.0
        %v5935 = vmax.f32 %v5903, 0.0
        %v5936 = vmax.f32 %v5904, 0.0
        %v5937 = vmax.f32 %v5905, 0.0
        %v5938 = vmax.f32 %v5906, 0.0
        %v5939 = vmax.f32 %v5907, 0.0
        %v5940 = vmax.f32 %v5908, 0.0
        %v5941 = vmax.f32 %v5909, 0.0
        %v5942 = vmax.f32 %v5910, 0.0
        %v5943 = vmax.f32 %v5911, 0.0
        %v5944 = vmax.f32 %v5912, 0.0
        %v5945 = vmax.f32 %v5913, 0.0
        %v5946 = vmax.f32 %v5914, 0.0
        %v5947 = vmax.f32 %v5915, 0.0
        %v5948 = vmax.f32 %v5916, 0.0
        %v5949 = vmax.f32 %v5917, 0.0
        %v5950 = vpack.c.bf16 %v5919, %v5918
        %v5951 = vpack.c.bf16 %v5921, %v5920
        %v5952 = vpack.c.bf16 %v5923, %v5922
        %v5953 = vpack.c.bf16 %v5925, %v5924
        %v5954 = vpack.c.bf16 %v5927, %v5926
        %v5955 = vpack.c.bf16 %v5929, %v5928
        %v5956 = vpack.c.bf16 %v5931, %v5930
        %v5957 = vpack.c.bf16 %v5933, %v5932
        %v5958 = vpack.c.bf16 %v5935, %v5934
        %v5959 = vpack.c.bf16 %v5937, %v5936
        %v5960 = vpack.c.bf16 %v5939, %v5938
        %v5961 = vpack.c.bf16 %v5941, %v5940
        %v5962 = vpack.c.bf16 %v5943, %v5942
        %v5963 = vpack.c.bf16 %v5945, %v5944
        %v5964 = vpack.c.bf16 %v5947, %v5946
        %v5965 = vpack.c.bf16 %v5949, %v5948
        %v5966 = vld [vmem:[%s10] sm:$0xf]
        %v5967 = vld [vmem:[%s10 + $0x4] sm:$0xf]
        %v5968 = vld [vmem:[%s10 + $0x8] sm:$0xf]
        %v5969 = vld [vmem:[%s10 + $0xc] sm:$0xf]
        %v5970 = vld [vmem:[%s10 + $0x10] sm:$0xf]
        %v5971 = vld [vmem:[%s10 + $0x14] sm:$0xf]
        %v5972 = vld [vmem:[%s10 + $0x18] sm:$0xf]
        %v5973 = vld [vmem:[%s10 + $0x1c] sm:$0xf]
        %v5974 = vld [vmem:[%s10 + $0x20] sm:$0xf]
        %v5975 = vld [vmem:[%s10 + $0x24] sm:$0xf]
        %v5976 = vld [vmem:[%s10 + $0x28] sm:$0xf]
        %v5977 = vld [vmem:[%s10 + $0x2c] sm:$0xf]
        %v5978 = vld [vmem:[%s10 + $0x30] sm:$0xf]
        %v5979 = vld [vmem:[%s10 + $0x34] sm:$0xf]
        %v5980 = vld [vmem:[%s10 + $0x38] sm:$0xf]
        %v5981 = vld [vmem:[%s10 + $0x3c] sm:$0xf]
        %v5998 = vunpack.c.l.b16 %v5966
        %v5999 = vunpack.c.l.b16 %v5967
        %v6000 = vunpack.c.l.b16 %v5968
        %v6001 = vunpack.c.l.b16 %v5969
        %v6002 = vunpack.c.l.b16 %v5970
        %v6003 = vunpack.c.l.b16 %v5971
        %v6004 = vunpack.c.l.b16 %v5972
        %v6005 = vunpack.c.l.b16 %v5973
        %v6006 = vunpack.c.l.b16 %v5974
        %v6007 = vunpack.c.l.b16 %v5975
        %v6008 = vunpack.c.l.b16 %v5976
        %v6009 = vunpack.c.l.b16 %v5977
        %v6010 = vunpack.c.l.b16 %v5978
        %v6011 = vunpack.c.l.b16 %v5979
        %v6012 = vunpack.c.l.b16 %v5980
        %v6013 = vunpack.c.l.b16 %v5981
        %v6014 = vpack.c.b16 %v5999, %v5998
        %v6015 = vpack.c.b16 %v6001, %v6000
        %v6016 = vpack.c.b16 %v6003, %v6002
        %v6017 = vpack.c.b16 %v6005, %v6004
        %v6018 = vpack.c.b16 %v6007, %v6006
        %v6019 = vpack.c.b16 %v6009, %v6008
        %v6020 = vpack.c.b16 %v6011, %v6010
        %v6021 = vpack.c.b16 %v6013, %v6012
        %6030 = vmatprep.subr.bf16.mxu0 0
        %6031 = vmatpush1.bf16.msra.mxu0 %v6014
        %6032 = vmatprep.subr.bf16.mxu0 0
        %6033 = vmatpush1.bf16.msra.mxu0 %v6015
        %6034 = vmatprep.subr.bf16.mxu0 0
        %6035 = vmatpush1.bf16.msra.mxu0 %v6016
        %6036 = vmatprep.subr.bf16.mxu0 0
        %6037 = vmatpush1.bf16.msra.mxu0 %v6017
        %6038 = vmatprep.subr.bf16.mxu0 0
        %6039 = vmatpush1.bf16.msra.mxu0 %v6018
        %6040 = vmatprep.subr.bf16.mxu0 0
        %6041 = vmatpush1.bf16.msra.mxu0 %v6019
        %6042 = vmatprep.subr.bf16.mxu0 0
        %6043 = vmatpush1.bf16.msra.mxu0 %v6020
        %6044 = vmatprep.subr.bf16.mxu0 0
        %6045 = vmatpush1.bf16.msra.mxu0 %v6021
        %6046 = vmatprep.subr.bf16.mxu0 0
        %6047 = vmatpush1.bf16.msra.mxu0 0
        %6048 = vmatprep.subr.bf16.mxu0 0
        %6049 = vmatpush1.bf16.msra.mxu0 0
        %6050 = vmatprep.subr.bf16.mxu0 0
        %6051 = vmatpush1.bf16.msra.mxu0 0
        %6052 = vmatprep.subr.bf16.mxu0 0
        %6053 = vmatpush1.bf16.msra.mxu0 0
        %6054 = vmatprep.subr.bf16.mxu0 0
        %6055 = vmatpush1.bf16.msra.mxu0 0
        %6056 = vmatprep.subr.bf16.mxu0 0
        %6057 = vmatpush1.bf16.msra.mxu0 0
        %6058 = vmatprep.subr.bf16.mxu0 0
        %6059 = vmatpush1.bf16.msra.mxu0 0
        %6060 = vmatprep.subr.bf16.mxu0 0
        %6061 = vmatpush1.bf16.msra.mxu0 0
        %6062 = vmatprep.mubr.bf16.mxu0 0
        %6063 = vmatmul.mubr.bf16.gmra.mrb[0].mxu0 %v5950
        %v6064 = vpop.f32.mrb[0].mxu0
        %v6065 = vadd.f32 0.0, %v6064
        %v6066 = vpop.f32.mrb[0].mxu0
        %v6067 = vpop.f32.mrb[0].mxu0
        %v6068 = vadd.f32 0.0, %v6067
        %v6069 = vpop.f32.mrb[0].mxu0
        %6070 = vmatprep.mubr.bf16.mxu0 0
        %6071 = vmatmul.mubr.bf16.gmra.mrb[0].mxu0 %v5951
        %v6072 = vpop.f32.mrb[0].mxu0
        %v6073 = vadd.f32 0.0, %v6072
        %v6074 = vpop.f32.mrb[0].mxu0
        %v6075 = vpop.f32.mrb[0].mxu0
        %v6076 = vadd.f32 0.0, %v6075
        %v6077 = vpop.f32.mrb[0].mxu0
        %6078 = vmatprep.mubr.bf16.mxu0 0
        %6079 = vmatmul.mubr.bf16.gmra.mrb[0].mxu0 %v5952
        %v6080 = vpop.f32.mrb[0].mxu0
        %v6081 = vadd.f32 0.0, %v6080
        %v6082 = vpop.f32.mrb[0].mxu0
        %v6083 = vpop.f32.mrb[0].mxu0
        %v6084 = vadd.f32 0.0, %v6083
        %v6085 = vpop.f32.mrb[0].mxu0
        %6086 = vmatprep.mubr.bf16.mxu0 0
        %6087 = vmatmul.mubr.bf16.gmra.mrb[0].mxu0 %v5953
        %v6088 = vpop.f32.mrb[0].mxu0
        %v6089 = vadd.f32 0.0, %v6088
        %v6090 = vpop.f32.mrb[0].mxu0
        %v6091 = vpop.f32.mrb[0].mxu0
        %v6092 = vadd.f32 0.0, %v6091
        %v6093 = vpop.f32.mrb[0].mxu0
        %6094 = vmatprep.mubr.bf16.mxu0 0
        %6095 = vmatmul.mubr.bf16.gmra.mrb[0].mxu0 %v5954
        %v6096 = vpop.f32.mrb[0].mxu0
        %v6097 = vadd.f32 0.0, %v6096
        %v6098 = vpop.f32.mrb[0].mxu0
        %v6099 = vpop.f32.mrb[0].mxu0
        %v6100 = vadd.f32 0.0, %v6099
        %v6101 = vpop.f32.mrb[0].mxu0
        %6102 = vmatprep.mubr.bf16.mxu0 0
        %6103 = vmatmul.mubr.bf16.gmra.mrb[0].mxu0 %v5955
        %v6104 = vpop.f32.mrb[0].mxu0
        %v6105 = vadd.f32 0.0, %v6104
        %v6106 = vpop.f32.mrb[0].mxu0
        %v6107 = vpop.f32.mrb[0].mxu0
        %v6108 = vadd.f32 0.0, %v6107
        %v6109 = vpop.f32.mrb[0].mxu0
        %6110 = vmatprep.mubr.bf16.mxu0 0
        %6111 = vmatmul.mubr.bf16.gmra.mrb[0].mxu0 %v5956
        %v6112 = vpop.f32.mrb[0].mxu0
        %v6113 = vadd.f32 0.0, %v6112
        %v6114 = vpop.f32.mrb[0].mxu0
        %v6115 = vpop.f32.mrb[0].mxu0
        %v6116 = vadd.f32 0.0, %v6115
        %v6117 = vpop.f32.mrb[0].mxu0
        %6118 = vmatprep.mubr.bf16.mxu0 0
        %6119 = vmatmul.mubr.bf16.gmra.mrb[0].mxu0 %v5957
        %v6120 = vpop.f32.mrb[0].mxu0
        %v6121 = vadd.f32 0.0, %v6120
        %v6122 = vpop.f32.mrb[0].mxu0
        %v6123 = vpop.f32.mrb[0].mxu0
        %v6124 = vadd.f32 0.0, %v6123
        %v6125 = vpop.f32.mrb[0].mxu0
        %6126 = vmatprep.mubr.bf16.mxu0 0
        %6127 = vmatmul.mubr.bf16.gmra.mrb[0].mxu0 %v5958
        %v6128 = vpop.f32.mrb[0].mxu0
        %v6129 = vadd.f32 0.0, %v6128
        %v6130 = vpop.f32.mrb[0].mxu0
        %v6131 = vpop.f32.mrb[0].mxu0
        %v6132 = vadd.f32 0.0, %v6131
        %v6133 = vpop.f32.mrb[0].mxu0
        %6134 = vmatprep.mubr.bf16.mxu0 0
        %6135 = vmatmul.mubr.bf16.gmra.mrb[0].mxu0 %v5959
        %v6136 = vpop.f32.mrb[0].mxu0
        %v6137 = vadd.f32 0.0, %v6136
        %v6138 = vpop.f32.mrb[0].mxu0
        %v6139 = vpop.f32.mrb[0].mxu0
        %v6140 = vadd.f32 0.0, %v6139
        %v6141 = vpop.f32.mrb[0].mxu0
        %6142 = vmatprep.mubr.bf16.mxu0 0
        %6143 = vmatmul.mubr.bf16.gmra.mrb[0].mxu0 %v5960
        %v6144 = vpop.f32.mrb[0].mxu0
        %v6145 = vadd.f32 0.0, %v6144
        %v6146 = vpop.f32.mrb[0].mxu0
        %v6147 = vpop.f32.mrb[0].mxu0
        %v6148 = vadd.f32 0.0, %v6147
        %v6149 = vpop.f32.mrb[0].mxu0
        %6150 = vmatprep.mubr.bf16.mxu0 0
        %6151 = vmatmul.mubr.bf16.gmra.mrb[0].mxu0 %v5961
        %v6152 = vpop.f32.mrb[0].mxu0
        %v6153 = vadd.f32 0.0, %v6152
        %v6154 = vpop.f32.mrb[0].mxu0
        %v6155 = vpop.f32.mrb[0].mxu0
        %v6156 = vadd.f32 0.0, %v6155
        %v6157 = vpop.f32.mrb[0].mxu0
        %6158 = vmatprep.mubr.bf16.mxu0 0
        %6159 = vmatmul.mubr.bf16.gmra.mrb[0].mxu0 %v5962
        %v6160 = vpop.f32.mrb[0].mxu0
        %v6161 = vadd.f32 0.0, %v6160
        %v6162 = vpop.f32.mrb[0].mxu0
        %v6163 = vpop.f32.mrb[0].mxu0
        %v6164 = vadd.f32 0.0, %v6163
        %v6165 = vpop.f32.mrb[0].mxu0
        %6166 = vmatprep.mubr.bf16.mxu0 0
        %6167 = vmatmul.mubr.bf16.gmra.mrb[0].mxu0 %v5963
        %v6168 = vpop.f32.mrb[0].mxu0
        %v6169 = vadd.f32 0.0, %v6168
        %v6170 = vpop.f32.mrb[0].mxu0
        %v6171 = vpop.f32.mrb[0].mxu0
        %v6172 = vadd.f32 0.0, %v6171
        %v6173 = vpop.f32.mrb[0].mxu0
        %6174 = vmatprep.mubr.bf16.mxu0 0
        %6175 = vmatmul.mubr.bf16.gmra.mrb[0].mxu0 %v5964
        %v6176 = vpop.f32.mrb[0].mxu0
        %v6177 = vadd.f32 0.0, %v6176
        %v6178 = vpop.f32.mrb[0].mxu0
        %v6179 = vpop.f32.mrb[0].mxu0
        %v6180 = vadd.f32 0.0, %v6179
        %v6181 = vpop.f32.mrb[0].mxu0
        %6182 = vmatprep.mubr.bf16.mxu0 0
        %6183 = vmatmul.mubr.bf16.gmra.mrb[0].mxu0 %v5965
        %v6184 = vpop.f32.mrb[0].mxu0
        %v6185 = vadd.f32 0.0, %v6184
        %v6186 = vpop.f32.mrb[0].mxu0
        %v6187 = vpop.f32.mrb[0].mxu0
        %v6188 = vadd.f32 0.0, %v6187
        %v6189 = vpop.f32.mrb[0].mxu0
        %6190 = vdwg.mxu0
        %v6191 = vadd.f32 %v5808, %v6065
        %v6192 = vadd.f32 %v5809, %v6068
        %v6193 = vadd.f32 %v5810, %v6073
        %v6194 = vadd.f32 %v5811, %v6076
        %v6195 = vadd.f32 %v5812, %v6081
        %v6196 = vadd.f32 %v5813, %v6084
        %v6197 = vadd.f32 %v5814, %v6089
        %v6198 = vadd.f32 %v5815, %v6092
        %v6199 = vadd.f32 %v5816, %v6097
        %v6200 = vadd.f32 %v5817, %v6100
        %v6201 = vadd.f32 %v5818, %v6105
        %v6202 = vadd.f32 %v5819, %v6108
        %v6203 = vadd.f32 %v5820, %v6113
        %v6204 = vadd.f32 %v5821, %v6116
        %v6205 = vadd.f32 %v5822, %v6121
        %v6206 = vadd.f32 %v5823, %v6124
        %v6207 = vadd.f32 %v5824, %v6129
        %v6208 = vadd.f32 %v5825, %v6132
        %v6209 = vadd.f32 %v5826, %v6137
        %v6210 = vadd.f32 %v5827, %v6140
        %v6211 = vadd.f32 %v5828, %v6145
        %v6212 = vadd.f32 %v5829, %v6148
        %v6213 = vadd.f32 %v5830, %v6153
        %v6214 = vadd.f32 %v5831, %v6156
        %v6215 = vadd.f32 %v5832, %v6161
        %v6216 = vadd.f32 %v5833, %v6164
        %v6217 = vadd.f32 %v5834, %v6169
        %v6218 = vadd.f32 %v5835, %v6172
        %v6219 = vadd.f32 %v5836, %v6177
        %v6220 = vadd.f32 %v5837, %v6180
        %v6221 = vadd.f32 %v5838, %v6185
        %v6222 = vadd.f32 %v5839, %v6188
        %6223 = vst [vmem:[%s463] sm:$0xff] %v6191
        %6224 = vst [vmem:[%s463 + $0x8] sm:$0xff] %v6192
        %6225 = vst [vmem:[%s463 + $0x10] sm:$0xff] %v6193
        %6226 = vst [vmem:[%s463 + $0x18] sm:$0xff] %v6194
        %6227 = vst [vmem:[%s463 + $0x20] sm:$0xff] %v6195
        %6228 = vst [vmem:[%s463 + $0x28] sm:$0xff] %v6196
        %6229 = vst [vmem:[%s463 + $0x30] sm:$0xff] %v6197
        %6230 = vst [vmem:[%s463 + $0x38] sm:$0xff] %v6198
        %6231 = vst [vmem:[%s463 + $0x40] sm:$0xff] %v6199
        %6232 = vst [vmem:[%s463 + $0x48] sm:$0xff] %v6200
        %6233 = vst [vmem:[%s463 + $0x50] sm:$0xff] %v6201
        %6234 = vst [vmem:[%s463 + $0x58] sm:$0xff] %v6202
        %6235 = vst [vmem:[%s463 + $0x60] sm:$0xff] %v6203
        %6236 = vst [vmem:[%s463 + $0x68] sm:$0xff] %v6204
        %6237 = vst [vmem:[%s463 + $0x70] sm:$0xff] %v6205
        %6238 = vst [vmem:[%s463 + $0x78] sm:$0xff] %v6206
        %6239 = vst [vmem:[%s463 + $0x80] sm:$0xff] %v6207
        %6240 = vst [vmem:[%s463 + $0x88] sm:$0xff] %v6208
        %6241 = vst [vmem:[%s463 + $0x90] sm:$0xff] %v6209
        %6242 = vst [vmem:[%s463 + $0x98] sm:$0xff] %v6210
        %6243 = vst [vmem:[%s463 + $0xa0] sm:$0xff] %v6211
        %6244 = vst [vmem:[%s463 + $0xa8] sm:$0xff] %v6212
        %6245 = vst [vmem:[%s463 + $0xb0] sm:$0xff] %v6213
        %6246 = vst [vmem:[%s463 + $0xb8] sm:$0xff] %v6214
        %6247 = vst [vmem:[%s463 + $0xc0] sm:$0xff] %v6215
        %6248 = vst [vmem:[%s463 + $0xc8] sm:$0xff] %v6216
        %6249 = vst [vmem:[%s463 + $0xd0] sm:$0xff] %v6217
        %6250 = vst [vmem:[%s463 + $0xd8] sm:$0xff] %v6218
        %6251 = vst [vmem:[%s463 + $0xe0] sm:$0xff] %v6219
        %6252 = vst [vmem:[%s463 + $0xe8] sm:$0xff] %v6220
        %6253 = vst [vmem:[%s463 + $0xf0] sm:$0xff] %v6221
        %6254 = vst [vmem:[%s463 + $0xf8] sm:$0xff] %v6222
        %s6255 = sand.u32 %s315, 1
        %s6256 = scalar_lea.sflag [#allocation7], %s6255
        %s6257 = sand.u32 %s315, 1
        %s6258 = smul.addr %s6257, 256
        %s6259 = scalar_lea.vmem [#allocation10], %s6258
        // Predicated region
        $region81: #{hdtr_conv_block_forward.1} parent=71 // pred_check
          %p6260 = pneg %p325
        $region82: #{hdtr_conv_block_forward.1} parent=71 // pred_check_branch
          %6262 = sbr.rel (%p6260) target = $region84
        $region83: #{hdtr_conv_block_forward.1} parent=71 // pred_region
          %s6264 = ssub.s32 4096, 4096
          %6265 = vsyncadd %s6256, %s6264
          %s6266 = smul.addr %s29, 32
          %s6267 = smul.addr %s6266, 128
          %s6268 = scalar_lea.hbm %s13, %s6267
          %s6269 = sshll.u32 %s6259, 4
          %s6270 = int_to_ptr.vmem [resolvable:$true] %s6269
          %6275 = dma.vmem_to_hbm [thread:$0]  %s6270, 4096, %s6268, %s6256, 128, 128, 8
        $region84: #{hdtr_conv_block_forward.1} parent=71 // pred_fallthru
          _
      $region72: #{hdtr_conv_block_forward.1} parent=5 // pred_fallthru
        _
      %p6276 = scmp.le.s32.totalorder 2, %s24
      // Predicated region
      $region85: #{hdtr_conv_block_forward.1} parent=5 // pred_check
        %p6277 = pneg %p6276
      $region86: #{hdtr_conv_block_forward.1} parent=5 // pred_check_branch
        %6279 = sbr.rel (%p6277) target = $region88
      $region87: #{hdtr_conv_block_forward.1} parent=5 // pred_region
        %s6280 = ssub.s32 %s24, 2
        // Predicated region
        $region89: #{hdtr_conv_block_forward.1} parent=87 // pred_check
          %p6281 = pneg %p331
        $region90: #{hdtr_conv_block_forward.1} parent=87 // pred_check_branch
          %6283 = sbr.rel (%p6281) target = $region92
        $region91: #{hdtr_conv_block_forward.1} parent=87 // pred_region
          %s6284 = sand.u32 %s316, 1
          %s6285 = scalar_lea.sflag [#allocation7], %s6284
          %s6286 = sand.u32 %s316, 1
          %s6287 = smul.addr %s6286, 256
          %s6288 = scalar_lea.vmem [#allocation10], %s6287
          %6289 = dma.done %s6285, 4096
        $region92: #{hdtr_conv_block_forward.1} parent=87 // pred_fallthru
          _
      $region88: #{hdtr_conv_block_forward.1} parent=5 // pred_fallthru
        _
    $region6: #{hdtr_conv_block_forward.1} parent=1 // loop_footer
      %s28 = sadd.s32 1, %s24
    $region7: #{hdtr_conv_block_forward.1} parent=1 // loop_footer_branch
      %23 = sbr.rel target = $region3
    $region8: #{hdtr_conv_block_forward.1} parent=1 // loop_exit
      _
    %6290 = vsyncpa [#allocation6], 1
    %s6291 = scalar_lea.sflag [#allocation6], 1
    %6292 = vsyncpa %s6291, 1
    %6293 = vsyncpa [#allocation9], 1
    %6294 = vsyncpa [#allocation7], 1
    %s6295 = scalar_lea.sflag [#allocation7], 1
    %6296 = vsyncpa %s6295, 1

</llo_original>
